<compile_context>
chip_gen: v7x
topology: tpu7x:2x2x1
jax: 0.10.0
libtpu: 0.0.40
codegen_flags: <defaults>
</compile_context>

<pallas_src>
import jax
import jax.numpy as jnp
from jax.experimental import pallas as pl
from jax.experimental.pallas import tpu as pltpu

EPS = 1e-5  # PyTorch BatchNorm2d default eps


def _round_up(v, m):
    return ((v + m - 1) // m) * m


def _vmem_limit_bytes():
    """Generation-aware scoped-VMEM limit (~75% of physical, capped)."""
    try:
        cap = int(pltpu.get_tpu_info().vmem_capacity_bytes)
    except Exception:
        cap = 64 * 1024 * 1024
    return max(32 * 1024 * 1024, min(96 * 1024 * 1024, (cap * 3) // 4))


# --------------------------- kernel 1: conv stack ----------------------------

def _conv_stack_kernel(x_ref, w1_ref, s1_ref, b1_ref,
                       w2cat_ref, s2_ref, b2_ref,
                       w3_ref, s3_ref, b3_ref,
                       out3_ref, pool_ref,
                       pad_ref, acc_ref):
    """Fused conv1+bn1+relu -> conv2(3x3)+bn2+relu -> conv3+bn3 + channel pools.

    x_ref:     (1, H, W, Cin) bf16
    w1_ref:    (Cin, P) bf16          s1/b1: (1, P)  f32
    w2cat_ref: (3, 3*P, P) bf16       (kh, kw*P + cin, cout)
    s2/b2:     (1, P)  f32
    w3_ref:    (P, C3) bf16           s3/b3: (1, C3) f32
    out3_ref:  (1, H*W, C3) bf16      pool_ref: (1, 2, C3) f32  [avg; max]
    pad_ref:   (H+2, W+2, P) bf16 VMEM scratch (halo-padded out1)
    acc_ref:   (H*W, P) f32 VMEM scratch (conv2 accumulator)
    """
    H = x_ref.shape[1]
    W = x_ref.shape[2]
    Cin = x_ref.shape[3]
    P = w1_ref.shape[1]

    # ---- conv1 (1x1) + bn1 + relu, written into the halo-padded scratch ----
    x2d = x_ref[0].reshape(H * W, Cin)
    o1 = jnp.dot(x2d, w1_ref[...], preferred_element_type=jnp.float32)
    o1 = jnp.maximum(o1 * s1_ref[...] + b1_ref[...], 0.0)

    # Zero only the 1-wide halo border (re-done every step: megacore-safe,
    # negligible cost), then fill the interior.
    zrow = jnp.zeros((1, W + 2, P), pad_ref.dtype)
    zcol = jnp.zeros((H + 2, 1, P), pad_ref.dtype)
    pad_ref[pl.ds(0, 1), :, :] = zrow
    pad_ref[pl.ds(H + 1, 1), :, :] = zrow
    pad_ref[:, pl.ds(0, 1), :] = zcol
    pad_ref[:, pl.ds(W + 1, 1), :] = zcol
    pad_ref[pl.ds(1, H), pl.ds(1, W), :] = o1.reshape(H, W, P).astype(pad_ref.dtype)

    # ---- conv2 (3x3, pad=1, stride=1): one K=3*P matmul per kh tap row -----
    for kh in range(3):
        cat = jnp.concatenate(
            [pad_ref[pl.ds(kh, H), pl.ds(kw, W), :] for kw in range(3)],
            axis=-1)                                            # (H, W, 3P)
        part = jnp.dot(cat.reshape(H * W, 3 * P), w2cat_ref[kh],
                       preferred_element_type=jnp.float32)      # (H*W, P)
        if kh == 0:
            acc_ref[...] = part
        else:
            acc_ref[...] += part

    # ---- bn2 + relu, conv3 (1x1) + bn3 (no relu) ----------------------------
    o2 = jnp.maximum(acc_ref[...] * s2_ref[...] + b2_ref[...], 0.0)
    o2 = o2.astype(jnp.bfloat16)
    o3 = jnp.dot(o2, w3_ref[...], preferred_element_type=jnp.float32)
    o3 = o3 * s3_ref[...] + b3_ref[...]                         # (H*W, C3) f32
    out3_ref[0] = o3.astype(out3_ref.dtype)

    # ---- global channel pooling (feeds CBAM channel attention) --------------
    avg = jnp.mean(o3, axis=0, keepdims=True)                   # (1, C3)
    mx = jnp.max(o3, axis=0, keepdims=True)                     # (1, C3)
    pool_ref[0] = jnp.concatenate([avg, mx], axis=0)


def conv_stack(x, p):
    """x: (N, H, W, Cin) bf16 -> (out3 (N, H*W, C3) bf16, pools (N, 2, C3) f32)."""
    N, H, W, Cin = x.shape
    P = p["w1"].shape[1]
    C3 = p["w3"].shape[1]
    return pl.pallas_call(
        _conv_stack_kernel,
        out_shape=(jax.ShapeDtypeStruct((N, H * W, C3), jnp.bfloat16),
                   jax.ShapeDtypeStruct((N, 2, C3), jnp.float32)),
        grid_spec=pltpu.PrefetchScalarGridSpec(
            num_scalar_prefetch=0,
            grid=(N,),
            in_specs=[
                pl.BlockSpec((1, H, W, Cin), lambda b: (b, 0, 0, 0)),
                pl.BlockSpec((Cin, P), lambda b: (0, 0)),
                pl.BlockSpec((1, P), lambda b: (0, 0)),
                pl.BlockSpec((1, P), lambda b: (0, 0)),
                pl.BlockSpec((3, 3 * P, P), lambda b: (0, 0, 0)),
                pl.BlockSpec((1, P), lambda b: (0, 0)),
                pl.BlockSpec((1, P), lambda b: (0, 0)),
                pl.BlockSpec((P, C3), lambda b: (0, 0)),
                pl.BlockSpec((1, C3), lambda b: (0, 0)),
                pl.BlockSpec((1, C3), lambda b: (0, 0)),
            ],
            out_specs=[pl.BlockSpec((1, H * W, C3), lambda b: (b, 0, 0)),
                       pl.BlockSpec((1, 2, C3), lambda b: (b, 0, 0))],
            scratch_shapes=[
                pltpu.VMEM((H + 2, W + 2, P), jnp.bfloat16),
                pltpu.VMEM((H * W, P), jnp.float32),
            ],
        ),
        compiler_params=pltpu.CompilerParams(
            dimension_semantics=("parallel",),
            vmem_limit_bytes=_vmem_limit_bytes()),
    )(x, p["w1"], p["s1"], p["b1"], p["w2cat"], p["s2"], p["b2"],
      p["w3"], p["s3"], p["b3"])


# -------------------------- kernel 2: CBAM epilogue ---------------------------

def _cbam_epilogue_kernel(out3_ref, res_ref, pool_ref, w1_ref, w2_ref, wsa_ref,
                          o_ref, avg_ref, max_ref):
    """Channel + spatial attention, residual add, ReLU (one image per step).

    out3_ref/res_ref: (1, H, W, C) bf16
    pool_ref: (1, 2, C) f32  ([avg; max] of out3 over H*W, from kernel 1)
    w1_ref: (C, hidden) bf16, w2_ref: (hidden, C) bf16 (shared channel MLP)
    wsa_ref: (98,) f32 SMEM  (7x7 spatial conv taps: [avg 49 | max 49])
    o_ref: (1, H, W, C) bf16
    avg_ref/max_ref: (H+6, Wp) f32 VMEM scratch — lane-dense channel-pooled
                     maps (W on the lane axis) with a 3-wide zero halo.
    """
    H, W, C = o_ref.shape[1], o_ref.shape[2], o_ref.shape[3]

    # ---- channel attention: shared MLP over stacked [avg; max], sigmoid ----
    pooled = pool_ref[0].astype(jnp.bfloat16)                  # (2, C)
    hid = jnp.maximum(jnp.dot(pooled, w1_ref[...],
                              preferred_element_type=jnp.float32), 0.0)
    mlp = jnp.dot(hid.astype(jnp.bfloat16), w2_ref[...],
                  preferred_element_type=jnp.float32)          # (2, C)
    ca = jax.nn.sigmoid(mlp[0:1, :] + mlp[1:2, :])[0]          # (C,) f32

    # ---- spatial attention: channel-pooled maps of (out3 * ca), lane-dense --
    xca = out3_ref[0].astype(jnp.float32) * ca                 # (H, W, C)
    avg_ref[...] = jnp.zeros_like(avg_ref)                     # halo/pad stay 0
    max_ref[...] = jnp.zeros_like(max_ref)
    avg_ref[pl.ds(3, H), pl.ds(3, W)] = jnp.mean(xca, axis=-1)
    max_ref[pl.ds(3, H), pl.ds(3, W)] = jnp.max(xca, axis=-1)

    acc = jnp.zeros((H, W), jnp.float32)
    for kh in range(7):
        for kw in range(7):
            acc = acc \
                + avg_ref[pl.ds(kh, H), pl.ds(kw, W)] * wsa_ref[kh * 7 + kw] \
                + max_ref[pl.ds(kh, H), pl.ds(kw, W)] * wsa_ref[49 + kh * 7 + kw]
    sa = jax.nn.sigmoid(acc)                                   # (H, W)

    # ---- apply attention, add identity residual, ReLU (recompute x*ca) -----
    out = out3_ref[0].astype(jnp.float32) * ca * sa[:, :, None] \
        + res_ref[0].astype(jnp.float32)
    o_ref[0] = jnp.maximum(out, 0.0).astype(o_ref.dtype)


def cbam_epilogue(out3, res, pools, p):
    """out3/res: (N, H, W, C) bf16 -> relu(CBAM(out3) + res), bf16 output."""
    N, H, W, C = out3.shape
    hidden = p["ca_w1"].shape[1]
    Wp = _round_up(W + 6, 128)          # lane-dense map width (W on lanes)
    return pl.pallas_call(
        _cbam_epilogue_kernel,
        out_shape=jax.ShapeDtypeStruct((N, H, W, C), jnp.bfloat16),
        grid_spec=pltpu.PrefetchScalarGridSpec(
            num_scalar_prefetch=0,
            grid=(N,),
            in_specs=[
                pl.BlockSpec((1, H, W, C), lambda b: (b, 0, 0, 0)),
                pl.BlockSpec((1, H, W, C), lambda b: (b, 0, 0, 0)),
                pl.BlockSpec((1, 2, C), lambda b: (b, 0, 0)),
                pl.BlockSpec((C, hidden), lambda b: (0, 0)),
                pl.BlockSpec((hidden, C), lambda b: (0, 0)),
                pl.BlockSpec(memory_space=pltpu.MemorySpace.SMEM),
            ],
            out_specs=pl.BlockSpec((1, H, W, C), lambda b: (b, 0, 0, 0)),
            scratch_shapes=[
                pltpu.VMEM((H + 6, Wp), jnp.float32),
                pltpu.VMEM((H + 6, Wp), jnp.float32),
            ],
        ),
        compiler_params=pltpu.CompilerParams(
            dimension_semantics=("parallel",),
            vmem_limit_bytes=_vmem_limit_bytes()),
    )(out3, res, pools, p["ca_w1"], p["ca_w2"], p["w_sa"])


# --------------------------------- glue ---------------------------------------

def fold_bn(gamma, beta, mean, var):
    scale = gamma / jnp.sqrt(var + EPS)
    bias = beta - mean * scale
    return scale[None, :].astype(jnp.float32), bias[None, :].astype(jnp.float32)


def init_params(key, inplanes, planes, ratio=1.0 / 8):
    expansion = 4
    c3 = planes * expansion
    hidden = max(1, int(c3 * ratio))
    keys = iter(jax.random.split(key, 32))

    def conv_w(shape):
        return 0.05 * jax.random.normal(next(keys), shape, jnp.float32)

    def bn(c):
        gamma = jax.random.uniform(next(keys), (c,), jnp.float32, 0.5, 1.5)
        beta = 0.1 * jax.random.normal(next(keys), (c,), jnp.float32)
        mean = 0.1 * jax.random.normal(next(keys), (c,), jnp.float32)
        var = jax.random.uniform(next(keys), (c,), jnp.float32, 0.5, 1.5)
        return fold_bn(gamma, beta, mean, var)

    p = {}
    # conv1: torch weight (planes, inplanes, 1, 1) -> (inplanes, planes)
    w1_t = conv_w((planes, inplanes, 1, 1))
    p["w1"] = w1_t[:, :, 0, 0].T.astype(jnp.bfloat16)
    p["s1"], p["b1"] = bn(planes)
    # conv2: torch weight (Cout, Cin, 3, 3) -> (kh, kw*Cin + cin, Cout)
    w2_t = conv_w((planes, planes, 3, 3))
    p["w2cat"] = (jnp.transpose(w2_t, (2, 3, 1, 0))
                  .reshape(3, 3 * planes, planes).astype(jnp.bfloat16))
    p["s2"], p["b2"] = bn(planes)
    # conv3: torch weight (c3, planes, 1, 1) -> (planes, c3)
    w3_t = conv_w((c3, planes, 1, 1))
    p["w3"] = w3_t[:, :, 0, 0].T.astype(jnp.bfloat16)
    p["s3"], p["b3"] = bn(c3)
    # CBAM channel-attention shared MLP (bias-free), bf16 operands
    p["ca_w1"] = conv_w((c3, hidden)).astype(jnp.bfloat16)
    p["ca_w2"] = conv_w((hidden, c3)).astype(jnp.bfloat16)
    # CBAM spatial attention: 7x7 conv 2->1, torch weight (1, 2, 7, 7)
    # flattened as [avg-channel 49 taps | max-channel 49 taps]
    wsa_t = conv_w((1, 2, 7, 7))
    p["w_sa"] = wsa_t[0].reshape(98).astype(jnp.float32)
    return p


def bottleneck_forward(x_nchw, params):
    """HRNet Bottleneck forward (inference BN, stride=1, downsample=None)."""
    x = jnp.transpose(x_nchw, (0, 2, 3, 1)).astype(jnp.bfloat16)   # NHWC bf16
    N, H, W, Cin = x.shape
    c3 = params["w3"].shape[1]
    assert Cin == c3, "identity residual requires inplanes == planes * expansion"

    # conv1 -> conv2 -> conv3 fully fused (out1/out2 never touch HBM),
    # plus global channel avg/max pools for CBAM.
    out3_flat, pools = conv_stack(x, params)
    out3 = out3_flat.reshape(N, H, W, c3)

    # CBAM (channel + spatial attention) + identity residual + ReLU, bf16 out.
    out = cbam_epilogue(out3, x, pools, params)
    return jnp.transpose(out, (0, 3, 1, 2)).astype(jnp.float32)    # NCHW f32


if __name__ == "__main__":
    # Small config: inplanes must equal planes * expansion for identity residual.
    Nb, inplanes, planes, H, W = 2, 16, 4, 16, 16
    key = jax.random.PRNGKey(0)
    kx, kp = jax.random.split(key)
    x = jax.random.normal(kx, (Nb, inplanes, H, W), jnp.float32)   # NCHW like PyTorch
    params = init_params(kp, inplanes, planes)

    fwd = jax.jit(bottleneck_forward)
    y = jax.block_until_ready(fwd(x, params))
    assert y.shape == (Nb, planes * 4, H, W)
    assert bool(jnp.all(jnp.isfinite(y)))
    print("KERNEL_OK")
</pallas_src>

<mosaic_0001>
module attributes {stable_mosaic.version = 11 : i64} {
  func.func @_conv_stack_kernel(%arg0: i32, %arg1: memref<1x16x16x16xbf16, #tpu.memory_space<vmem>>, %arg2: memref<16x4xbf16, #tpu.memory_space<vmem>>, %arg3: memref<1x4xf32, #tpu.memory_space<vmem>>, %arg4: memref<1x4xf32, #tpu.memory_space<vmem>>, %arg5: memref<3x12x4xbf16, #tpu.memory_space<vmem>>, %arg6: memref<1x4xf32, #tpu.memory_space<vmem>>, %arg7: memref<1x4xf32, #tpu.memory_space<vmem>>, %arg8: memref<4x16xbf16, #tpu.memory_space<vmem>>, %arg9: memref<1x16xf32, #tpu.memory_space<vmem>>, %arg10: memref<1x16xf32, #tpu.memory_space<vmem>>, %arg11: memref<1x256x16xbf16, #tpu.memory_space<vmem>>, %arg12: memref<1x2x16xf32, #tpu.memory_space<vmem>>, %arg13: memref<18x18x4xbf16, #tpu.memory_space<vmem>>, %arg14: memref<256x4xf32, #tpu.memory_space<vmem>>) attributes {dimension_semantics = [#tpu.dimension_semantics<parallel>], iteration_bounds = array<i64: 2>, scalar_prefetch = 0 : i64, scratch_operands = 2 : i64, tpu.core_type = #tpu.core_type<tc>, window_params = [{transform_indices = @transform_0, window_bounds = array<i64: 1, 16, 16, 16>}, {pipeline_mode = #tpu.pipeline_mode<synchronous>, transform_indices = @transform_1, window_bounds = array<i64: 16, 4>}, {pipeline_mode = #tpu.pipeline_mode<synchronous>, transform_indices = @transform_2, window_bounds = array<i64: 1, 4>}, {pipeline_mode = #tpu.pipeline_mode<synchronous>, transform_indices = @transform_3, window_bounds = array<i64: 1, 4>}, {pipeline_mode = #tpu.pipeline_mode<synchronous>, transform_indices = @transform_4, window_bounds = array<i64: 3, 12, 4>}, {pipeline_mode = #tpu.pipeline_mode<synchronous>, transform_indices = @transform_5, window_bounds = array<i64: 1, 4>}, {pipeline_mode = #tpu.pipeline_mode<synchronous>, transform_indices = @transform_6, window_bounds = array<i64: 1, 4>}, {pipeline_mode = #tpu.pipeline_mode<synchronous>, transform_indices = @transform_7, window_bounds = array<i64: 4, 16>}, {pipeline_mode = #tpu.pipeline_mode<synchronous>, transform_indices = @transform_8, window_bounds = array<i64: 1, 16>}, {pipeline_mode = #tpu.pipeline_mode<synchronous>, transform_indices = @transform_9, window_bounds = array<i64: 1, 16>}, {transform_indices = @transform_10, window_bounds = array<i64: 1, 256, 16>}, {transform_indices = @transform_11, window_bounds = array<i64: 1, 2, 16>}]} {
    %c0 = arith.constant 0 : index
    %c0_0 = arith.constant 0 : index
    %c0_1 = arith.constant 0 : index
    %c0_2 = arith.constant 0 : index
    %0 = vector.load %arg1[%c0, %c0_0, %c0_1, %c0_2] : memref<1x16x16x16xbf16, #tpu.memory_space<vmem>>, vector<1x16x16x16xbf16>
    %1 = vector.shape_cast %0 : vector<1x16x16x16xbf16> to vector<16x16x16xbf16>
    %2 = vector.shape_cast %1 : vector<16x16x16xbf16> to vector<256x16xbf16>
    %c0_3 = arith.constant 0 : index
    %c0_4 = arith.constant 0 : index
    %3 = vector.load %arg2[%c0_3, %c0_4] : memref<16x4xbf16, #tpu.memory_space<vmem>>, vector<16x4xbf16>
    %cst = arith.constant dense<0.000000e+00> : vector<256x4xf32>
    %4 = tpu.matmul %2, %3, %cst {dimension_numbers = #tpu.dot_dimension_numbers<[1], [0], [0], [1], [0, 0, 1, 1], [], []>} : vector<256x16xbf16>, vector<16x4xbf16>, vector<256x4xf32> -> vector<256x4xf32>
    %c0_5 = arith.constant 0 : index
    %c0_6 = arith.constant 0 : index
    %5 = vector.load %arg3[%c0_5, %c0_6] : memref<1x4xf32, #tpu.memory_space<vmem>>, vector<1x4xf32>
    %6 = vector.broadcast %5 : vector<1x4xf32> to vector<256x4xf32>
    %7 = arith.mulf %4, %6 : vector<256x4xf32>
    %c0_7 = arith.constant 0 : index
    %c0_8 = arith.constant 0 : index
    %8 = vector.load %arg4[%c0_7, %c0_8] : memref<1x4xf32, #tpu.memory_space<vmem>>, vector<1x4xf32>
    %9 = vector.broadcast %8 : vector<1x4xf32> to vector<256x4xf32>
    %10 = arith.addf %7, %9 : vector<256x4xf32>
    %cst_9 = arith.constant 0.000000e+00 : f32
    %11 = vector.broadcast %cst_9 : f32 to vector<256x4xf32>
    %12 = arith.maximumf %10, %11 : vector<256x4xf32>
    %cst_10 = arith.constant 0.000000e+00 : bf16
    %13 = vector.broadcast %cst_10 : bf16 to vector<1x18x4xbf16>
    %cst_11 = arith.constant 0.000000e+00 : bf16
    %14 = vector.broadcast %cst_11 : bf16 to vector<18x1x4xbf16>
    %c0_12 = arith.constant 0 : index
    %c0_13 = arith.constant 0 : index
    %c0_14 = arith.constant 0 : index
    %15 = vector.load %arg13[%c0_12, %c0_13, %c0_14] : memref<18x18x4xbf16, #tpu.memory_space<vmem>>, vector<1x18x4xbf16>
    tpu.vector_store %arg13[%c0_12, %c0_13, %c0_14], %13 {strides = array<i32>} : memref<18x18x4xbf16, #tpu.memory_space<vmem>>, vector<1x18x4xbf16>,
    %c17 = arith.constant 17 : index
    %c0_15 = arith.constant 0 : index
    %c0_16 = arith.constant 0 : index
    %16 = vector.load %arg13[%c17, %c0_15, %c0_16] : memref<18x18x4xbf16, #tpu.memory_space<vmem>>, vector<1x18x4xbf16>
    tpu.vector_store %arg13[%c17, %c0_15, %c0_16], %13 {strides = array<i32>} : memref<18x18x4xbf16, #tpu.memory_space<vmem>>, vector<1x18x4xbf16>,
    %c0_17 = arith.constant 0 : index
    %c0_18 = arith.constant 0 : index
    %c0_19 = arith.constant 0 : index
    %17 = vector.load %arg13[%c0_17, %c0_18, %c0_19] : memref<18x18x4xbf16, #tpu.memory_space<vmem>>, vector<18x1x4xbf16>
    tpu.vector_store %arg13[%c0_17, %c0_18, %c0_19], %14 {strides = array<i32>} : memref<18x18x4xbf16, #tpu.memory_space<vmem>>, vector<18x1x4xbf16>,
    %c0_20 = arith.constant 0 : index
    %c17_21 = arith.constant 17 : index
    %c0_22 = arith.constant 0 : index
    %18 = vector.load %arg13[%c0_20, %c17_21, %c0_22] : memref<18x18x4xbf16, #tpu.memory_space<vmem>>, vector<18x1x4xbf16>
    tpu.vector_store %arg13[%c0_20, %c17_21, %c0_22], %14 {strides = array<i32>} : memref<18x18x4xbf16, #tpu.memory_space<vmem>>, vector<18x1x4xbf16>,
    %19 = vector.shape_cast %12 : vector<256x4xf32> to vector<16x16x4xf32>
    %20 = arith.truncf %19 : vector<16x16x4xf32> to vector<16x16x4xbf16>
    %c1 = arith.constant 1 : index
    %c1_23 = arith.constant 1 : index
    %c0_24 = arith.constant 0 : index
    %21 = vector.load %arg13[%c1, %c1_23, %c0_24] : memref<18x18x4xbf16, #tpu.memory_space<vmem>>, vector<16x16x4xbf16>
    tpu.vector_store %arg13[%c1, %c1_23, %c0_24], %20 {strides = array<i32>} : memref<18x18x4xbf16, #tpu.memory_space<vmem>>, vector<16x16x4xbf16>,
    %c0_25 = arith.constant 0 : index
    %c0_26 = arith.constant 0 : index
    %c0_27 = arith.constant 0 : index
    %22 = vector.load %arg13[%c0_25, %c0_26, %c0_27] : memref<18x18x4xbf16, #tpu.memory_space<vmem>>, vector<16x16x4xbf16>
    %c0_28 = arith.constant 0 : index
    %c1_29 = arith.constant 1 : index
    %c0_30 = arith.constant 0 : index
    %23 = vector.load %arg13[%c0_28, %c1_29, %c0_30] : memref<18x18x4xbf16, #tpu.memory_space<vmem>>, vector<16x16x4xbf16>
    %c0_31 = arith.constant 0 : index
    %c2 = arith.constant 2 : index
    %c0_32 = arith.constant 0 : index
    %24 = vector.load %arg13[%c0_31, %c2, %c0_32] : memref<18x18x4xbf16, #tpu.memory_space<vmem>>, vector<16x16x4xbf16>
    %25 = tpu.concatenate %22, %23, %24 in 2 : vector<16x16x4xbf16>, vector<16x16x4xbf16>, vector<16x16x4xbf16> -> vector<16x16x12xbf16>
    %26 = vector.shape_cast %25 : vector<16x16x12xbf16> to vector<256x12xbf16>
    %c0_33 = arith.constant 0 : index
    %c0_34 = arith.constant 0 : index
    %c0_35 = arith.constant 0 : index
    %27 = vector.load %arg5[%c0_33, %c0_34, %c0_35] : memref<3x12x4xbf16, #tpu.memory_space<vmem>>, vector<1x12x4xbf16>
    %28 = vector.shape_cast %27 : vector<1x12x4xbf16> to vector<12x4xbf16>
    %cst_36 = arith.constant dense<0.000000e+00> : vector<256x4xf32>
    %29 = tpu.matmul %26, %28, %cst_36 {dimension_numbers = #tpu.dot_dimension_numbers<[1], [0], [0], [1], [0, 0, 1, 1], [], []>} : vector<256x12xbf16>, vector<12x4xbf16>, vector<256x4xf32> -> vector<256x4xf32>
    %c0_37 = arith.constant 0 : index
    %c0_38 = arith.constant 0 : index
    %30 = vector.load %arg14[%c0_37, %c0_38] : memref<256x4xf32, #tpu.memory_space<vmem>>, vector<256x4xf32>
    tpu.vector_store %arg14[%c0_37, %c0_38], %29 {strides = array<i32>} : memref<256x4xf32, #tpu.memory_space<vmem>>, vector<256x4xf32>,
    %c1_39 = arith.constant 1 : index
    %c0_40 = arith.constant 0 : index
    %c0_41 = arith.constant 0 : index
    %31 = vector.load %arg13[%c1_39, %c0_40, %c0_41] : memref<18x18x4xbf16, #tpu.memory_space<vmem>>, vector<16x16x4xbf16>
    %c1_42 = arith.constant 1 : index
    %c1_43 = arith.constant 1 : index
    %c0_44 = arith.constant 0 : index
    %32 = vector.load %arg13[%c1_42, %c1_43, %c0_44] : memref<18x18x4xbf16, #tpu.memory_space<vmem>>, vector<16x16x4xbf16>
    %c1_45 = arith.constant 1 : index
    %c2_46 = arith.constant 2 : index
    %c0_47 = arith.constant 0 : index
    %33 = vector.load %arg13[%c1_45, %c2_46, %c0_47] : memref<18x18x4xbf16, #tpu.memory_space<vmem>>, vector<16x16x4xbf16>
    %34 = tpu.concatenate %31, %32, %33 in 2 : vector<16x16x4xbf16>, vector<16x16x4xbf16>, vector<16x16x4xbf16> -> vector<16x16x12xbf16>
    %35 = vector.shape_cast %34 : vector<16x16x12xbf16> to vector<256x12xbf16>
    %c1_48 = arith.constant 1 : index
    %c0_49 = arith.constant 0 : index
    %c0_50 = arith.constant 0 : index
    %36 = vector.load %arg5[%c1_48, %c0_49, %c0_50] : memref<3x12x4xbf16, #tpu.memory_space<vmem>>, vector<1x12x4xbf16>
    %37 = vector.shape_cast %36 : vector<1x12x4xbf16> to vector<12x4xbf16>
    %cst_51 = arith.constant dense<0.000000e+00> : vector<256x4xf32>
    %38 = tpu.matmul %35, %37, %cst_51 {dimension_numbers = #tpu.dot_dimension_numbers<[1], [0], [0], [1], [0, 0, 1, 1], [], []>} : vector<256x12xbf16>, vector<12x4xbf16>, vector<256x4xf32> -> vector<256x4xf32>
    %c0_52 = arith.constant 0 : index
    %c0_53 = arith.constant 0 : index
    %39 = vector.load %arg14[%c0_52, %c0_53] : memref<256x4xf32, #tpu.memory_space<vmem>>, vector<256x4xf32>
    %40 = arith.addf %39, %38 : vector<256x4xf32>
    %c0_54 = arith.constant 0 : index
    %c0_55 = arith.constant 0 : index
    %41 = vector.load %arg14[%c0_54, %c0_55] : memref<256x4xf32, #tpu.memory_space<vmem>>, vector<256x4xf32>
    tpu.vector_store %arg14[%c0_54, %c0_55], %40 {strides = array<i32>} : memref<256x4xf32, #tpu.memory_space<vmem>>, vector<256x4xf32>,
    %c2_56 = arith.constant 2 : index
    %c0_57 = arith.constant 0 : index
    %c0_58 = arith.constant 0 : index
    %42 = vector.load %arg13[%c2_56, %c0_57, %c0_58] : memref<18x18x4xbf16, #tpu.memory_space<vmem>>, vector<16x16x4xbf16>
    %c2_59 = arith.constant 2 : index
    %c1_60 = arith.constant 1 : index
    %c0_61 = arith.constant 0 : index
    %43 = vector.load %arg13[%c2_59, %c1_60, %c0_61] : memref<18x18x4xbf16, #tpu.memory_space<vmem>>, vector<16x16x4xbf16>
    %c2_62 = arith.constant 2 : index
    %c2_63 = arith.constant 2 : index
    %c0_64 = arith.constant 0 : index
    %44 = vector.load %arg13[%c2_62, %c2_63, %c0_64] : memref<18x18x4xbf16, #tpu.memory_space<vmem>>, vector<16x16x4xbf16>
    %45 = tpu.concatenate %42, %43, %44 in 2 : vector<16x16x4xbf16>, vector<16x16x4xbf16>, vector<16x16x4xbf16> -> vector<16x16x12xbf16>
    %46 = vector.shape_cast %45 : vector<16x16x12xbf16> to vector<256x12xbf16>
    %c2_65 = arith.constant 2 : index
    %c0_66 = arith.constant 0 : index
    %c0_67 = arith.constant 0 : index
    %47 = vector.load %arg5[%c2_65, %c0_66, %c0_67] : memref<3x12x4xbf16, #tpu.memory_space<vmem>>, vector<1x12x4xbf16>
    %48 = vector.shape_cast %47 : vector<1x12x4xbf16> to vector<12x4xbf16>
    %cst_68 = arith.constant dense<0.000000e+00> : vector<256x4xf32>
    %49 = tpu.matmul %46, %48, %cst_68 {dimension_numbers = #tpu.dot_dimension_numbers<[1], [0], [0], [1], [0, 0, 1, 1], [], []>} : vector<256x12xbf16>, vector<12x4xbf16>, vector<256x4xf32> -> vector<256x4xf32>
    %c0_69 = arith.constant 0 : index
    %c0_70 = arith.constant 0 : index
    %50 = vector.load %arg14[%c0_69, %c0_70] : memref<256x4xf32, #tpu.memory_space<vmem>>, vector<256x4xf32>
    %51 = arith.addf %50, %49 : vector<256x4xf32>
    %c0_71 = arith.constant 0 : index
    %c0_72 = arith.constant 0 : index
    %52 = vector.load %arg14[%c0_71, %c0_72] : memref<256x4xf32, #tpu.memory_space<vmem>>, vector<256x4xf32>
    tpu.vector_store %arg14[%c0_71, %c0_72], %51 {strides = array<i32>} : memref<256x4xf32, #tpu.memory_space<vmem>>, vector<256x4xf32>,
    %c0_73 = arith.constant 0 : index
    %c0_74 = arith.constant 0 : index
    %53 = vector.load %arg14[%c0_73, %c0_74] : memref<256x4xf32, #tpu.memory_space<vmem>>, vector<256x4xf32>
    %c0_75 = arith.constant 0 : index
    %c0_76 = arith.constant 0 : index
    %54 = vector.load %arg6[%c0_75, %c0_76] : memref<1x4xf32, #tpu.memory_space<vmem>>, vector<1x4xf32>
    %55 = vector.broadcast %54 : vector<1x4xf32> to vector<256x4xf32>
    %56 = arith.mulf %53, %55 : vector<256x4xf32>
    %c0_77 = arith.constant 0 : index
    %c0_78 = arith.constant 0 : index
    %57 = vector.load %arg7[%c0_77, %c0_78] : memref<1x4xf32, #tpu.memory_space<vmem>>, vector<1x4xf32>
    %58 = vector.broadcast %57 : vector<1x4xf32> to vector<256x4xf32>
    %59 = arith.addf %56, %58 : vector<256x4xf32>
    %cst_79 = arith.constant 0.000000e+00 : f32
    %60 = vector.broadcast %cst_79 : f32 to vector<256x4xf32>
    %61 = arith.maximumf %59, %60 : vector<256x4xf32>
    %62 = arith.truncf %61 : vector<256x4xf32> to vector<256x4xbf16>
    %c0_80 = arith.constant 0 : index
    %c0_81 = arith.constant 0 : index
    %63 = vector.load %arg8[%c0_80, %c0_81] : memref<4x16xbf16, #tpu.memory_space<vmem>>, vector<4x16xbf16>
    %cst_82 = arith.constant dense<0.000000e+00> : vector<256x16xf32>
    %64 = tpu.matmul %62, %63, %cst_82 {dimension_numbers = #tpu.dot_dimension_numbers<[1], [0], [0], [1], [0, 0, 1, 1], [], []>} : vector<256x4xbf16>, vector<4x16xbf16>, vector<256x16xf32> -> vector<256x16xf32>
    %c0_83 = arith.constant 0 : index
    %c0_84 = arith.constant 0 : index
    %65 = vector.load %arg9[%c0_83, %c0_84] : memref<1x16xf32, #tpu.memory_space<vmem>>, vector<1x16xf32>
    %66 = vector.broadcast %65 : vector<1x16xf32> to vector<256x16xf32>
    %67 = arith.mulf %64, %66 : vector<256x16xf32>
    %c0_85 = arith.constant 0 : index
    %c0_86 = arith.constant 0 : index
    %68 = vector.load %arg10[%c0_85, %c0_86] : memref<1x16xf32, #tpu.memory_space<vmem>>, vector<1x16xf32>
    %69 = vector.broadcast %68 : vector<1x16xf32> to vector<256x16xf32>
    %70 = arith.addf %67, %69 : vector<256x16xf32>
    %71 = arith.truncf %70 : vector<256x16xf32> to vector<256x16xbf16>
    %c0_87 = arith.constant 0 : index
    %c0_88 = arith.constant 0 : index
    %c0_89 = arith.constant 0 : index
    %72 = vector.load %arg11[%c0_87, %c0_88, %c0_89] : memref<1x256x16xbf16, #tpu.memory_space<vmem>>, vector<1x256x16xbf16>
    %73 = vector.shape_cast %72 : vector<1x256x16xbf16> to vector<256x16xbf16>
    %74 = vector.shape_cast %71 : vector<256x16xbf16> to vector<1x256x16xbf16>
    tpu.vector_store %arg11[%c0_87, %c0_88, %c0_89], %74 {strides = array<i32>} : memref<1x256x16xbf16, #tpu.memory_space<vmem>>, vector<1x256x16xbf16>,
    %cst_90 = arith.constant dense<0.000000e+00> : vector<16xf32>
    %75 = vector.multi_reduction <add>, %70, %cst_90 [0] : vector<256x16xf32> to vector<16xf32>
    %76 = vector.shape_cast %75 : vector<16xf32> to vector<1x16xf32>
    %cst_91 = arith.constant 2.560000e+02 : f32
    %77 = vector.broadcast %cst_91 : f32 to vector<1x16xf32>
    %78 = arith.divf %76, %77 : vector<1x16xf32>
    %cst_92 = arith.constant dense<0xFF800000> : vector<16xf32>
    %79 = vector.multi_reduction <maximumf>, %70, %cst_92 [0] : vector<256x16xf32> to vector<16xf32>
    %80 = vector.shape_cast %79 : vector<16xf32> to vector<1x16xf32>
    %81 = tpu.concatenate %78, %80 in 0 : vector<1x16xf32>, vector<1x16xf32> -> vector<2x16xf32>
    %c0_93 = arith.constant 0 : index
    %c0_94 = arith.constant 0 : index
    %c0_95 = arith.constant 0 : index
    %82 = vector.load %arg12[%c0_93, %c0_94, %c0_95] : memref<1x2x16xf32, #tpu.memory_space<vmem>>, vector<1x2x16xf32>
    %83 = vector.shape_cast %82 : vector<1x2x16xf32> to vector<2x16xf32>
    %84 = vector.shape_cast %81 : vector<2x16xf32> to vector<1x2x16xf32>
    tpu.vector_store %arg12[%c0_93, %c0_94, %c0_95], %84 {strides = array<i32>} : memref<1x2x16xf32, #tpu.memory_space<vmem>>, vector<1x2x16xf32>,
    return
  }
  func.func @transform_0(%arg0: i32) -> (i32, i32, i32, i32) {
    %c0_i32 = arith.constant 0 : i32
    %c0_i32_0 = arith.constant 0 : i32
    %c0_i32_1 = arith.constant 0 : i32
    %c0_i32_2 = arith.constant 0 : i32
    return %arg0, %c0_i32, %c0_i32_0, %c0_i32_1 : i32, i32, i32, i32
  }
  func.func @transform_1(%arg0: i32) -> (i32, i32) {
    %c0_i32 = arith.constant 0 : i32
    %c0_i32_0 = arith.constant 0 : i32
    %c0_i32_1 = arith.constant 0 : i32
    return %c0_i32, %c0_i32_0 : i32, i32
  }
  func.func @transform_2(%arg0: i32) -> (i32, i32) {
    %c0_i32 = arith.constant 0 : i32
    %c0_i32_0 = arith.constant 0 : i32
    %c0_i32_1 = arith.constant 0 : i32
    return %c0_i32, %c0_i32_0 : i32, i32
  }
  func.func @transform_3(%arg0: i32) -> (i32, i32) {
    %c0_i32 = arith.constant 0 : i32
    %c0_i32_0 = arith.constant 0 : i32
    %c0_i32_1 = arith.constant 0 : i32
    return %c0_i32, %c0_i32_0 : i32, i32
  }
  func.func @transform_4(%arg0: i32) -> (i32, i32, i32) {
    %c0_i32 = arith.constant 0 : i32
    %c0_i32_0 = arith.constant 0 : i32
    %c0_i32_1 = arith.constant 0 : i32
    %c0_i32_2 = arith.constant 0 : i32
    return %c0_i32, %c0_i32_0, %c0_i32_1 : i32, i32, i32
  }
  func.func @transform_5(%arg0: i32) -> (i32, i32) {
    %c0_i32 = arith.constant 0 : i32
    %c0_i32_0 = arith.constant 0 : i32
    %c0_i32_1 = arith.constant 0 : i32
    return %c0_i32, %c0_i32_0 : i32, i32
  }
  func.func @transform_6(%arg0: i32) -> (i32, i32) {
    %c0_i32 = arith.constant 0 : i32
    %c0_i32_0 = arith.constant 0 : i32
    %c0_i32_1 = arith.constant 0 : i32
    return %c0_i32, %c0_i32_0 : i32, i32
  }
  func.func @transform_7(%arg0: i32) -> (i32, i32) {
    %c0_i32 = arith.constant 0 : i32
    %c0_i32_0 = arith.constant 0 : i32
    %c0_i32_1 = arith.constant 0 : i32
    return %c0_i32, %c0_i32_0 : i32, i32
  }
  func.func @transform_8(%arg0: i32) -> (i32, i32) {
    %c0_i32 = arith.constant 0 : i32
    %c0_i32_0 = arith.constant 0 : i32
    %c0_i32_1 = arith.constant 0 : i32
    return %c0_i32, %c0_i32_0 : i32, i32
  }
  func.func @transform_9(%arg0: i32) -> (i32, i32) {
    %c0_i32 = arith.constant 0 : i32
    %c0_i32_0 = arith.constant 0 : i32
    %c0_i32_1 = arith.constant 0 : i32
    return %c0_i32, %c0_i32_0 : i32, i32
  }
  func.func @transform_10(%arg0: i32) -> (i32, i32, i32) {
    %c0_i32 = arith.constant 0 : i32
    %c0_i32_0 = arith.constant 0 : i32
    %c0_i32_1 = arith.constant 0 : i32
    return %arg0, %c0_i32, %c0_i32_0 : i32, i32, i32
  }
  func.func @transform_11(%arg0: i32) -> (i32, i32, i32) {
    %c0_i32 = arith.constant 0 : i32
    %c0_i32_0 = arith.constant 0 : i32
    %c0_i32_1 = arith.constant 0 : i32
    return %arg0, %c0_i32, %c0_i32_0 : i32, i32, i32
  }
}

module attributes {stable_mosaic.version = 11 : i64} {
  func.func @_cbam_epilogue_kernel(%arg0: i32, %arg1: memref<1x16x16x16xbf16, #tpu.memory_space<vmem>>, %arg2: memref<1x16x16x16xbf16, #tpu.memory_space<vmem>>, %arg3: memref<1x2x16xf32, #tpu.memory_space<vmem>>, %arg4: memref<16x2xbf16, #tpu.memory_space<vmem>>, %arg5: memref<2x16xbf16, #tpu.memory_space<vmem>>, %arg6: memref<98xf32, #tpu.memory_space<smem>>, %arg7: memref<1x16x16x16xbf16, #tpu.memory_space<vmem>>, %arg8: memref<22x128xf32, #tpu.memory_space<vmem>>, %arg9: memref<22x128xf32, #tpu.memory_space<vmem>>) attributes {dimension_semantics = [#tpu.dimension_semantics<parallel>], iteration_bounds = array<i64: 2>, scalar_prefetch = 0 : i64, scratch_operands = 2 : i64, tpu.core_type = #tpu.core_type<tc>, window_params = [{transform_indices = @transform_0, window_bounds = array<i64: 1, 16, 16, 16>}, {transform_indices = @transform_1, window_bounds = array<i64: 1, 16, 16, 16>}, {transform_indices = @transform_2, window_bounds = array<i64: 1, 2, 16>}, {pipeline_mode = #tpu.pipeline_mode<synchronous>, transform_indices = @transform_3, window_bounds = array<i64: 16, 2>}, {pipeline_mode = #tpu.pipeline_mode<synchronous>, transform_indices = @transform_4, window_bounds = array<i64: 2, 16>}, {transform_indices = @transform_5, window_bounds = array<i64: 98>}, {transform_indices = @transform_6, window_bounds = array<i64: 1, 16, 16, 16>}]} {
    %c0 = arith.constant 0 : index
    %c0_0 = arith.constant 0 : index
    %c0_1 = arith.constant 0 : index
    %0 = vector.load %arg3[%c0, %c0_0, %c0_1] : memref<1x2x16xf32, #tpu.memory_space<vmem>>, vector<1x2x16xf32>
    %1 = vector.shape_cast %0 : vector<1x2x16xf32> to vector<2x16xf32>
    %2 = arith.truncf %1 : vector<2x16xf32> to vector<2x16xbf16>
    %c0_2 = arith.constant 0 : index
    %c0_3 = arith.constant 0 : index
    %3 = vector.load %arg4[%c0_2, %c0_3] : memref<16x2xbf16, #tpu.memory_space<vmem>>, vector<16x2xbf16>
    %cst = arith.constant dense<0.000000e+00> : vector<2x2xf32>
    %4 = tpu.matmul %2, %3, %cst {dimension_numbers = #tpu.dot_dimension_numbers<[1], [0], [0], [1], [0, 0, 1, 1], [], []>} : vector<2x16xbf16>, vector<16x2xbf16>, vector<2x2xf32> -> vector<2x2xf32>
    %cst_4 = arith.constant 0.000000e+00 : f32
    %5 = vector.broadcast %cst_4 : f32 to vector<2x2xf32>
    %6 = arith.maximumf %4, %5 : vector<2x2xf32>
    %7 = arith.truncf %6 : vector<2x2xf32> to vector<2x2xbf16>
    %c0_5 = arith.constant 0 : index
    %c0_6 = arith.constant 0 : index
    %8 = vector.load %arg5[%c0_5, %c0_6] : memref<2x16xbf16, #tpu.memory_space<vmem>>, vector<2x16xbf16>
    %cst_7 = arith.constant dense<0.000000e+00> : vector<2x16xf32>
    %9 = tpu.matmul %7, %8, %cst_7 {dimension_numbers = #tpu.dot_dimension_numbers<[1], [0], [0], [1], [0, 0, 1, 1], [], []>} : vector<2x2xbf16>, vector<2x16xbf16>, vector<2x16xf32> -> vector<2x16xf32>
    %10 = vector.extract_strided_slice %9 {offsets = [0, 0], sizes = [1, 16], strides = [1, 1]} : vector<2x16xf32> to vector<1x16xf32>
    %11 = vector.extract_strided_slice %9 {offsets = [1, 0], sizes = [1, 16], strides = [1, 1]} : vector<2x16xf32> to vector<1x16xf32>
    %12 = arith.addf %10, %11 : vector<1x16xf32>
    %13 = arith.negf %12 : vector<1x16xf32>
    %14 = math.exp %13 : vector<1x16xf32>
    %cst_8 = arith.constant 1.000000e+00 : f32
    %15 = vector.broadcast %cst_8 : f32 to vector<1x16xf32>
    %16 = arith.addf %15, %14 : vector<1x16xf32>
    %17 = arith.divf %15, %16 : vector<1x16xf32>
    %18 = vector.shape_cast %17 : vector<1x16xf32> to vector<16xf32>
    %c0_9 = arith.constant 0 : index
    %c0_10 = arith.constant 0 : index
    %c0_11 = arith.constant 0 : index
    %c0_12 = arith.constant 0 : index
    %19 = vector.load %arg1[%c0_9, %c0_10, %c0_11, %c0_12] : memref<1x16x16x16xbf16, #tpu.memory_space<vmem>>, vector<1x16x16x16xbf16>
    %20 = vector.shape_cast %19 : vector<1x16x16x16xbf16> to vector<16x16x16xbf16>
    %21 = arith.extf %20 : vector<16x16x16xbf16> to vector<16x16x16xf32>
    %22 = vector.shape_cast %18 : vector<16xf32> to vector<1x1x16xf32>
    %23 = vector.broadcast %22 : vector<1x1x16xf32> to vector<16x16x16xf32>
    %24 = arith.mulf %21, %23 : vector<16x16x16xf32>
    %cst_13 = arith.constant 0.000000e+00 : f32
    %25 = vector.broadcast %cst_13 : f32 to vector<22x128xf32>
    %c0_14 = arith.constant 0 : index
    %c0_15 = arith.constant 0 : index
    %26 = vector.load %arg8[%c0_14, %c0_15] : memref<22x128xf32, #tpu.memory_space<vmem>>, vector<22x128xf32>
    tpu.vector_store %arg8[%c0_14, %c0_15], %25 {strides = array<i32>} : memref<22x128xf32, #tpu.memory_space<vmem>>, vector<22x128xf32>,
    %cst_16 = arith.constant 0.000000e+00 : f32
    %27 = vector.broadcast %cst_16 : f32 to vector<22x128xf32>
    %c0_17 = arith.constant 0 : index
    %c0_18 = arith.constant 0 : index
    %28 = vector.load %arg9[%c0_17, %c0_18] : memref<22x128xf32, #tpu.memory_space<vmem>>, vector<22x128xf32>
    tpu.vector_store %arg9[%c0_17, %c0_18], %27 {strides = array<i32>} : memref<22x128xf32, #tpu.memory_space<vmem>>, vector<22x128xf32>,
    %cst_19 = arith.constant dense<0.000000e+00> : vector<16x16xf32>
    %29 = vector.multi_reduction <add>, %24, %cst_19 [2] : vector<16x16x16xf32> to vector<16x16xf32>
    %cst_20 = arith.constant 1.600000e+01 : f32
    %30 = vector.broadcast %cst_20 : f32 to vector<16x16xf32>
    %31 = arith.divf %29, %30 : vector<16x16xf32>
    %c3 = arith.constant 3 : index
    %c3_21 = arith.constant 3 : index
    %32 = vector.load %arg8[%c3, %c3_21] : memref<22x128xf32, #tpu.memory_space<vmem>>, vector<16x16xf32>
    tpu.vector_store %arg8[%c3, %c3_21], %31 {strides = array<i32>} : memref<22x128xf32, #tpu.memory_space<vmem>>, vector<16x16xf32>,
    %cst_22 = arith.constant dense<0xFF800000> : vector<16x16xf32>
    %33 = vector.multi_reduction <maximumf>, %24, %cst_22 [2] : vector<16x16x16xf32> to vector<16x16xf32>
    %c3_23 = arith.constant 3 : index
    %c3_24 = arith.constant 3 : index
    %34 = vector.load %arg9[%c3_23, %c3_24] : memref<22x128xf32, #tpu.memory_space<vmem>>, vector<16x16xf32>
    tpu.vector_store %arg9[%c3_23, %c3_24], %33 {strides = array<i32>} : memref<22x128xf32, #tpu.memory_space<vmem>>, vector<16x16xf32>,
    %cst_25 = arith.constant 0.000000e+00 : f32
    %35 = vector.broadcast %cst_25 : f32 to vector<16x16xf32>
    %c0_26 = arith.constant 0 : index
    %c0_27 = arith.constant 0 : index
    %36 = vector.load %arg8[%c0_26, %c0_27] : memref<22x128xf32, #tpu.memory_space<vmem>>, vector<16x16xf32>
    %c0_28 = arith.constant 0 : index
    %37 = memref.load %arg6[%c0_28] : memref<98xf32, #tpu.memory_space<smem>>
    %38 = vector.broadcast %37 : f32 to vector<16x16xf32>
    %39 = arith.mulf %36, %38 : vector<16x16xf32>
    %40 = arith.addf %35, %39 : vector<16x16xf32>
    %c0_29 = arith.constant 0 : index
    %c0_30 = arith.constant 0 : index
    %41 = vector.load %arg9[%c0_29, %c0_30] : memref<22x128xf32, #tpu.memory_space<vmem>>, vector<16x16xf32>
    %c49 = arith.constant 49 : index
    %42 = memref.load %arg6[%c49] : memref<98xf32, #tpu.memory_space<smem>>
    %43 = vector.broadcast %42 : f32 to vector<16x16xf32>
    %44 = arith.mulf %41, %43 : vector<16x16xf32>
    %45 = arith.addf %40, %44 : vector<16x16xf32>
    %c0_31 = arith.constant 0 : index
    %c1 = arith.constant 1 : index
    %46 = vector.load %arg8[%c0_31, %c1] : memref<22x128xf32, #tpu.memory_space<vmem>>, vector<16x16xf32>
    %c1_32 = arith.constant 1 : index
    %47 = memref.load %arg6[%c1_32] : memref<98xf32, #tpu.memory_space<smem>>
    %48 = vector.broadcast %47 : f32 to vector<16x16xf32>
    %49 = arith.mulf %46, %48 : vector<16x16xf32>
    %50 = arith.addf %45, %49 : vector<16x16xf32>
    %c0_33 = arith.constant 0 : index
    %c1_34 = arith.constant 1 : index
    %51 = vector.load %arg9[%c0_33, %c1_34] : memref<22x128xf32, #tpu.memory_space<vmem>>, vector<16x16xf32>
    %c50 = arith.constant 50 : index
    %52 = memref.load %arg6[%c50] : memref<98xf32, #tpu.memory_space<smem>>
    %53 = vector.broadcast %52 : f32 to vector<16x16xf32>
    %54 = arith.mulf %51, %53 : vector<16x16xf32>
    %55 = arith.addf %50, %54 : vector<16x16xf32>
    %c0_35 = arith.constant 0 : index
    %c2 = arith.constant 2 : index
    %56 = vector.load %arg8[%c0_35, %c2] : memref<22x128xf32, #tpu.memory_space<vmem>>, vector<16x16xf32>
    %c2_36 = arith.constant 2 : index
    %57 = memref.load %arg6[%c2_36] : memref<98xf32, #tpu.memory_space<smem>>
    %58 = vector.broadcast %57 : f32 to vector<16x16xf32>
    %59 = arith.mulf %56, %58 : vector<16x16xf32>
    %60 = arith.addf %55, %59 : vector<16x16xf32>
    %c0_37 = arith.constant 0 : index
    %c2_38 = arith.constant 2 : index
    %61 = vector.load %arg9[%c0_37, %c2_38] : memref<22x128xf32, #tpu.memory_space<vmem>>, vector<16x16xf32>
    %c51 = arith.constant 51 : index
    %62 = memref.load %arg6[%c51] : memref<98xf32, #tpu.memory_space<smem>>
    %63 = vector.broadcast %62 : f32 to vector<16x16xf32>
    %64 = arith.mulf %61, %63 : vector<16x16xf32>
    %65 = arith.addf %60, %64 : vector<16x16xf32>
    %c0_39 = arith.constant 0 : index
    %c3_40 = arith.constant 3 : index
    %66 = vector.load %arg8[%c0_39, %c3_40] : memref<22x128xf32, #tpu.memory_space<vmem>>, vector<16x16xf32>
    %c3_41 = arith.constant 3 : index
    %67 = memref.load %arg6[%c3_41] : memref<98xf32, #tpu.memory_space<smem>>
    %68 = vector.broadcast %67 : f32 to vector<16x16xf32>
    %69 = arith.mulf %66, %68 : vector<16x16xf32>
    %70 = arith.addf %65, %69 : vector<16x16xf32>
    %c0_42 = arith.constant 0 : index
    %c3_43 = arith.constant 3 : index
    %71 = vector.load %arg9[%c0_42, %c3_43] : memref<22x128xf32, #tpu.memory_space<vmem>>, vector<16x16xf32>
    %c52 = arith.constant 52 : index
    %72 = memref.load %arg6[%c52] : memref<98xf32, #tpu.memory_space<smem>>
    %73 = vector.broadcast %72 : f32 to vector<16x16xf32>
    %74 = arith.mulf %71, %73 : vector<16x16xf32>
    %75 = arith.addf %70, %74 : vector<16x16xf32>
    %c0_44 = arith.constant 0 : index
    %c4 = arith.constant 4 : index
    %76 = vector.load %arg8[%c0_44, %c4] : memref<22x128xf32, #tpu.memory_space<vmem>>, vector<16x16xf32>
    %c4_45 = arith.constant 4 : index
    %77 = memref.load %arg6[%c4_45] : memref<98xf32, #tpu.memory_space<smem>>
    %78 = vector.broadcast %77 : f32 to vector<16x16xf32>
    %79 = arith.mulf %76, %78 : vector<16x16xf32>
    %80 = arith.addf %75, %79 : vector<16x16xf32>
    %c0_46 = arith.constant 0 : index
    %c4_47 = arith.constant 4 : index
    %81 = vector.load %arg9[%c0_46, %c4_47] : memref<22x128xf32, #tpu.memory_space<vmem>>, vector<16x16xf32>
    %c53 = arith.constant 53 : index
    %82 = memref.load %arg6[%c53] : memref<98xf32, #tpu.memory_space<smem>>
    %83 = vector.broadcast %82 : f32 to vector<16x16xf32>
    %84 = arith.mulf %81, %83 : vector<16x16xf32>
    %85 = arith.addf %80, %84 : vector<16x16xf32>
    %c0_48 = arith.constant 0 : index
    %c5 = arith.constant 5 : index
    %86 = vector.load %arg8[%c0_48, %c5] : memref<22x128xf32, #tpu.memory_space<vmem>>, vector<16x16xf32>
    %c5_49 = arith.constant 5 : index
    %87 = memref.load %arg6[%c5_49] : memref<98xf32, #tpu.memory_space<smem>>
    %88 = vector.broadcast %87 : f32 to vector<16x16xf32>
    %89 = arith.mulf %86, %88 : vector<16x16xf32>
    %90 = arith.addf %85, %89 : vector<16x16xf32>
    %c0_50 = arith.constant 0 : index
    %c5_51 = arith.constant 5 : index
    %91 = vector.load %arg9[%c0_50, %c5_51] : memref<22x128xf32, #tpu.memory_space<vmem>>, vector<16x16xf32>
    %c54 = arith.constant 54 : index
    %92 = memref.load %arg6[%c54] : memref<98xf32, #tpu.memory_space<smem>>
    %93 = vector.broadcast %92 : f32 to vector<16x16xf32>
    %94 = arith.mulf %91, %93 : vector<16x16xf32>
    %95 = arith.addf %90, %94 : vector<16x16xf32>
    %c0_52 = arith.constant 0 : index
    %c6 = arith.constant 6 : index
    %96 = vector.load %arg8[%c0_52, %c6] : memref<22x128xf32, #tpu.memory_space<vmem>>, vector<16x16xf32>
    %c6_53 = arith.constant 6 : index
    %97 = memref.load %arg6[%c6_53] : memref<98xf32, #tpu.memory_space<smem>>
    %98 = vector.broadcast %97 : f32 to vector<16x16xf32>
    %99 = arith.mulf %96, %98 : vector<16x16xf32>
    %100 = arith.addf %95, %99 : vector<16x16xf32>
    %c0_54 = arith.constant 0 : index
    %c6_55 = arith.constant 6 : index
    %101 = vector.load %arg9[%c0_54, %c6_55] : memref<22x128xf32, #tpu.memory_space<vmem>>, vector<16x16xf32>
    %c55 = arith.constant 55 : index
    %102 = memref.load %arg6[%c55] : memref<98xf32, #tpu.memory_space<smem>>
    %103 = vector.broadcast %102 : f32 to vector<16x16xf32>
    %104 = arith.mulf %101, %103 : vector<16x16xf32>
    %105 = arith.addf %100, %104 : vector<16x16xf32>
    %c1_56 = arith.constant 1 : index
    %c0_57 = arith.constant 0 : index
    %106 = vector.load %arg8[%c1_56, %c0_57] : memref<22x128xf32, #tpu.memory_space<vmem>>, vector<16x16xf32>
    %c7 = arith.constant 7 : index
    %107 = memref.load %arg6[%c7] : memref<98xf32, #tpu.memory_space<smem>>
    %108 = vector.broadcast %107 : f32 to vector<16x16xf32>
    %109 = arith.mulf %106, %108 : vector<16x16xf32>
    %110 = arith.addf %105, %109 : vector<16x16xf32>
    %c1_58 = arith.constant 1 : index
    %c0_59 = arith.constant 0 : index
    %111 = vector.load %arg9[%c1_58, %c0_59] : memref<22x128xf32, #tpu.memory_space<vmem>>, vector<16x16xf32>
    %c56 = arith.constant 56 : index
    %112 = memref.load %arg6[%c56] : memref<98xf32, #tpu.memory_space<smem>>
    %113 = vector.broadcast %112 : f32 to vector<16x16xf32>
    %114 = arith.mulf %111, %113 : vector<16x16xf32>
    %115 = arith.addf %110, %114 : vector<16x16xf32>
    %c1_60 = arith.constant 1 : index
    %c1_61 = arith.constant 1 : index
    %116 = vector.load %arg8[%c1_60, %c1_61] : memref<22x128xf32, #tpu.memory_space<vmem>>, vector<16x16xf32>
    %c8 = arith.constant 8 : index
    %117 = memref.load %arg6[%c8] : memref<98xf32, #tpu.memory_space<smem>>
    %118 = vector.broadcast %117 : f32 to vector<16x16xf32>
    %119 = arith.mulf %116, %118 : vector<16x16xf32>
    %120 = arith.addf %115, %119 : vector<16x16xf32>
    %c1_62 = arith.constant 1 : index
    %c1_63 = arith.constant 1 : index
    %121 = vector.load %arg9[%c1_62, %c1_63] : memref<22x128xf32, #tpu.memory_space<vmem>>, vector<16x16xf32>
    %c57 = arith.constant 57 : index
    %122 = memref.load %arg6[%c57] : memref<98xf32, #tpu.memory_space<smem>>
    %123 = vector.broadcast %122 : f32 to vector<16x16xf32>
    %124 = arith.mulf %121, %123 : vector<16x16xf32>
    %125 = arith.addf %120, %124 : vector<16x16xf32>
    %c1_64 = arith.constant 1 : index
    %c2_65 = arith.constant 2 : index
    %126 = vector.load %arg8[%c1_64, %c2_65] : memref<22x128xf32, #tpu.memory_space<vmem>>, vector<16x16xf32>
    %c9 = arith.constant 9 : index
    %127 = memref.load %arg6[%c9] : memref<98xf32, #tpu.memory_space<smem>>
    %128 = vector.broadcast %127 : f32 to vector<16x16xf32>
    %129 = arith.mulf %126, %128 : vector<16x16xf32>
    %130 = arith.addf %125, %129 : vector<16x16xf32>
    %c1_66 = arith.constant 1 : index
    %c2_67 = arith.constant 2 : index
    %131 = vector.load %arg9[%c1_66, %c2_67] : memref<22x128xf32, #tpu.memory_space<vmem>>, vector<16x16xf32>
    %c58 = arith.constant 58 : index
    %132 = memref.load %arg6[%c58] : memref<98xf32, #tpu.memory_space<smem>>
    %133 = vector.broadcast %132 : f32 to vector<16x16xf32>
    %134 = arith.mulf %131, %133 : vector<16x16xf32>
    %135 = arith.addf %130, %134 : vector<16x16xf32>
    %c1_68 = arith.constant 1 : index
    %c3_69 = arith.constant 3 : index
    %136 = vector.load %arg8[%c1_68, %c3_69] : memref<22x128xf32, #tpu.memory_space<vmem>>, vector<16x16xf32>
    %c10 = arith.constant 10 : index
    %137 = memref.load %arg6[%c10] : memref<98xf32, #tpu.memory_space<smem>>
    %138 = vector.broadcast %137 : f32 to vector<16x16xf32>
    %139 = arith.mulf %136, %138 : vector<16x16xf32>
    %140 = arith.addf %135, %139 : vector<16x16xf32>
    %c1_70 = arith.constant 1 : index
    %c3_71 = arith.constant 3 : index
    %141 = vector.load %arg9[%c1_70, %c3_71] : memref<22x128xf32, #tpu.memory_space<vmem>>, vector<16x16xf32>
    %c59 = arith.constant 59 : index
    %142 = memref.load %arg6[%c59] : memref<98xf32, #tpu.memory_space<smem>>
    %143 = vector.broadcast %142 : f32 to vector<16x16xf32>
    %144 = arith.mulf %141, %143 : vector<16x16xf32>
    %145 = arith.addf %140, %144 : vector<16x16xf32>
    %c1_72 = arith.constant 1 : index
    %c4_73 = arith.constant 4 : index
    %146 = vector.load %arg8[%c1_72, %c4_73] : memref<22x128xf32, #tpu.memory_space<vmem>>, vector<16x16xf32>
    %c11 = arith.constant 11 : index
    %147 = memref.load %arg6[%c11] : memref<98xf32, #tpu.memory_space<smem>>
    %148 = vector.broadcast %147 : f32 to vector<16x16xf32>
    %149 = arith.mulf %146, %148 : vector<16x16xf32>
    %150 = arith.addf %145, %149 : vector<16x16xf32>
    %c1_74 = arith.constant 1 : index
    %c4_75 = arith.constant 4 : index
    %151 = vector.load %arg9[%c1_74, %c4_75] : memref<22x128xf32, #tpu.memory_space<vmem>>, vector<16x16xf32>
    %c60 = arith.constant 60 : index
    %152 = memref.load %arg6[%c60] : memref<98xf32, #tpu.memory_space<smem>>
    %153 = vector.broadcast %152 : f32 to vector<16x16xf32>
    %154 = arith.mulf %151, %153 : vector<16x16xf32>
    %155 = arith.addf %150, %154 : vector<16x16xf32>
    %c1_76 = arith.constant 1 : index
    %c5_77 = arith.constant 5 : index
    %156 = vector.load %arg8[%c1_76, %c5_77] : memref<22x128xf32, #tpu.memory_space<vmem>>, vector<16x16xf32>
    %c12 = arith.constant 12 : index
    %157 = memref.load %arg6[%c12] : memref<98xf32, #tpu.memory_space<smem>>
    %158 = vector.broadcast %157 : f32 to vector<16x16xf32>
    %159 = arith.mulf %156, %158 : vector<16x16xf32>
    %160 = arith.addf %155, %159 : vector<16x16xf32>
    %c1_78 = arith.constant 1 : index
    %c5_79 = arith.constant 5 : index
    %161 = vector.load %arg9[%c1_78, %c5_79] : memref<22x128xf32, #tpu.memory_space<vmem>>, vector<16x16xf32>
    %c61 = arith.constant 61 : index
    %162 = memref.load %arg6[%c61] : memref<98xf32, #tpu.memory_space<smem>>
    %163 = vector.broadcast %162 : f32 to vector<16x16xf32>
    %164 = arith.mulf %161, %163 : vector<16x16xf32>
    %165 = arith.addf %160, %164 : vector<16x16xf32>
    %c1_80 = arith.constant 1 : index
    %c6_81 = arith.constant 6 : index
    %166 = vector.load %arg8[%c1_80, %c6_81] : memref<22x128xf32, #tpu.memory_space<vmem>>, vector<16x16xf32>
    %c13 = arith.constant 13 : index
    %167 = memref.load %arg6[%c13] : memref<98xf32, #tpu.memory_space<smem>>
    %168 = vector.broadcast %167 : f32 to vector<16x16xf32>
    %169 = arith.mulf %166, %168 : vector<16x16xf32>
    %170 = arith.addf %165, %169 : vector<16x16xf32>
    %c1_82 = arith.constant 1 : index
    %c6_83 = arith.constant 6 : index
    %171 = vector.load %arg9[%c1_82, %c6_83] : memref<22x128xf32, #tpu.memory_space<vmem>>, vector<16x16xf32>
    %c62 = arith.constant 62 : index
    %172 = memref.load %arg6[%c62] : memref<98xf32, #tpu.memory_space<smem>>
    %173 = vector.broadcast %172 : f32 to vector<16x16xf32>
    %174 = arith.mulf %171, %173 : vector<16x16xf32>
    %175 = arith.addf %170, %174 : vector<16x16xf32>
    %c2_84 = arith.constant 2 : index
    %c0_85 = arith.constant 0 : index
    %176 = vector.load %arg8[%c2_84, %c0_85] : memref<22x128xf32, #tpu.memory_space<vmem>>, vector<16x16xf32>
    %c14 = arith.constant 14 : index
    %177 = memref.load %arg6[%c14] : memref<98xf32, #tpu.memory_space<smem>>
    %178 = vector.broadcast %177 : f32 to vector<16x16xf32>
    %179 = arith.mulf %176, %178 : vector<16x16xf32>
    %180 = arith.addf %175, %179 : vector<16x16xf32>
    %c2_86 = arith.constant 2 : index
    %c0_87 = arith.constant 0 : index
    %181 = vector.load %arg9[%c2_86, %c0_87] : memref<22x128xf32, #tpu.memory_space<vmem>>, vector<16x16xf32>
    %c63 = arith.constant 63 : index
    %182 = memref.load %arg6[%c63] : memref<98xf32, #tpu.memory_space<smem>>
    %183 = vector.broadcast %182 : f32 to vector<16x16xf32>
    %184 = arith.mulf %181, %183 : vector<16x16xf32>
    %185 = arith.addf %180, %184 : vector<16x16xf32>
    %c2_88 = arith.constant 2 : index
    %c1_89 = arith.constant 1 : index
    %186 = vector.load %arg8[%c2_88, %c1_89] : memref<22x128xf32, #tpu.memory_space<vmem>>, vector<16x16xf32>
    %c15 = arith.constant 15 : index
    %187 = memref.load %arg6[%c15] : memref<98xf32, #tpu.memory_space<smem>>
    %188 = vector.broadcast %187 : f32 to vector<16x16xf32>
    %189 = arith.mulf %186, %188 : vector<16x16xf32>
    %190 = arith.addf %185, %189 : vector<16x16xf32>
    %c2_90 = arith.constant 2 : index
    %c1_91 = arith.constant 1 : index
    %191 = vector.load %arg9[%c2_90, %c1_91] : memref<22x128xf32, #tpu.memory_space<vmem>>, vector<16x16xf32>
    %c64 = arith.constant 64 : index
    %192 = memref.load %arg6[%c64] : memref<98xf32, #tpu.memory_space<smem>>
    %193 = vector.broadcast %192 : f32 to vector<16x16xf32>
    %194 = arith.mulf %191, %193 : vector<16x16xf32>
    %195 = arith.addf %190, %194 : vector<16x16xf32>
    %c2_92 = arith.constant 2 : index
    %c2_93 = arith.constant 2 : index
    %196 = vector.load %arg8[%c2_92, %c2_93] : memref<22x128xf32, #tpu.memory_space<vmem>>, vector<16x16xf32>
    %c16 = arith.constant 16 : index
    %197 = memref.load %arg6[%c16] : memref<98xf32, #tpu.memory_space<smem>>
    %198 = vector.broadcast %197 : f32 to vector<16x16xf32>
    %199 = arith.mulf %196, %198 : vector<16x16xf32>
    %200 = arith.addf %195, %199 : vector<16x16xf32>
    %c2_94 = arith.constant 2 : index
    %c2_95 = arith.constant 2 : index
    %201 = vector.load %arg9[%c2_94, %c2_95] : memref<22x128xf32, #tpu.memory_space<vmem>>, vector<16x16xf32>
    %c65 = arith.constant 65 : index
    %202 = memref.load %arg6[%c65] : memref<98xf32, #tpu.memory_space<smem>>
    %203 = vector.broadcast %202 : f32 to vector<16x16xf32>
    %204 = arith.mulf %201, %203 : vector<16x16xf32>
    %205 = arith.addf %200, %204 : vector<16x16xf32>
    %c2_96 = arith.constant 2 : index
    %c3_97 = arith.constant 3 : index
    %206 = vector.load %arg8[%c2_96, %c3_97] : memref<22x128xf32, #tpu.memory_space<vmem>>, vector<16x16xf32>
    %c17 = arith.constant 17 : index
    %207 = memref.load %arg6[%c17] : memref<98xf32, #tpu.memory_space<smem>>
    %208 = vector.broadcast %207 : f32 to vector<16x16xf32>
    %209 = arith.mulf %206, %208 : vector<16x16xf32>
    %210 = arith.addf %205, %209 : vector<16x16xf32>
    %c2_98 = arith.constant 2 : index
    %c3_99 = arith.constant 3 : index
    %211 = vector.load %arg9[%c2_98, %c3_99] : memref<22x128xf32, #tpu.memory_space<vmem>>, vector<16x16xf32>
    %c66 = arith.constant 66 : index
    %212 = memref.load %arg6[%c66] : memref<98xf32, #tpu.memory_space<smem>>
    %213 = vector.broadcast %212 : f32 to vector<16x16xf32>
    %214 = arith.mulf %211, %213 : vector<16x16xf32>
    %215 = arith.addf %210, %214 : vector<16x16xf32>
    %c2_100 = arith.constant 2 : index
    %c4_101 = arith.constant 4 : index
    %216 = vector.load %arg8[%c2_100, %c4_101] : memref<22x128xf32, #tpu.memory_space<vmem>>, vector<16x16xf32>
    %c18 = arith.constant 18 : index
    %217 = memref.load %arg6[%c18] : memref<98xf32, #tpu.memory_space<smem>>
    %218 = vector.broadcast %217 : f32 to vector<16x16xf32>
    %219 = arith.mulf %216, %218 : vector<16x16xf32>
    %220 = arith.addf %215, %219 : vector<16x16xf32>
    %c2_102 = arith.constant 2 : index
    %c4_103 = arith.constant 4 : index
    %221 = vector.load %arg9[%c2_102, %c4_103] : memref<22x128xf32, #tpu.memory_space<vmem>>, vector<16x16xf32>
    %c67 = arith.constant 67 : index
    %222 = memref.load %arg6[%c67] : memref<98xf32, #tpu.memory_space<smem>>
    %223 = vector.broadcast %222 : f32 to vector<16x16xf32>
    %224 = arith.mulf %221, %223 : vector<16x16xf32>
    %225 = arith.addf %220, %224 : vector<16x16xf32>
    %c2_104 = arith.constant 2 : index
    %c5_105 = arith.constant 5 : index
    %226 = vector.load %arg8[%c2_104, %c5_105] : memref<22x128xf32, #tpu.memory_space<vmem>>, vector<16x16xf32>
    %c19 = arith.constant 19 : index
    %227 = memref.load %arg6[%c19] : memref<98xf32, #tpu.memory_space<smem>>
    %228 = vector.broadcast %227 : f32 to vector<16x16xf32>
    %229 = arith.mulf %226, %228 : vector<16x16xf32>
    %230 = arith.addf %225, %229 : vector<16x16xf32>
    %c2_106 = arith.constant 2 : index
    %c5_107 = arith.constant 5 : index
    %231 = vector.load %arg9[%c2_106, %c5_107] : memref<22x128xf32, #tpu.memory_space<vmem>>, vector<16x16xf32>
    %c68 = arith.constant 68 : index
    %232 = memref.load %arg6[%c68] : memref<98xf32, #tpu.memory_space<smem>>
    %233 = vector.broadcast %232 : f32 to vector<16x16xf32>
    %234 = arith.mulf %231, %233 : vector<16x16xf32>
    %235 = arith.addf %230, %234 : vector<16x16xf32>
    %c2_108 = arith.constant 2 : index
    %c6_109 = arith.constant 6 : index
    %236 = vector.load %arg8[%c2_108, %c6_109] : memref<22x128xf32, #tpu.memory_space<vmem>>, vector<16x16xf32>
    %c20 = arith.constant 20 : index
    %237 = memref.load %arg6[%c20] : memref<98xf32, #tpu.memory_space<smem>>
    %238 = vector.broadcast %237 : f32 to vector<16x16xf32>
    %239 = arith.mulf %236, %238 : vector<16x16xf32>
    %240 = arith.addf %235, %239 : vector<16x16xf32>
    %c2_110 = arith.constant 2 : index
    %c6_111 = arith.constant 6 : index
    %241 = vector.load %arg9[%c2_110, %c6_111] : memref<22x128xf32, #tpu.memory_space<vmem>>, vector<16x16xf32>
    %c69 = arith.constant 69 : index
    %242 = memref.load %arg6[%c69] : memref<98xf32, #tpu.memory_space<smem>>
    %243 = vector.broadcast %242 : f32 to vector<16x16xf32>
    %244 = arith.mulf %241, %243 : vector<16x16xf32>
    %245 = arith.addf %240, %244 : vector<16x16xf32>
    %c3_112 = arith.constant 3 : index
    %c0_113 = arith.constant 0 : index
    %246 = vector.load %arg8[%c3_112, %c0_113] : memref<22x128xf32, #tpu.memory_space<vmem>>, vector<16x16xf32>
    %c21 = arith.constant 21 : index
    %247 = memref.load %arg6[%c21] : memref<98xf32, #tpu.memory_space<smem>>
    %248 = vector.broadcast %247 : f32 to vector<16x16xf32>
    %249 = arith.mulf %246, %248 : vector<16x16xf32>
    %250 = arith.addf %245, %249 : vector<16x16xf32>
    %c3_114 = arith.constant 3 : index
    %c0_115 = arith.constant 0 : index
    %251 = vector.load %arg9[%c3_114, %c0_115] : memref<22x128xf32, #tpu.memory_space<vmem>>, vector<16x16xf32>
    %c70 = arith.constant 70 : index
    %252 = memref.load %arg6[%c70] : memref<98xf32, #tpu.memory_space<smem>>
    %253 = vector.broadcast %252 : f32 to vector<16x16xf32>
    %254 = arith.mulf %251, %253 : vector<16x16xf32>
    %255 = arith.addf %250, %254 : vector<16x16xf32>
    %c3_116 = arith.constant 3 : index
    %c1_117 = arith.constant 1 : index
    %256 = vector.load %arg8[%c3_116, %c1_117] : memref<22x128xf32, #tpu.memory_space<vmem>>, vector<16x16xf32>
    %c22 = arith.constant 22 : index
    %257 = memref.load %arg6[%c22] : memref<98xf32, #tpu.memory_space<smem>>
    %258 = vector.broadcast %257 : f32 to vector<16x16xf32>
    %259 = arith.mulf %256, %258 : vector<16x16xf32>
    %260 = arith.addf %255, %259 : vector<16x16xf32>
    %c3_118 = arith.constant 3 : index
    %c1_119 = arith.constant 1 : index
    %261 = vector.load %arg9[%c3_118, %c1_119] : memref<22x128xf32, #tpu.memory_space<vmem>>, vector<16x16xf32>
    %c71 = arith.constant 71 : index
    %262 = memref.load %arg6[%c71] : memref<98xf32, #tpu.memory_space<smem>>
    %263 = vector.broadcast %262 : f32 to vector<16x16xf32>
    %264 = arith.mulf %261, %263 : vector<16x16xf32>
    %265 = arith.addf %260, %264 : vector<16x16xf32>
    %c3_120 = arith.constant 3 : index
    %c2_121 = arith.constant 2 : index
    %266 = vector.load %arg8[%c3_120, %c2_121] : memref<22x128xf32, #tpu.memory_space<vmem>>, vector<16x16xf32>
    %c23 = arith.constant 23 : index
    %267 = memref.load %arg6[%c23] : memref<98xf32, #tpu.memory_space<smem>>
    %268 = vector.broadcast %267 : f32 to vector<16x16xf32>
    %269 = arith.mulf %266, %268 : vector<16x16xf32>
    %270 = arith.addf %265, %269 : vector<16x16xf32>
    %c3_122 = arith.constant 3 : index
    %c2_123 = arith.constant 2 : index
    %271 = vector.load %arg9[%c3_122, %c2_123] : memref<22x128xf32, #tpu.memory_space<vmem>>, vector<16x16xf32>
    %c72 = arith.constant 72 : index
    %272 = memref.load %arg6[%c72] : memref<98xf32, #tpu.memory_space<smem>>
    %273 = vector.broadcast %272 : f32 to vector<16x16xf32>
    %274 = arith.mulf %271, %273 : vector<16x16xf32>
    %275 = arith.addf %270, %274 : vector<16x16xf32>
    %c3_124 = arith.constant 3 : index
    %c3_125 = arith.constant 3 : index
    %276 = vector.load %arg8[%c3_124, %c3_125] : memref<22x128xf32, #tpu.memory_space<vmem>>, vector<16x16xf32>
    %c24 = arith.constant 24 : index
    %277 = memref.load %arg6[%c24] : memref<98xf32, #tpu.memory_space<smem>>
    %278 = vector.broadcast %277 : f32 to vector<16x16xf32>
    %279 = arith.mulf %276, %278 : vector<16x16xf32>
    %280 = arith.addf %275, %279 : vector<16x16xf32>
    %c3_126 = arith.constant 3 : index
    %c3_127 = arith.constant 3 : index
    %281 = vector.load %arg9[%c3_126, %c3_127] : memref<22x128xf32, #tpu.memory_space<vmem>>, vector<16x16xf32>
    %c73 = arith.constant 73 : index
    %282 = memref.load %arg6[%c73] : memref<98xf32, #tpu.memory_space<smem>>
    %283 = vector.broadcast %282 : f32 to vector<16x16xf32>
    %284 = arith.mulf %281, %283 : vector<16x16xf32>
    %285 = arith.addf %280, %284 : vector<16x16xf32>
    %c3_128 = arith.constant 3 : index
    %c4_129 = arith.constant 4 : index
    %286 = vector.load %arg8[%c3_128, %c4_129] : memref<22x128xf32, #tpu.memory_space<vmem>>, vector<16x16xf32>
    %c25 = arith.constant 25 : index
    %287 = memref.load %arg6[%c25] : memref<98xf32, #tpu.memory_space<smem>>
    %288 = vector.broadcast %287 : f32 to vector<16x16xf32>
    %289 = arith.mulf %286, %288 : vector<16x16xf32>
    %290 = arith.addf %285, %289 : vector<16x16xf32>
    %c3_130 = arith.constant 3 : index
    %c4_131 = arith.constant 4 : index
    %291 = vector.load %arg9[%c3_130, %c4_131] : memref<22x128xf32, #tpu.memory_space<vmem>>, vector<16x16xf32>
    %c74 = arith.constant 74 : index
    %292 = memref.load %arg6[%c74] : memref<98xf32, #tpu.memory_space<smem>>
    %293 = vector.broadcast %292 : f32 to vector<16x16xf32>
    %294 = arith.mulf %291, %293 : vector<16x16xf32>
    %295 = arith.addf %290, %294 : vector<16x16xf32>
    %c3_132 = arith.constant 3 : index
    %c5_133 = arith.constant 5 : index
    %296 = vector.load %arg8[%c3_132, %c5_133] : memref<22x128xf32, #tpu.memory_space<vmem>>, vector<16x16xf32>
    %c26 = arith.constant 26 : index
    %297 = memref.load %arg6[%c26] : memref<98xf32, #tpu.memory_space<smem>>
    %298 = vector.broadcast %297 : f32 to vector<16x16xf32>
    %299 = arith.mulf %296, %298 : vector<16x16xf32>
    %300 = arith.addf %295, %299 : vector<16x16xf32>
    %c3_134 = arith.constant 3 : index
    %c5_135 = arith.constant 5 : index
    %301 = vector.load %arg9[%c3_134, %c5_135] : memref<22x128xf32, #tpu.memory_space<vmem>>, vector<16x16xf32>
    %c75 = arith.constant 75 : index
    %302 = memref.load %arg6[%c75] : memref<98xf32, #tpu.memory_space<smem>>
    %303 = vector.broadcast %302 : f32 to vector<16x16xf32>
    %304 = arith.mulf %301, %303 : vector<16x16xf32>
    %305 = arith.addf %300, %304 : vector<16x16xf32>
    %c3_136 = arith.constant 3 : index
    %c6_137 = arith.constant 6 : index
    %306 = vector.load %arg8[%c3_136, %c6_137] : memref<22x128xf32, #tpu.memory_space<vmem>>, vector<16x16xf32>
    %c27 = arith.constant 27 : index
    %307 = memref.load %arg6[%c27] : memref<98xf32, #tpu.memory_space<smem>>
    %308 = vector.broadcast %307 : f32 to vector<16x16xf32>
    %309 = arith.mulf %306, %308 : vector<16x16xf32>
    %310 = arith.addf %305, %309 : vector<16x16xf32>
    %c3_138 = arith.constant 3 : index
    %c6_139 = arith.constant 6 : index
    %311 = vector.load %arg9[%c3_138, %c6_139] : memref<22x128xf32, #tpu.memory_space<vmem>>, vector<16x16xf32>
    %c76 = arith.constant 76 : index
    %312 = memref.load %arg6[%c76] : memref<98xf32, #tpu.memory_space<smem>>
    %313 = vector.broadcast %312 : f32 to vector<16x16xf32>
    %314 = arith.mulf %311, %313 : vector<16x16xf32>
    %315 = arith.addf %310, %314 : vector<16x16xf32>
    %c4_140 = arith.constant 4 : index
    %c0_141 = arith.constant 0 : index
    %316 = vector.load %arg8[%c4_140, %c0_141] : memref<22x128xf32, #tpu.memory_space<vmem>>, vector<16x16xf32>
    %c28 = arith.constant 28 : index
    %317 = memref.load %arg6[%c28] : memref<98xf32, #tpu.memory_space<smem>>
    %318 = vector.broadcast %317 : f32 to vector<16x16xf32>
    %319 = arith.mulf %316, %318 : vector<16x16xf32>
    %320 = arith.addf %315, %319 : vector<16x16xf32>
    %c4_142 = arith.constant 4 : index
    %c0_143 = arith.constant 0 : index
    %321 = vector.load %arg9[%c4_142, %c0_143] : memref<22x128xf32, #tpu.memory_space<vmem>>, vector<16x16xf32>
    %c77 = arith.constant 77 : index
    %322 = memref.load %arg6[%c77] : memref<98xf32, #tpu.memory_space<smem>>
    %323 = vector.broadcast %322 : f32 to vector<16x16xf32>
    %324 = arith.mulf %321, %323 : vector<16x16xf32>
    %325 = arith.addf %320, %324 : vector<16x16xf32>
    %c4_144 = arith.constant 4 : index
    %c1_145 = arith.constant 1 : index
    %326 = vector.load %arg8[%c4_144, %c1_145] : memref<22x128xf32, #tpu.memory_space<vmem>>, vector<16x16xf32>
    %c29 = arith.constant 29 : index
    %327 = memref.load %arg6[%c29] : memref<98xf32, #tpu.memory_space<smem>>
    %328 = vector.broadcast %327 : f32 to vector<16x16xf32>
    %329 = arith.mulf %326, %328 : vector<16x16xf32>
    %330 = arith.addf %325, %329 : vector<16x16xf32>
    %c4_146 = arith.constant 4 : index
    %c1_147 = arith.constant 1 : index
    %331 = vector.load %arg9[%c4_146, %c1_147] : memref<22x128xf32, #tpu.memory_space<vmem>>, vector<16x16xf32>
    %c78 = arith.constant 78 : index
    %332 = memref.load %arg6[%c78] : memref<98xf32, #tpu.memory_space<smem>>
    %333 = vector.broadcast %332 : f32 to vector<16x16xf32>
    %334 = arith.mulf %331, %333 : vector<16x16xf32>
    %335 = arith.addf %330, %334 : vector<16x16xf32>
    %c4_148 = arith.constant 4 : index
    %c2_149 = arith.constant 2 : index
    %336 = vector.load %arg8[%c4_148, %c2_149] : memref<22x128xf32, #tpu.memory_space<vmem>>, vector<16x16xf32>
    %c30 = arith.constant 30 : index
    %337 = memref.load %arg6[%c30] : memref<98xf32, #tpu.memory_space<smem>>
    %338 = vector.broadcast %337 : f32 to vector<16x16xf32>
    %339 = arith.mulf %336, %338 : vector<16x16xf32>
    %340 = arith.addf %335, %339 : vector<16x16xf32>
    %c4_150 = arith.constant 4 : index
    %c2_151 = arith.constant 2 : index
    %341 = vector.load %arg9[%c4_150, %c2_151] : memref<22x128xf32, #tpu.memory_space<vmem>>, vector<16x16xf32>
    %c79 = arith.constant 79 : index
    %342 = memref.load %arg6[%c79] : memref<98xf32, #tpu.memory_space<smem>>
    %343 = vector.broadcast %342 : f32 to vector<16x16xf32>
    %344 = arith.mulf %341, %343 : vector<16x16xf32>
    %345 = arith.addf %340, %344 : vector<16x16xf32>
    %c4_152 = arith.constant 4 : index
    %c3_153 = arith.constant 3 : index
    %346 = vector.load %arg8[%c4_152, %c3_153] : memref<22x128xf32, #tpu.memory_space<vmem>>, vector<16x16xf32>
    %c31 = arith.constant 31 : index
    %347 = memref.load %arg6[%c31] : memref<98xf32, #tpu.memory_space<smem>>
    %348 = vector.broadcast %347 : f32 to vector<16x16xf32>
    %349 = arith.mulf %346, %348 : vector<16x16xf32>
    %350 = arith.addf %345, %349 : vector<16x16xf32>
    %c4_154 = arith.constant 4 : index
    %c3_155 = arith.constant 3 : index
    %351 = vector.load %arg9[%c4_154, %c3_155] : memref<22x128xf32, #tpu.memory_space<vmem>>, vector<16x16xf32>
    %c80 = arith.constant 80 : index
    %352 = memref.load %arg6[%c80] : memref<98xf32, #tpu.memory_space<smem>>
    %353 = vector.broadcast %352 : f32 to vector<16x16xf32>
    %354 = arith.mulf %351, %353 : vector<16x16xf32>
    %355 = arith.addf %350, %354 : vector<16x16xf32>
    %c4_156 = arith.constant 4 : index
    %c4_157 = arith.constant 4 : index
    %356 = vector.load %arg8[%c4_156, %c4_157] : memref<22x128xf32, #tpu.memory_space<vmem>>, vector<16x16xf32>
    %c32 = arith.constant 32 : index
    %357 = memref.load %arg6[%c32] : memref<98xf32, #tpu.memory_space<smem>>
    %358 = vector.broadcast %357 : f32 to vector<16x16xf32>
    %359 = arith.mulf %356, %358 : vector<16x16xf32>
    %360 = arith.addf %355, %359 : vector<16x16xf32>
    %c4_158 = arith.constant 4 : index
    %c4_159 = arith.constant 4 : index
    %361 = vector.load %arg9[%c4_158, %c4_159] : memref<22x128xf32, #tpu.memory_space<vmem>>, vector<16x16xf32>
    %c81 = arith.constant 81 : index
    %362 = memref.load %arg6[%c81] : memref<98xf32, #tpu.memory_space<smem>>
    %363 = vector.broadcast %362 : f32 to vector<16x16xf32>
    %364 = arith.mulf %361, %363 : vector<16x16xf32>
    %365 = arith.addf %360, %364 : vector<16x16xf32>
    %c4_160 = arith.constant 4 : index
    %c5_161 = arith.constant 5 : index
    %366 = vector.load %arg8[%c4_160, %c5_161] : memref<22x128xf32, #tpu.memory_space<vmem>>, vector<16x16xf32>
    %c33 = arith.constant 33 : index
    %367 = memref.load %arg6[%c33] : memref<98xf32, #tpu.memory_space<smem>>
    %368 = vector.broadcast %367 : f32 to vector<16x16xf32>
    %369 = arith.mulf %366, %368 : vector<16x16xf32>
    %370 = arith.addf %365, %369 : vector<16x16xf32>
    %c4_162 = arith.constant 4 : index
    %c5_163 = arith.constant 5 : index
    %371 = vector.load %arg9[%c4_162, %c5_163] : memref<22x128xf32, #tpu.memory_space<vmem>>, vector<16x16xf32>
    %c82 = arith.constant 82 : index
    %372 = memref.load %arg6[%c82] : memref<98xf32, #tpu.memory_space<smem>>
    %373 = vector.broadcast %372 : f32 to vector<16x16xf32>
    %374 = arith.mulf %371, %373 : vector<16x16xf32>
    %375 = arith.addf %370, %374 : vector<16x16xf32>
    %c4_164 = arith.constant 4 : index
    %c6_165 = arith.constant 6 : index
    %376 = vector.load %arg8[%c4_164, %c6_165] : memref<22x128xf32, #tpu.memory_space<vmem>>, vector<16x16xf32>
    %c34 = arith.constant 34 : index
    %377 = memref.load %arg6[%c34] : memref<98xf32, #tpu.memory_space<smem>>
    %378 = vector.broadcast %377 : f32 to vector<16x16xf32>
    %379 = arith.mulf %376, %378 : vector<16x16xf32>
    %380 = arith.addf %375, %379 : vector<16x16xf32>
    %c4_166 = arith.constant 4 : index
    %c6_167 = arith.constant 6 : index
    %381 = vector.load %arg9[%c4_166, %c6_167] : memref<22x128xf32, #tpu.memory_space<vmem>>, vector<16x16xf32>
    %c83 = arith.constant 83 : index
    %382 = memref.load %arg6[%c83] : memref<98xf32, #tpu.memory_space<smem>>
    %383 = vector.broadcast %382 : f32 to vector<16x16xf32>
    %384 = arith.mulf %381, %383 : vector<16x16xf32>
    %385 = arith.addf %380, %384 : vector<16x16xf32>
    %c5_168 = arith.constant 5 : index
    %c0_169 = arith.constant 0 : index
    %386 = vector.load %arg8[%c5_168, %c0_169] : memref<22x128xf32, #tpu.memory_space<vmem>>, vector<16x16xf32>
    %c35 = arith.constant 35 : index
    %387 = memref.load %arg6[%c35] : memref<98xf32, #tpu.memory_space<smem>>
    %388 = vector.broadcast %387 : f32 to vector<16x16xf32>
    %389 = arith.mulf %386, %388 : vector<16x16xf32>
    %390 = arith.addf %385, %389 : vector<16x16xf32>
    %c5_170 = arith.constant 5 : index
    %c0_171 = arith.constant 0 : index
    %391 = vector.load %arg9[%c5_170, %c0_171] : memref<22x128xf32, #tpu.memory_space<vmem>>, vector<16x16xf32>
    %c84 = arith.constant 84 : index
    %392 = memref.load %arg6[%c84] : memref<98xf32, #tpu.memory_space<smem>>
    %393 = vector.broadcast %392 : f32 to vector<16x16xf32>
    %394 = arith.mulf %391, %393 : vector<16x16xf32>
    %395 = arith.addf %390, %394 : vector<16x16xf32>
    %c5_172 = arith.constant 5 : index
    %c1_173 = arith.constant 1 : index
    %396 = vector.load %arg8[%c5_172, %c1_173] : memref<22x128xf32, #tpu.memory_space<vmem>>, vector<16x16xf32>
    %c36 = arith.constant 36 : index
    %397 = memref.load %arg6[%c36] : memref<98xf32, #tpu.memory_space<smem>>
    %398 = vector.broadcast %397 : f32 to vector<16x16xf32>
    %399 = arith.mulf %396, %398 : vector<16x16xf32>
    %400 = arith.addf %395, %399 : vector<16x16xf32>
    %c5_174 = arith.constant 5 : index
    %c1_175 = arith.constant 1 : index
    %401 = vector.load %arg9[%c5_174, %c1_175] : memref<22x128xf32, #tpu.memory_space<vmem>>, vector<16x16xf32>
    %c85 = arith.constant 85 : index
    %402 = memref.load %arg6[%c85] : memref<98xf32, #tpu.memory_space<smem>>
    %403 = vector.broadcast %402 : f32 to vector<16x16xf32>
    %404 = arith.mulf %401, %403 : vector<16x16xf32>
    %405 = arith.addf %400, %404 : vector<16x16xf32>
    %c5_176 = arith.constant 5 : index
    %c2_177 = arith.constant 2 : index
    %406 = vector.load %arg8[%c5_176, %c2_177] : memref<22x128xf32, #tpu.memory_space<vmem>>, vector<16x16xf32>
    %c37 = arith.constant 37 : index
    %407 = memref.load %arg6[%c37] : memref<98xf32, #tpu.memory_space<smem>>
    %408 = vector.broadcast %407 : f32 to vector<16x16xf32>
    %409 = arith.mulf %406, %408 : vector<16x16xf32>
    %410 = arith.addf %405, %409 : vector<16x16xf32>
    %c5_178 = arith.constant 5 : index
    %c2_179 = arith.constant 2 : index
    %411 = vector.load %arg9[%c5_178, %c2_179] : memref<22x128xf32, #tpu.memory_space<vmem>>, vector<16x16xf32>
    %c86 = arith.constant 86 : index
    %412 = memref.load %arg6[%c86] : memref<98xf32, #tpu.memory_space<smem>>
    %413 = vector.broadcast %412 : f32 to vector<16x16xf32>
    %414 = arith.mulf %411, %413 : vector<16x16xf32>
    %415 = arith.addf %410, %414 : vector<16x16xf32>
    %c5_180 = arith.constant 5 : index
    %c3_181 = arith.constant 3 : index
    %416 = vector.load %arg8[%c5_180, %c3_181] : memref<22x128xf32, #tpu.memory_space<vmem>>, vector<16x16xf32>
    %c38 = arith.constant 38 : index
    %417 = memref.load %arg6[%c38] : memref<98xf32, #tpu.memory_space<smem>>
    %418 = vector.broadcast %417 : f32 to vector<16x16xf32>
    %419 = arith.mulf %416, %418 : vector<16x16xf32>
    %420 = arith.addf %415, %419 : vector<16x16xf32>
    %c5_182 = arith.constant 5 : index
    %c3_183 = arith.constant 3 : index
    %421 = vector.load %arg9[%c5_182, %c3_183] : memref<22x128xf32, #tpu.memory_space<vmem>>, vector<16x16xf32>
    %c87 = arith.constant 87 : index
    %422 = memref.load %arg6[%c87] : memref<98xf32, #tpu.memory_space<smem>>
    %423 = vector.broadcast %422 : f32 to vector<16x16xf32>
    %424 = arith.mulf %421, %423 : vector<16x16xf32>
    %425 = arith.addf %420, %424 : vector<16x16xf32>
    %c5_184 = arith.constant 5 : index
    %c4_185 = arith.constant 4 : index
    %426 = vector.load %arg8[%c5_184, %c4_185] : memref<22x128xf32, #tpu.memory_space<vmem>>, vector<16x16xf32>
    %c39 = arith.constant 39 : index
    %427 = memref.load %arg6[%c39] : memref<98xf32, #tpu.memory_space<smem>>
    %428 = vector.broadcast %427 : f32 to vector<16x16xf32>
    %429 = arith.mulf %426, %428 : vector<16x16xf32>
    %430 = arith.addf %425, %429 : vector<16x16xf32>
    %c5_186 = arith.constant 5 : index
    %c4_187 = arith.constant 4 : index
    %431 = vector.load %arg9[%c5_186, %c4_187] : memref<22x128xf32, #tpu.memory_space<vmem>>, vector<16x16xf32>
    %c88 = arith.constant 88 : index
    %432 = memref.load %arg6[%c88] : memref<98xf32, #tpu.memory_space<smem>>
    %433 = vector.broadcast %432 : f32 to vector<16x16xf32>
    %434 = arith.mulf %431, %433 : vector<16x16xf32>
    %435 = arith.addf %430, %434 : vector<16x16xf32>
    %c5_188 = arith.constant 5 : index
    %c5_189 = arith.constant 5 : index
    %436 = vector.load %arg8[%c5_188, %c5_189] : memref<22x128xf32, #tpu.memory_space<vmem>>, vector<16x16xf32>
    %c40 = arith.constant 40 : index
    %437 = memref.load %arg6[%c40] : memref<98xf32, #tpu.memory_space<smem>>
    %438 = vector.broadcast %437 : f32 to vector<16x16xf32>
    %439 = arith.mulf %436, %438 : vector<16x16xf32>
    %440 = arith.addf %435, %439 : vector<16x16xf32>
    %c5_190 = arith.constant 5 : index
    %c5_191 = arith.constant 5 : index
    %441 = vector.load %arg9[%c5_190, %c5_191] : memref<22x128xf32, #tpu.memory_space<vmem>>, vector<16x16xf32>
    %c89 = arith.constant 89 : index
    %442 = memref.load %arg6[%c89] : memref<98xf32, #tpu.memory_space<smem>>
    %443 = vector.broadcast %442 : f32 to vector<16x16xf32>
    %444 = arith.mulf %441, %443 : vector<16x16xf32>
    %445 = arith.addf %440, %444 : vector<16x16xf32>
    %c5_192 = arith.constant 5 : index
    %c6_193 = arith.constant 6 : index
    %446 = vector.load %arg8[%c5_192, %c6_193] : memref<22x128xf32, #tpu.memory_space<vmem>>, vector<16x16xf32>
    %c41 = arith.constant 41 : index
    %447 = memref.load %arg6[%c41] : memref<98xf32, #tpu.memory_space<smem>>
    %448 = vector.broadcast %447 : f32 to vector<16x16xf32>
    %449 = arith.mulf %446, %448 : vector<16x16xf32>
    %450 = arith.addf %445, %449 : vector<16x16xf32>
    %c5_194 = arith.constant 5 : index
    %c6_195 = arith.constant 6 : index
    %451 = vector.load %arg9[%c5_194, %c6_195] : memref<22x128xf32, #tpu.memory_space<vmem>>, vector<16x16xf32>
    %c90 = arith.constant 90 : index
    %452 = memref.load %arg6[%c90] : memref<98xf32, #tpu.memory_space<smem>>
    %453 = vector.broadcast %452 : f32 to vector<16x16xf32>
    %454 = arith.mulf %451, %453 : vector<16x16xf32>
    %455 = arith.addf %450, %454 : vector<16x16xf32>
    %c6_196 = arith.constant 6 : index
    %c0_197 = arith.constant 0 : index
    %456 = vector.load %arg8[%c6_196, %c0_197] : memref<22x128xf32, #tpu.memory_space<vmem>>, vector<16x16xf32>
    %c42 = arith.constant 42 : index
    %457 = memref.load %arg6[%c42] : memref<98xf32, #tpu.memory_space<smem>>
    %458 = vector.broadcast %457 : f32 to vector<16x16xf32>
    %459 = arith.mulf %456, %458 : vector<16x16xf32>
    %460 = arith.addf %455, %459 : vector<16x16xf32>
    %c6_198 = arith.constant 6 : index
    %c0_199 = arith.constant 0 : index
    %461 = vector.load %arg9[%c6_198, %c0_199] : memref<22x128xf32, #tpu.memory_space<vmem>>, vector<16x16xf32>
    %c91 = arith.constant 91 : index
    %462 = memref.load %arg6[%c91] : memref<98xf32, #tpu.memory_space<smem>>
    %463 = vector.broadcast %462 : f32 to vector<16x16xf32>
    %464 = arith.mulf %461, %463 : vector<16x16xf32>
    %465 = arith.addf %460, %464 : vector<16x16xf32>
    %c6_200 = arith.constant 6 : index
    %c1_201 = arith.constant 1 : index
    %466 = vector.load %arg8[%c6_200, %c1_201] : memref<22x128xf32, #tpu.memory_space<vmem>>, vector<16x16xf32>
    %c43 = arith.constant 43 : index
    %467 = memref.load %arg6[%c43] : memref<98xf32, #tpu.memory_space<smem>>
    %468 = vector.broadcast %467 : f32 to vector<16x16xf32>
    %469 = arith.mulf %466, %468 : vector<16x16xf32>
    %470 = arith.addf %465, %469 : vector<16x16xf32>
    %c6_202 = arith.constant 6 : index
    %c1_203 = arith.constant 1 : index
    %471 = vector.load %arg9[%c6_202, %c1_203] : memref<22x128xf32, #tpu.memory_space<vmem>>, vector<16x16xf32>
    %c92 = arith.constant 92 : index
    %472 = memref.load %arg6[%c92] : memref<98xf32, #tpu.memory_space<smem>>
    %473 = vector.broadcast %472 : f32 to vector<16x16xf32>
    %474 = arith.mulf %471, %473 : vector<16x16xf32>
    %475 = arith.addf %470, %474 : vector<16x16xf32>
    %c6_204 = arith.constant 6 : index
    %c2_205 = arith.constant 2 : index
    %476 = vector.load %arg8[%c6_204, %c2_205] : memref<22x128xf32, #tpu.memory_space<vmem>>, vector<16x16xf32>
    %c44 = arith.constant 44 : index
    %477 = memref.load %arg6[%c44] : memref<98xf32, #tpu.memory_space<smem>>
    %478 = vector.broadcast %477 : f32 to vector<16x16xf32>
    %479 = arith.mulf %476, %478 : vector<16x16xf32>
    %480 = arith.addf %475, %479 : vector<16x16xf32>
    %c6_206 = arith.constant 6 : index
    %c2_207 = arith.constant 2 : index
    %481 = vector.load %arg9[%c6_206, %c2_207] : memref<22x128xf32, #tpu.memory_space<vmem>>, vector<16x16xf32>
    %c93 = arith.constant 93 : index
    %482 = memref.load %arg6[%c93] : memref<98xf32, #tpu.memory_space<smem>>
    %483 = vector.broadcast %482 : f32 to vector<16x16xf32>
    %484 = arith.mulf %481, %483 : vector<16x16xf32>
    %485 = arith.addf %480, %484 : vector<16x16xf32>
    %c6_208 = arith.constant 6 : index
    %c3_209 = arith.constant 3 : index
    %486 = vector.load %arg8[%c6_208, %c3_209] : memref<22x128xf32, #tpu.memory_space<vmem>>, vector<16x16xf32>
    %c45 = arith.constant 45 : index
    %487 = memref.load %arg6[%c45] : memref<98xf32, #tpu.memory_space<smem>>
    %488 = vector.broadcast %487 : f32 to vector<16x16xf32>
    %489 = arith.mulf %486, %488 : vector<16x16xf32>
    %490 = arith.addf %485, %489 : vector<16x16xf32>
    %c6_210 = arith.constant 6 : index
    %c3_211 = arith.constant 3 : index
    %491 = vector.load %arg9[%c6_210, %c3_211] : memref<22x128xf32, #tpu.memory_space<vmem>>, vector<16x16xf32>
    %c94 = arith.constant 94 : index
    %492 = memref.load %arg6[%c94] : memref<98xf32, #tpu.memory_space<smem>>
    %493 = vector.broadcast %492 : f32 to vector<16x16xf32>
    %494 = arith.mulf %491, %493 : vector<16x16xf32>
    %495 = arith.addf %490, %494 : vector<16x16xf32>
    %c6_212 = arith.constant 6 : index
    %c4_213 = arith.constant 4 : index
    %496 = vector.load %arg8[%c6_212, %c4_213] : memref<22x128xf32, #tpu.memory_space<vmem>>, vector<16x16xf32>
    %c46 = arith.constant 46 : index
    %497 = memref.load %arg6[%c46] : memref<98xf32, #tpu.memory_space<smem>>
    %498 = vector.broadcast %497 : f32 to vector<16x16xf32>
    %499 = arith.mulf %496, %498 : vector<16x16xf32>
    %500 = arith.addf %495, %499 : vector<16x16xf32>
    %c6_214 = arith.constant 6 : index
    %c4_215 = arith.constant 4 : index
    %501 = vector.load %arg9[%c6_214, %c4_215] : memref<22x128xf32, #tpu.memory_space<vmem>>, vector<16x16xf32>
    %c95 = arith.constant 95 : index
    %502 = memref.load %arg6[%c95] : memref<98xf32, #tpu.memory_space<smem>>
    %503 = vector.broadcast %502 : f32 to vector<16x16xf32>
    %504 = arith.mulf %501, %503 : vector<16x16xf32>
    %505 = arith.addf %500, %504 : vector<16x16xf32>
    %c6_216 = arith.constant 6 : index
    %c5_217 = arith.constant 5 : index
    %506 = vector.load %arg8[%c6_216, %c5_217] : memref<22x128xf32, #tpu.memory_space<vmem>>, vector<16x16xf32>
    %c47 = arith.constant 47 : index
    %507 = memref.load %arg6[%c47] : memref<98xf32, #tpu.memory_space<smem>>
    %508 = vector.broadcast %507 : f32 to vector<16x16xf32>
    %509 = arith.mulf %506, %508 : vector<16x16xf32>
    %510 = arith.addf %505, %509 : vector<16x16xf32>
    %c6_218 = arith.constant 6 : index
    %c5_219 = arith.constant 5 : index
    %511 = vector.load %arg9[%c6_218, %c5_219] : memref<22x128xf32, #tpu.memory_space<vmem>>, vector<16x16xf32>
    %c96 = arith.constant 96 : index
    %512 = memref.load %arg6[%c96] : memref<98xf32, #tpu.memory_space<smem>>
    %513 = vector.broadcast %512 : f32 to vector<16x16xf32>
    %514 = arith.mulf %511, %513 : vector<16x16xf32>
    %515 = arith.addf %510, %514 : vector<16x16xf32>
    %c6_220 = arith.constant 6 : index
    %c6_221 = arith.constant 6 : index
    %516 = vector.load %arg8[%c6_220, %c6_221] : memref<22x128xf32, #tpu.memory_space<vmem>>, vector<16x16xf32>
    %c48 = arith.constant 48 : index
    %517 = memref.load %arg6[%c48] : memref<98xf32, #tpu.memory_space<smem>>
    %518 = vector.broadcast %517 : f32 to vector<16x16xf32>
    %519 = arith.mulf %516, %518 : vector<16x16xf32>
    %520 = arith.addf %515, %519 : vector<16x16xf32>
    %c6_222 = arith.constant 6 : index
    %c6_223 = arith.constant 6 : index
    %521 = vector.load %arg9[%c6_222, %c6_223] : memref<22x128xf32, #tpu.memory_space<vmem>>, vector<16x16xf32>
    %c97 = arith.constant 97 : index
    %522 = memref.load %arg6[%c97] : memref<98xf32, #tpu.memory_space<smem>>
    %523 = vector.broadcast %522 : f32 to vector<16x16xf32>
    %524 = arith.mulf %521, %523 : vector<16x16xf32>
    %525 = arith.addf %520, %524 : vector<16x16xf32>
    %526 = arith.negf %525 : vector<16x16xf32>
    %527 = math.exp %526 : vector<16x16xf32>
    %cst_224 = arith.constant 1.000000e+00 : f32
    %528 = vector.broadcast %cst_224 : f32 to vector<16x16xf32>
    %529 = arith.addf %528, %527 : vector<16x16xf32>
    %530 = arith.divf %528, %529 : vector<16x16xf32>
    %c0_225 = arith.constant 0 : index
    %c0_226 = arith.constant 0 : index
    %c0_227 = arith.constant 0 : index
    %c0_228 = arith.constant 0 : index
    %531 = vector.load %arg1[%c0_225, %c0_226, %c0_227, %c0_228] : memref<1x16x16x16xbf16, #tpu.memory_space<vmem>>, vector<1x16x16x16xbf16>
    %532 = vector.shape_cast %531 : vector<1x16x16x16xbf16> to vector<16x16x16xbf16>
    %533 = arith.extf %532 : vector<16x16x16xbf16> to vector<16x16x16xf32>
    %534 = vector.shape_cast %18 : vector<16xf32> to vector<1x1x16xf32>
    %535 = vector.broadcast %534 : vector<1x1x16xf32> to vector<16x16x16xf32>
    %536 = arith.mulf %533, %535 : vector<16x16x16xf32>
    %537 = vector.shape_cast %530 : vector<16x16xf32> to vector<16x16x1xf32>
    %538 = vector.broadcast %537 : vector<16x16x1xf32> to vector<16x16x16xf32>
    %539 = arith.mulf %536, %538 : vector<16x16x16xf32>
    %c0_229 = arith.constant 0 : index
    %c0_230 = arith.constant 0 : index
    %c0_231 = arith.constant 0 : index
    %c0_232 = arith.constant 0 : index
    %540 = vector.load %arg2[%c0_229, %c0_230, %c0_231, %c0_232] : memref<1x16x16x16xbf16, #tpu.memory_space<vmem>>, vector<1x16x16x16xbf16>
    %541 = vector.shape_cast %540 : vector<1x16x16x16xbf16> to vector<16x16x16xbf16>
    %542 = arith.extf %541 : vector<16x16x16xbf16> to vector<16x16x16xf32>
    %543 = arith.addf %539, %542 : vector<16x16x16xf32>
    %cst_233 = arith.constant 0.000000e+00 : f32
    %544 = vector.broadcast %cst_233 : f32 to vector<16x16x16xf32>
    %545 = arith.maximumf %543, %544 : vector<16x16x16xf32>
    %546 = arith.truncf %545 : vector<16x16x16xf32> to vector<16x16x16xbf16>
    %c0_234 = arith.constant 0 : index
    %c0_235 = arith.constant 0 : index
    %c0_236 = arith.constant 0 : index
    %c0_237 = arith.constant 0 : index
    %547 = vector.load %arg7[%c0_234, %c0_235, %c0_236, %c0_237] : memref<1x16x16x16xbf16, #tpu.memory_space<vmem>>, vector<1x16x16x16xbf16>
    %548 = vector.shape_cast %547 : vector<1x16x16x16xbf16> to vector<16x16x16xbf16>
    %549 = vector.shape_cast %546 : vector<16x16x16xbf16> to vector<1x16x16x16xbf16>
    tpu.vector_store %arg7[%c0_234, %c0_235, %c0_236, %c0_237], %549 {strides = array<i32>} : memref<1x16x16x16xbf16, #tpu.memory_space<vmem>>, vector<1x16x16x16xbf16>,
    return
  }
  func.func @transform_0(%arg0: i32) -> (i32, i32, i32, i32) {
    %c0_i32 = arith.constant 0 : i32
    %c0_i32_0 = arith.constant 0 : i32
    %c0_i32_1 = arith.constant 0 : i32
    %c0_i32_2 = arith.constant 0 : i32
    return %arg0, %c0_i32, %c0_i32_0, %c0_i32_1 : i32, i32, i32, i32
  }
  func.func @transform_1(%arg0: i32) -> (i32, i32, i32, i32) {
    %c0_i32 = arith.constant 0 : i32
    %c0_i32_0 = arith.constant 0 : i32
    %c0_i32_1 = arith.constant 0 : i32
    %c0_i32_2 = arith.constant 0 : i32
    return %arg0, %c0_i32, %c0_i32_0, %c0_i32_1 : i32, i32, i32, i32
  }
  func.func @transform_2(%arg0: i32) -> (i32, i32, i32) {
    %c0_i32 = arith.constant 0 : i32
    %c0_i32_0 = arith.constant 0 : i32
    %c0_i32_1 = arith.constant 0 : i32
    return %arg0, %c0_i32, %c0_i32_0 : i32, i32, i32
  }
  func.func @transform_3(%arg0: i32) -> (i32, i32) {
    %c0_i32 = arith.constant 0 : i32
    %c0_i32_0 = arith.constant 0 : i32
    %c0_i32_1 = arith.constant 0 : i32
    return %c0_i32, %c0_i32_0 : i32, i32
  }
  func.func @transform_4(%arg0: i32) -> (i32, i32) {
    %c0_i32 = arith.constant 0 : i32
    %c0_i32_0 = arith.constant 0 : i32
    %c0_i32_1 = arith.constant 0 : i32
    return %c0_i32, %c0_i32_0 : i32, i32
  }
  func.func @transform_5(%arg0: i32) -> i32 {
    %c0_i32 = arith.constant 0 : i32
    %c0_i32_0 = arith.constant 0 : i32
    return %c0_i32 : i32
  }
  func.func @transform_6(%arg0: i32) -> (i32, i32, i32, i32) {
    %c0_i32 = arith.constant 0 : i32
    %c0_i32_0 = arith.constant 0 : i32
    %c0_i32_1 = arith.constant 0 : i32
    %c0_i32_2 = arith.constant 0 : i32
    return %arg0, %c0_i32, %c0_i32_0, %c0_i32_1 : i32, i32, i32, i32
  }
}

</mosaic_0001>

<llo_original>
// kernel: bottleneck_forward.3
$region0: #{bottleneck_forward.3}
  #allocation0 [shape = 'u32[]', space=smem, size = 0x4, offset = 0x4, fixed_abs, tag = 'smem constant byte address 0x4 - core index']
  #allocation1 [shape = 'u32[144,128]{1,0:T(1,128)}', space=vmem, size = 0x12000, scoped, tag = 'internal scratch']
  #allocation2 [shape = 'f32[22,128]{1,0:T(8,128)}', space=vmem, size = 0x3000, scoped, tag = 'scratch operand']
  #allocation3 [shape = 'f32[22,128]{1,0:T(8,128)}', space=vmem, size = 0x3000, scoped, tag = 'scratch operand']
  %s0 = inlined_call_operand.vmem [shape: bf16[2,16,16,16], index: 0, kind: input, shape index: {}]
  %s1 = inlined_call_operand.vmem [shape: bf16[2,16,16,16], index: 1, kind: input, shape index: {}]
  %s2 = inlined_call_operand.vmem [shape: f32[2,2,16], index: 2, kind: input, shape index: {}]
  %s3 = inlined_call_operand.vmem [shape: bf16[16,2], index: 3, kind: input, shape index: {}]
  %s4 = inlined_call_operand.vmem [shape: bf16[2,16], index: 4, kind: input, shape index: {}]
  %s5 = inlined_call_operand.vmem [shape: f32[98], index: 5, kind: input, shape index: {}]
  %s6 = inlined_call_operand.vmem [shape: bf16[2,16,16,16], index: 6, kind: output, shape index: {}]
  %s7 = sld [smem:[#allocation0]]
  $region61: #{bottleneck_forward.3} parent=0
    _
  %s9 = ssub.s32 1, %s7
  %s10 = scalar_select 0, %s9, %s7
  $region1: #{bottleneck_forward.3} parent=0
    #allocation4 [shape = 'u8[512]{0}', space=smem, size = 0x200, scoped, tag = 'input window, operand 5, single buffered']
    #allocation5 [shape = 's32[2]{0}', space=sflag, size = 0x8, scoped, tag = 'scoped memory for bottleneck_forward.3']
    %11 = vsyncpa [#allocation5], 0
    loop: start=0, step=1, limit=4
    $region2: #{bottleneck_forward.3} parent=1 // loop_pre_header
      _
    $region3: #{bottleneck_forward.3} parent=1 // loop_header
      %s13 = sphi 0, %s17
      %p14 = scmp.ge.s32.totalorder %s13, 4
      %s23 = sphi 0, %s25
      %s26 = sphi 0, %s23
      %s27 = sphi 0, %s26
      %s43 = sphi 0, %s27
      %s49 = sphi 0, %s51
      %s52 = sphi 0, %s49
      %s53 = sphi 0, %s52
      %s69 = sphi 0, %s53
      %s75 = sphi 0, %s77
      %s78 = sphi 0, %s75
      %s79 = sphi 0, %s78
      %s95 = sphi 0, %s79
      %s99 = sphi 0, %s99
      %s101 = sphi 0, %s99
      %s102 = sphi 0, %s101
      %s116 = sphi 0, %s102
      %s120 = sphi 0, %s120
      %s122 = sphi 0, %s120
      %s123 = sphi 0, %s122
      %s137 = sphi 0, %s123
      %s141 = sphi 0, %s141
      %s143 = sphi 0, %s141
      %s144 = sphi 0, %s143
      %s158 = sphi 0, %s144
      %s164 = sphi 0, %s166
      %s167 = sphi 0, %s164
      %s168 = sphi 0, %s167
      %s184 = sphi 0, %s168
    $region4: #{bottleneck_forward.3} parent=1 // loop_header_branch
      %16 = sbr.rel (%p14) target = $region8
    $region5: #{bottleneck_forward.3} parent=1 // loop_body
      %s18 = ssub.s32 %s13, 1
      %s19 = ssub.s32 %s13, 2
      %s20 = sadd.s32 %s13, 1
      %s21 = ssub.s32 %s13, %s20
      %p22 = scmp.eq.s32.totalorder %s21, 0
      %s24 = sadd.s32 %s23, 1
      %s25 = scalar_select %p22, %s23, %s24
      %p28 = pneg %p22
      %p29 = scmp.eq.s32.totalorder %s13, 1
      %p30 = por %p28, %p29
      %p31 = scmp.ne.s32.totalorder %s23, %s26
      %p32 = scmp.eq.s32.totalorder %s13, 0
      %p33 = por %p31, %p32
      %p34 = scmp.ne.s32.totalorder %s23, %s26
      %p35 = scmp.eq.s32.totalorder %s18, 1
      %p36 = por %p34, %p35
      %p37 = scmp.ne.s32.totalorder %s26, %s27
      %p38 = scmp.eq.s32.totalorder %s18, 0
      %p39 = por %p37, %p38
      %p40 = scmp.ne.s32.totalorder %s26, %s27
      %p41 = scmp.eq.s32.totalorder %s19, 1
      %p42 = por %p40, %p41
      %p44 = scmp.ne.s32.totalorder %s27, %s43
      %p45 = scmp.eq.s32.totalorder %s19, 0
      %p46 = por %p44, %p45
      %s47 = ssub.s32 %s13, %s20
      %p48 = scmp.eq.s32.totalorder %s47, 0
      %s50 = sadd.s32 %s49, 1
      %s51 = scalar_select %p48, %s49, %s50
      %p54 = pneg %p48
      %p55 = scmp.eq.s32.totalorder %s13, 1
      %p56 = por %p54, %p55
      %p57 = scmp.ne.s32.totalorder %s49, %s52
      %p58 = scmp.eq.s32.totalorder %s13, 0
      %p59 = por %p57, %p58
      %p60 = scmp.ne.s32.totalorder %s49, %s52
      %p61 = scmp.eq.s32.totalorder %s18, 1
      %p62 = por %p60, %p61
      %p63 = scmp.ne.s32.totalorder %s52, %s53
      %p64 = scmp.eq.s32.totalorder %s18, 0
      %p65 = por %p63, %p64
      %p66 = scmp.ne.s32.totalorder %s52, %s53
      %p67 = scmp.eq.s32.totalorder %s19, 1
      %p68 = por %p66, %p67
      %p70 = scmp.ne.s32.totalorder %s53, %s69
      %p71 = scmp.eq.s32.totalorder %s19, 0
      %p72 = por %p70, %p71
      %s73 = ssub.s32 %s13, %s20
      %p74 = scmp.eq.s32.totalorder %s73, 0
      %s76 = sadd.s32 %s75, 1
      %s77 = scalar_select %p74, %s75, %s76
      %p80 = pneg %p74
      %p81 = scmp.eq.s32.totalorder %s13, 1
      %p82 = por %p80, %p81
      %p83 = scmp.ne.s32.totalorder %s75, %s78
      %p84 = scmp.eq.s32.totalorder %s13, 0
      %p85 = por %p83, %p84
      %p86 = scmp.ne.s32.totalorder %s75, %s78
      %p87 = scmp.eq.s32.totalorder %s18, 1
      %p88 = por %p86, %p87
      %p89 = scmp.ne.s32.totalorder %s78, %s79
      %p90 = scmp.eq.s32.totalorder %s18, 0
      %p91 = por %p89, %p90
      %p92 = scmp.ne.s32.totalorder %s78, %s79
      %p93 = scmp.eq.s32.totalorder %s19, 1
      %p94 = por %p92, %p93
      %p96 = scmp.ne.s32.totalorder %s79, %s95
      %p97 = scmp.eq.s32.totalorder %s19, 0
      %p98 = por %p96, %p97
      %s100 = sadd.s32 %s99, 1
      %p103 = scmp.eq.s32.totalorder %s13, 1
      %p104 = scmp.ne.s32.totalorder %s99, %s101
      %p105 = scmp.eq.s32.totalorder %s13, 0
      %p106 = por %p104, %p105
      %p107 = scmp.ne.s32.totalorder %s99, %s101
      %p108 = scmp.eq.s32.totalorder %s18, 1
      %p109 = por %p107, %p108
      %p110 = scmp.ne.s32.totalorder %s101, %s102
      %p111 = scmp.eq.s32.totalorder %s18, 0
      %p112 = por %p110, %p111
      %p113 = scmp.ne.s32.totalorder %s101, %s102
      %p114 = scmp.eq.s32.totalorder %s19, 1
      %p115 = por %p113, %p114
      %p117 = scmp.ne.s32.totalorder %s102, %s116
      %p118 = scmp.eq.s32.totalorder %s19, 0
      %p119 = por %p117, %p118
      %s121 = sadd.s32 %s120, 1
      %p124 = scmp.eq.s32.totalorder %s13, 1
      %p125 = scmp.ne.s32.totalorder %s120, %s122
      %p126 = scmp.eq.s32.totalorder %s13, 0
      %p127 = por %p125, %p126
      %p128 = scmp.ne.s32.totalorder %s120, %s122
      %p129 = scmp.eq.s32.totalorder %s18, 1
      %p130 = por %p128, %p129
      %p131 = scmp.ne.s32.totalorder %s122, %s123
      %p132 = scmp.eq.s32.totalorder %s18, 0
      %p133 = por %p131, %p132
      %p134 = scmp.ne.s32.totalorder %s122, %s123
      %p135 = scmp.eq.s32.totalorder %s19, 1
      %p136 = por %p134, %p135
      %p138 = scmp.ne.s32.totalorder %s123, %s137
      %p139 = scmp.eq.s32.totalorder %s19, 0
      %p140 = por %p138, %p139
      %s142 = sadd.s32 %s141, 1
      %p145 = scmp.eq.s32.totalorder %s13, 1
      %p146 = scmp.ne.s32.totalorder %s141, %s143
      %p147 = scmp.eq.s32.totalorder %s13, 0
      %p148 = por %p146, %p147
      %p149 = scmp.ne.s32.totalorder %s141, %s143
      %p150 = scmp.eq.s32.totalorder %s18, 1
      %p151 = por %p149, %p150
      %p152 = scmp.ne.s32.totalorder %s143, %s144
      %p153 = scmp.eq.s32.totalorder %s18, 0
      %p154 = por %p152, %p153
      %p155 = scmp.ne.s32.totalorder %s143, %s144
      %p156 = scmp.eq.s32.totalorder %s19, 1
      %p157 = por %p155, %p156
      %p159 = scmp.ne.s32.totalorder %s144, %s158
      %p160 = scmp.eq.s32.totalorder %s19, 0
      %p161 = por %p159, %p160
      %s162 = ssub.s32 %s13, %s20
      %p163 = scmp.eq.s32.totalorder %s162, 0
      %s165 = sadd.s32 %s164, 1
      %s166 = scalar_select %p163, %s164, %s165
      %p169 = pneg %p163
      %p170 = scmp.eq.s32.totalorder %s13, 1
      %p171 = por %p169, %p170
      %p172 = scmp.ne.s32.totalorder %s164, %s167
      %p173 = scmp.eq.s32.totalorder %s13, 0
      %p174 = por %p172, %p173
      %p175 = scmp.ne.s32.totalorder %s164, %s167
      %p176 = scmp.eq.s32.totalorder %s18, 1
      %p177 = por %p175, %p176
      %p178 = scmp.ne.s32.totalorder %s167, %s168
      %p179 = scmp.eq.s32.totalorder %s18, 0
      %p180 = por %p178, %p179
      %p181 = scmp.ne.s32.totalorder %s167, %s168
      %p182 = scmp.eq.s32.totalorder %s19, 1
      %p183 = por %p181, %p182
      %p185 = scmp.ne.s32.totalorder %s168, %s184
      %p186 = scmp.eq.s32.totalorder %s19, 0
      %p187 = por %p185, %p186
      %p188 = scmp.le.s32.totalorder 1, %s13
      %p189 = scmp.lt.s32.totalorder %s13, 3
      %p190 = pnand %p188, %p189
      %p191 = pneg %p190
      // Predicated region
      $region9: #{bottleneck_forward.3} parent=5 // pred_check
        _
      $region10: #{bottleneck_forward.3} parent=5 // pred_check_branch
        %193 = sbr.rel (%p190) target = $region12
      $region11: #{bottleneck_forward.3} parent=5 // pred_region
        %s194 = ssub.s32 %s13, 1
        // Predicated region
        $region13: #{bottleneck_forward.3} parent=11 // pred_check
          %p195 = pneg %p112
        $region14: #{bottleneck_forward.3} parent=11 // pred_check_branch
          %197 = sbr.rel (%p195) target = $region16
        $region15: #{bottleneck_forward.3} parent=11 // pred_region
          _
        $region16: #{bottleneck_forward.3} parent=11 // pred_fallthru
          _
        // Predicated region
        $region17: #{bottleneck_forward.3} parent=11 // pred_check
          %p198 = pneg %p133
        $region18: #{bottleneck_forward.3} parent=11 // pred_check_branch
          %200 = sbr.rel (%p198) target = $region20
        $region19: #{bottleneck_forward.3} parent=11 // pred_region
          _
        $region20: #{bottleneck_forward.3} parent=11 // pred_fallthru
          _
        // Predicated region
        $region21: #{bottleneck_forward.3} parent=11 // pred_check
          %p201 = pneg %p154
        $region22: #{bottleneck_forward.3} parent=11 // pred_check_branch
          %203 = sbr.rel (%p201) target = $region24
        $region23: #{bottleneck_forward.3} parent=11 // pred_region
          %s205 = ssub.s32 16, 16
          %206 = vsyncadd [#allocation5], %s205
          %s208 = sshll.u32 %s5, 4
          %s209 = int_to_ptr.vmem [resolvable:$true] %s208
          %211 = dma.vmem_to_smem %s209, 16, [#allocation4], [#allocation5]
        $region24: #{bottleneck_forward.3} parent=11 // pred_fallthru
          _
      $region12: #{bottleneck_forward.3} parent=5 // pred_fallthru
        _
      %p212 = scmp.lt.s32.totalorder %s13, 2
      // Predicated region
      $region25: #{bottleneck_forward.3} parent=5 // pred_check
        %p213 = pneg %p212
      $region26: #{bottleneck_forward.3} parent=5 // pred_check_branch
        %215 = sbr.rel (%p213) target = $region28
      $region27: #{bottleneck_forward.3} parent=5 // pred_region
        // Predicated region
        $region29: #{bottleneck_forward.3} parent=27 // pred_check
          %p216 = pneg %p33
        $region30: #{bottleneck_forward.3} parent=27 // pred_check_branch
          %218 = sbr.rel (%p216) target = $region32
        $region31: #{bottleneck_forward.3} parent=27 // pred_region
          %p219 = scmp.lt.s32.totalorder %s13, 1
          %s220 = scalar_select %p219, %s13, 1
          %s221 = smul.addr %s220, 32
          %s222 = smul.addr %s221, 4
          %s223 = scalar_lea.vmem %s0, %s222
        $region32: #{bottleneck_forward.3} parent=27 // pred_fallthru
          _
        // Predicated region
        $region33: #{bottleneck_forward.3} parent=27 // pred_check
          %p224 = pneg %p59
        $region34: #{bottleneck_forward.3} parent=27 // pred_check_branch
          %226 = sbr.rel (%p224) target = $region36
        $region35: #{bottleneck_forward.3} parent=27 // pred_region
          %p227 = scmp.lt.s32.totalorder %s13, 1
          %s228 = scalar_select %p227, %s13, 1
          %s229 = smul.addr %s228, 32
          %s230 = smul.addr %s229, 4
          %s231 = scalar_lea.vmem %s1, %s230
        $region36: #{bottleneck_forward.3} parent=27 // pred_fallthru
          _
        // Predicated region
        $region37: #{bottleneck_forward.3} parent=27 // pred_check
          %p232 = pneg %p85
        $region38: #{bottleneck_forward.3} parent=27 // pred_check_branch
          %234 = sbr.rel (%p232) target = $region40
        $region39: #{bottleneck_forward.3} parent=27 // pred_region
          %p235 = scmp.lt.s32.totalorder %s13, 1
          %s236 = scalar_select %p235, %s13, 1
          %s237 = smul.addr %s236, 2
          %s238 = scalar_lea.vmem %s2, %s237
        $region40: #{bottleneck_forward.3} parent=27 // pred_fallthru
          _
      $region28: #{bottleneck_forward.3} parent=5 // pred_fallthru
        _
      %p239 = scmp.le.s32.totalorder 1, %s13
      %p240 = scmp.lt.s32.totalorder %s13, 3
      %p241 = pnand %p239, %p240
      %p242 = pneg %p241
      // Predicated region
      $region41: #{bottleneck_forward.3} parent=5 // pred_check
        _
      $region42: #{bottleneck_forward.3} parent=5 // pred_check_branch
        %244 = sbr.rel (%p241) target = $region44
      $region43: #{bottleneck_forward.3} parent=5 // pred_region
        %s245 = ssub.s32 %s13, 1
        // Predicated region
        $region45: #{bottleneck_forward.3} parent=43 // pred_check
          %p246 = pneg %p154
        $region46: #{bottleneck_forward.3} parent=43 // pred_check_branch
          %248 = sbr.rel (%p246) target = $region48
        $region47: #{bottleneck_forward.3} parent=43 // pred_region
          %249 = dma.done [#allocation5], 16
        $region48: #{bottleneck_forward.3} parent=43 // pred_fallthru
          _
        %250 = sfence
        %p251 = scmp.lt.s32.totalorder %s18, 1
        %s252 = scalar_select %p251, %s18, 1
        %s253 = smul.addr %s252, 32
        %s254 = smul.addr %s253, 4
        %s255 = scalar_lea.vmem %s0, %s254
        %p256 = pneg %p39
        %p257 = pneg %p36
        %p258 = scmp.lt.s32.totalorder %s18, 1
        %s259 = scalar_select %p258, %s18, 1
        %s260 = smul.addr %s259, 32
        %s261 = smul.addr %s260, 4
        %s262 = scalar_lea.vmem %s1, %s261
        %p263 = pneg %p65
        %p264 = pneg %p62
        %p265 = scmp.lt.s32.totalorder %s18, 1
        %s266 = scalar_select %p265, %s18, 1
        %s267 = smul.addr %s266, 2
        %s268 = scalar_lea.vmem %s2, %s267
        %p269 = pneg %p91
        %p270 = pneg %p88
        %p271 = pneg %p112
        %p272 = pneg %p109
        %p273 = pneg %p133
        %p274 = pneg %p130
        %p275 = pneg %p154
        %p276 = pneg %p151
        %p277 = pneg %p180
        %p278 = pneg %p177
        %p279 = scmp.lt.s32.totalorder %s18, 1
        %s280 = scalar_select %p279, %s18, 1
        %s281 = smul.addr %s280, 32
        %s282 = smul.addr %s281, 4
        %s283 = scalar_lea.vmem %s6, %s282
        %p284 = scmp.lt.s32.totalorder %s18, 1
        %s285 = scalar_select %p284, %s18, 1
        %s286 = smul.addr %s285, 32
        %s287 = smul.addr %s286, 4
        %s288 = scalar_lea.vmem %s0, %s287
        %p289 = scmp.lt.s32.totalorder %s18, 1
        %s290 = scalar_select %p289, %s18, 1
        %s291 = smul.addr %s290, 32
        %s292 = smul.addr %s291, 4
        %s293 = scalar_lea.vmem %s1, %s292
        %p294 = scmp.lt.s32.totalorder %s18, 1
        %s295 = scalar_select %p294, %s18, 1
        %s296 = smul.addr %s295, 2
        %s297 = scalar_lea.vmem %s2, %s296
        %p298 = scmp.lt.s32.totalorder %s18, 1
        %s299 = scalar_select %p298, %s18, 1
        %s300 = smul.addr %s299, 32
        %s301 = smul.addr %s300, 4
        %s302 = scalar_lea.vmem %s6, %s301
        %v304 = vld [vmem:[%s297] sm:$0x3]
        %v305 = vpack.c.bf16 %v304, %v304
        %v306 = vld [vmem:[%s3] sm:$0xf]
        %v307 = vld [vmem:[%s3 + $0x4] sm:$0xf]
        %v310 = vunpack.c.l.b16 %v306
        %v311 = vunpack.c.l.b16 %v307
        %v312 = vpack.c.b16 %v311, %v310
        %vm314 = vcmask 130048
        %v316 = vsel %vm314, %v305, 0
        %318 = vmatprep.subr.bf16.mxu0 0
        %319 = vmatpush1.bf16.msra.mxu0 %v312
        %320 = vmatprep.subr.bf16.mxu0 0
        %321 = vmatpush1.bf16.msra.mxu0 0
        %322 = vmatprep.subr.bf16.mxu0 0
        %323 = vmatpush1.bf16.msra.mxu0 0
        %324 = vmatprep.subr.bf16.mxu0 0
        %325 = vmatpush1.bf16.msra.mxu0 0
        %326 = vmatprep.subr.bf16.mxu0 0
        %327 = vmatpush1.bf16.msra.mxu0 0
        %328 = vmatprep.subr.bf16.mxu0 0
        %329 = vmatpush1.bf16.msra.mxu0 0
        %330 = vmatprep.subr.bf16.mxu0 0
        %331 = vmatpush1.bf16.msra.mxu0 0
        %332 = vmatprep.subr.bf16.mxu0 0
        %333 = vmatpush1.bf16.msra.mxu0 0
        %334 = vmatprep.subr.bf16.mxu0 0
        %335 = vmatpush1.bf16.msra.mxu0 0
        %336 = vmatprep.subr.bf16.mxu0 0
        %337 = vmatpush1.bf16.msra.mxu0 0
        %338 = vmatprep.subr.bf16.mxu0 0
        %339 = vmatpush1.bf16.msra.mxu0 0
        %340 = vmatprep.subr.bf16.mxu0 0
        %341 = vmatpush1.bf16.msra.mxu0 0
        %342 = vmatprep.subr.bf16.mxu0 0
        %343 = vmatpush1.bf16.msra.mxu0 0
        %344 = vmatprep.subr.bf16.mxu0 0
        %345 = vmatpush1.bf16.msra.mxu0 0
        %346 = vmatprep.subr.bf16.mxu0 0
        %347 = vmatpush1.bf16.msra.mxu0 0
        %348 = vmatprep.subr.bf16.mxu0 0
        %349 = vmatpush1.bf16.msra.mxu0 0
        %350 = vmatprep.mubr.bf16.mxu0 0
        %351 = vmatmul.mubr.bf16.gmra.mrb[0].mxu0 %v316
        %v352 = vpop.f32.mrb[0].mxu0
        %v353 = vadd.f32 0.0, %v352
        %v354 = vpop.f32.mrb[0].mxu0
        %v355 = vpop.f32.mrb[0].mxu0
        %v356 = vpop.f32.mrb[0].mxu0
        %357 = vdwg.mxu0
        %v358 = vmax.f32 %v353, 0.0
        %v359 = vpack.c.bf16 %v358, %v358
        %v360 = vld [vmem:[%s4] sm:$0x1]
        %vm361 = vcmask 15360
        %v363 = vsel %vm361, %v359, 0
        %vm365 = vcmask 1040384
        %v367 = vsel %vm365, %v360, 0
        %369 = vmatprep.subr.bf16.mxu0 0
        %370 = vmatpush1.bf16.msra.mxu0 %v367
        %371 = vmatprep.subr.bf16.mxu0 0
        %372 = vmatpush1.bf16.msra.mxu0 0
        %373 = vmatprep.subr.bf16.mxu0 0
        %374 = vmatpush1.bf16.msra.mxu0 0
        %375 = vmatprep.subr.bf16.mxu0 0
        %376 = vmatpush1.bf16.msra.mxu0 0
        %377 = vmatprep.subr.bf16.mxu0 0
        %378 = vmatpush1.bf16.msra.mxu0 0
        %379 = vmatprep.subr.bf16.mxu0 0
        %380 = vmatpush1.bf16.msra.mxu0 0
        %381 = vmatprep.subr.bf16.mxu0 0
        %382 = vmatpush1.bf16.msra.mxu0 0
        %383 = vmatprep.subr.bf16.mxu0 0
        %384 = vmatpush1.bf16.msra.mxu0 0
        %385 = vmatprep.subr.bf16.mxu0 0
        %386 = vmatpush1.bf16.msra.mxu0 0
        %387 = vmatprep.subr.bf16.mxu0 0
        %388 = vmatpush1.bf16.msra.mxu0 0
        %389 = vmatprep.subr.bf16.mxu0 0
        %390 = vmatpush1.bf16.msra.mxu0 0
        %391 = vmatprep.subr.bf16.mxu0 0
        %392 = vmatpush1.bf16.msra.mxu0 0
        %393 = vmatprep.subr.bf16.mxu0 0
        %394 = vmatpush1.bf16.msra.mxu0 0
        %395 = vmatprep.subr.bf16.mxu0 0
        %396 = vmatpush1.bf16.msra.mxu0 0
        %397 = vmatprep.subr.bf16.mxu0 0
        %398 = vmatpush1.bf16.msra.mxu0 0
        %399 = vmatprep.subr.bf16.mxu0 0
        %400 = vmatpush1.bf16.msra.mxu0 0
        %401 = vmatprep.mubr.bf16.mxu0 0
        %402 = vmatmul.mubr.bf16.gmra.mrb[0].mxu0 %v363
        %v403 = vpop.f32.mrb[0].mxu0
        %v404 = vadd.f32 0.0, %v403
        %v405 = vpop.f32.mrb[0].mxu0
        %v406 = vpop.f32.mrb[0].mxu0
        %v407 = vpop.f32.mrb[0].mxu0
        %408 = vdwg.mxu0
        %v410 = vrot.slane %v404, 1
        %v412 = vadd.f32 %v404, %v410
        %v413 = vxor.u32 %v412, 2147483648
        %v414 = vmul.f32 %v413, 1.442695
        %v415 = vpow.pop %v414
        %v416 = vadd.f32 %v415, 1.0
        %v417 = vrcp.pop %v416
        %v418 = vmul.f32 1.0, %v417
        %v419 = vld [vmem:[%s288] sm:$0xf]
        %v420 = vld [vmem:[%s288 + $0x4] sm:$0xf]
        %v421 = vld [vmem:[%s288 + $0x8] sm:$0xf]
        %v422 = vld [vmem:[%s288 + $0xc] sm:$0xf]
        %v423 = vld [vmem:[%s288 + $0x10] sm:$0xf]
        %v424 = vld [vmem:[%s288 + $0x14] sm:$0xf]
        %v425 = vld [vmem:[%s288 + $0x18] sm:$0xf]
        %v426 = vld [vmem:[%s288 + $0x1c] sm:$0xf]
        %v427 = vld [vmem:[%s288 + $0x20] sm:$0xf]
        %v428 = vld [vmem:[%s288 + $0x24] sm:$0xf]
        %v429 = vld [vmem:[%s288 + $0x28] sm:$0xf]
        %v430 = vld [vmem:[%s288 + $0x2c] sm:$0xf]
        %v431 = vld [vmem:[%s288 + $0x30] sm:$0xf]
        %v432 = vld [vmem:[%s288 + $0x34] sm:$0xf]
        %v433 = vld [vmem:[%s288 + $0x38] sm:$0xf]
        %v434 = vld [vmem:[%s288 + $0x3c] sm:$0xf]
        %v435 = vld [vmem:[%s288 + $0x40] sm:$0xf]
        %v436 = vld [vmem:[%s288 + $0x44] sm:$0xf]
        %v437 = vld [vmem:[%s288 + $0x48] sm:$0xf]
        %v438 = vld [vmem:[%s288 + $0x4c] sm:$0xf]
        %v439 = vld [vmem:[%s288 + $0x50] sm:$0xf]
        %v440 = vld [vmem:[%s288 + $0x54] sm:$0xf]
        %v441 = vld [vmem:[%s288 + $0x58] sm:$0xf]
        %v442 = vld [vmem:[%s288 + $0x5c] sm:$0xf]
        %v443 = vld [vmem:[%s288 + $0x60] sm:$0xf]
        %v444 = vld [vmem:[%s288 + $0x64] sm:$0xf]
        %v445 = vld [vmem:[%s288 + $0x68] sm:$0xf]
        %v446 = vld [vmem:[%s288 + $0x6c] sm:$0xf]
        %v447 = vld [vmem:[%s288 + $0x70] sm:$0xf]
        %v448 = vld [vmem:[%s288 + $0x74] sm:$0xf]
        %v449 = vld [vmem:[%s288 + $0x78] sm:$0xf]
        %v450 = vld [vmem:[%s288 + $0x7c] sm:$0xf]
        %v451 = vunpack.c.l.bf16 %v419
        %v452 = vunpack.c.l.bf16 %v420
        %v453 = vunpack.c.l.bf16 %v421
        %v454 = vunpack.c.l.bf16 %v422
        %v455 = vunpack.c.l.bf16 %v423
        %v456 = vunpack.c.l.bf16 %v424
        %v457 = vunpack.c.l.bf16 %v425
        %v458 = vunpack.c.l.bf16 %v426
        %v459 = vunpack.c.l.bf16 %v427
        %v460 = vunpack.c.l.bf16 %v428
        %v461 = vunpack.c.l.bf16 %v429
        %v462 = vunpack.c.l.bf16 %v430
        %v463 = vunpack.c.l.bf16 %v431
        %v464 = vunpack.c.l.bf16 %v432
        %v465 = vunpack.c.l.bf16 %v433
        %v466 = vunpack.c.l.bf16 %v434
        %v467 = vunpack.c.l.bf16 %v435
        %v468 = vunpack.c.l.bf16 %v436
        %v469 = vunpack.c.l.bf16 %v437
        %v470 = vunpack.c.l.bf16 %v438
        %v471 = vunpack.c.l.bf16 %v439
        %v472 = vunpack.c.l.bf16 %v440
        %v473 = vunpack.c.l.bf16 %v441
        %v474 = vunpack.c.l.bf16 %v442
        %v475 = vunpack.c.l.bf16 %v443
        %v476 = vunpack.c.l.bf16 %v444
        %v477 = vunpack.c.l.bf16 %v445
        %v478 = vunpack.c.l.bf16 %v446
        %v479 = vunpack.c.l.bf16 %v447
        %v480 = vunpack.c.l.bf16 %v448
        %v481 = vunpack.c.l.bf16 %v449
        %v482 = vunpack.c.l.bf16 %v450
        %v483 = vlaneseq
        %v484 = vshrl.u32 %v483, 7
        %v485 = vsub.s32 0, %v484
        %v486 = vrot.slane %v418, %v485
        %v487 = vmul.f32 %v451, %v486
        %v488 = vmul.f32 %v452, %v486
        %v489 = vmul.f32 %v453, %v486
        %v490 = vmul.f32 %v454, %v486
        %v491 = vmul.f32 %v455, %v486
        %v492 = vmul.f32 %v456, %v486
        %v493 = vmul.f32 %v457, %v486
        %v494 = vmul.f32 %v458, %v486
        %v495 = vmul.f32 %v459, %v486
        %v496 = vmul.f32 %v460, %v486
        %v497 = vmul.f32 %v461, %v486
        %v498 = vmul.f32 %v462, %v486
        %v499 = vmul.f32 %v463, %v486
        %v500 = vmul.f32 %v464, %v486
        %v501 = vmul.f32 %v465, %v486
        %v502 = vmul.f32 %v466, %v486
        %v503 = vmul.f32 %v467, %v486
        %v504 = vmul.f32 %v468, %v486
        %v505 = vmul.f32 %v469, %v486
        %v506 = vmul.f32 %v470, %v486
        %v507 = vmul.f32 %v471, %v486
        %v508 = vmul.f32 %v472, %v486
        %v509 = vmul.f32 %v473, %v486
        %v510 = vmul.f32 %v474, %v486
        %v511 = vmul.f32 %v475, %v486
        %v512 = vmul.f32 %v476, %v486
        %v513 = vmul.f32 %v477, %v486
        %v514 = vmul.f32 %v478, %v486
        %v515 = vmul.f32 %v479, %v486
        %v516 = vmul.f32 %v480, %v486
        %v517 = vmul.f32 %v481, %v486
        %v518 = vmul.f32 %v482, %v486
        %519 = vst [vmem:[#allocation2] sm:$0xff] 0.0
        %520 = vst [vmem:[#allocation2 + $0x8] sm:$0xff] 0.0
        %521 = vst [vmem:[#allocation2 + $0x10] sm:$0x3f] 0.0
        %522 = vst [vmem:[#allocation3] sm:$0xff] 0.0
        %523 = vst [vmem:[#allocation3 + $0x8] sm:$0xff] 0.0
        %524 = vst [vmem:[#allocation3 + $0x10] sm:$0x3f] 0.0
        %v525 = vsel %vm314, %v487, 0.0
        %526 = vadd.xlane.f32.xlu0 %v525
        %v527 = vpop.xlane.xlu0 %526
        %v528 = vsel %vm314, %v488, 0.0
        %529 = vadd.xlane.f32.xlu0 %v528
        %v530 = vpop.xlane.xlu0 %529
        %v531 = vsel %vm314, %v489, 0.0
        %532 = vadd.xlane.f32.xlu0 %v531
        %v533 = vpop.xlane.xlu0 %532
        %v534 = vsel %vm314, %v490, 0.0
        %535 = vadd.xlane.f32.xlu0 %v534
        %v536 = vpop.xlane.xlu0 %535
        %v537 = vsel %vm314, %v491, 0.0
        %538 = vadd.xlane.f32.xlu0 %v537
        %v539 = vpop.xlane.xlu0 %538
        %v540 = vsel %vm314, %v492, 0.0
        %541 = vadd.xlane.f32.xlu0 %v540
        %v542 = vpop.xlane.xlu0 %541
        %v543 = vsel %vm314, %v493, 0.0
        %544 = vadd.xlane.f32.xlu0 %v543
        %v545 = vpop.xlane.xlu0 %544
        %v546 = vsel %vm314, %v494, 0.0
        %547 = vadd.xlane.f32.xlu0 %v546
        %v548 = vpop.xlane.xlu0 %547
        %v549 = vsel %vm314, %v495, 0.0
        %550 = vadd.xlane.f32.xlu0 %v549
        %v551 = vpop.xlane.xlu0 %550
        %v552 = vsel %vm314, %v496, 0.0
        %553 = vadd.xlane.f32.xlu0 %v552
        %v554 = vpop.xlane.xlu0 %553
        %v555 = vsel %vm314, %v497, 0.0
        %556 = vadd.xlane.f32.xlu0 %v555
        %v557 = vpop.xlane.xlu0 %556
        %v558 = vsel %vm314, %v498, 0.0
        %559 = vadd.xlane.f32.xlu0 %v558
        %v560 = vpop.xlane.xlu0 %559
        %v561 = vsel %vm314, %v499, 0.0
        %562 = vadd.xlane.f32.xlu0 %v561
        %v563 = vpop.xlane.xlu0 %562
        %v564 = vsel %vm314, %v500, 0.0
        %565 = vadd.xlane.f32.xlu0 %v564
        %v566 = vpop.xlane.xlu0 %565
        %v567 = vsel %vm314, %v501, 0.0
        %568 = vadd.xlane.f32.xlu0 %v567
        %v569 = vpop.xlane.xlu0 %568
        %v570 = vsel %vm314, %v502, 0.0
        %571 = vadd.xlane.f32.xlu0 %v570
        %v572 = vpop.xlane.xlu0 %571
        %v573 = vsel %vm314, %v503, 0.0
        %574 = vadd.xlane.f32.xlu0 %v573
        %v575 = vpop.xlane.xlu0 %574
        %v576 = vsel %vm314, %v504, 0.0
        %577 = vadd.xlane.f32.xlu0 %v576
        %v578 = vpop.xlane.xlu0 %577
        %v579 = vsel %vm314, %v505, 0.0
        %580 = vadd.xlane.f32.xlu0 %v579
        %v581 = vpop.xlane.xlu0 %580
        %v582 = vsel %vm314, %v506, 0.0
        %583 = vadd.xlane.f32.xlu0 %v582
        %v584 = vpop.xlane.xlu0 %583
        %v585 = vsel %vm314, %v507, 0.0
        %586 = vadd.xlane.f32.xlu0 %v585
        %v587 = vpop.xlane.xlu0 %586
        %v588 = vsel %vm314, %v508, 0.0
        %589 = vadd.xlane.f32.xlu0 %v588
        %v590 = vpop.xlane.xlu0 %589
        %v591 = vsel %vm314, %v509, 0.0
        %592 = vadd.xlane.f32.xlu0 %v591
        %v593 = vpop.xlane.xlu0 %592
        %v594 = vsel %vm314, %v510, 0.0
        %595 = vadd.xlane.f32.xlu0 %v594
        %v596 = vpop.xlane.xlu0 %595
        %v597 = vsel %vm314, %v511, 0.0
        %598 = vadd.xlane.f32.xlu0 %v597
        %v599 = vpop.xlane.xlu0 %598
        %v600 = vsel %vm314, %v512, 0.0
        %601 = vadd.xlane.f32.xlu0 %v600
        %v602 = vpop.xlane.xlu0 %601
        %v603 = vsel %vm314, %v513, 0.0
        %604 = vadd.xlane.f32.xlu0 %v603
        %v605 = vpop.xlane.xlu0 %604
        %v606 = vsel %vm314, %v514, 0.0
        %607 = vadd.xlane.f32.xlu0 %v606
        %v608 = vpop.xlane.xlu0 %607
        %v609 = vsel %vm314, %v515, 0.0
        %610 = vadd.xlane.f32.xlu0 %v609
        %v611 = vpop.xlane.xlu0 %610
        %v612 = vsel %vm314, %v516, 0.0
        %613 = vadd.xlane.f32.xlu0 %v612
        %v614 = vpop.xlane.xlu0 %613
        %v615 = vsel %vm314, %v517, 0.0
        %616 = vadd.xlane.f32.xlu0 %v615
        %v617 = vpop.xlane.xlu0 %616
        %v618 = vsel %vm314, %v518, 0.0
        %619 = vadd.xlane.f32.xlu0 %v618
        %v620 = vpop.xlane.xlu0 %619
        %v621 = vrcp.pop 16.0
        %v622 = vmul.f32 %v527, %v621
        %v623 = vmul.f32 %v530, %v621
        %v624 = vmul.f32 %v533, %v621
        %v625 = vmul.f32 %v536, %v621
        %v626 = vmul.f32 %v539, %v621
        %v627 = vmul.f32 %v542, %v621
        %v628 = vmul.f32 %v545, %v621
        %v629 = vmul.f32 %v548, %v621
        %v630 = vmul.f32 %v551, %v621
        %v631 = vmul.f32 %v554, %v621
        %v632 = vmul.f32 %v557, %v621
        %v633 = vmul.f32 %v560, %v621
        %v634 = vmul.f32 %v563, %v621
        %v635 = vmul.f32 %v566, %v621
        %v636 = vmul.f32 %v569, %v621
        %v637 = vmul.f32 %v572, %v621
        %v638 = vmul.f32 %v575, %v621
        %v639 = vmul.f32 %v578, %v621
        %v640 = vmul.f32 %v581, %v621
        %v641 = vmul.f32 %v584, %v621
        %v642 = vmul.f32 %v587, %v621
        %v643 = vmul.f32 %v590, %v621
        %v644 = vmul.f32 %v593, %v621
        %v645 = vmul.f32 %v596, %v621
        %v646 = vmul.f32 %v599, %v621
        %v647 = vmul.f32 %v602, %v621
        %v648 = vmul.f32 %v605, %v621
        %v649 = vmul.f32 %v608, %v621
        %v650 = vmul.f32 %v611, %v621
        %v651 = vmul.f32 %v614, %v621
        %v652 = vmul.f32 %v617, %v621
        %v653 = vmul.f32 %v620, %v621
        %v686 = vlaneseq
        %v687 = vand.u32 %v686, 127
        %v688 = vadd.s32 %v687, 4294967293
        %v689 = vlaneseq
        %v690 = vshrl.u32 %v689, 7
        %v691 = vsub.s32 %v688, %v690
        %v692 = vrot.slane %v622, %v691
        %v693 = vadd.s32 %v687, 4294967285
        %v694 = vlaneseq
        %v695 = vshrl.u32 %v694, 7
        %v696 = vsub.s32 %v693, %v695
        %v697 = vrot.slane %v623, %v696
        %vm698 = vcmask 154712
        %v699 = vsel %vm698, %v697, %v692
        %v700 = vlaneseq
        %v701 = vshrl.u32 %v700, 7
        %v702 = vsub.s32 %v688, %v701
        %v703 = vrot.slane %v624, %v702
        %v704 = vlaneseq
        %v705 = vshrl.u32 %v704, 7
        %v706 = vsub.s32 %v693, %v705
        %v707 = vrot.slane %v625, %v706
        %v708 = vsel %vm698, %v707, %v703
        %v709 = vlaneseq
        %v710 = vshrl.u32 %v709, 7
        %v711 = vsub.s32 %v688, %v710
        %v712 = vrot.slane %v626, %v711
        %v713 = vlaneseq
        %v714 = vshrl.u32 %v713, 7
        %v715 = vsub.s32 %v693, %v714
        %v716 = vrot.slane %v627, %v715
        %v717 = vsel %vm698, %v716, %v712
        %v718 = vlaneseq
        %v719 = vshrl.u32 %v718, 7
        %v720 = vsub.s32 %v688, %v719
        %v721 = vrot.slane %v628, %v720
        %v722 = vlaneseq
        %v723 = vshrl.u32 %v722, 7
        %v724 = vsub.s32 %v693, %v723
        %v725 = vrot.slane %v629, %v724
        %v726 = vsel %vm698, %v725, %v721
        %v727 = vlaneseq
        %v728 = vshrl.u32 %v727, 7
        %v729 = vsub.s32 %v688, %v728
        %v730 = vrot.slane %v630, %v729
        %v731 = vlaneseq
        %v732 = vshrl.u32 %v731, 7
        %v733 = vsub.s32 %v693, %v732
        %v734 = vrot.slane %v631, %v733
        %v735 = vsel %vm698, %v734, %v730
        %v736 = vlaneseq
        %v737 = vshrl.u32 %v736, 7
        %v738 = vsub.s32 %v688, %v737
        %v739 = vrot.slane %v632, %v738
        %v740 = vlaneseq
        %v741 = vshrl.u32 %v740, 7
        %v742 = vsub.s32 %v693, %v741
        %v743 = vrot.slane %v633, %v742
        %v744 = vsel %vm698, %v743, %v739
        %v745 = vlaneseq
        %v746 = vshrl.u32 %v745, 7
        %v747 = vsub.s32 %v688, %v746
        %v748 = vrot.slane %v634, %v747
        %v749 = vlaneseq
        %v750 = vshrl.u32 %v749, 7
        %v751 = vsub.s32 %v693, %v750
        %v752 = vrot.slane %v635, %v751
        %v753 = vsel %vm698, %v752, %v748
        %v754 = vlaneseq
        %v755 = vshrl.u32 %v754, 7
        %v756 = vsub.s32 %v688, %v755
        %v757 = vrot.slane %v636, %v756
        %v758 = vlaneseq
        %v759 = vshrl.u32 %v758, 7
        %v760 = vsub.s32 %v693, %v759
        %v761 = vrot.slane %v637, %v760
        %v762 = vsel %vm698, %v761, %v757
        %v763 = vlaneseq
        %v764 = vshrl.u32 %v763, 7
        %v765 = vsub.s32 %v688, %v764
        %v766 = vrot.slane %v638, %v765
        %v767 = vlaneseq
        %v768 = vshrl.u32 %v767, 7
        %v769 = vsub.s32 %v693, %v768
        %v770 = vrot.slane %v639, %v769
        %v771 = vsel %vm698, %v770, %v766
        %v772 = vlaneseq
        %v773 = vshrl.u32 %v772, 7
        %v774 = vsub.s32 %v688, %v773
        %v775 = vrot.slane %v640, %v774
        %v776 = vlaneseq
        %v777 = vshrl.u32 %v776, 7
        %v778 = vsub.s32 %v693, %v777
        %v779 = vrot.slane %v641, %v778
        %v780 = vsel %vm698, %v779, %v775
        %v781 = vlaneseq
        %v782 = vshrl.u32 %v781, 7
        %v783 = vsub.s32 %v688, %v782
        %v784 = vrot.slane %v642, %v783
        %v785 = vlaneseq
        %v786 = vshrl.u32 %v785, 7
        %v787 = vsub.s32 %v693, %v786
        %v788 = vrot.slane %v643, %v787
        %v789 = vsel %vm698, %v788, %v784
        %v790 = vlaneseq
        %v791 = vshrl.u32 %v790, 7
        %v792 = vsub.s32 %v688, %v791
        %v793 = vrot.slane %v644, %v792
        %v794 = vlaneseq
        %v795 = vshrl.u32 %v794, 7
        %v796 = vsub.s32 %v693, %v795
        %v797 = vrot.slane %v645, %v796
        %v798 = vsel %vm698, %v797, %v793
        %v799 = vlaneseq
        %v800 = vshrl.u32 %v799, 7
        %v801 = vsub.s32 %v688, %v800
        %v802 = vrot.slane %v646, %v801
        %v803 = vlaneseq
        %v804 = vshrl.u32 %v803, 7
        %v805 = vsub.s32 %v693, %v804
        %v806 = vrot.slane %v647, %v805
        %v807 = vsel %vm698, %v806, %v802
        %v808 = vlaneseq
        %v809 = vshrl.u32 %v808, 7
        %v810 = vsub.s32 %v688, %v809
        %v811 = vrot.slane %v648, %v810
        %v812 = vlaneseq
        %v813 = vshrl.u32 %v812, 7
        %v814 = vsub.s32 %v693, %v813
        %v815 = vrot.slane %v649, %v814
        %v816 = vsel %vm698, %v815, %v811
        %v817 = vlaneseq
        %v818 = vshrl.u32 %v817, 7
        %v819 = vsub.s32 %v688, %v818
        %v820 = vrot.slane %v650, %v819
        %v821 = vlaneseq
        %v822 = vshrl.u32 %v821, 7
        %v823 = vsub.s32 %v693, %v822
        %v824 = vrot.slane %v651, %v823
        %v825 = vsel %vm698, %v824, %v820
        %v826 = vlaneseq
        %v827 = vshrl.u32 %v826, 7
        %v828 = vsub.s32 %v688, %v827
        %v829 = vrot.slane %v652, %v828
        %v830 = vlaneseq
        %v831 = vshrl.u32 %v830, 7
        %v832 = vsub.s32 %v693, %v831
        %v833 = vrot.slane %v653, %v832
        %v834 = vsel %vm698, %v833, %v829
        %vm835 = vcmask 1041409
        %v836 = vsel %vm835, %v708, %v699
        %vm837 = vcmask 1042434
        %v838 = vsel %vm837, %v717, %v836
        %vm839 = vcmask 1043459
        %v840 = vsel %vm839, %v726, %v838
        %vm841 = vcmask 1044484
        %v842 = vsel %vm841, %v735, %v840
        %vm843 = vcmask 1045509
        %v844 = vsel %vm843, %v744, %v842
        %vm845 = vcmask 1046534
        %v846 = vsel %vm845, %v753, %v844
        %vm847 = vcmask 1047559
        %v848 = vsel %vm847, %v762, %v846
        %v849 = vsel %vm835, %v780, %v771
        %v850 = vsel %vm837, %v789, %v849
        %v851 = vsel %vm839, %v798, %v850
        %v852 = vsel %vm841, %v807, %v851
        %v853 = vsel %vm843, %v816, %v852
        %v854 = vsel %vm845, %v825, %v853
        %v855 = vsel %vm847, %v834, %v854
        %vm858 = vcmask 154648
        %859 = vst.msk [vmem:[#allocation2 + $0x3] sm:$0xff] %vm858, %v848
        %860 = vst.msk [vmem:[#allocation2 + $0xb] sm:$0xff] %vm858, %v855
        %v861 = vsel %vm314, %v487, -inf
        %862 = vmax.xlane.f32.xlu0 %v861
        %v863 = vpop.xlane.xlu0 %862
        %v864 = vsel %vm314, %v488, -inf
        %865 = vmax.xlane.f32.xlu0 %v864
        %v866 = vpop.xlane.xlu0 %865
        %v867 = vsel %vm314, %v489, -inf
        %868 = vmax.xlane.f32.xlu0 %v867
        %v869 = vpop.xlane.xlu0 %868
        %v870 = vsel %vm314, %v490, -inf
        %871 = vmax.xlane.f32.xlu0 %v870
        %v872 = vpop.xlane.xlu0 %871
        %v873 = vsel %vm314, %v491, -inf
        %874 = vmax.xlane.f32.xlu0 %v873
        %v875 = vpop.xlane.xlu0 %874
        %v876 = vsel %vm314, %v492, -inf
        %877 = vmax.xlane.f32.xlu0 %v876
        %v878 = vpop.xlane.xlu0 %877
        %v879 = vsel %vm314, %v493, -inf
        %880 = vmax.xlane.f32.xlu0 %v879
        %v881 = vpop.xlane.xlu0 %880
        %v882 = vsel %vm314, %v494, -inf
        %883 = vmax.xlane.f32.xlu0 %v882
        %v884 = vpop.xlane.xlu0 %883
        %v885 = vsel %vm314, %v495, -inf
        %886 = vmax.xlane.f32.xlu0 %v885
        %v887 = vpop.xlane.xlu0 %886
        %v888 = vsel %vm314, %v496, -inf
        %889 = vmax.xlane.f32.xlu0 %v888
        %v890 = vpop.xlane.xlu0 %889
        %v891 = vsel %vm314, %v497, -inf
        %892 = vmax.xlane.f32.xlu0 %v891
        %v893 = vpop.xlane.xlu0 %892
        %v894 = vsel %vm314, %v498, -inf
        %895 = vmax.xlane.f32.xlu0 %v894
        %v896 = vpop.xlane.xlu0 %895
        %v897 = vsel %vm314, %v499, -inf
        %898 = vmax.xlane.f32.xlu0 %v897
        %v899 = vpop.xlane.xlu0 %898
        %v900 = vsel %vm314, %v500, -inf
        %901 = vmax.xlane.f32.xlu0 %v900
        %v902 = vpop.xlane.xlu0 %901
        %v903 = vsel %vm314, %v501, -inf
        %904 = vmax.xlane.f32.xlu0 %v903
        %v905 = vpop.xlane.xlu0 %904
        %v906 = vsel %vm314, %v502, -inf
        %907 = vmax.xlane.f32.xlu0 %v906
        %v908 = vpop.xlane.xlu0 %907
        %v909 = vsel %vm314, %v503, -inf
        %910 = vmax.xlane.f32.xlu0 %v909
        %v911 = vpop.xlane.xlu0 %910
        %v912 = vsel %vm314, %v504, -inf
        %913 = vmax.xlane.f32.xlu0 %v912
        %v914 = vpop.xlane.xlu0 %913
        %v915 = vsel %vm314, %v505, -inf
        %916 = vmax.xlane.f32.xlu0 %v915
        %v917 = vpop.xlane.xlu0 %916
        %v918 = vsel %vm314, %v506, -inf
        %919 = vmax.xlane.f32.xlu0 %v918
        %v920 = vpop.xlane.xlu0 %919
        %v921 = vsel %vm314, %v507, -inf
        %922 = vmax.xlane.f32.xlu0 %v921
        %v923 = vpop.xlane.xlu0 %922
        %v924 = vsel %vm314, %v508, -inf
        %925 = vmax.xlane.f32.xlu0 %v924
        %v926 = vpop.xlane.xlu0 %925
        %v927 = vsel %vm314, %v509, -inf
        %928 = vmax.xlane.f32.xlu0 %v927
        %v929 = vpop.xlane.xlu0 %928
        %v930 = vsel %vm314, %v510, -inf
        %931 = vmax.xlane.f32.xlu0 %v930
        %v932 = vpop.xlane.xlu0 %931
        %v933 = vsel %vm314, %v511, -inf
        %934 = vmax.xlane.f32.xlu0 %v933
        %v935 = vpop.xlane.xlu0 %934
        %v936 = vsel %vm314, %v512, -inf
        %937 = vmax.xlane.f32.xlu0 %v936
        %v938 = vpop.xlane.xlu0 %937
        %v939 = vsel %vm314, %v513, -inf
        %940 = vmax.xlane.f32.xlu0 %v939
        %v941 = vpop.xlane.xlu0 %940
        %v942 = vsel %vm314, %v514, -inf
        %943 = vmax.xlane.f32.xlu0 %v942
        %v944 = vpop.xlane.xlu0 %943
        %v945 = vsel %vm314, %v515, -inf
        %946 = vmax.xlane.f32.xlu0 %v945
        %v947 = vpop.xlane.xlu0 %946
        %v948 = vsel %vm314, %v516, -inf
        %949 = vmax.xlane.f32.xlu0 %v948
        %v950 = vpop.xlane.xlu0 %949
        %v951 = vsel %vm314, %v517, -inf
        %952 = vmax.xlane.f32.xlu0 %v951
        %v953 = vpop.xlane.xlu0 %952
        %v954 = vsel %vm314, %v518, -inf
        %955 = vmax.xlane.f32.xlu0 %v954
        %v956 = vpop.xlane.xlu0 %955
        %v989 = vlaneseq
        %v990 = vshrl.u32 %v989, 7
        %v991 = vsub.s32 %v688, %v990
        %v992 = vrot.slane %v863, %v991
        %v993 = vlaneseq
        %v994 = vshrl.u32 %v993, 7
        %v995 = vsub.s32 %v693, %v994
        %v996 = vrot.slane %v866, %v995
        %v997 = vsel %vm698, %v996, %v992
        %v998 = vlaneseq
        %v999 = vshrl.u32 %v998, 7
        %v1000 = vsub.s32 %v688, %v999
        %v1001 = vrot.slane %v869, %v1000
        %v1002 = vlaneseq
        %v1003 = vshrl.u32 %v1002, 7
        %v1004 = vsub.s32 %v693, %v1003
        %v1005 = vrot.slane %v872, %v1004
        %v1006 = vsel %vm698, %v1005, %v1001
        %v1007 = vlaneseq
        %v1008 = vshrl.u32 %v1007, 7
        %v1009 = vsub.s32 %v688, %v1008
        %v1010 = vrot.slane %v875, %v1009
        %v1011 = vlaneseq
        %v1012 = vshrl.u32 %v1011, 7
        %v1013 = vsub.s32 %v693, %v1012
        %v1014 = vrot.slane %v878, %v1013
        %v1015 = vsel %vm698, %v1014, %v1010
        %v1016 = vlaneseq
        %v1017 = vshrl.u32 %v1016, 7
        %v1018 = vsub.s32 %v688, %v1017
        %v1019 = vrot.slane %v881, %v1018
        %v1020 = vlaneseq
        %v1021 = vshrl.u32 %v1020, 7
        %v1022 = vsub.s32 %v693, %v1021
        %v1023 = vrot.slane %v884, %v1022
        %v1024 = vsel %vm698, %v1023, %v1019
        %v1025 = vlaneseq
        %v1026 = vshrl.u32 %v1025, 7
        %v1027 = vsub.s32 %v688, %v1026
        %v1028 = vrot.slane %v887, %v1027
        %v1029 = vlaneseq
        %v1030 = vshrl.u32 %v1029, 7
        %v1031 = vsub.s32 %v693, %v1030
        %v1032 = vrot.slane %v890, %v1031
        %v1033 = vsel %vm698, %v1032, %v1028
        %v1034 = vlaneseq
        %v1035 = vshrl.u32 %v1034, 7
        %v1036 = vsub.s32 %v688, %v1035
        %v1037 = vrot.slane %v893, %v1036
        %v1038 = vlaneseq
        %v1039 = vshrl.u32 %v1038, 7
        %v1040 = vsub.s32 %v693, %v1039
        %v1041 = vrot.slane %v896, %v1040
        %v1042 = vsel %vm698, %v1041, %v1037
        %v1043 = vlaneseq
        %v1044 = vshrl.u32 %v1043, 7
        %v1045 = vsub.s32 %v688, %v1044
        %v1046 = vrot.slane %v899, %v1045
        %v1047 = vlaneseq
        %v1048 = vshrl.u32 %v1047, 7
        %v1049 = vsub.s32 %v693, %v1048
        %v1050 = vrot.slane %v902, %v1049
        %v1051 = vsel %vm698, %v1050, %v1046
        %v1052 = vlaneseq
        %v1053 = vshrl.u32 %v1052, 7
        %v1054 = vsub.s32 %v688, %v1053
        %v1055 = vrot.slane %v905, %v1054
        %v1056 = vlaneseq
        %v1057 = vshrl.u32 %v1056, 7
        %v1058 = vsub.s32 %v693, %v1057
        %v1059 = vrot.slane %v908, %v1058
        %v1060 = vsel %vm698, %v1059, %v1055
        %v1061 = vlaneseq
        %v1062 = vshrl.u32 %v1061, 7
        %v1063 = vsub.s32 %v688, %v1062
        %v1064 = vrot.slane %v911, %v1063
        %v1065 = vlaneseq
        %v1066 = vshrl.u32 %v1065, 7
        %v1067 = vsub.s32 %v693, %v1066
        %v1068 = vrot.slane %v914, %v1067
        %v1069 = vsel %vm698, %v1068, %v1064
        %v1070 = vlaneseq
        %v1071 = vshrl.u32 %v1070, 7
        %v1072 = vsub.s32 %v688, %v1071
        %v1073 = vrot.slane %v917, %v1072
        %v1074 = vlaneseq
        %v1075 = vshrl.u32 %v1074, 7
        %v1076 = vsub.s32 %v693, %v1075
        %v1077 = vrot.slane %v920, %v1076
        %v1078 = vsel %vm698, %v1077, %v1073
        %v1079 = vlaneseq
        %v1080 = vshrl.u32 %v1079, 7
        %v1081 = vsub.s32 %v688, %v1080
        %v1082 = vrot.slane %v923, %v1081
        %v1083 = vlaneseq
        %v1084 = vshrl.u32 %v1083, 7
        %v1085 = vsub.s32 %v693, %v1084
        %v1086 = vrot.slane %v926, %v1085
        %v1087 = vsel %vm698, %v1086, %v1082
        %v1088 = vlaneseq
        %v1089 = vshrl.u32 %v1088, 7
        %v1090 = vsub.s32 %v688, %v1089
        %v1091 = vrot.slane %v929, %v1090
        %v1092 = vlaneseq
        %v1093 = vshrl.u32 %v1092, 7
        %v1094 = vsub.s32 %v693, %v1093
        %v1095 = vrot.slane %v932, %v1094
        %v1096 = vsel %vm698, %v1095, %v1091
        %v1097 = vlaneseq
        %v1098 = vshrl.u32 %v1097, 7
        %v1099 = vsub.s32 %v688, %v1098
        %v1100 = vrot.slane %v935, %v1099
        %v1101 = vlaneseq
        %v1102 = vshrl.u32 %v1101, 7
        %v1103 = vsub.s32 %v693, %v1102
        %v1104 = vrot.slane %v938, %v1103
        %v1105 = vsel %vm698, %v1104, %v1100
        %v1106 = vlaneseq
        %v1107 = vshrl.u32 %v1106, 7
        %v1108 = vsub.s32 %v688, %v1107
        %v1109 = vrot.slane %v941, %v1108
        %v1110 = vlaneseq
        %v1111 = vshrl.u32 %v1110, 7
        %v1112 = vsub.s32 %v693, %v1111
        %v1113 = vrot.slane %v944, %v1112
        %v1114 = vsel %vm698, %v1113, %v1109
        %v1115 = vlaneseq
        %v1116 = vshrl.u32 %v1115, 7
        %v1117 = vsub.s32 %v688, %v1116
        %v1118 = vrot.slane %v947, %v1117
        %v1119 = vlaneseq
        %v1120 = vshrl.u32 %v1119, 7
        %v1121 = vsub.s32 %v693, %v1120
        %v1122 = vrot.slane %v950, %v1121
        %v1123 = vsel %vm698, %v1122, %v1118
        %v1124 = vlaneseq
        %v1125 = vshrl.u32 %v1124, 7
        %v1126 = vsub.s32 %v688, %v1125
        %v1127 = vrot.slane %v953, %v1126
        %v1128 = vlaneseq
        %v1129 = vshrl.u32 %v1128, 7
        %v1130 = vsub.s32 %v693, %v1129
        %v1131 = vrot.slane %v956, %v1130
        %v1132 = vsel %vm698, %v1131, %v1127
        %v1133 = vsel %vm835, %v1006, %v997
        %v1134 = vsel %vm837, %v1015, %v1133
        %v1135 = vsel %vm839, %v1024, %v1134
        %v1136 = vsel %vm841, %v1033, %v1135
        %v1137 = vsel %vm843, %v1042, %v1136
        %v1138 = vsel %vm845, %v1051, %v1137
        %v1139 = vsel %vm847, %v1060, %v1138
        %v1140 = vsel %vm835, %v1078, %v1069
        %v1141 = vsel %vm837, %v1087, %v1140
        %v1142 = vsel %vm839, %v1096, %v1141
        %v1143 = vsel %vm841, %v1105, %v1142
        %v1144 = vsel %vm843, %v1114, %v1143
        %v1145 = vsel %vm845, %v1123, %v1144
        %v1146 = vsel %vm847, %v1132, %v1145
        %1149 = vst.msk [vmem:[#allocation3 + $0x3] sm:$0xff] %vm858, %v1139
        %1150 = vst.msk [vmem:[#allocation3 + $0xb] sm:$0xff] %vm858, %v1146
        %v1151 = vld [vmem:[#allocation2] sm:$0xff]
        %v1152 = vld [vmem:[#allocation2 + $0x8] sm:$0xff]
        %s1153 = sld [smem:[#allocation4]]
        %v1154 = vstv %s1153
        %v1155 = vmul.f32 %v1151, %v1154
        %v1156 = vmul.f32 %v1152, %v1154
        %v1157 = vadd.f32 %v1155, 0.0
        %v1158 = vadd.f32 %v1156, 0.0
        %v1159 = vld [vmem:[#allocation3] sm:$0xff]
        %v1160 = vld [vmem:[#allocation3 + $0x8] sm:$0xff]
        %s1161 = sld [smem:[#allocation4 + $0x31]]
        %v1162 = vstv %s1161
        %v1163 = vmul.f32 %v1159, %v1162
        %v1164 = vmul.f32 %v1160, %v1162
        %v1165 = vadd.f32 %v1157, %v1163
        %v1166 = vadd.f32 %v1158, %v1164
        %s1167 = sld [smem:[#allocation4 + $0x1]]
        %v1168 = vstv %s1167
        %v1169 = vmul.f32 %v1151, %v1168
        %v1170 = vmul.f32 %v1152, %v1168
        %1173 = vrot.lane.b32.xlu0 %v1169, 127
        %v1174 = vpop.permute.xlu0 %1173
        %1175 = vrot.lane.b32.xlu0 %v1170, 127
        %v1176 = vpop.permute.xlu0 %1175
        %v1179 = vadd.f32 %v1165, %v1174
        %v1180 = vadd.f32 %v1166, %v1176
        %s1181 = sld [smem:[#allocation4 + $0x32]]
        %v1182 = vstv %s1181
        %v1183 = vmul.f32 %v1159, %v1182
        %v1184 = vmul.f32 %v1160, %v1182
        %1187 = vrot.lane.b32.xlu0 %v1183, 127
        %v1188 = vpop.permute.xlu0 %1187
        %1189 = vrot.lane.b32.xlu0 %v1184, 127
        %v1190 = vpop.permute.xlu0 %1189
        %v1193 = vadd.f32 %v1179, %v1188
        %v1194 = vadd.f32 %v1180, %v1190
        %s1195 = sld [smem:[#allocation4 + $0x2]]
        %v1196 = vstv %s1195
        %v1197 = vmul.f32 %v1151, %v1196
        %v1198 = vmul.f32 %v1152, %v1196
        %1201 = vrot.lane.b32.xlu0 %v1197, 126
        %v1202 = vpop.permute.xlu0 %1201
        %1203 = vrot.lane.b32.xlu0 %v1198, 126
        %v1204 = vpop.permute.xlu0 %1203
        %v1207 = vadd.f32 %v1193, %v1202
        %v1208 = vadd.f32 %v1194, %v1204
        %s1209 = sld [smem:[#allocation4 + $0x33]]
        %v1210 = vstv %s1209
        %v1211 = vmul.f32 %v1159, %v1210
        %v1212 = vmul.f32 %v1160, %v1210
        %1215 = vrot.lane.b32.xlu0 %v1211, 126
        %v1216 = vpop.permute.xlu0 %1215
        %1217 = vrot.lane.b32.xlu0 %v1212, 126
        %v1218 = vpop.permute.xlu0 %1217
        %v1221 = vadd.f32 %v1207, %v1216
        %v1222 = vadd.f32 %v1208, %v1218
        %s1223 = sld [smem:[#allocation4 + $0x3]]
        %v1224 = vstv %s1223
        %v1225 = vmul.f32 %v1151, %v1224
        %v1226 = vmul.f32 %v1152, %v1224
        %1229 = vrot.lane.b32.xlu0 %v1225, 125
        %v1230 = vpop.permute.xlu0 %1229
        %1231 = vrot.lane.b32.xlu0 %v1226, 125
        %v1232 = vpop.permute.xlu0 %1231
        %v1235 = vadd.f32 %v1221, %v1230
        %v1236 = vadd.f32 %v1222, %v1232
        %s1237 = sld [smem:[#allocation4 + $0x34]]
        %v1238 = vstv %s1237
        %v1239 = vmul.f32 %v1159, %v1238
        %v1240 = vmul.f32 %v1160, %v1238
        %1243 = vrot.lane.b32.xlu0 %v1239, 125
        %v1244 = vpop.permute.xlu0 %1243
        %1245 = vrot.lane.b32.xlu0 %v1240, 125
        %v1246 = vpop.permute.xlu0 %1245
        %v1249 = vadd.f32 %v1235, %v1244
        %v1250 = vadd.f32 %v1236, %v1246
        %s1251 = sld [smem:[#allocation4 + $0x4]]
        %v1252 = vstv %s1251
        %v1253 = vmul.f32 %v1151, %v1252
        %v1254 = vmul.f32 %v1152, %v1252
        %1257 = vrot.lane.b32.xlu0 %v1253, 124
        %v1258 = vpop.permute.xlu0 %1257
        %1259 = vrot.lane.b32.xlu0 %v1254, 124
        %v1260 = vpop.permute.xlu0 %1259
        %v1263 = vadd.f32 %v1249, %v1258
        %v1264 = vadd.f32 %v1250, %v1260
        %s1265 = sld [smem:[#allocation4 + $0x35]]
        %v1266 = vstv %s1265
        %v1267 = vmul.f32 %v1159, %v1266
        %v1268 = vmul.f32 %v1160, %v1266
        %1271 = vrot.lane.b32.xlu0 %v1267, 124
        %v1272 = vpop.permute.xlu0 %1271
        %1273 = vrot.lane.b32.xlu0 %v1268, 124
        %v1274 = vpop.permute.xlu0 %1273
        %v1277 = vadd.f32 %v1263, %v1272
        %v1278 = vadd.f32 %v1264, %v1274
        %s1279 = sld [smem:[#allocation4 + $0x5]]
        %v1280 = vstv %s1279
        %v1281 = vmul.f32 %v1151, %v1280
        %v1282 = vmul.f32 %v1152, %v1280
        %1285 = vrot.lane.b32.xlu0 %v1281, 123
        %v1286 = vpop.permute.xlu0 %1285
        %1287 = vrot.lane.b32.xlu0 %v1282, 123
        %v1288 = vpop.permute.xlu0 %1287
        %v1291 = vadd.f32 %v1277, %v1286
        %v1292 = vadd.f32 %v1278, %v1288
        %s1293 = sld [smem:[#allocation4 + $0x36]]
        %v1294 = vstv %s1293
        %v1295 = vmul.f32 %v1159, %v1294
        %v1296 = vmul.f32 %v1160, %v1294
        %1299 = vrot.lane.b32.xlu0 %v1295, 123
        %v1300 = vpop.permute.xlu0 %1299
        %1301 = vrot.lane.b32.xlu0 %v1296, 123
        %v1302 = vpop.permute.xlu0 %1301
        %v1305 = vadd.f32 %v1291, %v1300
        %v1306 = vadd.f32 %v1292, %v1302
        %s1307 = sld [smem:[#allocation4 + $0x6]]
        %v1308 = vstv %s1307
        %v1309 = vmul.f32 %v1151, %v1308
        %v1310 = vmul.f32 %v1152, %v1308
        %1313 = vrot.lane.b32.xlu0 %v1309, 122
        %v1314 = vpop.permute.xlu0 %1313
        %1315 = vrot.lane.b32.xlu0 %v1310, 122
        %v1316 = vpop.permute.xlu0 %1315
        %v1319 = vadd.f32 %v1305, %v1314
        %v1320 = vadd.f32 %v1306, %v1316
        %s1321 = sld [smem:[#allocation4 + $0x37]]
        %v1322 = vstv %s1321
        %v1323 = vmul.f32 %v1159, %v1322
        %v1324 = vmul.f32 %v1160, %v1322
        %1327 = vrot.lane.b32.xlu0 %v1323, 122
        %v1328 = vpop.permute.xlu0 %1327
        %1329 = vrot.lane.b32.xlu0 %v1324, 122
        %v1330 = vpop.permute.xlu0 %1329
        %v1333 = vadd.f32 %v1319, %v1328
        %v1334 = vadd.f32 %v1320, %v1330
        %v1335 = vld [vmem:[#allocation2 + $0x1] sm:$0xff]
        %v1336 = vld [vmem:[#allocation2 + $0x9] sm:$0xff]
        %s1337 = sld [smem:[#allocation4 + $0x7]]
        %v1338 = vstv %s1337
        %v1339 = vmul.f32 %v1335, %v1338
        %v1340 = vmul.f32 %v1336, %v1338
        %v1341 = vadd.f32 %v1333, %v1339
        %v1342 = vadd.f32 %v1334, %v1340
        %v1343 = vld [vmem:[#allocation3 + $0x1] sm:$0xff]
        %v1344 = vld [vmem:[#allocation3 + $0x9] sm:$0xff]
        %s1345 = sld [smem:[#allocation4 + $0x38]]
        %v1346 = vstv %s1345
        %v1347 = vmul.f32 %v1343, %v1346
        %v1348 = vmul.f32 %v1344, %v1346
        %v1349 = vadd.f32 %v1341, %v1347
        %v1350 = vadd.f32 %v1342, %v1348
        %s1351 = sld [smem:[#allocation4 + $0x8]]
        %v1352 = vstv %s1351
        %v1353 = vmul.f32 %v1335, %v1352
        %v1354 = vmul.f32 %v1336, %v1352
        %1357 = vrot.lane.b32.xlu0 %v1353, 127
        %v1358 = vpop.permute.xlu0 %1357
        %1359 = vrot.lane.b32.xlu0 %v1354, 127
        %v1360 = vpop.permute.xlu0 %1359
        %v1363 = vadd.f32 %v1349, %v1358
        %v1364 = vadd.f32 %v1350, %v1360
        %s1365 = sld [smem:[#allocation4 + $0x39]]
        %v1366 = vstv %s1365
        %v1367 = vmul.f32 %v1343, %v1366
        %v1368 = vmul.f32 %v1344, %v1366
        %1371 = vrot.lane.b32.xlu0 %v1367, 127
        %v1372 = vpop.permute.xlu0 %1371
        %1373 = vrot.lane.b32.xlu0 %v1368, 127
        %v1374 = vpop.permute.xlu0 %1373
        %v1377 = vadd.f32 %v1363, %v1372
        %v1378 = vadd.f32 %v1364, %v1374
        %s1379 = sld [smem:[#allocation4 + $0x9]]
        %v1380 = vstv %s1379
        %v1381 = vmul.f32 %v1335, %v1380
        %v1382 = vmul.f32 %v1336, %v1380
        %1385 = vrot.lane.b32.xlu0 %v1381, 126
        %v1386 = vpop.permute.xlu0 %1385
        %1387 = vrot.lane.b32.xlu0 %v1382, 126
        %v1388 = vpop.permute.xlu0 %1387
        %v1391 = vadd.f32 %v1377, %v1386
        %v1392 = vadd.f32 %v1378, %v1388
        %s1393 = sld [smem:[#allocation4 + $0x3a]]
        %v1394 = vstv %s1393
        %v1395 = vmul.f32 %v1343, %v1394
        %v1396 = vmul.f32 %v1344, %v1394
        %1399 = vrot.lane.b32.xlu0 %v1395, 126
        %v1400 = vpop.permute.xlu0 %1399
        %1401 = vrot.lane.b32.xlu0 %v1396, 126
        %v1402 = vpop.permute.xlu0 %1401
        %v1405 = vadd.f32 %v1391, %v1400
        %v1406 = vadd.f32 %v1392, %v1402
        %s1407 = sld [smem:[#allocation4 + $0xa]]
        %v1408 = vstv %s1407
        %v1409 = vmul.f32 %v1335, %v1408
        %v1410 = vmul.f32 %v1336, %v1408
        %1413 = vrot.lane.b32.xlu0 %v1409, 125
        %v1414 = vpop.permute.xlu0 %1413
        %1415 = vrot.lane.b32.xlu0 %v1410, 125
        %v1416 = vpop.permute.xlu0 %1415
        %v1419 = vadd.f32 %v1405, %v1414
        %v1420 = vadd.f32 %v1406, %v1416
        %s1421 = sld [smem:[#allocation4 + $0x3b]]
        %v1422 = vstv %s1421
        %v1423 = vmul.f32 %v1343, %v1422
        %v1424 = vmul.f32 %v1344, %v1422
        %1427 = vrot.lane.b32.xlu0 %v1423, 125
        %v1428 = vpop.permute.xlu0 %1427
        %1429 = vrot.lane.b32.xlu0 %v1424, 125
        %v1430 = vpop.permute.xlu0 %1429
        %v1433 = vadd.f32 %v1419, %v1428
        %v1434 = vadd.f32 %v1420, %v1430
        %s1435 = sld [smem:[#allocation4 + $0xb]]
        %v1436 = vstv %s1435
        %v1437 = vmul.f32 %v1335, %v1436
        %v1438 = vmul.f32 %v1336, %v1436
        %1441 = vrot.lane.b32.xlu0 %v1437, 124
        %v1442 = vpop.permute.xlu0 %1441
        %1443 = vrot.lane.b32.xlu0 %v1438, 124
        %v1444 = vpop.permute.xlu0 %1443
        %v1447 = vadd.f32 %v1433, %v1442
        %v1448 = vadd.f32 %v1434, %v1444
        %s1449 = sld [smem:[#allocation4 + $0x3c]]
        %v1450 = vstv %s1449
        %v1451 = vmul.f32 %v1343, %v1450
        %v1452 = vmul.f32 %v1344, %v1450
        %1455 = vrot.lane.b32.xlu0 %v1451, 124
        %v1456 = vpop.permute.xlu0 %1455
        %1457 = vrot.lane.b32.xlu0 %v1452, 124
        %v1458 = vpop.permute.xlu0 %1457
        %v1461 = vadd.f32 %v1447, %v1456
        %v1462 = vadd.f32 %v1448, %v1458
        %s1463 = sld [smem:[#allocation4 + $0xc]]
        %v1464 = vstv %s1463
        %v1465 = vmul.f32 %v1335, %v1464
        %v1466 = vmul.f32 %v1336, %v1464
        %1469 = vrot.lane.b32.xlu0 %v1465, 123
        %v1470 = vpop.permute.xlu0 %1469
        %1471 = vrot.lane.b32.xlu0 %v1466, 123
        %v1472 = vpop.permute.xlu0 %1471
        %v1475 = vadd.f32 %v1461, %v1470
        %v1476 = vadd.f32 %v1462, %v1472
        %s1477 = sld [smem:[#allocation4 + $0x3d]]
        %v1478 = vstv %s1477
        %v1479 = vmul.f32 %v1343, %v1478
        %v1480 = vmul.f32 %v1344, %v1478
        %1483 = vrot.lane.b32.xlu0 %v1479, 123
        %v1484 = vpop.permute.xlu0 %1483
        %1485 = vrot.lane.b32.xlu0 %v1480, 123
        %v1486 = vpop.permute.xlu0 %1485
        %v1489 = vadd.f32 %v1475, %v1484
        %v1490 = vadd.f32 %v1476, %v1486
        %s1491 = sld [smem:[#allocation4 + $0xd]]
        %v1492 = vstv %s1491
        %v1493 = vmul.f32 %v1335, %v1492
        %v1494 = vmul.f32 %v1336, %v1492
        %1497 = vrot.lane.b32.xlu0 %v1493, 122
        %v1498 = vpop.permute.xlu0 %1497
        %1499 = vrot.lane.b32.xlu0 %v1494, 122
        %v1500 = vpop.permute.xlu0 %1499
        %v1503 = vadd.f32 %v1489, %v1498
        %v1504 = vadd.f32 %v1490, %v1500
        %s1505 = sld [smem:[#allocation4 + $0x3e]]
        %v1506 = vstv %s1505
        %v1507 = vmul.f32 %v1343, %v1506
        %v1508 = vmul.f32 %v1344, %v1506
        %1511 = vrot.lane.b32.xlu0 %v1507, 122
        %v1512 = vpop.permute.xlu0 %1511
        %1513 = vrot.lane.b32.xlu0 %v1508, 122
        %v1514 = vpop.permute.xlu0 %1513
        %v1517 = vadd.f32 %v1503, %v1512
        %v1518 = vadd.f32 %v1504, %v1514
        %v1519 = vld [vmem:[#allocation2 + $0x2] sm:$0xff]
        %v1520 = vld [vmem:[#allocation2 + $0xa] sm:$0xff]
        %s1521 = sld [smem:[#allocation4 + $0xe]]
        %v1522 = vstv %s1521
        %v1523 = vmul.f32 %v1519, %v1522
        %v1524 = vmul.f32 %v1520, %v1522
        %v1525 = vadd.f32 %v1517, %v1523
        %v1526 = vadd.f32 %v1518, %v1524
        %v1527 = vld [vmem:[#allocation3 + $0x2] sm:$0xff]
        %v1528 = vld [vmem:[#allocation3 + $0xa] sm:$0xff]
        %s1529 = sld [smem:[#allocation4 + $0x3f]]
        %v1530 = vstv %s1529
        %v1531 = vmul.f32 %v1527, %v1530
        %v1532 = vmul.f32 %v1528, %v1530
        %v1533 = vadd.f32 %v1525, %v1531
        %v1534 = vadd.f32 %v1526, %v1532
        %s1535 = sld [smem:[#allocation4 + $0xf]]
        %v1536 = vstv %s1535
        %v1537 = vmul.f32 %v1519, %v1536
        %v1538 = vmul.f32 %v1520, %v1536
        %1541 = vrot.lane.b32.xlu0 %v1537, 127
        %v1542 = vpop.permute.xlu0 %1541
        %1543 = vrot.lane.b32.xlu0 %v1538, 127
        %v1544 = vpop.permute.xlu0 %1543
        %v1547 = vadd.f32 %v1533, %v1542
        %v1548 = vadd.f32 %v1534, %v1544
        %s1549 = sld [smem:[#allocation4 + $0x40]]
        %v1550 = vstv %s1549
        %v1551 = vmul.f32 %v1527, %v1550
        %v1552 = vmul.f32 %v1528, %v1550
        %1555 = vrot.lane.b32.xlu0 %v1551, 127
        %v1556 = vpop.permute.xlu0 %1555
        %1557 = vrot.lane.b32.xlu0 %v1552, 127
        %v1558 = vpop.permute.xlu0 %1557
        %v1561 = vadd.f32 %v1547, %v1556
        %v1562 = vadd.f32 %v1548, %v1558
        %s1563 = sld [smem:[#allocation4 + $0x10]]
        %v1564 = vstv %s1563
        %v1565 = vmul.f32 %v1519, %v1564
        %v1566 = vmul.f32 %v1520, %v1564
        %1569 = vrot.lane.b32.xlu0 %v1565, 126
        %v1570 = vpop.permute.xlu0 %1569
        %1571 = vrot.lane.b32.xlu0 %v1566, 126
        %v1572 = vpop.permute.xlu0 %1571
        %v1575 = vadd.f32 %v1561, %v1570
        %v1576 = vadd.f32 %v1562, %v1572
        %s1577 = sld [smem:[#allocation4 + $0x41]]
        %v1578 = vstv %s1577
        %v1579 = vmul.f32 %v1527, %v1578
        %v1580 = vmul.f32 %v1528, %v1578
        %1583 = vrot.lane.b32.xlu0 %v1579, 126
        %v1584 = vpop.permute.xlu0 %1583
        %1585 = vrot.lane.b32.xlu0 %v1580, 126
        %v1586 = vpop.permute.xlu0 %1585
        %v1589 = vadd.f32 %v1575, %v1584
        %v1590 = vadd.f32 %v1576, %v1586
        %s1591 = sld [smem:[#allocation4 + $0x11]]
        %v1592 = vstv %s1591
        %v1593 = vmul.f32 %v1519, %v1592
        %v1594 = vmul.f32 %v1520, %v1592
        %1597 = vrot.lane.b32.xlu0 %v1593, 125
        %v1598 = vpop.permute.xlu0 %1597
        %1599 = vrot.lane.b32.xlu0 %v1594, 125
        %v1600 = vpop.permute.xlu0 %1599
        %v1603 = vadd.f32 %v1589, %v1598
        %v1604 = vadd.f32 %v1590, %v1600
        %s1605 = sld [smem:[#allocation4 + $0x42]]
        %v1606 = vstv %s1605
        %v1607 = vmul.f32 %v1527, %v1606
        %v1608 = vmul.f32 %v1528, %v1606
        %1611 = vrot.lane.b32.xlu0 %v1607, 125
        %v1612 = vpop.permute.xlu0 %1611
        %1613 = vrot.lane.b32.xlu0 %v1608, 125
        %v1614 = vpop.permute.xlu0 %1613
        %v1617 = vadd.f32 %v1603, %v1612
        %v1618 = vadd.f32 %v1604, %v1614
        %s1619 = sld [smem:[#allocation4 + $0x12]]
        %v1620 = vstv %s1619
        %v1621 = vmul.f32 %v1519, %v1620
        %v1622 = vmul.f32 %v1520, %v1620
        %1625 = vrot.lane.b32.xlu0 %v1621, 124
        %v1626 = vpop.permute.xlu0 %1625
        %1627 = vrot.lane.b32.xlu0 %v1622, 124
        %v1628 = vpop.permute.xlu0 %1627
        %v1631 = vadd.f32 %v1617, %v1626
        %v1632 = vadd.f32 %v1618, %v1628
        %s1633 = sld [smem:[#allocation4 + $0x43]]
        %v1634 = vstv %s1633
        %v1635 = vmul.f32 %v1527, %v1634
        %v1636 = vmul.f32 %v1528, %v1634
        %1639 = vrot.lane.b32.xlu0 %v1635, 124
        %v1640 = vpop.permute.xlu0 %1639
        %1641 = vrot.lane.b32.xlu0 %v1636, 124
        %v1642 = vpop.permute.xlu0 %1641
        %v1645 = vadd.f32 %v1631, %v1640
        %v1646 = vadd.f32 %v1632, %v1642
        %s1647 = sld [smem:[#allocation4 + $0x13]]
        %v1648 = vstv %s1647
        %v1649 = vmul.f32 %v1519, %v1648
        %v1650 = vmul.f32 %v1520, %v1648
        %1653 = vrot.lane.b32.xlu0 %v1649, 123
        %v1654 = vpop.permute.xlu0 %1653
        %1655 = vrot.lane.b32.xlu0 %v1650, 123
        %v1656 = vpop.permute.xlu0 %1655
        %v1659 = vadd.f32 %v1645, %v1654
        %v1660 = vadd.f32 %v1646, %v1656
        %s1661 = sld [smem:[#allocation4 + $0x44]]
        %v1662 = vstv %s1661
        %v1663 = vmul.f32 %v1527, %v1662
        %v1664 = vmul.f32 %v1528, %v1662
        %1667 = vrot.lane.b32.xlu0 %v1663, 123
        %v1668 = vpop.permute.xlu0 %1667
        %1669 = vrot.lane.b32.xlu0 %v1664, 123
        %v1670 = vpop.permute.xlu0 %1669
        %v1673 = vadd.f32 %v1659, %v1668
        %v1674 = vadd.f32 %v1660, %v1670
        %s1675 = sld [smem:[#allocation4 + $0x14]]
        %v1676 = vstv %s1675
        %v1677 = vmul.f32 %v1519, %v1676
        %v1678 = vmul.f32 %v1520, %v1676
        %1681 = vrot.lane.b32.xlu0 %v1677, 122
        %v1682 = vpop.permute.xlu0 %1681
        %1683 = vrot.lane.b32.xlu0 %v1678, 122
        %v1684 = vpop.permute.xlu0 %1683
        %v1687 = vadd.f32 %v1673, %v1682
        %v1688 = vadd.f32 %v1674, %v1684
        %s1689 = sld [smem:[#allocation4 + $0x45]]
        %v1690 = vstv %s1689
        %v1691 = vmul.f32 %v1527, %v1690
        %v1692 = vmul.f32 %v1528, %v1690
        %1695 = vrot.lane.b32.xlu0 %v1691, 122
        %v1696 = vpop.permute.xlu0 %1695
        %1697 = vrot.lane.b32.xlu0 %v1692, 122
        %v1698 = vpop.permute.xlu0 %1697
        %v1701 = vadd.f32 %v1687, %v1696
        %v1702 = vadd.f32 %v1688, %v1698
        %v1703 = vld [vmem:[#allocation2 + $0x3] sm:$0xff]
        %v1704 = vld [vmem:[#allocation2 + $0xb] sm:$0xff]
        %s1705 = sld [smem:[#allocation4 + $0x15]]
        %v1706 = vstv %s1705
        %v1707 = vmul.f32 %v1703, %v1706
        %v1708 = vmul.f32 %v1704, %v1706
        %v1709 = vadd.f32 %v1701, %v1707
        %v1710 = vadd.f32 %v1702, %v1708
        %v1711 = vld [vmem:[#allocation3 + $0x3] sm:$0xff]
        %v1712 = vld [vmem:[#allocation3 + $0xb] sm:$0xff]
        %s1713 = sld [smem:[#allocation4 + $0x46]]
        %v1714 = vstv %s1713
        %v1715 = vmul.f32 %v1711, %v1714
        %v1716 = vmul.f32 %v1712, %v1714
        %v1717 = vadd.f32 %v1709, %v1715
        %v1718 = vadd.f32 %v1710, %v1716
        %s1719 = sld [smem:[#allocation4 + $0x16]]
        %v1720 = vstv %s1719
        %v1721 = vmul.f32 %v1703, %v1720
        %v1722 = vmul.f32 %v1704, %v1720
        %1725 = vrot.lane.b32.xlu0 %v1721, 127
        %v1726 = vpop.permute.xlu0 %1725
        %1727 = vrot.lane.b32.xlu0 %v1722, 127
        %v1728 = vpop.permute.xlu0 %1727
        %v1731 = vadd.f32 %v1717, %v1726
        %v1732 = vadd.f32 %v1718, %v1728
        %s1733 = sld [smem:[#allocation4 + $0x47]]
        %v1734 = vstv %s1733
        %v1735 = vmul.f32 %v1711, %v1734
        %v1736 = vmul.f32 %v1712, %v1734
        %1739 = vrot.lane.b32.xlu0 %v1735, 127
        %v1740 = vpop.permute.xlu0 %1739
        %1741 = vrot.lane.b32.xlu0 %v1736, 127
        %v1742 = vpop.permute.xlu0 %1741
        %v1745 = vadd.f32 %v1731, %v1740
        %v1746 = vadd.f32 %v1732, %v1742
        %s1747 = sld [smem:[#allocation4 + $0x17]]
        %v1748 = vstv %s1747
        %v1749 = vmul.f32 %v1703, %v1748
        %v1750 = vmul.f32 %v1704, %v1748
        %1753 = vrot.lane.b32.xlu0 %v1749, 126
        %v1754 = vpop.permute.xlu0 %1753
        %1755 = vrot.lane.b32.xlu0 %v1750, 126
        %v1756 = vpop.permute.xlu0 %1755
        %v1759 = vadd.f32 %v1745, %v1754
        %v1760 = vadd.f32 %v1746, %v1756
        %s1761 = sld [smem:[#allocation4 + $0x48]]
        %v1762 = vstv %s1761
        %v1763 = vmul.f32 %v1711, %v1762
        %v1764 = vmul.f32 %v1712, %v1762
        %1767 = vrot.lane.b32.xlu0 %v1763, 126
        %v1768 = vpop.permute.xlu0 %1767
        %1769 = vrot.lane.b32.xlu0 %v1764, 126
        %v1770 = vpop.permute.xlu0 %1769
        %v1773 = vadd.f32 %v1759, %v1768
        %v1774 = vadd.f32 %v1760, %v1770
        %s1775 = sld [smem:[#allocation4 + $0x18]]
        %v1776 = vstv %s1775
        %v1777 = vmul.f32 %v1703, %v1776
        %v1778 = vmul.f32 %v1704, %v1776
        %1781 = vrot.lane.b32.xlu0 %v1777, 125
        %v1782 = vpop.permute.xlu0 %1781
        %1783 = vrot.lane.b32.xlu0 %v1778, 125
        %v1784 = vpop.permute.xlu0 %1783
        %v1787 = vadd.f32 %v1773, %v1782
        %v1788 = vadd.f32 %v1774, %v1784
        %s1789 = sld [smem:[#allocation4 + $0x49]]
        %v1790 = vstv %s1789
        %v1791 = vmul.f32 %v1711, %v1790
        %v1792 = vmul.f32 %v1712, %v1790
        %1795 = vrot.lane.b32.xlu0 %v1791, 125
        %v1796 = vpop.permute.xlu0 %1795
        %1797 = vrot.lane.b32.xlu0 %v1792, 125
        %v1798 = vpop.permute.xlu0 %1797
        %v1801 = vadd.f32 %v1787, %v1796
        %v1802 = vadd.f32 %v1788, %v1798
        %s1803 = sld [smem:[#allocation4 + $0x19]]
        %v1804 = vstv %s1803
        %v1805 = vmul.f32 %v1703, %v1804
        %v1806 = vmul.f32 %v1704, %v1804
        %1809 = vrot.lane.b32.xlu0 %v1805, 124
        %v1810 = vpop.permute.xlu0 %1809
        %1811 = vrot.lane.b32.xlu0 %v1806, 124
        %v1812 = vpop.permute.xlu0 %1811
        %v1815 = vadd.f32 %v1801, %v1810
        %v1816 = vadd.f32 %v1802, %v1812
        %s1817 = sld [smem:[#allocation4 + $0x4a]]
        %v1818 = vstv %s1817
        %v1819 = vmul.f32 %v1711, %v1818
        %v1820 = vmul.f32 %v1712, %v1818
        %1823 = vrot.lane.b32.xlu0 %v1819, 124
        %v1824 = vpop.permute.xlu0 %1823
        %1825 = vrot.lane.b32.xlu0 %v1820, 124
        %v1826 = vpop.permute.xlu0 %1825
        %v1829 = vadd.f32 %v1815, %v1824
        %v1830 = vadd.f32 %v1816, %v1826
        %s1831 = sld [smem:[#allocation4 + $0x1a]]
        %v1832 = vstv %s1831
        %v1833 = vmul.f32 %v1703, %v1832
        %v1834 = vmul.f32 %v1704, %v1832
        %1837 = vrot.lane.b32.xlu0 %v1833, 123
        %v1838 = vpop.permute.xlu0 %1837
        %1839 = vrot.lane.b32.xlu0 %v1834, 123
        %v1840 = vpop.permute.xlu0 %1839
        %v1843 = vadd.f32 %v1829, %v1838
        %v1844 = vadd.f32 %v1830, %v1840
        %s1845 = sld [smem:[#allocation4 + $0x4b]]
        %v1846 = vstv %s1845
        %v1847 = vmul.f32 %v1711, %v1846
        %v1848 = vmul.f32 %v1712, %v1846
        %1851 = vrot.lane.b32.xlu0 %v1847, 123
        %v1852 = vpop.permute.xlu0 %1851
        %1853 = vrot.lane.b32.xlu0 %v1848, 123
        %v1854 = vpop.permute.xlu0 %1853
        %v1857 = vadd.f32 %v1843, %v1852
        %v1858 = vadd.f32 %v1844, %v1854
        %s1859 = sld [smem:[#allocation4 + $0x1b]]
        %v1860 = vstv %s1859
        %v1861 = vmul.f32 %v1703, %v1860
        %v1862 = vmul.f32 %v1704, %v1860
        %1865 = vrot.lane.b32.xlu0 %v1861, 122
        %v1866 = vpop.permute.xlu0 %1865
        %1867 = vrot.lane.b32.xlu0 %v1862, 122
        %v1868 = vpop.permute.xlu0 %1867
        %v1871 = vadd.f32 %v1857, %v1866
        %v1872 = vadd.f32 %v1858, %v1868
        %s1873 = sld [smem:[#allocation4 + $0x4c]]
        %v1874 = vstv %s1873
        %v1875 = vmul.f32 %v1711, %v1874
        %v1876 = vmul.f32 %v1712, %v1874
        %1879 = vrot.lane.b32.xlu0 %v1875, 122
        %v1880 = vpop.permute.xlu0 %1879
        %1881 = vrot.lane.b32.xlu0 %v1876, 122
        %v1882 = vpop.permute.xlu0 %1881
        %v1885 = vadd.f32 %v1871, %v1880
        %v1886 = vadd.f32 %v1872, %v1882
        %v1887 = vld [vmem:[#allocation2 + $0x4] sm:$0xff]
        %v1888 = vld [vmem:[#allocation2 + $0xc] sm:$0xff]
        %s1889 = sld [smem:[#allocation4 + $0x1c]]
        %v1890 = vstv %s1889
        %v1891 = vmul.f32 %v1887, %v1890
        %v1892 = vmul.f32 %v1888, %v1890
        %v1893 = vadd.f32 %v1885, %v1891
        %v1894 = vadd.f32 %v1886, %v1892
        %v1895 = vld [vmem:[#allocation3 + $0x4] sm:$0xff]
        %v1896 = vld [vmem:[#allocation3 + $0xc] sm:$0xff]
        %s1897 = sld [smem:[#allocation4 + $0x4d]]
        %v1898 = vstv %s1897
        %v1899 = vmul.f32 %v1895, %v1898
        %v1900 = vmul.f32 %v1896, %v1898
        %v1901 = vadd.f32 %v1893, %v1899
        %v1902 = vadd.f32 %v1894, %v1900
        %s1903 = sld [smem:[#allocation4 + $0x1d]]
        %v1904 = vstv %s1903
        %v1905 = vmul.f32 %v1887, %v1904
        %v1906 = vmul.f32 %v1888, %v1904
        %1909 = vrot.lane.b32.xlu0 %v1905, 127
        %v1910 = vpop.permute.xlu0 %1909
        %1911 = vrot.lane.b32.xlu0 %v1906, 127
        %v1912 = vpop.permute.xlu0 %1911
        %v1915 = vadd.f32 %v1901, %v1910
        %v1916 = vadd.f32 %v1902, %v1912
        %s1917 = sld [smem:[#allocation4 + $0x4e]]
        %v1918 = vstv %s1917
        %v1919 = vmul.f32 %v1895, %v1918
        %v1920 = vmul.f32 %v1896, %v1918
        %1923 = vrot.lane.b32.xlu0 %v1919, 127
        %v1924 = vpop.permute.xlu0 %1923
        %1925 = vrot.lane.b32.xlu0 %v1920, 127
        %v1926 = vpop.permute.xlu0 %1925
        %v1929 = vadd.f32 %v1915, %v1924
        %v1930 = vadd.f32 %v1916, %v1926
        %s1931 = sld [smem:[#allocation4 + $0x1e]]
        %v1932 = vstv %s1931
        %v1933 = vmul.f32 %v1887, %v1932
        %v1934 = vmul.f32 %v1888, %v1932
        %1937 = vrot.lane.b32.xlu0 %v1933, 126
        %v1938 = vpop.permute.xlu0 %1937
        %1939 = vrot.lane.b32.xlu0 %v1934, 126
        %v1940 = vpop.permute.xlu0 %1939
        %v1943 = vadd.f32 %v1929, %v1938
        %v1944 = vadd.f32 %v1930, %v1940
        %s1945 = sld [smem:[#allocation4 + $0x4f]]
        %v1946 = vstv %s1945
        %v1947 = vmul.f32 %v1895, %v1946
        %v1948 = vmul.f32 %v1896, %v1946
        %1951 = vrot.lane.b32.xlu0 %v1947, 126
        %v1952 = vpop.permute.xlu0 %1951
        %1953 = vrot.lane.b32.xlu0 %v1948, 126
        %v1954 = vpop.permute.xlu0 %1953
        %v1957 = vadd.f32 %v1943, %v1952
        %v1958 = vadd.f32 %v1944, %v1954
        %s1959 = sld [smem:[#allocation4 + $0x1f]]
        %v1960 = vstv %s1959
        %v1961 = vmul.f32 %v1887, %v1960
        %v1962 = vmul.f32 %v1888, %v1960
        %1965 = vrot.lane.b32.xlu0 %v1961, 125
        %v1966 = vpop.permute.xlu0 %1965
        %1967 = vrot.lane.b32.xlu0 %v1962, 125
        %v1968 = vpop.permute.xlu0 %1967
        %v1971 = vadd.f32 %v1957, %v1966
        %v1972 = vadd.f32 %v1958, %v1968
        %s1973 = sld [smem:[#allocation4 + $0x50]]
        %v1974 = vstv %s1973
        %v1975 = vmul.f32 %v1895, %v1974
        %v1976 = vmul.f32 %v1896, %v1974
        %1979 = vrot.lane.b32.xlu0 %v1975, 125
        %v1980 = vpop.permute.xlu0 %1979
        %1981 = vrot.lane.b32.xlu0 %v1976, 125
        %v1982 = vpop.permute.xlu0 %1981
        %v1985 = vadd.f32 %v1971, %v1980
        %v1986 = vadd.f32 %v1972, %v1982
        %s1987 = sld [smem:[#allocation4 + $0x20]]
        %v1988 = vstv %s1987
        %v1989 = vmul.f32 %v1887, %v1988
        %v1990 = vmul.f32 %v1888, %v1988
        %1993 = vrot.lane.b32.xlu0 %v1989, 124
        %v1994 = vpop.permute.xlu0 %1993
        %1995 = vrot.lane.b32.xlu0 %v1990, 124
        %v1996 = vpop.permute.xlu0 %1995
        %v1999 = vadd.f32 %v1985, %v1994
        %v2000 = vadd.f32 %v1986, %v1996
        %s2001 = sld [smem:[#allocation4 + $0x51]]
        %v2002 = vstv %s2001
        %v2003 = vmul.f32 %v1895, %v2002
        %v2004 = vmul.f32 %v1896, %v2002
        %2007 = vrot.lane.b32.xlu0 %v2003, 124
        %v2008 = vpop.permute.xlu0 %2007
        %2009 = vrot.lane.b32.xlu0 %v2004, 124
        %v2010 = vpop.permute.xlu0 %2009
        %v2013 = vadd.f32 %v1999, %v2008
        %v2014 = vadd.f32 %v2000, %v2010
        %s2015 = sld [smem:[#allocation4 + $0x21]]
        %v2016 = vstv %s2015
        %v2017 = vmul.f32 %v1887, %v2016
        %v2018 = vmul.f32 %v1888, %v2016
        %2021 = vrot.lane.b32.xlu0 %v2017, 123
        %v2022 = vpop.permute.xlu0 %2021
        %2023 = vrot.lane.b32.xlu0 %v2018, 123
        %v2024 = vpop.permute.xlu0 %2023
        %v2027 = vadd.f32 %v2013, %v2022
        %v2028 = vadd.f32 %v2014, %v2024
        %s2029 = sld [smem:[#allocation4 + $0x52]]
        %v2030 = vstv %s2029
        %v2031 = vmul.f32 %v1895, %v2030
        %v2032 = vmul.f32 %v1896, %v2030
        %2035 = vrot.lane.b32.xlu0 %v2031, 123
        %v2036 = vpop.permute.xlu0 %2035
        %2037 = vrot.lane.b32.xlu0 %v2032, 123
        %v2038 = vpop.permute.xlu0 %2037
        %v2041 = vadd.f32 %v2027, %v2036
        %v2042 = vadd.f32 %v2028, %v2038
        %s2043 = sld [smem:[#allocation4 + $0x22]]
        %v2044 = vstv %s2043
        %v2045 = vmul.f32 %v1887, %v2044
        %v2046 = vmul.f32 %v1888, %v2044
        %2049 = vrot.lane.b32.xlu0 %v2045, 122
        %v2050 = vpop.permute.xlu0 %2049
        %2051 = vrot.lane.b32.xlu0 %v2046, 122
        %v2052 = vpop.permute.xlu0 %2051
        %v2055 = vadd.f32 %v2041, %v2050
        %v2056 = vadd.f32 %v2042, %v2052
        %s2057 = sld [smem:[#allocation4 + $0x53]]
        %v2058 = vstv %s2057
        %v2059 = vmul.f32 %v1895, %v2058
        %v2060 = vmul.f32 %v1896, %v2058
        %2063 = vrot.lane.b32.xlu0 %v2059, 122
        %v2064 = vpop.permute.xlu0 %2063
        %2065 = vrot.lane.b32.xlu0 %v2060, 122
        %v2066 = vpop.permute.xlu0 %2065
        %v2069 = vadd.f32 %v2055, %v2064
        %v2070 = vadd.f32 %v2056, %v2066
        %v2071 = vld [vmem:[#allocation2 + $0x5] sm:$0xff]
        %v2072 = vld [vmem:[#allocation2 + $0xd] sm:$0xff]
        %s2073 = sld [smem:[#allocation4 + $0x23]]
        %v2074 = vstv %s2073
        %v2075 = vmul.f32 %v2071, %v2074
        %v2076 = vmul.f32 %v2072, %v2074
        %v2077 = vadd.f32 %v2069, %v2075
        %v2078 = vadd.f32 %v2070, %v2076
        %v2079 = vld [vmem:[#allocation3 + $0x5] sm:$0xff]
        %v2080 = vld [vmem:[#allocation3 + $0xd] sm:$0xff]
        %s2081 = sld [smem:[#allocation4 + $0x54]]
        %v2082 = vstv %s2081
        %v2083 = vmul.f32 %v2079, %v2082
        %v2084 = vmul.f32 %v2080, %v2082
        %v2085 = vadd.f32 %v2077, %v2083
        %v2086 = vadd.f32 %v2078, %v2084
        %s2087 = sld [smem:[#allocation4 + $0x24]]
        %v2088 = vstv %s2087
        %v2089 = vmul.f32 %v2071, %v2088
        %v2090 = vmul.f32 %v2072, %v2088
        %2093 = vrot.lane.b32.xlu0 %v2089, 127
        %v2094 = vpop.permute.xlu0 %2093
        %2095 = vrot.lane.b32.xlu0 %v2090, 127
        %v2096 = vpop.permute.xlu0 %2095
        %v2099 = vadd.f32 %v2085, %v2094
        %v2100 = vadd.f32 %v2086, %v2096
        %s2101 = sld [smem:[#allocation4 + $0x55]]
        %v2102 = vstv %s2101
        %v2103 = vmul.f32 %v2079, %v2102
        %v2104 = vmul.f32 %v2080, %v2102
        %2107 = vrot.lane.b32.xlu0 %v2103, 127
        %v2108 = vpop.permute.xlu0 %2107
        %2109 = vrot.lane.b32.xlu0 %v2104, 127
        %v2110 = vpop.permute.xlu0 %2109
        %v2113 = vadd.f32 %v2099, %v2108
        %v2114 = vadd.f32 %v2100, %v2110
        %s2115 = sld [smem:[#allocation4 + $0x25]]
        %v2116 = vstv %s2115
        %v2117 = vmul.f32 %v2071, %v2116
        %v2118 = vmul.f32 %v2072, %v2116
        %2121 = vrot.lane.b32.xlu0 %v2117, 126
        %v2122 = vpop.permute.xlu0 %2121
        %2123 = vrot.lane.b32.xlu0 %v2118, 126
        %v2124 = vpop.permute.xlu0 %2123
        %v2127 = vadd.f32 %v2113, %v2122
        %v2128 = vadd.f32 %v2114, %v2124
        %s2129 = sld [smem:[#allocation4 + $0x56]]
        %v2130 = vstv %s2129
        %v2131 = vmul.f32 %v2079, %v2130
        %v2132 = vmul.f32 %v2080, %v2130
        %2135 = vrot.lane.b32.xlu0 %v2131, 126
        %v2136 = vpop.permute.xlu0 %2135
        %2137 = vrot.lane.b32.xlu0 %v2132, 126
        %v2138 = vpop.permute.xlu0 %2137
        %v2141 = vadd.f32 %v2127, %v2136
        %v2142 = vadd.f32 %v2128, %v2138
        %s2143 = sld [smem:[#allocation4 + $0x26]]
        %v2144 = vstv %s2143
        %v2145 = vmul.f32 %v2071, %v2144
        %v2146 = vmul.f32 %v2072, %v2144
        %2149 = vrot.lane.b32.xlu0 %v2145, 125
        %v2150 = vpop.permute.xlu0 %2149
        %2151 = vrot.lane.b32.xlu0 %v2146, 125
        %v2152 = vpop.permute.xlu0 %2151
        %v2155 = vadd.f32 %v2141, %v2150
        %v2156 = vadd.f32 %v2142, %v2152
        %s2157 = sld [smem:[#allocation4 + $0x57]]
        %v2158 = vstv %s2157
        %v2159 = vmul.f32 %v2079, %v2158
        %v2160 = vmul.f32 %v2080, %v2158
        %2163 = vrot.lane.b32.xlu0 %v2159, 125
        %v2164 = vpop.permute.xlu0 %2163
        %2165 = vrot.lane.b32.xlu0 %v2160, 125
        %v2166 = vpop.permute.xlu0 %2165
        %v2169 = vadd.f32 %v2155, %v2164
        %v2170 = vadd.f32 %v2156, %v2166
        %s2171 = sld [smem:[#allocation4 + $0x27]]
        %v2172 = vstv %s2171
        %v2173 = vmul.f32 %v2071, %v2172
        %v2174 = vmul.f32 %v2072, %v2172
        %2177 = vrot.lane.b32.xlu0 %v2173, 124
        %v2178 = vpop.permute.xlu0 %2177
        %2179 = vrot.lane.b32.xlu0 %v2174, 124
        %v2180 = vpop.permute.xlu0 %2179
        %v2183 = vadd.f32 %v2169, %v2178
        %v2184 = vadd.f32 %v2170, %v2180
        %s2185 = sld [smem:[#allocation4 + $0x58]]
        %v2186 = vstv %s2185
        %v2187 = vmul.f32 %v2079, %v2186
        %v2188 = vmul.f32 %v2080, %v2186
        %2191 = vrot.lane.b32.xlu0 %v2187, 124
        %v2192 = vpop.permute.xlu0 %2191
        %2193 = vrot.lane.b32.xlu0 %v2188, 124
        %v2194 = vpop.permute.xlu0 %2193
        %v2197 = vadd.f32 %v2183, %v2192
        %v2198 = vadd.f32 %v2184, %v2194
        %s2199 = sld [smem:[#allocation4 + $0x28]]
        %v2200 = vstv %s2199
        %v2201 = vmul.f32 %v2071, %v2200
        %v2202 = vmul.f32 %v2072, %v2200
        %2205 = vrot.lane.b32.xlu0 %v2201, 123
        %v2206 = vpop.permute.xlu0 %2205
        %2207 = vrot.lane.b32.xlu0 %v2202, 123
        %v2208 = vpop.permute.xlu0 %2207
        %v2211 = vadd.f32 %v2197, %v2206
        %v2212 = vadd.f32 %v2198, %v2208
        %s2213 = sld [smem:[#allocation4 + $0x59]]
        %v2214 = vstv %s2213
        %v2215 = vmul.f32 %v2079, %v2214
        %v2216 = vmul.f32 %v2080, %v2214
        %2219 = vrot.lane.b32.xlu0 %v2215, 123
        %v2220 = vpop.permute.xlu0 %2219
        %2221 = vrot.lane.b32.xlu0 %v2216, 123
        %v2222 = vpop.permute.xlu0 %2221
        %v2225 = vadd.f32 %v2211, %v2220
        %v2226 = vadd.f32 %v2212, %v2222
        %s2227 = sld [smem:[#allocation4 + $0x29]]
        %v2228 = vstv %s2227
        %v2229 = vmul.f32 %v2071, %v2228
        %v2230 = vmul.f32 %v2072, %v2228
        %2233 = vrot.lane.b32.xlu0 %v2229, 122
        %v2234 = vpop.permute.xlu0 %2233
        %2235 = vrot.lane.b32.xlu0 %v2230, 122
        %v2236 = vpop.permute.xlu0 %2235
        %v2239 = vadd.f32 %v2225, %v2234
        %v2240 = vadd.f32 %v2226, %v2236
        %s2241 = sld [smem:[#allocation4 + $0x5a]]
        %v2242 = vstv %s2241
        %v2243 = vmul.f32 %v2079, %v2242
        %v2244 = vmul.f32 %v2080, %v2242
        %2247 = vrot.lane.b32.xlu0 %v2243, 122
        %v2248 = vpop.permute.xlu0 %2247
        %2249 = vrot.lane.b32.xlu0 %v2244, 122
        %v2250 = vpop.permute.xlu0 %2249
        %v2253 = vadd.f32 %v2239, %v2248
        %v2254 = vadd.f32 %v2240, %v2250
        %v2255 = vld [vmem:[#allocation2 + $0x6] sm:$0xff]
        %v2256 = vld [vmem:[#allocation2 + $0xe] sm:$0xff]
        %s2257 = sld [smem:[#allocation4 + $0x2a]]
        %v2258 = vstv %s2257
        %v2259 = vmul.f32 %v2255, %v2258
        %v2260 = vmul.f32 %v2256, %v2258
        %v2261 = vadd.f32 %v2253, %v2259
        %v2262 = vadd.f32 %v2254, %v2260
        %v2263 = vld [vmem:[#allocation3 + $0x6] sm:$0xff]
        %v2264 = vld [vmem:[#allocation3 + $0xe] sm:$0xff]
        %s2265 = sld [smem:[#allocation4 + $0x5b]]
        %v2266 = vstv %s2265
        %v2267 = vmul.f32 %v2263, %v2266
        %v2268 = vmul.f32 %v2264, %v2266
        %v2269 = vadd.f32 %v2261, %v2267
        %v2270 = vadd.f32 %v2262, %v2268
        %s2271 = sld [smem:[#allocation4 + $0x2b]]
        %v2272 = vstv %s2271
        %v2273 = vmul.f32 %v2255, %v2272
        %v2274 = vmul.f32 %v2256, %v2272
        %2277 = vrot.lane.b32.xlu0 %v2273, 127
        %v2278 = vpop.permute.xlu0 %2277
        %2279 = vrot.lane.b32.xlu0 %v2274, 127
        %v2280 = vpop.permute.xlu0 %2279
        %v2283 = vadd.f32 %v2269, %v2278
        %v2284 = vadd.f32 %v2270, %v2280
        %s2285 = sld [smem:[#allocation4 + $0x5c]]
        %v2286 = vstv %s2285
        %v2287 = vmul.f32 %v2263, %v2286
        %v2288 = vmul.f32 %v2264, %v2286
        %2291 = vrot.lane.b32.xlu0 %v2287, 127
        %v2292 = vpop.permute.xlu0 %2291
        %2293 = vrot.lane.b32.xlu0 %v2288, 127
        %v2294 = vpop.permute.xlu0 %2293
        %v2297 = vadd.f32 %v2283, %v2292
        %v2298 = vadd.f32 %v2284, %v2294
        %s2299 = sld [smem:[#allocation4 + $0x2c]]
        %v2300 = vstv %s2299
        %v2301 = vmul.f32 %v2255, %v2300
        %v2302 = vmul.f32 %v2256, %v2300
        %2305 = vrot.lane.b32.xlu0 %v2301, 126
        %v2306 = vpop.permute.xlu0 %2305
        %2307 = vrot.lane.b32.xlu0 %v2302, 126
        %v2308 = vpop.permute.xlu0 %2307
        %v2311 = vadd.f32 %v2297, %v2306
        %v2312 = vadd.f32 %v2298, %v2308
        %s2313 = sld [smem:[#allocation4 + $0x5d]]
        %v2314 = vstv %s2313
        %v2315 = vmul.f32 %v2263, %v2314
        %v2316 = vmul.f32 %v2264, %v2314
        %2319 = vrot.lane.b32.xlu0 %v2315, 126
        %v2320 = vpop.permute.xlu0 %2319
        %2321 = vrot.lane.b32.xlu0 %v2316, 126
        %v2322 = vpop.permute.xlu0 %2321
        %v2325 = vadd.f32 %v2311, %v2320
        %v2326 = vadd.f32 %v2312, %v2322
        %s2327 = sld [smem:[#allocation4 + $0x2d]]
        %v2328 = vstv %s2327
        %v2329 = vmul.f32 %v2255, %v2328
        %v2330 = vmul.f32 %v2256, %v2328
        %2333 = vrot.lane.b32.xlu0 %v2329, 125
        %v2334 = vpop.permute.xlu0 %2333
        %2335 = vrot.lane.b32.xlu0 %v2330, 125
        %v2336 = vpop.permute.xlu0 %2335
        %v2339 = vadd.f32 %v2325, %v2334
        %v2340 = vadd.f32 %v2326, %v2336
        %s2341 = sld [smem:[#allocation4 + $0x5e]]
        %v2342 = vstv %s2341
        %v2343 = vmul.f32 %v2263, %v2342
        %v2344 = vmul.f32 %v2264, %v2342
        %2347 = vrot.lane.b32.xlu0 %v2343, 125
        %v2348 = vpop.permute.xlu0 %2347
        %2349 = vrot.lane.b32.xlu0 %v2344, 125
        %v2350 = vpop.permute.xlu0 %2349
        %v2353 = vadd.f32 %v2339, %v2348
        %v2354 = vadd.f32 %v2340, %v2350
        %s2355 = sld [smem:[#allocation4 + $0x2e]]
        %v2356 = vstv %s2355
        %v2357 = vmul.f32 %v2255, %v2356
        %v2358 = vmul.f32 %v2256, %v2356
        %2361 = vrot.lane.b32.xlu0 %v2357, 124
        %v2362 = vpop.permute.xlu0 %2361
        %2363 = vrot.lane.b32.xlu0 %v2358, 124
        %v2364 = vpop.permute.xlu0 %2363
        %v2367 = vadd.f32 %v2353, %v2362
        %v2368 = vadd.f32 %v2354, %v2364
        %s2369 = sld [smem:[#allocation4 + $0x5f]]
        %v2370 = vstv %s2369
        %v2371 = vmul.f32 %v2263, %v2370
        %v2372 = vmul.f32 %v2264, %v2370
        %2375 = vrot.lane.b32.xlu0 %v2371, 124
        %v2376 = vpop.permute.xlu0 %2375
        %2377 = vrot.lane.b32.xlu0 %v2372, 124
        %v2378 = vpop.permute.xlu0 %2377
        %v2381 = vadd.f32 %v2367, %v2376
        %v2382 = vadd.f32 %v2368, %v2378
        %s2383 = sld [smem:[#allocation4 + $0x2f]]
        %v2384 = vstv %s2383
        %v2385 = vmul.f32 %v2255, %v2384
        %v2386 = vmul.f32 %v2256, %v2384
        %2389 = vrot.lane.b32.xlu0 %v2385, 123
        %v2390 = vpop.permute.xlu0 %2389
        %2391 = vrot.lane.b32.xlu0 %v2386, 123
        %v2392 = vpop.permute.xlu0 %2391
        %v2395 = vadd.f32 %v2381, %v2390
        %v2396 = vadd.f32 %v2382, %v2392
        %s2397 = sld [smem:[#allocation4 + $0x60]]
        %v2398 = vstv %s2397
        %v2399 = vmul.f32 %v2263, %v2398
        %v2400 = vmul.f32 %v2264, %v2398
        %2403 = vrot.lane.b32.xlu0 %v2399, 123
        %v2404 = vpop.permute.xlu0 %2403
        %2405 = vrot.lane.b32.xlu0 %v2400, 123
        %v2406 = vpop.permute.xlu0 %2405
        %v2409 = vadd.f32 %v2395, %v2404
        %v2410 = vadd.f32 %v2396, %v2406
        %s2411 = sld [smem:[#allocation4 + $0x30]]
        %v2412 = vstv %s2411
        %v2413 = vmul.f32 %v2255, %v2412
        %v2414 = vmul.f32 %v2256, %v2412
        %2417 = vrot.lane.b32.xlu0 %v2413, 122
        %v2418 = vpop.permute.xlu0 %2417
        %2419 = vrot.lane.b32.xlu0 %v2414, 122
        %v2420 = vpop.permute.xlu0 %2419
        %v2423 = vadd.f32 %v2409, %v2418
        %v2424 = vadd.f32 %v2410, %v2420
        %s2425 = sld [smem:[#allocation4 + $0x61]]
        %v2426 = vstv %s2425
        %v2427 = vmul.f32 %v2263, %v2426
        %v2428 = vmul.f32 %v2264, %v2426
        %2431 = vrot.lane.b32.xlu0 %v2427, 122
        %v2432 = vpop.permute.xlu0 %2431
        %2433 = vrot.lane.b32.xlu0 %v2428, 122
        %v2434 = vpop.permute.xlu0 %2433
        %v2437 = vadd.f32 %v2423, %v2432
        %v2438 = vadd.f32 %v2424, %v2434
        %v2439 = vxor.u32 %v2437, 2147483648
        %v2440 = vxor.u32 %v2438, 2147483648
        %v2441 = vmul.f32 %v2439, 1.442695
        %v2442 = vpow.pop %v2441
        %v2443 = vmul.f32 %v2440, 1.442695
        %v2444 = vpow.pop %v2443
        %v2445 = vadd.f32 %v2442, 1.0
        %v2446 = vadd.f32 %v2444, 1.0
        %v2447 = vrcp.pop %v2445
        %v2448 = vmul.f32 1.0, %v2447
        %v2449 = vrcp.pop %v2446
        %v2450 = vmul.f32 1.0, %v2449
        %v2451 = vld [vmem:[%s288] sm:$0xf]
        %v2452 = vld [vmem:[%s288 + $0x4] sm:$0xf]
        %v2453 = vld [vmem:[%s288 + $0x8] sm:$0xf]
        %v2454 = vld [vmem:[%s288 + $0xc] sm:$0xf]
        %v2455 = vld [vmem:[%s288 + $0x10] sm:$0xf]
        %v2456 = vld [vmem:[%s288 + $0x14] sm:$0xf]
        %v2457 = vld [vmem:[%s288 + $0x18] sm:$0xf]
        %v2458 = vld [vmem:[%s288 + $0x1c] sm:$0xf]
        %v2459 = vld [vmem:[%s288 + $0x20] sm:$0xf]
        %v2460 = vld [vmem:[%s288 + $0x24] sm:$0xf]
        %v2461 = vld [vmem:[%s288 + $0x28] sm:$0xf]
        %v2462 = vld [vmem:[%s288 + $0x2c] sm:$0xf]
        %v2463 = vld [vmem:[%s288 + $0x30] sm:$0xf]
        %v2464 = vld [vmem:[%s288 + $0x34] sm:$0xf]
        %v2465 = vld [vmem:[%s288 + $0x38] sm:$0xf]
        %v2466 = vld [vmem:[%s288 + $0x3c] sm:$0xf]
        %v2467 = vld [vmem:[%s288 + $0x40] sm:$0xf]
        %v2468 = vld [vmem:[%s288 + $0x44] sm:$0xf]
        %v2469 = vld [vmem:[%s288 + $0x48] sm:$0xf]
        %v2470 = vld [vmem:[%s288 + $0x4c] sm:$0xf]
        %v2471 = vld [vmem:[%s288 + $0x50] sm:$0xf]
        %v2472 = vld [vmem:[%s288 + $0x54] sm:$0xf]
        %v2473 = vld [vmem:[%s288 + $0x58] sm:$0xf]
        %v2474 = vld [vmem:[%s288 + $0x5c] sm:$0xf]
        %v2475 = vld [vmem:[%s288 + $0x60] sm:$0xf]
        %v2476 = vld [vmem:[%s288 + $0x64] sm:$0xf]
        %v2477 = vld [vmem:[%s288 + $0x68] sm:$0xf]
        %v2478 = vld [vmem:[%s288 + $0x6c] sm:$0xf]
        %v2479 = vld [vmem:[%s288 + $0x70] sm:$0xf]
        %v2480 = vld [vmem:[%s288 + $0x74] sm:$0xf]
        %v2481 = vld [vmem:[%s288 + $0x78] sm:$0xf]
        %v2482 = vld [vmem:[%s288 + $0x7c] sm:$0xf]
        %v2483 = vunpack.c.l.bf16 %v2451
        %v2484 = vunpack.c.l.bf16 %v2452
        %v2485 = vunpack.c.l.bf16 %v2453
        %v2486 = vunpack.c.l.bf16 %v2454
        %v2487 = vunpack.c.l.bf16 %v2455
        %v2488 = vunpack.c.l.bf16 %v2456
        %v2489 = vunpack.c.l.bf16 %v2457
        %v2490 = vunpack.c.l.bf16 %v2458
        %v2491 = vunpack.c.l.bf16 %v2459
        %v2492 = vunpack.c.l.bf16 %v2460
        %v2493 = vunpack.c.l.bf16 %v2461
        %v2494 = vunpack.c.l.bf16 %v2462
        %v2495 = vunpack.c.l.bf16 %v2463
        %v2496 = vunpack.c.l.bf16 %v2464
        %v2497 = vunpack.c.l.bf16 %v2465
        %v2498 = vunpack.c.l.bf16 %v2466
        %v2499 = vunpack.c.l.bf16 %v2467
        %v2500 = vunpack.c.l.bf16 %v2468
        %v2501 = vunpack.c.l.bf16 %v2469
        %v2502 = vunpack.c.l.bf16 %v2470
        %v2503 = vunpack.c.l.bf16 %v2471
        %v2504 = vunpack.c.l.bf16 %v2472
        %v2505 = vunpack.c.l.bf16 %v2473
        %v2506 = vunpack.c.l.bf16 %v2474
        %v2507 = vunpack.c.l.bf16 %v2475
        %v2508 = vunpack.c.l.bf16 %v2476
        %v2509 = vunpack.c.l.bf16 %v2477
        %v2510 = vunpack.c.l.bf16 %v2478
        %v2511 = vunpack.c.l.bf16 %v2479
        %v2512 = vunpack.c.l.bf16 %v2480
        %v2513 = vunpack.c.l.bf16 %v2481
        %v2514 = vunpack.c.l.bf16 %v2482
        %v2515 = vmul.f32 %v2483, %v486
        %v2516 = vmul.f32 %v2484, %v486
        %v2517 = vmul.f32 %v2485, %v486
        %v2518 = vmul.f32 %v2486, %v486
        %v2519 = vmul.f32 %v2487, %v486
        %v2520 = vmul.f32 %v2488, %v486
        %v2521 = vmul.f32 %v2489, %v486
        %v2522 = vmul.f32 %v2490, %v486
        %v2523 = vmul.f32 %v2491, %v486
        %v2524 = vmul.f32 %v2492, %v486
        %v2525 = vmul.f32 %v2493, %v486
        %v2526 = vmul.f32 %v2494, %v486
        %v2527 = vmul.f32 %v2495, %v486
        %v2528 = vmul.f32 %v2496, %v486
        %v2529 = vmul.f32 %v2497, %v486
        %v2530 = vmul.f32 %v2498, %v486
        %v2531 = vmul.f32 %v2499, %v486
        %v2532 = vmul.f32 %v2500, %v486
        %v2533 = vmul.f32 %v2501, %v486
        %v2534 = vmul.f32 %v2502, %v486
        %v2535 = vmul.f32 %v2503, %v486
        %v2536 = vmul.f32 %v2504, %v486
        %v2537 = vmul.f32 %v2505, %v486
        %v2538 = vmul.f32 %v2506, %v486
        %v2539 = vmul.f32 %v2507, %v486
        %v2540 = vmul.f32 %v2508, %v486
        %v2541 = vmul.f32 %v2509, %v486
        %v2542 = vmul.f32 %v2510, %v486
        %v2543 = vmul.f32 %v2511, %v486
        %v2544 = vmul.f32 %v2512, %v486
        %v2545 = vmul.f32 %v2513, %v486
        %v2546 = vmul.f32 %v2514, %v486
        %v2547 = vlaneseq
        %v2548 = vshrl.u32 %v2547, 7
        %v2549 = vsub.s32 0, %v2548
        %v2550 = vrot.slane %v2448, %v2549
        %2552 = vbcast.lane.b32.xlu0 %v2550, 256
        %v2553 = vpop.permute.xlu0 %2552
        %s2555 = sor.u32 256, 8
        %2556 = vbcast.lane.b32.xlu0 %v2550, %s2555
        %v2557 = vpop.permute.xlu0 %2556
        %v2558 = vlaneseq
        %v2559 = vshrl.u32 %v2558, 7
        %v2560 = vsub.s32 1, %v2559
        %v2561 = vrot.slane %v2448, %v2560
        %2563 = vbcast.lane.b32.xlu0 %v2561, 256
        %v2564 = vpop.permute.xlu0 %2563
        %s2566 = sor.u32 256, 8
        %2567 = vbcast.lane.b32.xlu0 %v2561, %s2566
        %v2568 = vpop.permute.xlu0 %2567
        %v2569 = vlaneseq
        %v2570 = vshrl.u32 %v2569, 7
        %v2571 = vsub.s32 2, %v2570
        %v2572 = vrot.slane %v2448, %v2571
        %2574 = vbcast.lane.b32.xlu0 %v2572, 256
        %v2575 = vpop.permute.xlu0 %2574
        %s2577 = sor.u32 256, 8
        %2578 = vbcast.lane.b32.xlu0 %v2572, %s2577
        %v2579 = vpop.permute.xlu0 %2578
        %v2580 = vlaneseq
        %v2581 = vshrl.u32 %v2580, 7
        %v2582 = vsub.s32 3, %v2581
        %v2583 = vrot.slane %v2448, %v2582
        %2585 = vbcast.lane.b32.xlu0 %v2583, 256
        %v2586 = vpop.permute.xlu0 %2585
        %s2588 = sor.u32 256, 8
        %2589 = vbcast.lane.b32.xlu0 %v2583, %s2588
        %v2590 = vpop.permute.xlu0 %2589
        %v2591 = vlaneseq
        %v2592 = vshrl.u32 %v2591, 7
        %v2593 = vsub.s32 4, %v2592
        %v2594 = vrot.slane %v2448, %v2593
        %2596 = vbcast.lane.b32.xlu0 %v2594, 256
        %v2597 = vpop.permute.xlu0 %2596
        %s2599 = sor.u32 256, 8
        %2600 = vbcast.lane.b32.xlu0 %v2594, %s2599
        %v2601 = vpop.permute.xlu0 %2600
        %v2602 = vlaneseq
        %v2603 = vshrl.u32 %v2602, 7
        %v2604 = vsub.s32 5, %v2603
        %v2605 = vrot.slane %v2448, %v2604
        %2607 = vbcast.lane.b32.xlu0 %v2605, 256
        %v2608 = vpop.permute.xlu0 %2607
        %s2610 = sor.u32 256, 8
        %2611 = vbcast.lane.b32.xlu0 %v2605, %s2610
        %v2612 = vpop.permute.xlu0 %2611
        %v2613 = vlaneseq
        %v2614 = vshrl.u32 %v2613, 7
        %v2615 = vsub.s32 6, %v2614
        %v2616 = vrot.slane %v2448, %v2615
        %2618 = vbcast.lane.b32.xlu0 %v2616, 256
        %v2619 = vpop.permute.xlu0 %2618
        %s2621 = sor.u32 256, 8
        %2622 = vbcast.lane.b32.xlu0 %v2616, %s2621
        %v2623 = vpop.permute.xlu0 %2622
        %v2624 = vlaneseq
        %v2625 = vshrl.u32 %v2624, 7
        %v2626 = vsub.s32 7, %v2625
        %v2627 = vrot.slane %v2448, %v2626
        %2629 = vbcast.lane.b32.xlu0 %v2627, 256
        %v2630 = vpop.permute.xlu0 %2629
        %s2632 = sor.u32 256, 8
        %2633 = vbcast.lane.b32.xlu0 %v2627, %s2632
        %v2634 = vpop.permute.xlu0 %2633
        %v2635 = vlaneseq
        %v2636 = vshrl.u32 %v2635, 7
        %v2637 = vsub.s32 0, %v2636
        %v2638 = vrot.slane %v2450, %v2637
        %2640 = vbcast.lane.b32.xlu0 %v2638, 256
        %v2641 = vpop.permute.xlu0 %2640
        %s2643 = sor.u32 256, 8
        %2644 = vbcast.lane.b32.xlu0 %v2638, %s2643
        %v2645 = vpop.permute.xlu0 %2644
        %v2646 = vlaneseq
        %v2647 = vshrl.u32 %v2646, 7
        %v2648 = vsub.s32 1, %v2647
        %v2649 = vrot.slane %v2450, %v2648
        %2651 = vbcast.lane.b32.xlu0 %v2649, 256
        %v2652 = vpop.permute.xlu0 %2651
        %s2654 = sor.u32 256, 8
        %2655 = vbcast.lane.b32.xlu0 %v2649, %s2654
        %v2656 = vpop.permute.xlu0 %2655
        %v2657 = vlaneseq
        %v2658 = vshrl.u32 %v2657, 7
        %v2659 = vsub.s32 2, %v2658
        %v2660 = vrot.slane %v2450, %v2659
        %2662 = vbcast.lane.b32.xlu0 %v2660, 256
        %v2663 = vpop.permute.xlu0 %2662
        %s2665 = sor.u32 256, 8
        %2666 = vbcast.lane.b32.xlu0 %v2660, %s2665
        %v2667 = vpop.permute.xlu0 %2666
        %v2668 = vlaneseq
        %v2669 = vshrl.u32 %v2668, 7
        %v2670 = vsub.s32 3, %v2669
        %v2671 = vrot.slane %v2450, %v2670
        %2673 = vbcast.lane.b32.xlu0 %v2671, 256
        %v2674 = vpop.permute.xlu0 %2673
        %s2676 = sor.u32 256, 8
        %2677 = vbcast.lane.b32.xlu0 %v2671, %s2676
        %v2678 = vpop.permute.xlu0 %2677
        %v2679 = vlaneseq
        %v2680 = vshrl.u32 %v2679, 7
        %v2681 = vsub.s32 4, %v2680
        %v2682 = vrot.slane %v2450, %v2681
        %2684 = vbcast.lane.b32.xlu0 %v2682, 256
        %v2685 = vpop.permute.xlu0 %2684
        %s2687 = sor.u32 256, 8
        %2688 = vbcast.lane.b32.xlu0 %v2682, %s2687
        %v2689 = vpop.permute.xlu0 %2688
        %v2690 = vlaneseq
        %v2691 = vshrl.u32 %v2690, 7
        %v2692 = vsub.s32 5, %v2691
        %v2693 = vrot.slane %v2450, %v2692
        %2695 = vbcast.lane.b32.xlu0 %v2693, 256
        %v2696 = vpop.permute.xlu0 %2695
        %s2698 = sor.u32 256, 8
        %2699 = vbcast.lane.b32.xlu0 %v2693, %s2698
        %v2700 = vpop.permute.xlu0 %2699
        %v2701 = vlaneseq
        %v2702 = vshrl.u32 %v2701, 7
        %v2703 = vsub.s32 6, %v2702
        %v2704 = vrot.slane %v2450, %v2703
        %2706 = vbcast.lane.b32.xlu0 %v2704, 256
        %v2707 = vpop.permute.xlu0 %2706
        %s2709 = sor.u32 256, 8
        %2710 = vbcast.lane.b32.xlu0 %v2704, %s2709
        %v2711 = vpop.permute.xlu0 %2710
        %v2712 = vlaneseq
        %v2713 = vshrl.u32 %v2712, 7
        %v2714 = vsub.s32 7, %v2713
        %v2715 = vrot.slane %v2450, %v2714
        %2717 = vbcast.lane.b32.xlu0 %v2715, 256
        %v2718 = vpop.permute.xlu0 %2717
        %s2720 = sor.u32 256, 8
        %2721 = vbcast.lane.b32.xlu0 %v2715, %s2720
        %v2722 = vpop.permute.xlu0 %2721
        %v2723 = vmul.f32 %v2515, %v2553
        %v2724 = vmul.f32 %v2516, %v2557
        %v2725 = vmul.f32 %v2517, %v2564
        %v2726 = vmul.f32 %v2518, %v2568
        %v2727 = vmul.f32 %v2519, %v2575
        %v2728 = vmul.f32 %v2520, %v2579
        %v2729 = vmul.f32 %v2521, %v2586
        %v2730 = vmul.f32 %v2522, %v2590
        %v2731 = vmul.f32 %v2523, %v2597
        %v2732 = vmul.f32 %v2524, %v2601
        %v2733 = vmul.f32 %v2525, %v2608
        %v2734 = vmul.f32 %v2526, %v2612
        %v2735 = vmul.f32 %v2527, %v2619
        %v2736 = vmul.f32 %v2528, %v2623
        %v2737 = vmul.f32 %v2529, %v2630
        %v2738 = vmul.f32 %v2530, %v2634
        %v2739 = vmul.f32 %v2531, %v2641
        %v2740 = vmul.f32 %v2532, %v2645
        %v2741 = vmul.f32 %v2533, %v2652
        %v2742 = vmul.f32 %v2534, %v2656
        %v2743 = vmul.f32 %v2535, %v2663
        %v2744 = vmul.f32 %v2536, %v2667
        %v2745 = vmul.f32 %v2537, %v2674
        %v2746 = vmul.f32 %v2538, %v2678
        %v2747 = vmul.f32 %v2539, %v2685
        %v2748 = vmul.f32 %v2540, %v2689
        %v2749 = vmul.f32 %v2541, %v2696
        %v2750 = vmul.f32 %v2542, %v2700
        %v2751 = vmul.f32 %v2543, %v2707
        %v2752 = vmul.f32 %v2544, %v2711
        %v2753 = vmul.f32 %v2545, %v2718
        %v2754 = vmul.f32 %v2546, %v2722
        %v2755 = vld [vmem:[%s293] sm:$0xf]
        %v2756 = vld [vmem:[%s293 + $0x4] sm:$0xf]
        %v2757 = vld [vmem:[%s293 + $0x8] sm:$0xf]
        %v2758 = vld [vmem:[%s293 + $0xc] sm:$0xf]
        %v2759 = vld [vmem:[%s293 + $0x10] sm:$0xf]
        %v2760 = vld [vmem:[%s293 + $0x14] sm:$0xf]
        %v2761 = vld [vmem:[%s293 + $0x18] sm:$0xf]
        %v2762 = vld [vmem:[%s293 + $0x1c] sm:$0xf]
        %v2763 = vld [vmem:[%s293 + $0x20] sm:$0xf]
        %v2764 = vld [vmem:[%s293 + $0x24] sm:$0xf]
        %v2765 = vld [vmem:[%s293 + $0x28] sm:$0xf]
        %v2766 = vld [vmem:[%s293 + $0x2c] sm:$0xf]
        %v2767 = vld [vmem:[%s293 + $0x30] sm:$0xf]
        %v2768 = vld [vmem:[%s293 + $0x34] sm:$0xf]
        %v2769 = vld [vmem:[%s293 + $0x38] sm:$0xf]
        %v2770 = vld [vmem:[%s293 + $0x3c] sm:$0xf]
        %v2771 = vld [vmem:[%s293 + $0x40] sm:$0xf]
        %v2772 = vld [vmem:[%s293 + $0x44] sm:$0xf]
        %v2773 = vld [vmem:[%s293 + $0x48] sm:$0xf]
        %v2774 = vld [vmem:[%s293 + $0x4c] sm:$0xf]
        %v2775 = vld [vmem:[%s293 + $0x50] sm:$0xf]
        %v2776 = vld [vmem:[%s293 + $0x54] sm:$0xf]
        %v2777 = vld [vmem:[%s293 + $0x58] sm:$0xf]
        %v2778 = vld [vmem:[%s293 + $0x5c] sm:$0xf]
        %v2779 = vld [vmem:[%s293 + $0x60] sm:$0xf]
        %v2780 = vld [vmem:[%s293 + $0x64] sm:$0xf]
        %v2781 = vld [vmem:[%s293 + $0x68] sm:$0xf]
        %v2782 = vld [vmem:[%s293 + $0x6c] sm:$0xf]
        %v2783 = vld [vmem:[%s293 + $0x70] sm:$0xf]
        %v2784 = vld [vmem:[%s293 + $0x74] sm:$0xf]
        %v2785 = vld [vmem:[%s293 + $0x78] sm:$0xf]
        %v2786 = vld [vmem:[%s293 + $0x7c] sm:$0xf]
        %v2787 = vunpack.c.l.bf16 %v2755
        %v2788 = vunpack.c.l.bf16 %v2756
        %v2789 = vunpack.c.l.bf16 %v2757
        %v2790 = vunpack.c.l.bf16 %v2758
        %v2791 = vunpack.c.l.bf16 %v2759
        %v2792 = vunpack.c.l.bf16 %v2760
        %v2793 = vunpack.c.l.bf16 %v2761
        %v2794 = vunpack.c.l.bf16 %v2762
        %v2795 = vunpack.c.l.bf16 %v2763
        %v2796 = vunpack.c.l.bf16 %v2764
        %v2797 = vunpack.c.l.bf16 %v2765
        %v2798 = vunpack.c.l.bf16 %v2766
        %v2799 = vunpack.c.l.bf16 %v2767
        %v2800 = vunpack.c.l.bf16 %v2768
        %v2801 = vunpack.c.l.bf16 %v2769
        %v2802 = vunpack.c.l.bf16 %v2770
        %v2803 = vunpack.c.l.bf16 %v2771
        %v2804 = vunpack.c.l.bf16 %v2772
        %v2805 = vunpack.c.l.bf16 %v2773
        %v2806 = vunpack.c.l.bf16 %v2774
        %v2807 = vunpack.c.l.bf16 %v2775
        %v2808 = vunpack.c.l.bf16 %v2776
        %v2809 = vunpack.c.l.bf16 %v2777
        %v2810 = vunpack.c.l.bf16 %v2778
        %v2811 = vunpack.c.l.bf16 %v2779
        %v2812 = vunpack.c.l.bf16 %v2780
        %v2813 = vunpack.c.l.bf16 %v2781
        %v2814 = vunpack.c.l.bf16 %v2782
        %v2815 = vunpack.c.l.bf16 %v2783
        %v2816 = vunpack.c.l.bf16 %v2784
        %v2817 = vunpack.c.l.bf16 %v2785
        %v2818 = vunpack.c.l.bf16 %v2786
        %v2819 = vadd.f32 %v2723, %v2787
        %v2820 = vadd.f32 %v2724, %v2788
        %v2821 = vadd.f32 %v2725, %v2789
        %v2822 = vadd.f32 %v2726, %v2790
        %v2823 = vadd.f32 %v2727, %v2791
        %v2824 = vadd.f32 %v2728, %v2792
        %v2825 = vadd.f32 %v2729, %v2793
        %v2826 = vadd.f32 %v2730, %v2794
        %v2827 = vadd.f32 %v2731, %v2795
        %v2828 = vadd.f32 %v2732, %v2796
        %v2829 = vadd.f32 %v2733, %v2797
        %v2830 = vadd.f32 %v2734, %v2798
        %v2831 = vadd.f32 %v2735, %v2799
        %v2832 = vadd.f32 %v2736, %v2800
        %v2833 = vadd.f32 %v2737, %v2801
        %v2834 = vadd.f32 %v2738, %v2802
        %v2835 = vadd.f32 %v2739, %v2803
        %v2836 = vadd.f32 %v2740, %v2804
        %v2837 = vadd.f32 %v2741, %v2805
        %v2838 = vadd.f32 %v2742, %v2806
        %v2839 = vadd.f32 %v2743, %v2807
        %v2840 = vadd.f32 %v2744, %v2808
        %v2841 = vadd.f32 %v2745, %v2809
        %v2842 = vadd.f32 %v2746, %v2810
        %v2843 = vadd.f32 %v2747, %v2811
        %v2844 = vadd.f32 %v2748, %v2812
        %v2845 = vadd.f32 %v2749, %v2813
        %v2846 = vadd.f32 %v2750, %v2814
        %v2847 = vadd.f32 %v2751, %v2815
        %v2848 = vadd.f32 %v2752, %v2816
        %v2849 = vadd.f32 %v2753, %v2817
        %v2850 = vadd.f32 %v2754, %v2818
        %v2851 = vmax.f32 %v2819, 0.0
        %v2852 = vmax.f32 %v2820, 0.0
        %v2853 = vmax.f32 %v2821, 0.0
        %v2854 = vmax.f32 %v2822, 0.0
        %v2855 = vmax.f32 %v2823, 0.0
        %v2856 = vmax.f32 %v2824, 0.0
        %v2857 = vmax.f32 %v2825, 0.0
        %v2858 = vmax.f32 %v2826, 0.0
        %v2859 = vmax.f32 %v2827, 0.0
        %v2860 = vmax.f32 %v2828, 0.0
        %v2861 = vmax.f32 %v2829, 0.0
        %v2862 = vmax.f32 %v2830, 0.0
        %v2863 = vmax.f32 %v2831, 0.0
        %v2864 = vmax.f32 %v2832, 0.0
        %v2865 = vmax.f32 %v2833, 0.0
        %v2866 = vmax.f32 %v2834, 0.0
        %v2867 = vmax.f32 %v2835, 0.0
        %v2868 = vmax.f32 %v2836, 0.0
        %v2869 = vmax.f32 %v2837, 0.0
        %v2870 = vmax.f32 %v2838, 0.0
        %v2871 = vmax.f32 %v2839, 0.0
        %v2872 = vmax.f32 %v2840, 0.0
        %v2873 = vmax.f32 %v2841, 0.0
        %v2874 = vmax.f32 %v2842, 0.0
        %v2875 = vmax.f32 %v2843, 0.0
        %v2876 = vmax.f32 %v2844, 0.0
        %v2877 = vmax.f32 %v2845, 0.0
        %v2878 = vmax.f32 %v2846, 0.0
        %v2879 = vmax.f32 %v2847, 0.0
        %v2880 = vmax.f32 %v2848, 0.0
        %v2881 = vmax.f32 %v2849, 0.0
        %v2882 = vmax.f32 %v2850, 0.0
        %v2883 = vpack.c.bf16 %v2852, %v2851
        %v2884 = vpack.c.bf16 %v2854, %v2853
        %v2885 = vpack.c.bf16 %v2856, %v2855
        %v2886 = vpack.c.bf16 %v2858, %v2857
        %v2887 = vpack.c.bf16 %v2860, %v2859
        %v2888 = vpack.c.bf16 %v2862, %v2861
        %v2889 = vpack.c.bf16 %v2864, %v2863
        %v2890 = vpack.c.bf16 %v2866, %v2865
        %v2891 = vpack.c.bf16 %v2868, %v2867
        %v2892 = vpack.c.bf16 %v2870, %v2869
        %v2893 = vpack.c.bf16 %v2872, %v2871
        %v2894 = vpack.c.bf16 %v2874, %v2873
        %v2895 = vpack.c.bf16 %v2876, %v2875
        %v2896 = vpack.c.bf16 %v2878, %v2877
        %v2897 = vpack.c.bf16 %v2880, %v2879
        %v2898 = vpack.c.bf16 %v2882, %v2881
        %v2915 = vunpack.c.l.b16 %v2883
        %v2916 = vunpack.c.h.b16 %v2883
        %v2917 = vunpack.c.l.b16 %v2884
        %v2918 = vunpack.c.h.b16 %v2884
        %v2919 = vunpack.c.l.b16 %v2885
        %v2920 = vunpack.c.h.b16 %v2885
        %v2921 = vunpack.c.l.b16 %v2886
        %v2922 = vunpack.c.h.b16 %v2886
        %v2923 = vunpack.c.l.b16 %v2887
        %v2924 = vunpack.c.h.b16 %v2887
        %v2925 = vunpack.c.l.b16 %v2888
        %v2926 = vunpack.c.h.b16 %v2888
        %v2927 = vunpack.c.l.b16 %v2889
        %v2928 = vunpack.c.h.b16 %v2889
        %v2929 = vunpack.c.l.b16 %v2890
        %v2930 = vunpack.c.h.b16 %v2890
        %v2931 = vunpack.c.l.b16 %v2891
        %v2932 = vunpack.c.h.b16 %v2891
        %v2933 = vunpack.c.l.b16 %v2892
        %v2934 = vunpack.c.h.b16 %v2892
        %v2935 = vunpack.c.l.b16 %v2893
        %v2936 = vunpack.c.h.b16 %v2893
        %v2937 = vunpack.c.l.b16 %v2894
        %v2938 = vunpack.c.h.b16 %v2894
        %v2939 = vunpack.c.l.b16 %v2895
        %v2940 = vunpack.c.h.b16 %v2895
        %v2941 = vunpack.c.l.b16 %v2896
        %v2942 = vunpack.c.h.b16 %v2896
        %v2943 = vunpack.c.l.b16 %v2897
        %v2944 = vunpack.c.h.b16 %v2897
        %v2945 = vunpack.c.l.b16 %v2898
        %v2946 = vunpack.c.h.b16 %v2898
        %v2947 = vpack.c.b16 %v2915, %v2915
        %v2948 = vpack.c.b16 %v2916, %v2916
        %v2949 = vpack.c.b16 %v2917, %v2917
        %v2950 = vpack.c.b16 %v2918, %v2918
        %v2951 = vpack.c.b16 %v2919, %v2919
        %v2952 = vpack.c.b16 %v2920, %v2920
        %v2953 = vpack.c.b16 %v2921, %v2921
        %v2954 = vpack.c.b16 %v2922, %v2922
        %v2955 = vpack.c.b16 %v2923, %v2923
        %v2956 = vpack.c.b16 %v2924, %v2924
        %v2957 = vpack.c.b16 %v2925, %v2925
        %v2958 = vpack.c.b16 %v2926, %v2926
        %v2959 = vpack.c.b16 %v2927, %v2927
        %v2960 = vpack.c.b16 %v2928, %v2928
        %v2961 = vpack.c.b16 %v2929, %v2929
        %v2962 = vpack.c.b16 %v2930, %v2930
        %v2963 = vpack.c.b16 %v2931, %v2931
        %v2964 = vpack.c.b16 %v2932, %v2932
        %v2965 = vpack.c.b16 %v2933, %v2933
        %v2966 = vpack.c.b16 %v2934, %v2934
        %v2967 = vpack.c.b16 %v2935, %v2935
        %v2968 = vpack.c.b16 %v2936, %v2936
        %v2969 = vpack.c.b16 %v2937, %v2937
        %v2970 = vpack.c.b16 %v2938, %v2938
        %v2971 = vpack.c.b16 %v2939, %v2939
        %v2972 = vpack.c.b16 %v2940, %v2940
        %v2973 = vpack.c.b16 %v2941, %v2941
        %v2974 = vpack.c.b16 %v2942, %v2942
        %v2975 = vpack.c.b16 %v2943, %v2943
        %v2976 = vpack.c.b16 %v2944, %v2944
        %v2977 = vpack.c.b16 %v2945, %v2945
        %v2978 = vpack.c.b16 %v2946, %v2946
        %vm3011 = vcmask 125952
        %3012 = vst.msk [vmem:[%s302] sm:$0xf] %vm3011, %v2947
        %3013 = vst.msk [vmem:[%s302 + $0x4] sm:$0xf] %vm3011, %v2948
        %3014 = vst.msk [vmem:[%s302 + $0x8] sm:$0xf] %vm3011, %v2949
        %3015 = vst.msk [vmem:[%s302 + $0xc] sm:$0xf] %vm3011, %v2950
        %3016 = vst.msk [vmem:[%s302 + $0x10] sm:$0xf] %vm3011, %v2951
        %3017 = vst.msk [vmem:[%s302 + $0x14] sm:$0xf] %vm3011, %v2952
        %3018 = vst.msk [vmem:[%s302 + $0x18] sm:$0xf] %vm3011, %v2953
        %3019 = vst.msk [vmem:[%s302 + $0x1c] sm:$0xf] %vm3011, %v2954
        %3020 = vst.msk [vmem:[%s302 + $0x20] sm:$0xf] %vm3011, %v2955
        %3021 = vst.msk [vmem:[%s302 + $0x24] sm:$0xf] %vm3011, %v2956
        %3022 = vst.msk [vmem:[%s302 + $0x28] sm:$0xf] %vm3011, %v2957
        %3023 = vst.msk [vmem:[%s302 + $0x2c] sm:$0xf] %vm3011, %v2958
        %3024 = vst.msk [vmem:[%s302 + $0x30] sm:$0xf] %vm3011, %v2959
        %3025 = vst.msk [vmem:[%s302 + $0x34] sm:$0xf] %vm3011, %v2960
        %3026 = vst.msk [vmem:[%s302 + $0x38] sm:$0xf] %vm3011, %v2961
        %3027 = vst.msk [vmem:[%s302 + $0x3c] sm:$0xf] %vm3011, %v2962
        %3028 = vst.msk [vmem:[%s302 + $0x40] sm:$0xf] %vm3011, %v2963
        %3029 = vst.msk [vmem:[%s302 + $0x44] sm:$0xf] %vm3011, %v2964
        %3030 = vst.msk [vmem:[%s302 + $0x48] sm:$0xf] %vm3011, %v2965
        %3031 = vst.msk [vmem:[%s302 + $0x4c] sm:$0xf] %vm3011, %v2966
        %3032 = vst.msk [vmem:[%s302 + $0x50] sm:$0xf] %vm3011, %v2967
        %3033 = vst.msk [vmem:[%s302 + $0x54] sm:$0xf] %vm3011, %v2968
        %3034 = vst.msk [vmem:[%s302 + $0x58] sm:$0xf] %vm3011, %v2969
        %3035 = vst.msk [vmem:[%s302 + $0x5c] sm:$0xf] %vm3011, %v2970
        %3036 = vst.msk [vmem:[%s302 + $0x60] sm:$0xf] %vm3011, %v2971
        %3037 = vst.msk [vmem:[%s302 + $0x64] sm:$0xf] %vm3011, %v2972
        %3038 = vst.msk [vmem:[%s302 + $0x68] sm:$0xf] %vm3011, %v2973
        %3039 = vst.msk [vmem:[%s302 + $0x6c] sm:$0xf] %vm3011, %v2974
        %3040 = vst.msk [vmem:[%s302 + $0x70] sm:$0xf] %vm3011, %v2975
        %3041 = vst.msk [vmem:[%s302 + $0x74] sm:$0xf] %vm3011, %v2976
        %3042 = vst.msk [vmem:[%s302 + $0x78] sm:$0xf] %vm3011, %v2977
        %3043 = vst.msk [vmem:[%s302 + $0x7c] sm:$0xf] %vm3011, %v2978
        %p3044 = scmp.lt.s32.totalorder %s18, 1
        %s3045 = scalar_select %p3044, %s18, 1
        %s3046 = smul.addr %s3045, 32
        %s3047 = smul.addr %s3046, 4
        %s3048 = scalar_lea.vmem %s6, %s3047
        // Predicated region
        $region49: #{bottleneck_forward.3} parent=43 // pred_check
          %p3049 = pneg %p177
        $region50: #{bottleneck_forward.3} parent=43 // pred_check_branch
          %3051 = sbr.rel (%p3049) target = $region52
        $region51: #{bottleneck_forward.3} parent=43 // pred_region
          _
        $region52: #{bottleneck_forward.3} parent=43 // pred_fallthru
          _
      $region44: #{bottleneck_forward.3} parent=5 // pred_fallthru
        _
      %p3052 = scmp.le.s32.totalorder 2, %s13
      // Predicated region
      $region53: #{bottleneck_forward.3} parent=5 // pred_check
        %p3053 = pneg %p3052
      $region54: #{bottleneck_forward.3} parent=5 // pred_check_branch
        %3055 = sbr.rel (%p3053) target = $region56
      $region55: #{bottleneck_forward.3} parent=5 // pred_region
        %s3056 = ssub.s32 %s13, 2
        // Predicated region
        $region57: #{bottleneck_forward.3} parent=55 // pred_check
          %p3057 = pneg %p183
        $region58: #{bottleneck_forward.3} parent=55 // pred_check_branch
          %3059 = sbr.rel (%p3057) target = $region60
        $region59: #{bottleneck_forward.3} parent=55 // pred_region
          %p3060 = scmp.lt.s32.totalorder %s19, 1
          %s3061 = scalar_select %p3060, %s19, 1
          %s3062 = smul.addr %s3061, 32
          %s3063 = smul.addr %s3062, 4
          %s3064 = scalar_lea.vmem %s6, %s3063
        $region60: #{bottleneck_forward.3} parent=55 // pred_fallthru
          _
      $region56: #{bottleneck_forward.3} parent=5 // pred_fallthru
        _
    $region6: #{bottleneck_forward.3} parent=1 // loop_footer
      %s17 = sadd.s32 1, %s13
    $region7: #{bottleneck_forward.3} parent=1 // loop_footer_branch
      %12 = sbr.rel target = $region3
    $region8: #{bottleneck_forward.3} parent=1 // loop_exit
      _
    %3065 = vsyncpa [#allocation5], 1
    %s3066 = scalar_lea.sflag [#allocation5], 1
    %3067 = vsyncpa %s3066, 1

// kernel: bottleneck_forward.2
$region0: #{bottleneck_forward.2}
  #allocation0 [shape = 'u32[]', space=smem, size = 0x4, offset = 0x4, fixed_abs, tag = 'smem constant byte address 0x4 - core index']
  #allocation1 [shape = 'u32[144,128]{1,0:T(1,128)}', space=vmem, size = 0x12000, scoped, tag = 'internal scratch']
  #allocation2 [shape = 'bf16[18,18,4]{2,1,0:T(8,128)(2,1)}', space=vmem, size = 0x1b000, scoped, tag = 'scratch operand']
  #allocation3 [shape = 'f32[256,4]{1,0:T(8,128)}', space=vmem, size = 0x20000, scoped, tag = 'scratch operand']
  %s0 = inlined_call_operand.vmem [shape: bf16[2,16,16,16], index: 0, kind: input, shape index: {}]
  %s1 = inlined_call_operand.vmem [shape: bf16[16,4], index: 1, kind: input, shape index: {}]
  %s2 = inlined_call_operand.vmem [shape: f32[1,4], index: 2, kind: input, shape index: {}]
  %s3 = inlined_call_operand.vmem [shape: f32[1,4], index: 3, kind: input, shape index: {}]
  %s4 = inlined_call_operand.vmem [shape: bf16[3,12,4], index: 4, kind: input, shape index: {}]
  %s5 = inlined_call_operand.vmem [shape: f32[1,4], index: 5, kind: input, shape index: {}]
  %s6 = inlined_call_operand.vmem [shape: f32[1,4], index: 6, kind: input, shape index: {}]
  %s7 = inlined_call_operand.vmem [shape: bf16[4,16], index: 7, kind: input, shape index: {}]
  %s8 = inlined_call_operand.vmem [shape: f32[1,16], index: 8, kind: input, shape index: {}]
  %s9 = inlined_call_operand.vmem [shape: f32[1,16], index: 9, kind: input, shape index: {}]
  %s10 = inlined_call_operand.vmem [shape: bf16[2,256,16], index: 10, kind: output, shape index: {0}]
  %s11 = inlined_call_operand.vmem [shape: f32[2,2,16], index: 11, kind: output, shape index: {1}]
  %12 = xla_tuple %s10, %s11
  %s13 = sld [smem:[#allocation0]]
  $region81: #{bottleneck_forward.2} parent=0
    _
  %s15 = ssub.s32 1, %s13
  %s16 = scalar_select 0, %s15, %s13
  loop: start=0, step=1, limit=4
  $region2: #{bottleneck_forward.2} parent=0 // loop_pre_header
    _
  $region3: #{bottleneck_forward.2} parent=0 // loop_header
    %s18 = sphi 0, %s22
    %p19 = scmp.ge.s32.totalorder %s18, 4
    %s28 = sphi 0, %s30
    %s31 = sphi 0, %s28
    %s32 = sphi 0, %s31
    %s48 = sphi 0, %s32
    %s52 = sphi 0, %s52
    %s54 = sphi 0, %s52
    %s55 = sphi 0, %s54
    %s69 = sphi 0, %s55
    %s73 = sphi 0, %s73
    %s75 = sphi 0, %s73
    %s76 = sphi 0, %s75
    %s90 = sphi 0, %s76
    %s94 = sphi 0, %s94
    %s96 = sphi 0, %s94
    %s97 = sphi 0, %s96
    %s111 = sphi 0, %s97
    %s115 = sphi 0, %s115
    %s117 = sphi 0, %s115
    %s118 = sphi 0, %s117
    %s132 = sphi 0, %s118
    %s136 = sphi 0, %s136
    %s138 = sphi 0, %s136
    %s139 = sphi 0, %s138
    %s153 = sphi 0, %s139
    %s157 = sphi 0, %s157
    %s159 = sphi 0, %s157
    %s160 = sphi 0, %s159
    %s174 = sphi 0, %s160
    %s178 = sphi 0, %s178
    %s180 = sphi 0, %s178
    %s181 = sphi 0, %s180
    %s195 = sphi 0, %s181
    %s199 = sphi 0, %s199
    %s201 = sphi 0, %s199
    %s202 = sphi 0, %s201
    %s216 = sphi 0, %s202
    %s220 = sphi 0, %s220
    %s222 = sphi 0, %s220
    %s223 = sphi 0, %s222
    %s237 = sphi 0, %s223
    %s243 = sphi 0, %s245
    %s246 = sphi 0, %s243
    %s247 = sphi 0, %s246
    %s263 = sphi 0, %s247
    %s269 = sphi 0, %s271
    %s272 = sphi 0, %s269
    %s273 = sphi 0, %s272
    %s289 = sphi 0, %s273
  $region4: #{bottleneck_forward.2} parent=0 // loop_header_branch
    %21 = sbr.rel (%p19) target = $region8
  $region5: #{bottleneck_forward.2} parent=0 // loop_body
    %s23 = ssub.s32 %s18, 1
    %s24 = ssub.s32 %s18, 2
    %s25 = sadd.s32 %s18, 1
    %s26 = ssub.s32 %s18, %s25
    %p27 = scmp.eq.s32.totalorder %s26, 0
    %s29 = sadd.s32 %s28, 1
    %s30 = scalar_select %p27, %s28, %s29
    %p33 = pneg %p27
    %p34 = scmp.eq.s32.totalorder %s18, 1
    %p35 = por %p33, %p34
    %p36 = scmp.ne.s32.totalorder %s28, %s31
    %p37 = scmp.eq.s32.totalorder %s18, 0
    %p38 = por %p36, %p37
    %p39 = scmp.ne.s32.totalorder %s28, %s31
    %p40 = scmp.eq.s32.totalorder %s23, 1
    %p41 = por %p39, %p40
    %p42 = scmp.ne.s32.totalorder %s31, %s32
    %p43 = scmp.eq.s32.totalorder %s23, 0
    %p44 = por %p42, %p43
    %p45 = scmp.ne.s32.totalorder %s31, %s32
    %p46 = scmp.eq.s32.totalorder %s24, 1
    %p47 = por %p45, %p46
    %p49 = scmp.ne.s32.totalorder %s32, %s48
    %p50 = scmp.eq.s32.totalorder %s24, 0
    %p51 = por %p49, %p50
    %s53 = sadd.s32 %s52, 1
    %p56 = scmp.eq.s32.totalorder %s18, 1
    %p57 = scmp.ne.s32.totalorder %s52, %s54
    %p58 = scmp.eq.s32.totalorder %s18, 0
    %p59 = por %p57, %p58
    %p60 = scmp.ne.s32.totalorder %s52, %s54
    %p61 = scmp.eq.s32.totalorder %s23, 1
    %p62 = por %p60, %p61
    %p63 = scmp.ne.s32.totalorder %s54, %s55
    %p64 = scmp.eq.s32.totalorder %s23, 0
    %p65 = por %p63, %p64
    %p66 = scmp.ne.s32.totalorder %s54, %s55
    %p67 = scmp.eq.s32.totalorder %s24, 1
    %p68 = por %p66, %p67
    %p70 = scmp.ne.s32.totalorder %s55, %s69
    %p71 = scmp.eq.s32.totalorder %s24, 0
    %p72 = por %p70, %p71
    %s74 = sadd.s32 %s73, 1
    %p77 = scmp.eq.s32.totalorder %s18, 1
    %p78 = scmp.ne.s32.totalorder %s73, %s75
    %p79 = scmp.eq.s32.totalorder %s18, 0
    %p80 = por %p78, %p79
    %p81 = scmp.ne.s32.totalorder %s73, %s75
    %p82 = scmp.eq.s32.totalorder %s23, 1
    %p83 = por %p81, %p82
    %p84 = scmp.ne.s32.totalorder %s75, %s76
    %p85 = scmp.eq.s32.totalorder %s23, 0
    %p86 = por %p84, %p85
    %p87 = scmp.ne.s32.totalorder %s75, %s76
    %p88 = scmp.eq.s32.totalorder %s24, 1
    %p89 = por %p87, %p88
    %p91 = scmp.ne.s32.totalorder %s76, %s90
    %p92 = scmp.eq.s32.totalorder %s24, 0
    %p93 = por %p91, %p92
    %s95 = sadd.s32 %s94, 1
    %p98 = scmp.eq.s32.totalorder %s18, 1
    %p99 = scmp.ne.s32.totalorder %s94, %s96
    %p100 = scmp.eq.s32.totalorder %s18, 0
    %p101 = por %p99, %p100
    %p102 = scmp.ne.s32.totalorder %s94, %s96
    %p103 = scmp.eq.s32.totalorder %s23, 1
    %p104 = por %p102, %p103
    %p105 = scmp.ne.s32.totalorder %s96, %s97
    %p106 = scmp.eq.s32.totalorder %s23, 0
    %p107 = por %p105, %p106
    %p108 = scmp.ne.s32.totalorder %s96, %s97
    %p109 = scmp.eq.s32.totalorder %s24, 1
    %p110 = por %p108, %p109
    %p112 = scmp.ne.s32.totalorder %s97, %s111
    %p113 = scmp.eq.s32.totalorder %s24, 0
    %p114 = por %p112, %p113
    %s116 = sadd.s32 %s115, 1
    %p119 = scmp.eq.s32.totalorder %s18, 1
    %p120 = scmp.ne.s32.totalorder %s115, %s117
    %p121 = scmp.eq.s32.totalorder %s18, 0
    %p122 = por %p120, %p121
    %p123 = scmp.ne.s32.totalorder %s115, %s117
    %p124 = scmp.eq.s32.totalorder %s23, 1
    %p125 = por %p123, %p124
    %p126 = scmp.ne.s32.totalorder %s117, %s118
    %p127 = scmp.eq.s32.totalorder %s23, 0
    %p128 = por %p126, %p127
    %p129 = scmp.ne.s32.totalorder %s117, %s118
    %p130 = scmp.eq.s32.totalorder %s24, 1
    %p131 = por %p129, %p130
    %p133 = scmp.ne.s32.totalorder %s118, %s132
    %p134 = scmp.eq.s32.totalorder %s24, 0
    %p135 = por %p133, %p134
    %s137 = sadd.s32 %s136, 1
    %p140 = scmp.eq.s32.totalorder %s18, 1
    %p141 = scmp.ne.s32.totalorder %s136, %s138
    %p142 = scmp.eq.s32.totalorder %s18, 0
    %p143 = por %p141, %p142
    %p144 = scmp.ne.s32.totalorder %s136, %s138
    %p145 = scmp.eq.s32.totalorder %s23, 1
    %p146 = por %p144, %p145
    %p147 = scmp.ne.s32.totalorder %s138, %s139
    %p148 = scmp.eq.s32.totalorder %s23, 0
    %p149 = por %p147, %p148
    %p150 = scmp.ne.s32.totalorder %s138, %s139
    %p151 = scmp.eq.s32.totalorder %s24, 1
    %p152 = por %p150, %p151
    %p154 = scmp.ne.s32.totalorder %s139, %s153
    %p155 = scmp.eq.s32.totalorder %s24, 0
    %p156 = por %p154, %p155
    %s158 = sadd.s32 %s157, 1
    %p161 = scmp.eq.s32.totalorder %s18, 1
    %p162 = scmp.ne.s32.totalorder %s157, %s159
    %p163 = scmp.eq.s32.totalorder %s18, 0
    %p164 = por %p162, %p163
    %p165 = scmp.ne.s32.totalorder %s157, %s159
    %p166 = scmp.eq.s32.totalorder %s23, 1
    %p167 = por %p165, %p166
    %p168 = scmp.ne.s32.totalorder %s159, %s160
    %p169 = scmp.eq.s32.totalorder %s23, 0
    %p170 = por %p168, %p169
    %p171 = scmp.ne.s32.totalorder %s159, %s160
    %p172 = scmp.eq.s32.totalorder %s24, 1
    %p173 = por %p171, %p172
    %p175 = scmp.ne.s32.totalorder %s160, %s174
    %p176 = scmp.eq.s32.totalorder %s24, 0
    %p177 = por %p175, %p176
    %s179 = sadd.s32 %s178, 1
    %p182 = scmp.eq.s32.totalorder %s18, 1
    %p183 = scmp.ne.s32.totalorder %s178, %s180
    %p184 = scmp.eq.s32.totalorder %s18, 0
    %p185 = por %p183, %p184
    %p186 = scmp.ne.s32.totalorder %s178, %s180
    %p187 = scmp.eq.s32.totalorder %s23, 1
    %p188 = por %p186, %p187
    %p189 = scmp.ne.s32.totalorder %s180, %s181
    %p190 = scmp.eq.s32.totalorder %s23, 0
    %p191 = por %p189, %p190
    %p192 = scmp.ne.s32.totalorder %s180, %s181
    %p193 = scmp.eq.s32.totalorder %s24, 1
    %p194 = por %p192, %p193
    %p196 = scmp.ne.s32.totalorder %s181, %s195
    %p197 = scmp.eq.s32.totalorder %s24, 0
    %p198 = por %p196, %p197
    %s200 = sadd.s32 %s199, 1
    %p203 = scmp.eq.s32.totalorder %s18, 1
    %p204 = scmp.ne.s32.totalorder %s199, %s201
    %p205 = scmp.eq.s32.totalorder %s18, 0
    %p206 = por %p204, %p205
    %p207 = scmp.ne.s32.totalorder %s199, %s201
    %p208 = scmp.eq.s32.totalorder %s23, 1
    %p209 = por %p207, %p208
    %p210 = scmp.ne.s32.totalorder %s201, %s202
    %p211 = scmp.eq.s32.totalorder %s23, 0
    %p212 = por %p210, %p211
    %p213 = scmp.ne.s32.totalorder %s201, %s202
    %p214 = scmp.eq.s32.totalorder %s24, 1
    %p215 = por %p213, %p214
    %p217 = scmp.ne.s32.totalorder %s202, %s216
    %p218 = scmp.eq.s32.totalorder %s24, 0
    %p219 = por %p217, %p218
    %s221 = sadd.s32 %s220, 1
    %p224 = scmp.eq.s32.totalorder %s18, 1
    %p225 = scmp.ne.s32.totalorder %s220, %s222
    %p226 = scmp.eq.s32.totalorder %s18, 0
    %p227 = por %p225, %p226
    %p228 = scmp.ne.s32.totalorder %s220, %s222
    %p229 = scmp.eq.s32.totalorder %s23, 1
    %p230 = por %p228, %p229
    %p231 = scmp.ne.s32.totalorder %s222, %s223
    %p232 = scmp.eq.s32.totalorder %s23, 0
    %p233 = por %p231, %p232
    %p234 = scmp.ne.s32.totalorder %s222, %s223
    %p235 = scmp.eq.s32.totalorder %s24, 1
    %p236 = por %p234, %p235
    %p238 = scmp.ne.s32.totalorder %s223, %s237
    %p239 = scmp.eq.s32.totalorder %s24, 0
    %p240 = por %p238, %p239
    %s241 = ssub.s32 %s18, %s25
    %p242 = scmp.eq.s32.totalorder %s241, 0
    %s244 = sadd.s32 %s243, 1
    %s245 = scalar_select %p242, %s243, %s244
    %p248 = pneg %p242
    %p249 = scmp.eq.s32.totalorder %s18, 1
    %p250 = por %p248, %p249
    %p251 = scmp.ne.s32.totalorder %s243, %s246
    %p252 = scmp.eq.s32.totalorder %s18, 0
    %p253 = por %p251, %p252
    %p254 = scmp.ne.s32.totalorder %s243, %s246
    %p255 = scmp.eq.s32.totalorder %s23, 1
    %p256 = por %p254, %p255
    %p257 = scmp.ne.s32.totalorder %s246, %s247
    %p258 = scmp.eq.s32.totalorder %s23, 0
    %p259 = por %p257, %p258
    %p260 = scmp.ne.s32.totalorder %s246, %s247
    %p261 = scmp.eq.s32.totalorder %s24, 1
    %p262 = por %p260, %p261
    %p264 = scmp.ne.s32.totalorder %s247, %s263
    %p265 = scmp.eq.s32.totalorder %s24, 0
    %p266 = por %p264, %p265
    %s267 = ssub.s32 %s18, %s25
    %p268 = scmp.eq.s32.totalorder %s267, 0
    %s270 = sadd.s32 %s269, 1
    %s271 = scalar_select %p268, %s269, %s270
    %p274 = pneg %p268
    %p275 = scmp.eq.s32.totalorder %s18, 1
    %p276 = por %p274, %p275
    %p277 = scmp.ne.s32.totalorder %s269, %s272
    %p278 = scmp.eq.s32.totalorder %s18, 0
    %p279 = por %p277, %p278
    %p280 = scmp.ne.s32.totalorder %s269, %s272
    %p281 = scmp.eq.s32.totalorder %s23, 1
    %p282 = por %p280, %p281
    %p283 = scmp.ne.s32.totalorder %s272, %s273
    %p284 = scmp.eq.s32.totalorder %s23, 0
    %p285 = por %p283, %p284
    %p286 = scmp.ne.s32.totalorder %s272, %s273
    %p287 = scmp.eq.s32.totalorder %s24, 1
    %p288 = por %p286, %p287
    %p290 = scmp.ne.s32.totalorder %s273, %s289
    %p291 = scmp.eq.s32.totalorder %s24, 0
    %p292 = por %p290, %p291
    %p293 = scmp.le.s32.totalorder 1, %s18
    %p294 = scmp.lt.s32.totalorder %s18, 3
    %p295 = pnand %p293, %p294
    %p296 = pneg %p295
    // Predicated region
    $region9: #{bottleneck_forward.2} parent=5 // pred_check
      _
    $region10: #{bottleneck_forward.2} parent=5 // pred_check_branch
      %298 = sbr.rel (%p295) target = $region12
    $region11: #{bottleneck_forward.2} parent=5 // pred_region
      %s299 = ssub.s32 %s18, 1
      // Predicated region
      $region13: #{bottleneck_forward.2} parent=11 // pred_check
        %p300 = pneg %p65
      $region14: #{bottleneck_forward.2} parent=11 // pred_check_branch
        %302 = sbr.rel (%p300) target = $region16
      $region15: #{bottleneck_forward.2} parent=11 // pred_region
        _
      $region16: #{bottleneck_forward.2} parent=11 // pred_fallthru
        _
      // Predicated region
      $region17: #{bottleneck_forward.2} parent=11 // pred_check
        %p303 = pneg %p86
      $region18: #{bottleneck_forward.2} parent=11 // pred_check_branch
        %305 = sbr.rel (%p303) target = $region20
      $region19: #{bottleneck_forward.2} parent=11 // pred_region
        _
      $region20: #{bottleneck_forward.2} parent=11 // pred_fallthru
        _
      // Predicated region
      $region21: #{bottleneck_forward.2} parent=11 // pred_check
        %p306 = pneg %p107
      $region22: #{bottleneck_forward.2} parent=11 // pred_check_branch
        %308 = sbr.rel (%p306) target = $region24
      $region23: #{bottleneck_forward.2} parent=11 // pred_region
        _
      $region24: #{bottleneck_forward.2} parent=11 // pred_fallthru
        _
      // Predicated region
      $region25: #{bottleneck_forward.2} parent=11 // pred_check
        %p309 = pneg %p128
      $region26: #{bottleneck_forward.2} parent=11 // pred_check_branch
        %311 = sbr.rel (%p309) target = $region28
      $region27: #{bottleneck_forward.2} parent=11 // pred_region
        _
      $region28: #{bottleneck_forward.2} parent=11 // pred_fallthru
        _
      // Predicated region
      $region29: #{bottleneck_forward.2} parent=11 // pred_check
        %p312 = pneg %p149
      $region30: #{bottleneck_forward.2} parent=11 // pred_check_branch
        %314 = sbr.rel (%p312) target = $region32
      $region31: #{bottleneck_forward.2} parent=11 // pred_region
        _
      $region32: #{bottleneck_forward.2} parent=11 // pred_fallthru
        _
      // Predicated region
      $region33: #{bottleneck_forward.2} parent=11 // pred_check
        %p315 = pneg %p170
      $region34: #{bottleneck_forward.2} parent=11 // pred_check_branch
        %317 = sbr.rel (%p315) target = $region36
      $region35: #{bottleneck_forward.2} parent=11 // pred_region
        _
      $region36: #{bottleneck_forward.2} parent=11 // pred_fallthru
        _
      // Predicated region
      $region37: #{bottleneck_forward.2} parent=11 // pred_check
        %p318 = pneg %p191
      $region38: #{bottleneck_forward.2} parent=11 // pred_check_branch
        %320 = sbr.rel (%p318) target = $region40
      $region39: #{bottleneck_forward.2} parent=11 // pred_region
        _
      $region40: #{bottleneck_forward.2} parent=11 // pred_fallthru
        _
      // Predicated region
      $region41: #{bottleneck_forward.2} parent=11 // pred_check
        %p321 = pneg %p212
      $region42: #{bottleneck_forward.2} parent=11 // pred_check_branch
        %323 = sbr.rel (%p321) target = $region44
      $region43: #{bottleneck_forward.2} parent=11 // pred_region
        _
      $region44: #{bottleneck_forward.2} parent=11 // pred_fallthru
        _
      // Predicated region
      $region45: #{bottleneck_forward.2} parent=11 // pred_check
        %p324 = pneg %p233
      $region46: #{bottleneck_forward.2} parent=11 // pred_check_branch
        %326 = sbr.rel (%p324) target = $region48
      $region47: #{bottleneck_forward.2} parent=11 // pred_region
        _
      $region48: #{bottleneck_forward.2} parent=11 // pred_fallthru
        _
    $region12: #{bottleneck_forward.2} parent=5 // pred_fallthru
      _
    %p327 = scmp.lt.s32.totalorder %s18, 2
    // Predicated region
    $region49: #{bottleneck_forward.2} parent=5 // pred_check
      %p328 = pneg %p327
    $region50: #{bottleneck_forward.2} parent=5 // pred_check_branch
      %330 = sbr.rel (%p328) target = $region52
    $region51: #{bottleneck_forward.2} parent=5 // pred_region
      // Predicated region
      $region53: #{bottleneck_forward.2} parent=51 // pred_check
        %p331 = pneg %p38
      $region54: #{bottleneck_forward.2} parent=51 // pred_check_branch
        %333 = sbr.rel (%p331) target = $region56
      $region55: #{bottleneck_forward.2} parent=51 // pred_region
        %p334 = scmp.lt.s32.totalorder %s18, 1
        %s335 = scalar_select %p334, %s18, 1
        %s336 = smul.addr %s335, 32
        %s337 = smul.addr %s336, 4
        %s338 = scalar_lea.vmem %s0, %s337
      $region56: #{bottleneck_forward.2} parent=51 // pred_fallthru
        _
    $region52: #{bottleneck_forward.2} parent=5 // pred_fallthru
      _
    %p339 = scmp.le.s32.totalorder 1, %s18
    %p340 = scmp.lt.s32.totalorder %s18, 3
    %p341 = pnand %p339, %p340
    %p342 = pneg %p341
    // Predicated region
    $region57: #{bottleneck_forward.2} parent=5 // pred_check
      _
    $region58: #{bottleneck_forward.2} parent=5 // pred_check_branch
      %344 = sbr.rel (%p341) target = $region60
    $region59: #{bottleneck_forward.2} parent=5 // pred_region
      %s345 = ssub.s32 %s18, 1
      %p346 = scmp.lt.s32.totalorder %s23, 1
      %s347 = scalar_select %p346, %s23, 1
      %s348 = smul.addr %s347, 32
      %s349 = smul.addr %s348, 4
      %s350 = scalar_lea.vmem %s0, %s349
      %p351 = pneg %p44
      %p352 = pneg %p41
      %p353 = pneg %p65
      %p354 = pneg %p62
      %p355 = pneg %p86
      %p356 = pneg %p83
      %p357 = pneg %p107
      %p358 = pneg %p104
      %p359 = pneg %p128
      %p360 = pneg %p125
      %p361 = pneg %p149
      %p362 = pneg %p146
      %p363 = pneg %p170
      %p364 = pneg %p167
      %p365 = pneg %p191
      %p366 = pneg %p188
      %p367 = pneg %p212
      %p368 = pneg %p209
      %p369 = pneg %p233
      %p370 = pneg %p230
      %p371 = pneg %p259
      %p372 = pneg %p256
      %p373 = scmp.lt.s32.totalorder %s23, 1
      %s374 = scalar_select %p373, %s23, 1
      %s375 = smul.addr %s374, 32
      %s376 = smul.addr %s375, 4
      %s377 = scalar_lea.vmem %s10, %s376
      %p378 = pneg %p285
      %p379 = pneg %p282
      %p380 = scmp.lt.s32.totalorder %s23, 1
      %s381 = scalar_select %p380, %s23, 1
      %s382 = smul.addr %s381, 2
      %s383 = scalar_lea.vmem %s11, %s382
      %p384 = scmp.lt.s32.totalorder %s23, 1
      %s385 = scalar_select %p384, %s23, 1
      %s386 = smul.addr %s385, 32
      %s387 = smul.addr %s386, 4
      %s388 = scalar_lea.vmem %s0, %s387
      %p389 = scmp.lt.s32.totalorder %s23, 1
      %s390 = scalar_select %p389, %s23, 1
      %s391 = smul.addr %s390, 32
      %s392 = smul.addr %s391, 4
      %s393 = scalar_lea.vmem %s10, %s392
      %p394 = scmp.lt.s32.totalorder %s23, 1
      %s395 = scalar_select %p394, %s23, 1
      %s396 = smul.addr %s395, 2
      %s397 = scalar_lea.vmem %s11, %s396
      %v399 = vld [vmem:[%s388] sm:$0xf]
      %v400 = vld [vmem:[%s388 + $0x4] sm:$0xf]
      %v401 = vld [vmem:[%s388 + $0x8] sm:$0xf]
      %v402 = vld [vmem:[%s388 + $0xc] sm:$0xf]
      %v403 = vld [vmem:[%s388 + $0x10] sm:$0xf]
      %v404 = vld [vmem:[%s388 + $0x14] sm:$0xf]
      %v405 = vld [vmem:[%s388 + $0x18] sm:$0xf]
      %v406 = vld [vmem:[%s388 + $0x1c] sm:$0xf]
      %v407 = vld [vmem:[%s388 + $0x20] sm:$0xf]
      %v408 = vld [vmem:[%s388 + $0x24] sm:$0xf]
      %v409 = vld [vmem:[%s388 + $0x28] sm:$0xf]
      %v410 = vld [vmem:[%s388 + $0x2c] sm:$0xf]
      %v411 = vld [vmem:[%s388 + $0x30] sm:$0xf]
      %v412 = vld [vmem:[%s388 + $0x34] sm:$0xf]
      %v413 = vld [vmem:[%s388 + $0x38] sm:$0xf]
      %v414 = vld [vmem:[%s388 + $0x3c] sm:$0xf]
      %v415 = vld [vmem:[%s388 + $0x40] sm:$0xf]
      %v416 = vld [vmem:[%s388 + $0x44] sm:$0xf]
      %v417 = vld [vmem:[%s388 + $0x48] sm:$0xf]
      %v418 = vld [vmem:[%s388 + $0x4c] sm:$0xf]
      %v419 = vld [vmem:[%s388 + $0x50] sm:$0xf]
      %v420 = vld [vmem:[%s388 + $0x54] sm:$0xf]
      %v421 = vld [vmem:[%s388 + $0x58] sm:$0xf]
      %v422 = vld [vmem:[%s388 + $0x5c] sm:$0xf]
      %v423 = vld [vmem:[%s388 + $0x60] sm:$0xf]
      %v424 = vld [vmem:[%s388 + $0x64] sm:$0xf]
      %v425 = vld [vmem:[%s388 + $0x68] sm:$0xf]
      %v426 = vld [vmem:[%s388 + $0x6c] sm:$0xf]
      %v427 = vld [vmem:[%s388 + $0x70] sm:$0xf]
      %v428 = vld [vmem:[%s388 + $0x74] sm:$0xf]
      %v429 = vld [vmem:[%s388 + $0x78] sm:$0xf]
      %v430 = vld [vmem:[%s388 + $0x7c] sm:$0xf]
      %v431 = vld [vmem:[%s1] sm:$0xf]
      %v432 = vld [vmem:[%s1 + $0x4] sm:$0xf]
      %v465 = vunpack.c.l.b16 %v399
      %v466 = vunpack.c.l.b16 %v400
      %v467 = vunpack.c.l.b16 %v401
      %v468 = vunpack.c.l.b16 %v402
      %v469 = vunpack.c.l.b16 %v403
      %v470 = vunpack.c.l.b16 %v404
      %v471 = vunpack.c.l.b16 %v405
      %v472 = vunpack.c.l.b16 %v406
      %v473 = vunpack.c.l.b16 %v407
      %v474 = vunpack.c.l.b16 %v408
      %v475 = vunpack.c.l.b16 %v409
      %v476 = vunpack.c.l.b16 %v410
      %v477 = vunpack.c.l.b16 %v411
      %v478 = vunpack.c.l.b16 %v412
      %v479 = vunpack.c.l.b16 %v413
      %v480 = vunpack.c.l.b16 %v414
      %v481 = vunpack.c.l.b16 %v415
      %v482 = vunpack.c.l.b16 %v416
      %v483 = vunpack.c.l.b16 %v417
      %v484 = vunpack.c.l.b16 %v418
      %v485 = vunpack.c.l.b16 %v419
      %v486 = vunpack.c.l.b16 %v420
      %v487 = vunpack.c.l.b16 %v421
      %v488 = vunpack.c.l.b16 %v422
      %v489 = vunpack.c.l.b16 %v423
      %v490 = vunpack.c.l.b16 %v424
      %v491 = vunpack.c.l.b16 %v425
      %v492 = vunpack.c.l.b16 %v426
      %v493 = vunpack.c.l.b16 %v427
      %v494 = vunpack.c.l.b16 %v428
      %v495 = vunpack.c.l.b16 %v429
      %v496 = vunpack.c.l.b16 %v430
      %v497 = vpack.c.b16 %v466, %v465
      %v498 = vpack.c.b16 %v468, %v467
      %v499 = vpack.c.b16 %v470, %v469
      %v500 = vpack.c.b16 %v472, %v471
      %v501 = vpack.c.b16 %v474, %v473
      %v502 = vpack.c.b16 %v476, %v475
      %v503 = vpack.c.b16 %v478, %v477
      %v504 = vpack.c.b16 %v480, %v479
      %v505 = vpack.c.b16 %v482, %v481
      %v506 = vpack.c.b16 %v484, %v483
      %v507 = vpack.c.b16 %v486, %v485
      %v508 = vpack.c.b16 %v488, %v487
      %v509 = vpack.c.b16 %v490, %v489
      %v510 = vpack.c.b16 %v492, %v491
      %v511 = vpack.c.b16 %v494, %v493
      %v512 = vpack.c.b16 %v496, %v495
      %v515 = vunpack.c.l.b16 %v431
      %v516 = vunpack.c.l.b16 %v432
      %v517 = vpack.c.b16 %v516, %v515
      %vm519 = vcmask 130048
      %v521 = vsel %vm519, %v497, 0
      %v524 = vsel %vm519, %v498, 0
      %v527 = vsel %vm519, %v499, 0
      %v530 = vsel %vm519, %v500, 0
      %v533 = vsel %vm519, %v501, 0
      %v536 = vsel %vm519, %v502, 0
      %v539 = vsel %vm519, %v503, 0
      %v542 = vsel %vm519, %v504, 0
      %v545 = vsel %vm519, %v505, 0
      %v548 = vsel %vm519, %v506, 0
      %v551 = vsel %vm519, %v507, 0
      %v554 = vsel %vm519, %v508, 0
      %v557 = vsel %vm519, %v509, 0
      %v560 = vsel %vm519, %v510, 0
      %v563 = vsel %vm519, %v511, 0
      %v566 = vsel %vm519, %v512, 0
      %568 = vmatprep.subr.bf16.mxu0 0
      %569 = vmatpush1.bf16.msra.mxu0 %v517
      %570 = vmatprep.subr.bf16.mxu0 0
      %571 = vmatpush1.bf16.msra.mxu0 0
      %572 = vmatprep.subr.bf16.mxu0 0
      %573 = vmatpush1.bf16.msra.mxu0 0
      %574 = vmatprep.subr.bf16.mxu0 0
      %575 = vmatpush1.bf16.msra.mxu0 0
      %576 = vmatprep.subr.bf16.mxu0 0
      %577 = vmatpush1.bf16.msra.mxu0 0
      %578 = vmatprep.subr.bf16.mxu0 0
      %579 = vmatpush1.bf16.msra.mxu0 0
      %580 = vmatprep.subr.bf16.mxu0 0
      %581 = vmatpush1.bf16.msra.mxu0 0
      %582 = vmatprep.subr.bf16.mxu0 0
      %583 = vmatpush1.bf16.msra.mxu0 0
      %584 = vmatprep.subr.bf16.mxu0 0
      %585 = vmatpush1.bf16.msra.mxu0 0
      %586 = vmatprep.subr.bf16.mxu0 0
      %587 = vmatpush1.bf16.msra.mxu0 0
      %588 = vmatprep.subr.bf16.mxu0 0
      %589 = vmatpush1.bf16.msra.mxu0 0
      %590 = vmatprep.subr.bf16.mxu0 0
      %591 = vmatpush1.bf16.msra.mxu0 0
      %592 = vmatprep.subr.bf16.mxu0 0
      %593 = vmatpush1.bf16.msra.mxu0 0
      %594 = vmatprep.subr.bf16.mxu0 0
      %595 = vmatpush1.bf16.msra.mxu0 0
      %596 = vmatprep.subr.bf16.mxu0 0
      %597 = vmatpush1.bf16.msra.mxu0 0
      %598 = vmatprep.subr.bf16.mxu0 0
      %599 = vmatpush1.bf16.msra.mxu0 0
      %600 = vmatprep.mubr.bf16.mxu0 0
      %601 = vmatmul.mubr.bf16.gmra.mrb[0].mxu0 %v521
      %v602 = vpop.f32.mrb[0].mxu0
      %v603 = vadd.f32 0.0, %v602
      %v604 = vpop.f32.mrb[0].mxu0
      %v605 = vpop.f32.mrb[0].mxu0
      %v606 = vadd.f32 0.0, %v605
      %v607 = vpop.f32.mrb[0].mxu0
      %608 = vmatprep.mubr.bf16.mxu0 0
      %609 = vmatmul.mubr.bf16.gmra.mrb[0].mxu0 %v524
      %v610 = vpop.f32.mrb[0].mxu0
      %v611 = vadd.f32 0.0, %v610
      %v612 = vpop.f32.mrb[0].mxu0
      %v613 = vpop.f32.mrb[0].mxu0
      %v614 = vadd.f32 0.0, %v613
      %v615 = vpop.f32.mrb[0].mxu0
      %616 = vmatprep.mubr.bf16.mxu0 0
      %617 = vmatmul.mubr.bf16.gmra.mrb[0].mxu0 %v527
      %v618 = vpop.f32.mrb[0].mxu0
      %v619 = vadd.f32 0.0, %v618
      %v620 = vpop.f32.mrb[0].mxu0
      %v621 = vpop.f32.mrb[0].mxu0
      %v622 = vadd.f32 0.0, %v621
      %v623 = vpop.f32.mrb[0].mxu0
      %624 = vmatprep.mubr.bf16.mxu0 0
      %625 = vmatmul.mubr.bf16.gmra.mrb[0].mxu0 %v530
      %v626 = vpop.f32.mrb[0].mxu0
      %v627 = vadd.f32 0.0, %v626
      %v628 = vpop.f32.mrb[0].mxu0
      %v629 = vpop.f32.mrb[0].mxu0
      %v630 = vadd.f32 0.0, %v629
      %v631 = vpop.f32.mrb[0].mxu0
      %632 = vmatprep.mubr.bf16.mxu0 0
      %633 = vmatmul.mubr.bf16.gmra.mrb[0].mxu0 %v533
      %v634 = vpop.f32.mrb[0].mxu0
      %v635 = vadd.f32 0.0, %v634
      %v636 = vpop.f32.mrb[0].mxu0
      %v637 = vpop.f32.mrb[0].mxu0
      %v638 = vadd.f32 0.0, %v637
      %v639 = vpop.f32.mrb[0].mxu0
      %640 = vmatprep.mubr.bf16.mxu0 0
      %641 = vmatmul.mubr.bf16.gmra.mrb[0].mxu0 %v536
      %v642 = vpop.f32.mrb[0].mxu0
      %v643 = vadd.f32 0.0, %v642
      %v644 = vpop.f32.mrb[0].mxu0
      %v645 = vpop.f32.mrb[0].mxu0
      %v646 = vadd.f32 0.0, %v645
      %v647 = vpop.f32.mrb[0].mxu0
      %648 = vmatprep.mubr.bf16.mxu0 0
      %649 = vmatmul.mubr.bf16.gmra.mrb[0].mxu0 %v539
      %v650 = vpop.f32.mrb[0].mxu0
      %v651 = vadd.f32 0.0, %v650
      %v652 = vpop.f32.mrb[0].mxu0
      %v653 = vpop.f32.mrb[0].mxu0
      %v654 = vadd.f32 0.0, %v653
      %v655 = vpop.f32.mrb[0].mxu0
      %656 = vmatprep.mubr.bf16.mxu0 0
      %657 = vmatmul.mubr.bf16.gmra.mrb[0].mxu0 %v542
      %v658 = vpop.f32.mrb[0].mxu0
      %v659 = vadd.f32 0.0, %v658
      %v660 = vpop.f32.mrb[0].mxu0
      %v661 = vpop.f32.mrb[0].mxu0
      %v662 = vadd.f32 0.0, %v661
      %v663 = vpop.f32.mrb[0].mxu0
      %664 = vmatprep.mubr.bf16.mxu0 0
      %665 = vmatmul.mubr.bf16.gmra.mrb[0].mxu0 %v545
      %v666 = vpop.f32.mrb[0].mxu0
      %v667 = vadd.f32 0.0, %v666
      %v668 = vpop.f32.mrb[0].mxu0
      %v669 = vpop.f32.mrb[0].mxu0
      %v670 = vadd.f32 0.0, %v669
      %v671 = vpop.f32.mrb[0].mxu0
      %672 = vmatprep.mubr.bf16.mxu0 0
      %673 = vmatmul.mubr.bf16.gmra.mrb[0].mxu0 %v548
      %v674 = vpop.f32.mrb[0].mxu0
      %v675 = vadd.f32 0.0, %v674
      %v676 = vpop.f32.mrb[0].mxu0
      %v677 = vpop.f32.mrb[0].mxu0
      %v678 = vadd.f32 0.0, %v677
      %v679 = vpop.f32.mrb[0].mxu0
      %680 = vmatprep.mubr.bf16.mxu0 0
      %681 = vmatmul.mubr.bf16.gmra.mrb[0].mxu0 %v551
      %v682 = vpop.f32.mrb[0].mxu0
      %v683 = vadd.f32 0.0, %v682
      %v684 = vpop.f32.mrb[0].mxu0
      %v685 = vpop.f32.mrb[0].mxu0
      %v686 = vadd.f32 0.0, %v685
      %v687 = vpop.f32.mrb[0].mxu0
      %688 = vmatprep.mubr.bf16.mxu0 0
      %689 = vmatmul.mubr.bf16.gmra.mrb[0].mxu0 %v554
      %v690 = vpop.f32.mrb[0].mxu0
      %v691 = vadd.f32 0.0, %v690
      %v692 = vpop.f32.mrb[0].mxu0
      %v693 = vpop.f32.mrb[0].mxu0
      %v694 = vadd.f32 0.0, %v693
      %v695 = vpop.f32.mrb[0].mxu0
      %696 = vmatprep.mubr.bf16.mxu0 0
      %697 = vmatmul.mubr.bf16.gmra.mrb[0].mxu0 %v557
      %v698 = vpop.f32.mrb[0].mxu0
      %v699 = vadd.f32 0.0, %v698
      %v700 = vpop.f32.mrb[0].mxu0
      %v701 = vpop.f32.mrb[0].mxu0
      %v702 = vadd.f32 0.0, %v701
      %v703 = vpop.f32.mrb[0].mxu0
      %704 = vmatprep.mubr.bf16.mxu0 0
      %705 = vmatmul.mubr.bf16.gmra.mrb[0].mxu0 %v560
      %v706 = vpop.f32.mrb[0].mxu0
      %v707 = vadd.f32 0.0, %v706
      %v708 = vpop.f32.mrb[0].mxu0
      %v709 = vpop.f32.mrb[0].mxu0
      %v710 = vadd.f32 0.0, %v709
      %v711 = vpop.f32.mrb[0].mxu0
      %712 = vmatprep.mubr.bf16.mxu0 0
      %713 = vmatmul.mubr.bf16.gmra.mrb[0].mxu0 %v563
      %v714 = vpop.f32.mrb[0].mxu0
      %v715 = vadd.f32 0.0, %v714
      %v716 = vpop.f32.mrb[0].mxu0
      %v717 = vpop.f32.mrb[0].mxu0
      %v718 = vadd.f32 0.0, %v717
      %v719 = vpop.f32.mrb[0].mxu0
      %720 = vmatprep.mubr.bf16.mxu0 0
      %721 = vmatmul.mubr.bf16.gmra.mrb[0].mxu0 %v566
      %v722 = vpop.f32.mrb[0].mxu0
      %v723 = vadd.f32 0.0, %v722
      %v724 = vpop.f32.mrb[0].mxu0
      %v725 = vpop.f32.mrb[0].mxu0
      %v726 = vadd.f32 0.0, %v725
      %v727 = vpop.f32.mrb[0].mxu0
      %728 = vdwg.mxu0
      %v729 = vld [vmem:[%s2] sm:$0x1]
      %v731 = vlaneseq
      %v732 = vshrl.u32 %v731, 7
      %v733 = vsub.s32 0, %v732
      %v734 = vrot.slane %v729, %v733
      %v736 = vmul.f32 %v603, %v734
      %v737 = vmul.f32 %v606, %v734
      %v738 = vmul.f32 %v611, %v734
      %v739 = vmul.f32 %v614, %v734
      %v740 = vmul.f32 %v619, %v734
      %v741 = vmul.f32 %v622, %v734
      %v742 = vmul.f32 %v627, %v734
      %v743 = vmul.f32 %v630, %v734
      %v744 = vmul.f32 %v635, %v734
      %v745 = vmul.f32 %v638, %v734
      %v746 = vmul.f32 %v643, %v734
      %v747 = vmul.f32 %v646, %v734
      %v748 = vmul.f32 %v651, %v734
      %v749 = vmul.f32 %v654, %v734
      %v750 = vmul.f32 %v659, %v734
      %v751 = vmul.f32 %v662, %v734
      %v752 = vmul.f32 %v667, %v734
      %v753 = vmul.f32 %v670, %v734
      %v754 = vmul.f32 %v675, %v734
      %v755 = vmul.f32 %v678, %v734
      %v756 = vmul.f32 %v683, %v734
      %v757 = vmul.f32 %v686, %v734
      %v758 = vmul.f32 %v691, %v734
      %v759 = vmul.f32 %v694, %v734
      %v760 = vmul.f32 %v699, %v734
      %v761 = vmul.f32 %v702, %v734
      %v762 = vmul.f32 %v707, %v734
      %v763 = vmul.f32 %v710, %v734
      %v764 = vmul.f32 %v715, %v734
      %v765 = vmul.f32 %v718, %v734
      %v766 = vmul.f32 %v723, %v734
      %v767 = vmul.f32 %v726, %v734
      %v768 = vld [vmem:[%s3] sm:$0x1]
      %v770 = vlaneseq
      %v771 = vshrl.u32 %v770, 7
      %v772 = vsub.s32 0, %v771
      %v773 = vrot.slane %v768, %v772
      %v775 = vadd.f32 %v736, %v773
      %v776 = vadd.f32 %v737, %v773
      %v777 = vadd.f32 %v738, %v773
      %v778 = vadd.f32 %v739, %v773
      %v779 = vadd.f32 %v740, %v773
      %v780 = vadd.f32 %v741, %v773
      %v781 = vadd.f32 %v742, %v773
      %v782 = vadd.f32 %v743, %v773
      %v783 = vadd.f32 %v744, %v773
      %v784 = vadd.f32 %v745, %v773
      %v785 = vadd.f32 %v746, %v773
      %v786 = vadd.f32 %v747, %v773
      %v787 = vadd.f32 %v748, %v773
      %v788 = vadd.f32 %v749, %v773
      %v789 = vadd.f32 %v750, %v773
      %v790 = vadd.f32 %v751, %v773
      %v791 = vadd.f32 %v752, %v773
      %v792 = vadd.f32 %v753, %v773
      %v793 = vadd.f32 %v754, %v773
      %v794 = vadd.f32 %v755, %v773
      %v795 = vadd.f32 %v756, %v773
      %v796 = vadd.f32 %v757, %v773
      %v797 = vadd.f32 %v758, %v773
      %v798 = vadd.f32 %v759, %v773
      %v799 = vadd.f32 %v760, %v773
      %v800 = vadd.f32 %v761, %v773
      %v801 = vadd.f32 %v762, %v773
      %v802 = vadd.f32 %v763, %v773
      %v803 = vadd.f32 %v764, %v773
      %v804 = vadd.f32 %v765, %v773
      %v805 = vadd.f32 %v766, %v773
      %v806 = vadd.f32 %v767, %v773
      %v807 = vmax.f32 %v775, 0.0
      %v808 = vmax.f32 %v776, 0.0
      %v809 = vmax.f32 %v777, 0.0
      %v810 = vmax.f32 %v778, 0.0
      %v811 = vmax.f32 %v779, 0.0
      %v812 = vmax.f32 %v780, 0.0
      %v813 = vmax.f32 %v781, 0.0
      %v814 = vmax.f32 %v782, 0.0
      %v815 = vmax.f32 %v783, 0.0
      %v816 = vmax.f32 %v784, 0.0
      %v817 = vmax.f32 %v785, 0.0
      %v818 = vmax.f32 %v786, 0.0
      %v819 = vmax.f32 %v787, 0.0
      %v820 = vmax.f32 %v788, 0.0
      %v821 = vmax.f32 %v789, 0.0
      %v822 = vmax.f32 %v790, 0.0
      %v823 = vmax.f32 %v791, 0.0
      %v824 = vmax.f32 %v792, 0.0
      %v825 = vmax.f32 %v793, 0.0
      %v826 = vmax.f32 %v794, 0.0
      %v827 = vmax.f32 %v795, 0.0
      %v828 = vmax.f32 %v796, 0.0
      %v829 = vmax.f32 %v797, 0.0
      %v830 = vmax.f32 %v798, 0.0
      %v831 = vmax.f32 %v799, 0.0
      %v832 = vmax.f32 %v800, 0.0
      %v833 = vmax.f32 %v801, 0.0
      %v834 = vmax.f32 %v802, 0.0
      %v835 = vmax.f32 %v803, 0.0
      %v836 = vmax.f32 %v804, 0.0
      %v837 = vmax.f32 %v805, 0.0
      %v838 = vmax.f32 %v806, 0.0
      %vm839 = vcmask 27648
      %840 = vst.msk [vmem:[#allocation2] sm:$0xf] %vm839, 0
      %841 = vst.msk [vmem:[#allocation2 + $0x4] sm:$0xf] %vm839, 0
      %vm842 = vcmask 24576
      %843 = vst.msk [vmem:[#allocation2 + $0x8] sm:$0x1] %vm842, 0
      %s844 = scalar_lea.vmem [#allocation2], 204
      %845 = vst.msk [vmem:[%s844] sm:$0xf] %vm839, 0
      %846 = vst.msk [vmem:[%s844 + $0x4] sm:$0xf] %vm839, 0
      %847 = vst.msk [vmem:[%s844 + $0x8] sm:$0x1] %vm842, 0
      %vm848 = vcmask 24576
      %vm849 = vsmask.f32 256
      %vm850 = vmand %vm848, %vm849
      %v851 = vld [vmem:[#allocation2] sm:$0x1]
      %v852 = vsel %vm850, 0, %v851
      %853 = vst [vmem:[#allocation2] sm:$0x1] %v852
      %v854 = vld [vmem:[#allocation2 + $0xc] sm:$0x1]
      %v855 = vsel %vm850, 0, %v854
      %856 = vst [vmem:[#allocation2 + $0xc] sm:$0x1] %v855
      %v857 = vld [vmem:[#allocation2 + $0x18] sm:$0x1]
      %v858 = vsel %vm850, 0, %v857
      %859 = vst [vmem:[#allocation2 + $0x18] sm:$0x1] %v858
      %v860 = vld [vmem:[#allocation2 + $0x24] sm:$0x1]
      %v861 = vsel %vm850, 0, %v860
      %862 = vst [vmem:[#allocation2 + $0x24] sm:$0x1] %v861
      %v863 = vld [vmem:[#allocation2 + $0x30] sm:$0x1]
      %v864 = vsel %vm850, 0, %v863
      %865 = vst [vmem:[#allocation2 + $0x30] sm:$0x1] %v864
      %v866 = vld [vmem:[#allocation2 + $0x3c] sm:$0x1]
      %v867 = vsel %vm850, 0, %v866
      %868 = vst [vmem:[#allocation2 + $0x3c] sm:$0x1] %v867
      %v869 = vld [vmem:[#allocation2 + $0x48] sm:$0x1]
      %v870 = vsel %vm850, 0, %v869
      %871 = vst [vmem:[#allocation2 + $0x48] sm:$0x1] %v870
      %v872 = vld [vmem:[#allocation2 + $0x54] sm:$0x1]
      %v873 = vsel %vm850, 0, %v872
      %874 = vst [vmem:[#allocation2 + $0x54] sm:$0x1] %v873
      %v875 = vld [vmem:[#allocation2 + $0x60] sm:$0x1]
      %v876 = vsel %vm850, 0, %v875
      %877 = vst [vmem:[#allocation2 + $0x60] sm:$0x1] %v876
      %v878 = vld [vmem:[#allocation2 + $0x6c] sm:$0x1]
      %v879 = vsel %vm850, 0, %v878
      %880 = vst [vmem:[#allocation2 + $0x6c] sm:$0x1] %v879
      %v881 = vld [vmem:[#allocation2 + $0x78] sm:$0x1]
      %v882 = vsel %vm850, 0, %v881
      %883 = vst [vmem:[#allocation2 + $0x78] sm:$0x1] %v882
      %v884 = vld [vmem:[#allocation2 + $0x84] sm:$0x1]
      %v885 = vsel %vm850, 0, %v884
      %886 = vst [vmem:[#allocation2 + $0x84] sm:$0x1] %v885
      %v887 = vld [vmem:[#allocation2 + $0x90] sm:$0x1]
      %v888 = vsel %vm850, 0, %v887
      %889 = vst [vmem:[#allocation2 + $0x90] sm:$0x1] %v888
      %v890 = vld [vmem:[#allocation2 + $0x9c] sm:$0x1]
      %v891 = vsel %vm850, 0, %v890
      %892 = vst [vmem:[#allocation2 + $0x9c] sm:$0x1] %v891
      %v893 = vld [vmem:[#allocation2 + $0xa8] sm:$0x1]
      %v894 = vsel %vm850, 0, %v893
      %895 = vst [vmem:[#allocation2 + $0xa8] sm:$0x1] %v894
      %v896 = vld [vmem:[#allocation2 + $0xb4] sm:$0x1]
      %v897 = vsel %vm850, 0, %v896
      %898 = vst [vmem:[#allocation2 + $0xb4] sm:$0x1] %v897
      %v899 = vld [vmem:[#allocation2 + $0xc0] sm:$0x1]
      %v900 = vsel %vm850, 0, %v899
      %901 = vst [vmem:[#allocation2 + $0xc0] sm:$0x1] %v900
      %v902 = vld [vmem:[#allocation2 + $0xcc] sm:$0x1]
      %v903 = vsel %vm850, 0, %v902
      %904 = vst [vmem:[#allocation2 + $0xcc] sm:$0x1] %v903
      %vm905 = vsmask.f32 7938
      %vm906 = vmand %vm848, %vm905
      %v907 = vld [vmem:[#allocation2 + $0x8] sm:$0x1]
      %v908 = vsel %vm906, 0, %v907
      %909 = vst [vmem:[#allocation2 + $0x8] sm:$0x1] %v908
      %v910 = vld [vmem:[#allocation2 + $0x14] sm:$0x1]
      %v911 = vsel %vm906, 0, %v910
      %912 = vst [vmem:[#allocation2 + $0x14] sm:$0x1] %v911
      %v913 = vld [vmem:[#allocation2 + $0x20] sm:$0x1]
      %v914 = vsel %vm906, 0, %v913
      %915 = vst [vmem:[#allocation2 + $0x20] sm:$0x1] %v914
      %v916 = vld [vmem:[#allocation2 + $0x2c] sm:$0x1]
      %v917 = vsel %vm906, 0, %v916
      %918 = vst [vmem:[#allocation2 + $0x2c] sm:$0x1] %v917
      %v919 = vld [vmem:[#allocation2 + $0x38] sm:$0x1]
      %v920 = vsel %vm906, 0, %v919
      %921 = vst [vmem:[#allocation2 + $0x38] sm:$0x1] %v920
      %v922 = vld [vmem:[#allocation2 + $0x44] sm:$0x1]
      %v923 = vsel %vm906, 0, %v922
      %924 = vst [vmem:[#allocation2 + $0x44] sm:$0x1] %v923
      %v925 = vld [vmem:[#allocation2 + $0x50] sm:$0x1]
      %v926 = vsel %vm906, 0, %v925
      %927 = vst [vmem:[#allocation2 + $0x50] sm:$0x1] %v926
      %v928 = vld [vmem:[#allocation2 + $0x5c] sm:$0x1]
      %v929 = vsel %vm906, 0, %v928
      %930 = vst [vmem:[#allocation2 + $0x5c] sm:$0x1] %v929
      %v931 = vld [vmem:[#allocation2 + $0x68] sm:$0x1]
      %v932 = vsel %vm906, 0, %v931
      %933 = vst [vmem:[#allocation2 + $0x68] sm:$0x1] %v932
      %v934 = vld [vmem:[#allocation2 + $0x74] sm:$0x1]
      %v935 = vsel %vm906, 0, %v934
      %936 = vst [vmem:[#allocation2 + $0x74] sm:$0x1] %v935
      %v937 = vld [vmem:[#allocation2 + $0x80] sm:$0x1]
      %v938 = vsel %vm906, 0, %v937
      %939 = vst [vmem:[#allocation2 + $0x80] sm:$0x1] %v938
      %v940 = vld [vmem:[#allocation2 + $0x8c] sm:$0x1]
      %v941 = vsel %vm906, 0, %v940
      %942 = vst [vmem:[#allocation2 + $0x8c] sm:$0x1] %v941
      %v943 = vld [vmem:[#allocation2 + $0x98] sm:$0x1]
      %v944 = vsel %vm906, 0, %v943
      %945 = vst [vmem:[#allocation2 + $0x98] sm:$0x1] %v944
      %v946 = vld [vmem:[#allocation2 + $0xa4] sm:$0x1]
      %v947 = vsel %vm906, 0, %v946
      %948 = vst [vmem:[#allocation2 + $0xa4] sm:$0x1] %v947
      %v949 = vld [vmem:[#allocation2 + $0xb0] sm:$0x1]
      %v950 = vsel %vm906, 0, %v949
      %951 = vst [vmem:[#allocation2 + $0xb0] sm:$0x1] %v950
      %v952 = vld [vmem:[#allocation2 + $0xbc] sm:$0x1]
      %v953 = vsel %vm906, 0, %v952
      %954 = vst [vmem:[#allocation2 + $0xbc] sm:$0x1] %v953
      %v955 = vld [vmem:[#allocation2 + $0xc8] sm:$0x1]
      %v956 = vsel %vm906, 0, %v955
      %957 = vst [vmem:[#allocation2 + $0xc8] sm:$0x1] %v956
      %v958 = vld [vmem:[#allocation2 + $0xd4] sm:$0x1]
      %v959 = vsel %vm906, 0, %v958
      %960 = vst [vmem:[#allocation2 + $0xd4] sm:$0x1] %v959
      %v961 = vpack.c.bf16 %v808, %v807
      %v962 = vpack.c.bf16 %v810, %v809
      %v963 = vpack.c.bf16 %v812, %v811
      %v964 = vpack.c.bf16 %v814, %v813
      %v965 = vpack.c.bf16 %v816, %v815
      %v966 = vpack.c.bf16 %v818, %v817
      %v967 = vpack.c.bf16 %v820, %v819
      %v968 = vpack.c.bf16 %v822, %v821
      %v969 = vpack.c.bf16 %v824, %v823
      %v970 = vpack.c.bf16 %v826, %v825
      %v971 = vpack.c.bf16 %v828, %v827
      %v972 = vpack.c.bf16 %v830, %v829
      %v973 = vpack.c.bf16 %v832, %v831
      %v974 = vpack.c.bf16 %v834, %v833
      %v975 = vpack.c.bf16 %v836, %v835
      %v976 = vpack.c.bf16 %v838, %v837
      %v993 = vunpack.c.l.b16 %v961
      %v994 = vunpack.c.h.b16 %v961
      %v995 = vunpack.c.l.b16 %v962
      %v996 = vunpack.c.h.b16 %v962
      %v997 = vunpack.c.l.b16 %v963
      %v998 = vunpack.c.h.b16 %v963
      %v999 = vunpack.c.l.b16 %v964
      %v1000 = vunpack.c.h.b16 %v964
      %v1001 = vunpack.c.l.b16 %v965
      %v1002 = vunpack.c.h.b16 %v965
      %v1003 = vunpack.c.l.b16 %v966
      %v1004 = vunpack.c.h.b16 %v966
      %v1005 = vunpack.c.l.b16 %v967
      %v1006 = vunpack.c.h.b16 %v967
      %v1007 = vunpack.c.l.b16 %v968
      %v1008 = vunpack.c.h.b16 %v968
      %v1009 = vunpack.c.l.b16 %v969
      %v1010 = vunpack.c.h.b16 %v969
      %v1011 = vunpack.c.l.b16 %v970
      %v1012 = vunpack.c.h.b16 %v970
      %v1013 = vunpack.c.l.b16 %v971
      %v1014 = vunpack.c.h.b16 %v971
      %v1015 = vunpack.c.l.b16 %v972
      %v1016 = vunpack.c.h.b16 %v972
      %v1017 = vunpack.c.l.b16 %v973
      %v1018 = vunpack.c.h.b16 %v973
      %v1019 = vunpack.c.l.b16 %v974
      %v1020 = vunpack.c.h.b16 %v974
      %v1021 = vunpack.c.l.b16 %v975
      %v1022 = vunpack.c.h.b16 %v975
      %v1023 = vunpack.c.l.b16 %v976
      %v1024 = vunpack.c.h.b16 %v976
      %v1025 = vpack.c.b16 %v993, %v993
      %v1026 = vpack.c.b16 %v994, %v994
      %v1027 = vpack.c.b16 %v995, %v995
      %v1028 = vpack.c.b16 %v996, %v996
      %v1029 = vpack.c.b16 %v997, %v997
      %v1030 = vpack.c.b16 %v998, %v998
      %v1031 = vpack.c.b16 %v999, %v999
      %v1032 = vpack.c.b16 %v1000, %v1000
      %v1033 = vpack.c.b16 %v1001, %v1001
      %v1034 = vpack.c.b16 %v1002, %v1002
      %v1035 = vpack.c.b16 %v1003, %v1003
      %v1036 = vpack.c.b16 %v1004, %v1004
      %v1037 = vpack.c.b16 %v1005, %v1005
      %v1038 = vpack.c.b16 %v1006, %v1006
      %v1039 = vpack.c.b16 %v1007, %v1007
      %v1040 = vpack.c.b16 %v1008, %v1008
      %v1041 = vpack.c.b16 %v1009, %v1009
      %v1042 = vpack.c.b16 %v1010, %v1010
      %v1043 = vpack.c.b16 %v1011, %v1011
      %v1044 = vpack.c.b16 %v1012, %v1012
      %v1045 = vpack.c.b16 %v1013, %v1013
      %v1046 = vpack.c.b16 %v1014, %v1014
      %v1047 = vpack.c.b16 %v1015, %v1015
      %v1048 = vpack.c.b16 %v1016, %v1016
      %v1049 = vpack.c.b16 %v1017, %v1017
      %v1050 = vpack.c.b16 %v1018, %v1018
      %v1051 = vpack.c.b16 %v1019, %v1019
      %v1052 = vpack.c.b16 %v1020, %v1020
      %v1053 = vpack.c.b16 %v1021, %v1021
      %v1054 = vpack.c.b16 %v1022, %v1022
      %v1055 = vpack.c.b16 %v1023, %v1023
      %v1056 = vpack.c.b16 %v1024, %v1024
      %vm1057 = vsmask.f32 4368
      %vm1058 = vmor %vm849, %vm1057
      %v1060 = vshrl.u32 %v1025, 16
      %v1062 = vrot.slane %v1060, 7
      %v1063 = vshll.u32 %v1025, 16
      %v1065 = vor.u32 %v1062, %v1063
      %v1066 = vrot.slane %v1062, 4
      %v1068 = vshrl.u32 %v1026, 16
      %v1070 = vrot.slane %v1068, 7
      %v1071 = vshll.u32 %v1026, 16
      %v1073 = vor.u32 %v1070, %v1071
      %v1074 = vsel %vm1058, %v1066, %v1073
      %v1075 = vrot.slane %v1070, 4
      %v1077 = vshrl.u32 %v1027, 16
      %v1079 = vrot.slane %v1077, 7
      %v1080 = vshll.u32 %v1027, 16
      %v1082 = vor.u32 %v1079, %v1080
      %v1083 = vrot.slane %v1079, 4
      %v1085 = vshrl.u32 %v1028, 16
      %v1087 = vrot.slane %v1085, 7
      %v1088 = vshll.u32 %v1028, 16
      %v1090 = vor.u32 %v1087, %v1088
      %v1091 = vsel %vm1058, %v1083, %v1090
      %v1092 = vrot.slane %v1087, 4
      %v1094 = vshrl.u32 %v1029, 16
      %v1096 = vrot.slane %v1094, 7
      %v1097 = vshll.u32 %v1029, 16
      %v1099 = vor.u32 %v1096, %v1097
      %v1100 = vrot.slane %v1096, 4
      %v1102 = vshrl.u32 %v1030, 16
      %v1104 = vrot.slane %v1102, 7
      %v1105 = vshll.u32 %v1030, 16
      %v1107 = vor.u32 %v1104, %v1105
      %v1108 = vsel %vm1058, %v1100, %v1107
      %v1109 = vrot.slane %v1104, 4
      %v1111 = vshrl.u32 %v1031, 16
      %v1113 = vrot.slane %v1111, 7
      %v1114 = vshll.u32 %v1031, 16
      %v1116 = vor.u32 %v1113, %v1114
      %v1117 = vrot.slane %v1113, 4
      %v1119 = vshrl.u32 %v1032, 16
      %v1121 = vrot.slane %v1119, 7
      %v1122 = vshll.u32 %v1032, 16
      %v1124 = vor.u32 %v1121, %v1122
      %v1125 = vsel %vm1058, %v1117, %v1124
      %v1126 = vrot.slane %v1121, 4
      %v1128 = vshrl.u32 %v1033, 16
      %v1130 = vrot.slane %v1128, 7
      %v1131 = vshll.u32 %v1033, 16
      %v1133 = vor.u32 %v1130, %v1131
      %v1134 = vrot.slane %v1130, 4
      %v1136 = vshrl.u32 %v1034, 16
      %v1138 = vrot.slane %v1136, 7
      %v1139 = vshll.u32 %v1034, 16
      %v1141 = vor.u32 %v1138, %v1139
      %v1142 = vsel %vm1058, %v1134, %v1141
      %v1143 = vrot.slane %v1138, 4
      %v1145 = vshrl.u32 %v1035, 16
      %v1147 = vrot.slane %v1145, 7
      %v1148 = vshll.u32 %v1035, 16
      %v1150 = vor.u32 %v1147, %v1148
      %v1151 = vrot.slane %v1147, 4
      %v1153 = vshrl.u32 %v1036, 16
      %v1155 = vrot.slane %v1153, 7
      %v1156 = vshll.u32 %v1036, 16
      %v1158 = vor.u32 %v1155, %v1156
      %v1159 = vsel %vm1058, %v1151, %v1158
      %v1160 = vrot.slane %v1155, 4
      %v1162 = vshrl.u32 %v1037, 16
      %v1164 = vrot.slane %v1162, 7
      %v1165 = vshll.u32 %v1037, 16
      %v1167 = vor.u32 %v1164, %v1165
      %v1168 = vrot.slane %v1164, 4
      %v1170 = vshrl.u32 %v1038, 16
      %v1172 = vrot.slane %v1170, 7
      %v1173 = vshll.u32 %v1038, 16
      %v1175 = vor.u32 %v1172, %v1173
      %v1176 = vsel %vm1058, %v1168, %v1175
      %v1177 = vrot.slane %v1172, 4
      %v1179 = vshrl.u32 %v1039, 16
      %v1181 = vrot.slane %v1179, 7
      %v1182 = vshll.u32 %v1039, 16
      %v1184 = vor.u32 %v1181, %v1182
      %v1185 = vrot.slane %v1181, 4
      %v1187 = vshrl.u32 %v1040, 16
      %v1189 = vrot.slane %v1187, 7
      %v1190 = vshll.u32 %v1040, 16
      %v1192 = vor.u32 %v1189, %v1190
      %v1193 = vsel %vm1058, %v1185, %v1192
      %v1194 = vrot.slane %v1189, 4
      %v1196 = vshrl.u32 %v1041, 16
      %v1198 = vrot.slane %v1196, 7
      %v1199 = vshll.u32 %v1041, 16
      %v1201 = vor.u32 %v1198, %v1199
      %v1202 = vrot.slane %v1198, 4
      %v1204 = vshrl.u32 %v1042, 16
      %v1206 = vrot.slane %v1204, 7
      %v1207 = vshll.u32 %v1042, 16
      %v1209 = vor.u32 %v1206, %v1207
      %v1210 = vsel %vm1058, %v1202, %v1209
      %v1211 = vrot.slane %v1206, 4
      %v1213 = vshrl.u32 %v1043, 16
      %v1215 = vrot.slane %v1213, 7
      %v1216 = vshll.u32 %v1043, 16
      %v1218 = vor.u32 %v1215, %v1216
      %v1219 = vrot.slane %v1215, 4
      %v1221 = vshrl.u32 %v1044, 16
      %v1223 = vrot.slane %v1221, 7
      %v1224 = vshll.u32 %v1044, 16
      %v1226 = vor.u32 %v1223, %v1224
      %v1227 = vsel %vm1058, %v1219, %v1226
      %v1228 = vrot.slane %v1223, 4
      %v1230 = vshrl.u32 %v1045, 16
      %v1232 = vrot.slane %v1230, 7
      %v1233 = vshll.u32 %v1045, 16
      %v1235 = vor.u32 %v1232, %v1233
      %v1236 = vrot.slane %v1232, 4
      %v1238 = vshrl.u32 %v1046, 16
      %v1240 = vrot.slane %v1238, 7
      %v1241 = vshll.u32 %v1046, 16
      %v1243 = vor.u32 %v1240, %v1241
      %v1244 = vsel %vm1058, %v1236, %v1243
      %v1245 = vrot.slane %v1240, 4
      %v1247 = vshrl.u32 %v1047, 16
      %v1249 = vrot.slane %v1247, 7
      %v1250 = vshll.u32 %v1047, 16
      %v1252 = vor.u32 %v1249, %v1250
      %v1253 = vrot.slane %v1249, 4
      %v1255 = vshrl.u32 %v1048, 16
      %v1257 = vrot.slane %v1255, 7
      %v1258 = vshll.u32 %v1048, 16
      %v1260 = vor.u32 %v1257, %v1258
      %v1261 = vsel %vm1058, %v1253, %v1260
      %v1262 = vrot.slane %v1257, 4
      %v1264 = vshrl.u32 %v1049, 16
      %v1266 = vrot.slane %v1264, 7
      %v1267 = vshll.u32 %v1049, 16
      %v1269 = vor.u32 %v1266, %v1267
      %v1270 = vrot.slane %v1266, 4
      %v1272 = vshrl.u32 %v1050, 16
      %v1274 = vrot.slane %v1272, 7
      %v1275 = vshll.u32 %v1050, 16
      %v1277 = vor.u32 %v1274, %v1275
      %v1278 = vsel %vm1058, %v1270, %v1277
      %v1279 = vrot.slane %v1274, 4
      %v1281 = vshrl.u32 %v1051, 16
      %v1283 = vrot.slane %v1281, 7
      %v1284 = vshll.u32 %v1051, 16
      %v1286 = vor.u32 %v1283, %v1284
      %v1287 = vrot.slane %v1283, 4
      %v1289 = vshrl.u32 %v1052, 16
      %v1291 = vrot.slane %v1289, 7
      %v1292 = vshll.u32 %v1052, 16
      %v1294 = vor.u32 %v1291, %v1292
      %v1295 = vsel %vm1058, %v1287, %v1294
      %v1296 = vrot.slane %v1291, 4
      %v1298 = vshrl.u32 %v1053, 16
      %v1300 = vrot.slane %v1298, 7
      %v1301 = vshll.u32 %v1053, 16
      %v1303 = vor.u32 %v1300, %v1301
      %v1304 = vrot.slane %v1300, 4
      %v1306 = vshrl.u32 %v1054, 16
      %v1308 = vrot.slane %v1306, 7
      %v1309 = vshll.u32 %v1054, 16
      %v1311 = vor.u32 %v1308, %v1309
      %v1312 = vsel %vm1058, %v1304, %v1311
      %v1313 = vrot.slane %v1308, 4
      %v1315 = vshrl.u32 %v1055, 16
      %v1317 = vrot.slane %v1315, 7
      %v1318 = vshll.u32 %v1055, 16
      %v1320 = vor.u32 %v1317, %v1318
      %v1321 = vrot.slane %v1317, 4
      %v1323 = vshrl.u32 %v1056, 16
      %v1325 = vrot.slane %v1323, 7
      %v1326 = vshll.u32 %v1056, 16
      %v1328 = vor.u32 %v1325, %v1326
      %v1329 = vsel %vm1058, %v1321, %v1328
      %v1330 = vrot.slane %v1325, 4
      %s1379 = scalar_lea.vmem [#allocation2], 12
      %vm1380 = vcmask 27648
      %vm1381 = vmand %vm1380, %vm905
      %v1382 = vld [vmem:[%s1379] sm:$0xf]
      %v1383 = vsel %vm1381, %v1065, %v1382
      %1384 = vst [vmem:[%s1379] sm:$0xf] %v1383
      %1385 = vst.msk [vmem:[%s1379 + $0x4] sm:$0xf] %vm839, %v1074
      %v1386 = vld [vmem:[%s1379 + $0x8] sm:$0x1]
      %v1387 = vsel %vm850, %v1075, %v1386
      %1388 = vst [vmem:[%s1379 + $0x8] sm:$0x1] %v1387
      %v1389 = vld [vmem:[%s1379 + $0xc] sm:$0xf]
      %v1390 = vsel %vm1381, %v1082, %v1389
      %1391 = vst [vmem:[%s1379 + $0xc] sm:$0xf] %v1390
      %1392 = vst.msk [vmem:[%s1379 + $0x10] sm:$0xf] %vm839, %v1091
      %v1393 = vld [vmem:[%s1379 + $0x14] sm:$0x1]
      %v1394 = vsel %vm850, %v1092, %v1393
      %1395 = vst [vmem:[%s1379 + $0x14] sm:$0x1] %v1394
      %v1396 = vld [vmem:[%s1379 + $0x18] sm:$0xf]
      %v1397 = vsel %vm1381, %v1099, %v1396
      %1398 = vst [vmem:[%s1379 + $0x18] sm:$0xf] %v1397
      %1399 = vst.msk [vmem:[%s1379 + $0x1c] sm:$0xf] %vm839, %v1108
      %v1400 = vld [vmem:[%s1379 + $0x20] sm:$0x1]
      %v1401 = vsel %vm850, %v1109, %v1400
      %1402 = vst [vmem:[%s1379 + $0x20] sm:$0x1] %v1401
      %v1403 = vld [vmem:[%s1379 + $0x24] sm:$0xf]
      %v1404 = vsel %vm1381, %v1116, %v1403
      %1405 = vst [vmem:[%s1379 + $0x24] sm:$0xf] %v1404
      %1406 = vst.msk [vmem:[%s1379 + $0x28] sm:$0xf] %vm839, %v1125
      %v1407 = vld [vmem:[%s1379 + $0x2c] sm:$0x1]
      %v1408 = vsel %vm850, %v1126, %v1407
      %1409 = vst [vmem:[%s1379 + $0x2c] sm:$0x1] %v1408
      %v1410 = vld [vmem:[%s1379 + $0x30] sm:$0xf]
      %v1411 = vsel %vm1381, %v1133, %v1410
      %1412 = vst [vmem:[%s1379 + $0x30] sm:$0xf] %v1411
      %1413 = vst.msk [vmem:[%s1379 + $0x34] sm:$0xf] %vm839, %v1142
      %v1414 = vld [vmem:[%s1379 + $0x38] sm:$0x1]
      %v1415 = vsel %vm850, %v1143, %v1414
      %1416 = vst [vmem:[%s1379 + $0x38] sm:$0x1] %v1415
      %v1417 = vld [vmem:[%s1379 + $0x3c] sm:$0xf]
      %v1418 = vsel %vm1381, %v1150, %v1417
      %1419 = vst [vmem:[%s1379 + $0x3c] sm:$0xf] %v1418
      %1420 = vst.msk [vmem:[%s1379 + $0x40] sm:$0xf] %vm839, %v1159
      %v1421 = vld [vmem:[%s1379 + $0x44] sm:$0x1]
      %v1422 = vsel %vm850, %v1160, %v1421
      %1423 = vst [vmem:[%s1379 + $0x44] sm:$0x1] %v1422
      %v1424 = vld [vmem:[%s1379 + $0x48] sm:$0xf]
      %v1425 = vsel %vm1381, %v1167, %v1424
      %1426 = vst [vmem:[%s1379 + $0x48] sm:$0xf] %v1425
      %1427 = vst.msk [vmem:[%s1379 + $0x4c] sm:$0xf] %vm839, %v1176
      %v1428 = vld [vmem:[%s1379 + $0x50] sm:$0x1]
      %v1429 = vsel %vm850, %v1177, %v1428
      %1430 = vst [vmem:[%s1379 + $0x50] sm:$0x1] %v1429
      %v1431 = vld [vmem:[%s1379 + $0x54] sm:$0xf]
      %v1432 = vsel %vm1381, %v1184, %v1431
      %1433 = vst [vmem:[%s1379 + $0x54] sm:$0xf] %v1432
      %1434 = vst.msk [vmem:[%s1379 + $0x58] sm:$0xf] %vm839, %v1193
      %v1435 = vld [vmem:[%s1379 + $0x5c] sm:$0x1]
      %v1436 = vsel %vm850, %v1194, %v1435
      %1437 = vst [vmem:[%s1379 + $0x5c] sm:$0x1] %v1436
      %v1438 = vld [vmem:[%s1379 + $0x60] sm:$0xf]
      %v1439 = vsel %vm1381, %v1201, %v1438
      %1440 = vst [vmem:[%s1379 + $0x60] sm:$0xf] %v1439
      %1441 = vst.msk [vmem:[%s1379 + $0x64] sm:$0xf] %vm839, %v1210
      %v1442 = vld [vmem:[%s1379 + $0x68] sm:$0x1]
      %v1443 = vsel %vm850, %v1211, %v1442
      %1444 = vst [vmem:[%s1379 + $0x68] sm:$0x1] %v1443
      %v1445 = vld [vmem:[%s1379 + $0x6c] sm:$0xf]
      %v1446 = vsel %vm1381, %v1218, %v1445
      %1447 = vst [vmem:[%s1379 + $0x6c] sm:$0xf] %v1446
      %1448 = vst.msk [vmem:[%s1379 + $0x70] sm:$0xf] %vm839, %v1227
      %v1449 = vld [vmem:[%s1379 + $0x74] sm:$0x1]
      %v1450 = vsel %vm850, %v1228, %v1449
      %1451 = vst [vmem:[%s1379 + $0x74] sm:$0x1] %v1450
      %v1452 = vld [vmem:[%s1379 + $0x78] sm:$0xf]
      %v1453 = vsel %vm1381, %v1235, %v1452
      %1454 = vst [vmem:[%s1379 + $0x78] sm:$0xf] %v1453
      %1455 = vst.msk [vmem:[%s1379 + $0x7c] sm:$0xf] %vm839, %v1244
      %v1456 = vld [vmem:[%s1379 + $0x80] sm:$0x1]
      %v1457 = vsel %vm850, %v1245, %v1456
      %1458 = vst [vmem:[%s1379 + $0x80] sm:$0x1] %v1457
      %v1459 = vld [vmem:[%s1379 + $0x84] sm:$0xf]
      %v1460 = vsel %vm1381, %v1252, %v1459
      %1461 = vst [vmem:[%s1379 + $0x84] sm:$0xf] %v1460
      %1462 = vst.msk [vmem:[%s1379 + $0x88] sm:$0xf] %vm839, %v1261
      %v1463 = vld [vmem:[%s1379 + $0x8c] sm:$0x1]
      %v1464 = vsel %vm850, %v1262, %v1463
      %1465 = vst [vmem:[%s1379 + $0x8c] sm:$0x1] %v1464
      %v1466 = vld [vmem:[%s1379 + $0x90] sm:$0xf]
      %v1467 = vsel %vm1381, %v1269, %v1466
      %1468 = vst [vmem:[%s1379 + $0x90] sm:$0xf] %v1467
      %1469 = vst.msk [vmem:[%s1379 + $0x94] sm:$0xf] %vm839, %v1278
      %v1470 = vld [vmem:[%s1379 + $0x98] sm:$0x1]
      %v1471 = vsel %vm850, %v1279, %v1470
      %1472 = vst [vmem:[%s1379 + $0x98] sm:$0x1] %v1471
      %v1473 = vld [vmem:[%s1379 + $0x9c] sm:$0xf]
      %v1474 = vsel %vm1381, %v1286, %v1473
      %1475 = vst [vmem:[%s1379 + $0x9c] sm:$0xf] %v1474
      %1476 = vst.msk [vmem:[%s1379 + $0xa0] sm:$0xf] %vm839, %v1295
      %v1477 = vld [vmem:[%s1379 + $0xa4] sm:$0x1]
      %v1478 = vsel %vm850, %v1296, %v1477
      %1479 = vst [vmem:[%s1379 + $0xa4] sm:$0x1] %v1478
      %v1480 = vld [vmem:[%s1379 + $0xa8] sm:$0xf]
      %v1481 = vsel %vm1381, %v1303, %v1480
      %1482 = vst [vmem:[%s1379 + $0xa8] sm:$0xf] %v1481
      %1483 = vst.msk [vmem:[%s1379 + $0xac] sm:$0xf] %vm839, %v1312
      %v1484 = vld [vmem:[%s1379 + $0xb0] sm:$0x1]
      %v1485 = vsel %vm850, %v1313, %v1484
      %1486 = vst [vmem:[%s1379 + $0xb0] sm:$0x1] %v1485
      %v1487 = vld [vmem:[%s1379 + $0xb4] sm:$0xf]
      %v1488 = vsel %vm1381, %v1320, %v1487
      %1489 = vst [vmem:[%s1379 + $0xb4] sm:$0xf] %v1488
      %1490 = vst.msk [vmem:[%s1379 + $0xb8] sm:$0xf] %vm839, %v1329
      %v1491 = vld [vmem:[%s1379 + $0xbc] sm:$0x1]
      %v1492 = vsel %vm850, %v1330, %v1491
      %1493 = vst [vmem:[%s1379 + $0xbc] sm:$0x1] %v1492
      %v1494 = vld [vmem:[#allocation2] sm:$0xf]
      %v1495 = vld [vmem:[#allocation2 + $0x4] sm:$0xf]
      %v1496 = vld [vmem:[#allocation2 + $0xc] sm:$0xf]
      %v1497 = vld [vmem:[#allocation2 + $0x10] sm:$0xf]
      %v1498 = vld [vmem:[#allocation2 + $0x18] sm:$0xf]
      %v1499 = vld [vmem:[#allocation2 + $0x1c] sm:$0xf]
      %v1500 = vld [vmem:[#allocation2 + $0x24] sm:$0xf]
      %v1501 = vld [vmem:[#allocation2 + $0x28] sm:$0xf]
      %v1502 = vld [vmem:[#allocation2 + $0x30] sm:$0xf]
      %v1503 = vld [vmem:[#allocation2 + $0x34] sm:$0xf]
      %v1504 = vld [vmem:[#allocation2 + $0x3c] sm:$0xf]
      %v1505 = vld [vmem:[#allocation2 + $0x40] sm:$0xf]
      %v1506 = vld [vmem:[#allocation2 + $0x48] sm:$0xf]
      %v1507 = vld [vmem:[#allocation2 + $0x4c] sm:$0xf]
      %v1508 = vld [vmem:[#allocation2 + $0x54] sm:$0xf]
      %v1509 = vld [vmem:[#allocation2 + $0x58] sm:$0xf]
      %v1510 = vld [vmem:[#allocation2 + $0x60] sm:$0xf]
      %v1511 = vld [vmem:[#allocation2 + $0x64] sm:$0xf]
      %v1512 = vld [vmem:[#allocation2 + $0x6c] sm:$0xf]
      %v1513 = vld [vmem:[#allocation2 + $0x70] sm:$0xf]
      %v1514 = vld [vmem:[#allocation2 + $0x78] sm:$0xf]
      %v1515 = vld [vmem:[#allocation2 + $0x7c] sm:$0xf]
      %v1516 = vld [vmem:[#allocation2 + $0x84] sm:$0xf]
      %v1517 = vld [vmem:[#allocation2 + $0x88] sm:$0xf]
      %v1518 = vld [vmem:[#allocation2 + $0x90] sm:$0xf]
      %v1519 = vld [vmem:[#allocation2 + $0x94] sm:$0xf]
      %v1520 = vld [vmem:[#allocation2 + $0x9c] sm:$0xf]
      %v1521 = vld [vmem:[#allocation2 + $0xa0] sm:$0xf]
      %v1522 = vld [vmem:[#allocation2 + $0xa8] sm:$0xf]
      %v1523 = vld [vmem:[#allocation2 + $0xac] sm:$0xf]
      %v1524 = vld [vmem:[#allocation2 + $0xb4] sm:$0xf]
      %v1525 = vld [vmem:[#allocation2 + $0xb8] sm:$0xf]
      %v1526 = vld [vmem:[#allocation2 + $0x8] sm:$0x1]
      %v1527 = vld [vmem:[#allocation2 + $0x14] sm:$0x1]
      %v1528 = vld [vmem:[#allocation2 + $0x20] sm:$0x1]
      %v1529 = vld [vmem:[#allocation2 + $0x2c] sm:$0x1]
      %v1530 = vld [vmem:[#allocation2 + $0x38] sm:$0x1]
      %v1531 = vld [vmem:[#allocation2 + $0x44] sm:$0x1]
      %v1532 = vld [vmem:[#allocation2 + $0x50] sm:$0x1]
      %v1533 = vld [vmem:[#allocation2 + $0x5c] sm:$0x1]
      %v1534 = vld [vmem:[#allocation2 + $0x68] sm:$0x1]
      %v1535 = vld [vmem:[#allocation2 + $0x74] sm:$0x1]
      %v1536 = vld [vmem:[#allocation2 + $0x80] sm:$0x1]
      %v1537 = vld [vmem:[#allocation2 + $0x8c] sm:$0x1]
      %v1538 = vld [vmem:[#allocation2 + $0x98] sm:$0x1]
      %v1539 = vld [vmem:[#allocation2 + $0xa4] sm:$0x1]
      %v1540 = vld [vmem:[#allocation2 + $0xb0] sm:$0x1]
      %v1541 = vld [vmem:[#allocation2 + $0xbc] sm:$0x1]
      %v1542 = vld [vmem:[#allocation2] sm:$0xe]
      %v1543 = vld [vmem:[#allocation2 + $0xc] sm:$0xe]
      %v1544 = vld [vmem:[#allocation2 + $0x18] sm:$0xe]
      %v1545 = vld [vmem:[#allocation2 + $0x24] sm:$0xe]
      %v1546 = vld [vmem:[#allocation2 + $0x30] sm:$0xe]
      %v1547 = vld [vmem:[#allocation2 + $0x3c] sm:$0xe]
      %v1548 = vld [vmem:[#allocation2 + $0x48] sm:$0xe]
      %v1549 = vld [vmem:[#allocation2 + $0x54] sm:$0xe]
      %v1550 = vld [vmem:[#allocation2 + $0x60] sm:$0xe]
      %v1551 = vld [vmem:[#allocation2 + $0x6c] sm:$0xe]
      %v1552 = vld [vmem:[#allocation2 + $0x78] sm:$0xe]
      %v1553 = vld [vmem:[#allocation2 + $0x84] sm:$0xe]
      %v1554 = vld [vmem:[#allocation2 + $0x90] sm:$0xe]
      %v1555 = vld [vmem:[#allocation2 + $0x9c] sm:$0xe]
      %v1556 = vld [vmem:[#allocation2 + $0xa8] sm:$0xe]
      %v1557 = vld [vmem:[#allocation2 + $0xb4] sm:$0xe]
      %v1590 = vunpack.c.l.b16 %v1494
      %v1591 = vunpack.c.l.b16 %v1495
      %v1592 = vunpack.c.l.b16 %v1496
      %v1593 = vunpack.c.l.b16 %v1497
      %v1594 = vunpack.c.l.b16 %v1498
      %v1595 = vunpack.c.l.b16 %v1499
      %v1596 = vunpack.c.l.b16 %v1500
      %v1597 = vunpack.c.l.b16 %v1501
      %v1598 = vunpack.c.l.b16 %v1502
      %v1599 = vunpack.c.l.b16 %v1503
      %v1600 = vunpack.c.l.b16 %v1504
      %v1601 = vunpack.c.l.b16 %v1505
      %v1602 = vunpack.c.l.b16 %v1506
      %v1603 = vunpack.c.l.b16 %v1507
      %v1604 = vunpack.c.l.b16 %v1508
      %v1605 = vunpack.c.l.b16 %v1509
      %v1606 = vunpack.c.l.b16 %v1510
      %v1607 = vunpack.c.l.b16 %v1511
      %v1608 = vunpack.c.l.b16 %v1512
      %v1609 = vunpack.c.l.b16 %v1513
      %v1610 = vunpack.c.l.b16 %v1514
      %v1611 = vunpack.c.l.b16 %v1515
      %v1612 = vunpack.c.l.b16 %v1516
      %v1613 = vunpack.c.l.b16 %v1517
      %v1614 = vunpack.c.l.b16 %v1518
      %v1615 = vunpack.c.l.b16 %v1519
      %v1616 = vunpack.c.l.b16 %v1520
      %v1617 = vunpack.c.l.b16 %v1521
      %v1618 = vunpack.c.l.b16 %v1522
      %v1619 = vunpack.c.l.b16 %v1523
      %v1620 = vunpack.c.l.b16 %v1524
      %v1621 = vunpack.c.l.b16 %v1525
      %v1622 = vpack.c.b16 %v1591, %v1590
      %v1623 = vpack.c.b16 %v1593, %v1592
      %v1624 = vpack.c.b16 %v1595, %v1594
      %v1625 = vpack.c.b16 %v1597, %v1596
      %v1626 = vpack.c.b16 %v1599, %v1598
      %v1627 = vpack.c.b16 %v1601, %v1600
      %v1628 = vpack.c.b16 %v1603, %v1602
      %v1629 = vpack.c.b16 %v1605, %v1604
      %v1630 = vpack.c.b16 %v1607, %v1606
      %v1631 = vpack.c.b16 %v1609, %v1608
      %v1632 = vpack.c.b16 %v1611, %v1610
      %v1633 = vpack.c.b16 %v1613, %v1612
      %v1634 = vpack.c.b16 %v1615, %v1614
      %v1635 = vpack.c.b16 %v1617, %v1616
      %v1636 = vpack.c.b16 %v1619, %v1618
      %v1637 = vpack.c.b16 %v1621, %v1620
      %v1654 = vunpack.c.l.b16 %v1526
      %v1655 = vunpack.c.l.b16 %v1527
      %v1656 = vunpack.c.l.b16 %v1528
      %v1657 = vunpack.c.l.b16 %v1529
      %v1658 = vunpack.c.l.b16 %v1530
      %v1659 = vunpack.c.l.b16 %v1531
      %v1660 = vunpack.c.l.b16 %v1532
      %v1661 = vunpack.c.l.b16 %v1533
      %v1662 = vunpack.c.l.b16 %v1534
      %v1663 = vunpack.c.l.b16 %v1535
      %v1664 = vunpack.c.l.b16 %v1536
      %v1665 = vunpack.c.l.b16 %v1537
      %v1666 = vunpack.c.l.b16 %v1538
      %v1667 = vunpack.c.l.b16 %v1539
      %v1668 = vunpack.c.l.b16 %v1540
      %v1669 = vunpack.c.l.b16 %v1541
      %v1670 = vpack.c.b16 %v1654, %v1654
      %v1671 = vpack.c.b16 %v1655, %v1655
      %v1672 = vpack.c.b16 %v1656, %v1656
      %v1673 = vpack.c.b16 %v1657, %v1657
      %v1674 = vpack.c.b16 %v1658, %v1658
      %v1675 = vpack.c.b16 %v1659, %v1659
      %v1676 = vpack.c.b16 %v1660, %v1660
      %v1677 = vpack.c.b16 %v1661, %v1661
      %v1678 = vpack.c.b16 %v1662, %v1662
      %v1679 = vpack.c.b16 %v1663, %v1663
      %v1680 = vpack.c.b16 %v1664, %v1664
      %v1681 = vpack.c.b16 %v1665, %v1665
      %v1682 = vpack.c.b16 %v1666, %v1666
      %v1683 = vpack.c.b16 %v1667, %v1667
      %v1684 = vpack.c.b16 %v1668, %v1668
      %v1685 = vpack.c.b16 %v1669, %v1669
      %vm1686 = vsmask.f32 7424
      %v1688 = vshrl.u32 %v1622, 16
      %v1690 = vshll.u32 %v1622, 16
      %v1692 = vrot.slane %v1690, 1
      %v1693 = vor.u32 %v1688, %v1692
      %v1695 = vshll.u32 %v1670, 16
      %v1697 = vrot.slane %v1695, 1
      %v1698 = vsel %vm1686, %v1693, %v1697
      %v1700 = vshrl.u32 %v1623, 16
      %v1702 = vshll.u32 %v1623, 16
      %v1704 = vrot.slane %v1702, 1
      %v1705 = vor.u32 %v1700, %v1704
      %v1707 = vshll.u32 %v1671, 16
      %v1709 = vrot.slane %v1707, 1
      %v1710 = vsel %vm1686, %v1705, %v1709
      %v1712 = vshrl.u32 %v1624, 16
      %v1714 = vshll.u32 %v1624, 16
      %v1716 = vrot.slane %v1714, 1
      %v1717 = vor.u32 %v1712, %v1716
      %v1719 = vshll.u32 %v1672, 16
      %v1721 = vrot.slane %v1719, 1
      %v1722 = vsel %vm1686, %v1717, %v1721
      %v1724 = vshrl.u32 %v1625, 16
      %v1726 = vshll.u32 %v1625, 16
      %v1728 = vrot.slane %v1726, 1
      %v1729 = vor.u32 %v1724, %v1728
      %v1731 = vshll.u32 %v1673, 16
      %v1733 = vrot.slane %v1731, 1
      %v1734 = vsel %vm1686, %v1729, %v1733
      %v1736 = vshrl.u32 %v1626, 16
      %v1738 = vshll.u32 %v1626, 16
      %v1740 = vrot.slane %v1738, 1
      %v1741 = vor.u32 %v1736, %v1740
      %v1743 = vshll.u32 %v1674, 16
      %v1745 = vrot.slane %v1743, 1
      %v1746 = vsel %vm1686, %v1741, %v1745
      %v1748 = vshrl.u32 %v1627, 16
      %v1750 = vshll.u32 %v1627, 16
      %v1752 = vrot.slane %v1750, 1
      %v1753 = vor.u32 %v1748, %v1752
      %v1755 = vshll.u32 %v1675, 16
      %v1757 = vrot.slane %v1755, 1
      %v1758 = vsel %vm1686, %v1753, %v1757
      %v1760 = vshrl.u32 %v1628, 16
      %v1762 = vshll.u32 %v1628, 16
      %v1764 = vrot.slane %v1762, 1
      %v1765 = vor.u32 %v1760, %v1764
      %v1767 = vshll.u32 %v1676, 16
      %v1769 = vrot.slane %v1767, 1
      %v1770 = vsel %vm1686, %v1765, %v1769
      %v1772 = vshrl.u32 %v1629, 16
      %v1774 = vshll.u32 %v1629, 16
      %v1776 = vrot.slane %v1774, 1
      %v1777 = vor.u32 %v1772, %v1776
      %v1779 = vshll.u32 %v1677, 16
      %v1781 = vrot.slane %v1779, 1
      %v1782 = vsel %vm1686, %v1777, %v1781
      %v1784 = vshrl.u32 %v1630, 16
      %v1786 = vshll.u32 %v1630, 16
      %v1788 = vrot.slane %v1786, 1
      %v1789 = vor.u32 %v1784, %v1788
      %v1791 = vshll.u32 %v1678, 16
      %v1793 = vrot.slane %v1791, 1
      %v1794 = vsel %vm1686, %v1789, %v1793
      %v1796 = vshrl.u32 %v1631, 16
      %v1798 = vshll.u32 %v1631, 16
      %v1800 = vrot.slane %v1798, 1
      %v1801 = vor.u32 %v1796, %v1800
      %v1803 = vshll.u32 %v1679, 16
      %v1805 = vrot.slane %v1803, 1
      %v1806 = vsel %vm1686, %v1801, %v1805
      %v1808 = vshrl.u32 %v1632, 16
      %v1810 = vshll.u32 %v1632, 16
      %v1812 = vrot.slane %v1810, 1
      %v1813 = vor.u32 %v1808, %v1812
      %v1815 = vshll.u32 %v1680, 16
      %v1817 = vrot.slane %v1815, 1
      %v1818 = vsel %vm1686, %v1813, %v1817
      %v1820 = vshrl.u32 %v1633, 16
      %v1822 = vshll.u32 %v1633, 16
      %v1824 = vrot.slane %v1822, 1
      %v1825 = vor.u32 %v1820, %v1824
      %v1827 = vshll.u32 %v1681, 16
      %v1829 = vrot.slane %v1827, 1
      %v1830 = vsel %vm1686, %v1825, %v1829
      %v1832 = vshrl.u32 %v1634, 16
      %v1834 = vshll.u32 %v1634, 16
      %v1836 = vrot.slane %v1834, 1
      %v1837 = vor.u32 %v1832, %v1836
      %v1839 = vshll.u32 %v1682, 16
      %v1841 = vrot.slane %v1839, 1
      %v1842 = vsel %vm1686, %v1837, %v1841
      %v1844 = vshrl.u32 %v1635, 16
      %v1846 = vshll.u32 %v1635, 16
      %v1848 = vrot.slane %v1846, 1
      %v1849 = vor.u32 %v1844, %v1848
      %v1851 = vshll.u32 %v1683, 16
      %v1853 = vrot.slane %v1851, 1
      %v1854 = vsel %vm1686, %v1849, %v1853
      %v1856 = vshrl.u32 %v1636, 16
      %v1858 = vshll.u32 %v1636, 16
      %v1860 = vrot.slane %v1858, 1
      %v1861 = vor.u32 %v1856, %v1860
      %v1863 = vshll.u32 %v1684, 16
      %v1865 = vrot.slane %v1863, 1
      %v1866 = vsel %vm1686, %v1861, %v1865
      %v1868 = vshrl.u32 %v1637, 16
      %v1870 = vshll.u32 %v1637, 16
      %v1872 = vrot.slane %v1870, 1
      %v1873 = vor.u32 %v1868, %v1872
      %v1875 = vshll.u32 %v1685, 16
      %v1877 = vrot.slane %v1875, 1
      %v1878 = vsel %vm1686, %v1873, %v1877
      %1879 = vrot.lane.b32.xlu0 %v1698, 4
      %v1880 = vpop.permute.xlu0 %1879
      %1881 = vrot.lane.b32.xlu0 %v1710, 4
      %v1882 = vpop.permute.xlu0 %1881
      %1883 = vrot.lane.b32.xlu0 %v1722, 4
      %v1884 = vpop.permute.xlu0 %1883
      %1885 = vrot.lane.b32.xlu0 %v1734, 4
      %v1886 = vpop.permute.xlu0 %1885
      %1887 = vrot.lane.b32.xlu0 %v1746, 4
      %v1888 = vpop.permute.xlu0 %1887
      %1889 = vrot.lane.b32.xlu0 %v1758, 4
      %v1890 = vpop.permute.xlu0 %1889
      %1891 = vrot.lane.b32.xlu0 %v1770, 4
      %v1892 = vpop.permute.xlu0 %1891
      %1893 = vrot.lane.b32.xlu0 %v1782, 4
      %v1894 = vpop.permute.xlu0 %1893
      %1895 = vrot.lane.b32.xlu0 %v1794, 4
      %v1896 = vpop.permute.xlu0 %1895
      %1897 = vrot.lane.b32.xlu0 %v1806, 4
      %v1898 = vpop.permute.xlu0 %1897
      %1899 = vrot.lane.b32.xlu0 %v1818, 4
      %v1900 = vpop.permute.xlu0 %1899
      %1901 = vrot.lane.b32.xlu0 %v1830, 4
      %v1902 = vpop.permute.xlu0 %1901
      %1903 = vrot.lane.b32.xlu0 %v1842, 4
      %v1904 = vpop.permute.xlu0 %1903
      %1905 = vrot.lane.b32.xlu0 %v1854, 4
      %v1906 = vpop.permute.xlu0 %1905
      %1907 = vrot.lane.b32.xlu0 %v1866, 4
      %v1908 = vpop.permute.xlu0 %1907
      %1909 = vrot.lane.b32.xlu0 %v1878, 4
      %v1910 = vpop.permute.xlu0 %1909
      %v1927 = vunpack.c.l.b16 %v1542
      %v1928 = vunpack.c.l.b16 %v1543
      %v1929 = vunpack.c.l.b16 %v1544
      %v1930 = vunpack.c.l.b16 %v1545
      %v1931 = vunpack.c.l.b16 %v1546
      %v1932 = vunpack.c.l.b16 %v1547
      %v1933 = vunpack.c.l.b16 %v1548
      %v1934 = vunpack.c.l.b16 %v1549
      %v1935 = vunpack.c.l.b16 %v1550
      %v1936 = vunpack.c.l.b16 %v1551
      %v1937 = vunpack.c.l.b16 %v1552
      %v1938 = vunpack.c.l.b16 %v1553
      %v1939 = vunpack.c.l.b16 %v1554
      %v1940 = vunpack.c.l.b16 %v1555
      %v1941 = vunpack.c.l.b16 %v1556
      %v1942 = vunpack.c.l.b16 %v1557
      %v1943 = vpack.c.b16 %v1591, %v1927
      %v1944 = vpack.c.b16 %v1593, %v1928
      %v1945 = vpack.c.b16 %v1595, %v1929
      %v1946 = vpack.c.b16 %v1597, %v1930
      %v1947 = vpack.c.b16 %v1599, %v1931
      %v1948 = vpack.c.b16 %v1601, %v1932
      %v1949 = vpack.c.b16 %v1603, %v1933
      %v1950 = vpack.c.b16 %v1605, %v1934
      %v1951 = vpack.c.b16 %v1607, %v1935
      %v1952 = vpack.c.b16 %v1609, %v1936
      %v1953 = vpack.c.b16 %v1611, %v1937
      %v1954 = vpack.c.b16 %v1613, %v1938
      %v1955 = vpack.c.b16 %v1615, %v1939
      %v1956 = vpack.c.b16 %v1617, %v1940
      %v1957 = vpack.c.b16 %v1619, %v1941
      %v1958 = vpack.c.b16 %v1621, %v1942
      %vm1959 = vcmask 1046528
      %v1960 = vrot.slane %v1943, 1
      %v1961 = vrot.slane %v1670, 1
      %v1962 = vsel %vm1959, %v1960, %v1961
      %v1963 = vrot.slane %v1944, 1
      %v1964 = vrot.slane %v1671, 1
      %v1965 = vsel %vm1959, %v1963, %v1964
      %v1966 = vrot.slane %v1945, 1
      %v1967 = vrot.slane %v1672, 1
      %v1968 = vsel %vm1959, %v1966, %v1967
      %v1969 = vrot.slane %v1946, 1
      %v1970 = vrot.slane %v1673, 1
      %v1971 = vsel %vm1959, %v1969, %v1970
      %v1972 = vrot.slane %v1947, 1
      %v1973 = vrot.slane %v1674, 1
      %v1974 = vsel %vm1959, %v1972, %v1973
      %v1975 = vrot.slane %v1948, 1
      %v1976 = vrot.slane %v1675, 1
      %v1977 = vsel %vm1959, %v1975, %v1976
      %v1978 = vrot.slane %v1949, 1
      %v1979 = vrot.slane %v1676, 1
      %v1980 = vsel %vm1959, %v1978, %v1979
      %v1981 = vrot.slane %v1950, 1
      %v1982 = vrot.slane %v1677, 1
      %v1983 = vsel %vm1959, %v1981, %v1982
      %v1984 = vrot.slane %v1951, 1
      %v1985 = vrot.slane %v1678, 1
      %v1986 = vsel %vm1959, %v1984, %v1985
      %v1987 = vrot.slane %v1952, 1
      %v1988 = vrot.slane %v1679, 1
      %v1989 = vsel %vm1959, %v1987, %v1988
      %v1990 = vrot.slane %v1953, 1
      %v1991 = vrot.slane %v1680, 1
      %v1992 = vsel %vm1959, %v1990, %v1991
      %v1993 = vrot.slane %v1954, 1
      %v1994 = vrot.slane %v1681, 1
      %v1995 = vsel %vm1959, %v1993, %v1994
      %v1996 = vrot.slane %v1955, 1
      %v1997 = vrot.slane %v1682, 1
      %v1998 = vsel %vm1959, %v1996, %v1997
      %v1999 = vrot.slane %v1956, 1
      %v2000 = vrot.slane %v1683, 1
      %v2001 = vsel %vm1959, %v1999, %v2000
      %v2002 = vrot.slane %v1957, 1
      %v2003 = vrot.slane %v1684, 1
      %v2004 = vsel %vm1959, %v2002, %v2003
      %v2005 = vrot.slane %v1958, 1
      %v2006 = vrot.slane %v1685, 1
      %v2007 = vsel %vm1959, %v2005, %v2006
      %2008 = vrot.lane.b32.xlu0 %v1962, 8
      %v2009 = vpop.permute.xlu0 %2008
      %2010 = vrot.lane.b32.xlu0 %v1965, 8
      %v2011 = vpop.permute.xlu0 %2010
      %2012 = vrot.lane.b32.xlu0 %v1968, 8
      %v2013 = vpop.permute.xlu0 %2012
      %2014 = vrot.lane.b32.xlu0 %v1971, 8
      %v2015 = vpop.permute.xlu0 %2014
      %2016 = vrot.lane.b32.xlu0 %v1974, 8
      %v2017 = vpop.permute.xlu0 %2016
      %2018 = vrot.lane.b32.xlu0 %v1977, 8
      %v2019 = vpop.permute.xlu0 %2018
      %2020 = vrot.lane.b32.xlu0 %v1980, 8
      %v2021 = vpop.permute.xlu0 %2020
      %2022 = vrot.lane.b32.xlu0 %v1983, 8
      %v2023 = vpop.permute.xlu0 %2022
      %2024 = vrot.lane.b32.xlu0 %v1986, 8
      %v2025 = vpop.permute.xlu0 %2024
      %2026 = vrot.lane.b32.xlu0 %v1989, 8
      %v2027 = vpop.permute.xlu0 %2026
      %2028 = vrot.lane.b32.xlu0 %v1992, 8
      %v2029 = vpop.permute.xlu0 %2028
      %2030 = vrot.lane.b32.xlu0 %v1995, 8
      %v2031 = vpop.permute.xlu0 %2030
      %2032 = vrot.lane.b32.xlu0 %v1998, 8
      %v2033 = vpop.permute.xlu0 %2032
      %2034 = vrot.lane.b32.xlu0 %v2001, 8
      %v2035 = vpop.permute.xlu0 %2034
      %2036 = vrot.lane.b32.xlu0 %v2004, 8
      %v2037 = vpop.permute.xlu0 %2036
      %2038 = vrot.lane.b32.xlu0 %v2007, 8
      %v2039 = vpop.permute.xlu0 %2038
      %vm2040 = vcmask 31744
      %v2042 = vsel %vm2040, %v1622, %v1880
      %v2044 = vsel %vm2040, %v1623, %v1882
      %v2046 = vsel %vm2040, %v1624, %v1884
      %v2048 = vsel %vm2040, %v1625, %v1886
      %v2050 = vsel %vm2040, %v1626, %v1888
      %v2052 = vsel %vm2040, %v1627, %v1890
      %v2054 = vsel %vm2040, %v1628, %v1892
      %v2056 = vsel %vm2040, %v1629, %v1894
      %v2058 = vsel %vm2040, %v1630, %v1896
      %v2060 = vsel %vm2040, %v1631, %v1898
      %v2062 = vsel %vm2040, %v1632, %v1900
      %v2064 = vsel %vm2040, %v1633, %v1902
      %v2066 = vsel %vm2040, %v1634, %v1904
      %v2068 = vsel %vm2040, %v1635, %v1906
      %v2070 = vsel %vm2040, %v1636, %v1908
      %v2072 = vsel %vm2040, %v1637, %v1910
      %vm2073 = vcmask 64512
      %v2075 = vsel %vm2073, %v2042, %v2009
      %v2077 = vsel %vm2073, %v2044, %v2011
      %v2079 = vsel %vm2073, %v2046, %v2013
      %v2081 = vsel %vm2073, %v2048, %v2015
      %v2083 = vsel %vm2073, %v2050, %v2017
      %v2085 = vsel %vm2073, %v2052, %v2019
      %v2087 = vsel %vm2073, %v2054, %v2021
      %v2089 = vsel %vm2073, %v2056, %v2023
      %v2091 = vsel %vm2073, %v2058, %v2025
      %v2093 = vsel %vm2073, %v2060, %v2027
      %v2095 = vsel %vm2073, %v2062, %v2029
      %v2097 = vsel %vm2073, %v2064, %v2031
      %v2099 = vsel %vm2073, %v2066, %v2033
      %v2101 = vsel %vm2073, %v2068, %v2035
      %v2103 = vsel %vm2073, %v2070, %v2037
      %v2105 = vsel %vm2073, %v2072, %v2039
      %v2106 = vld [vmem:[%s4] sm:$0xf]
      %v2107 = vld [vmem:[%s4 + $0x4] sm:$0x3]
      %v2110 = vunpack.c.l.b16 %v2106
      %v2111 = vunpack.c.l.b16 %v2107
      %v2112 = vpack.c.b16 %v2111, %v2110
      %vm2113 = vcmask 97280
      %v2114 = vsel %vm2113, %v2075, 0
      %v2116 = vsel %vm2113, %v2077, 0
      %v2118 = vsel %vm2113, %v2079, 0
      %v2120 = vsel %vm2113, %v2081, 0
      %v2122 = vsel %vm2113, %v2083, 0
      %v2124 = vsel %vm2113, %v2085, 0
      %v2126 = vsel %vm2113, %v2087, 0
      %v2128 = vsel %vm2113, %v2089, 0
      %v2130 = vsel %vm2113, %v2091, 0
      %v2132 = vsel %vm2113, %v2093, 0
      %v2134 = vsel %vm2113, %v2095, 0
      %v2136 = vsel %vm2113, %v2097, 0
      %v2138 = vsel %vm2113, %v2099, 0
      %v2140 = vsel %vm2113, %v2101, 0
      %v2142 = vsel %vm2113, %v2103, 0
      %v2144 = vsel %vm2113, %v2105, 0
      %vm2146 = vcmask 1045504
      %v2148 = vsel %vm2146, %v2112, 0
      %2150 = vmatprep.subr.bf16.mxu0 0
      %2151 = vmatpush1.bf16.msra.mxu0 %v2148
      %2152 = vmatprep.subr.bf16.mxu0 0
      %2153 = vmatpush1.bf16.msra.mxu0 0
      %2154 = vmatprep.subr.bf16.mxu0 0
      %2155 = vmatpush1.bf16.msra.mxu0 0
      %2156 = vmatprep.subr.bf16.mxu0 0
      %2157 = vmatpush1.bf16.msra.mxu0 0
      %2158 = vmatprep.subr.bf16.mxu0 0
      %2159 = vmatpush1.bf16.msra.mxu0 0
      %2160 = vmatprep.subr.bf16.mxu0 0
      %2161 = vmatpush1.bf16.msra.mxu0 0
      %2162 = vmatprep.subr.bf16.mxu0 0
      %2163 = vmatpush1.bf16.msra.mxu0 0
      %2164 = vmatprep.subr.bf16.mxu0 0
      %2165 = vmatpush1.bf16.msra.mxu0 0
      %2166 = vmatprep.subr.bf16.mxu0 0
      %2167 = vmatpush1.bf16.msra.mxu0 0
      %2168 = vmatprep.subr.bf16.mxu0 0
      %2169 = vmatpush1.bf16.msra.mxu0 0
      %2170 = vmatprep.subr.bf16.mxu0 0
      %2171 = vmatpush1.bf16.msra.mxu0 0
      %2172 = vmatprep.subr.bf16.mxu0 0
      %2173 = vmatpush1.bf16.msra.mxu0 0
      %2174 = vmatprep.subr.bf16.mxu0 0
      %2175 = vmatpush1.bf16.msra.mxu0 0
      %2176 = vmatprep.subr.bf16.mxu0 0
      %2177 = vmatpush1.bf16.msra.mxu0 0
      %2178 = vmatprep.subr.bf16.mxu0 0
      %2179 = vmatpush1.bf16.msra.mxu0 0
      %2180 = vmatprep.subr.bf16.mxu0 0
      %2181 = vmatpush1.bf16.msra.mxu0 0
      %2182 = vmatprep.mubr.bf16.mxu0 0
      %2183 = vmatmul.mubr.bf16.gmra.mrb[0].mxu0 %v2114
      %v2184 = vpop.f32.mrb[0].mxu0
      %v2185 = vadd.f32 0.0, %v2184
      %v2186 = vpop.f32.mrb[0].mxu0
      %v2187 = vpop.f32.mrb[0].mxu0
      %v2188 = vadd.f32 0.0, %v2187
      %v2189 = vpop.f32.mrb[0].mxu0
      %2190 = vmatprep.mubr.bf16.mxu0 0
      %2191 = vmatmul.mubr.bf16.gmra.mrb[0].mxu0 %v2116
      %v2192 = vpop.f32.mrb[0].mxu0
      %v2193 = vadd.f32 0.0, %v2192
      %v2194 = vpop.f32.mrb[0].mxu0
      %v2195 = vpop.f32.mrb[0].mxu0
      %v2196 = vadd.f32 0.0, %v2195
      %v2197 = vpop.f32.mrb[0].mxu0
      %2198 = vmatprep.mubr.bf16.mxu0 0
      %2199 = vmatmul.mubr.bf16.gmra.mrb[0].mxu0 %v2118
      %v2200 = vpop.f32.mrb[0].mxu0
      %v2201 = vadd.f32 0.0, %v2200
      %v2202 = vpop.f32.mrb[0].mxu0
      %v2203 = vpop.f32.mrb[0].mxu0
      %v2204 = vadd.f32 0.0, %v2203
      %v2205 = vpop.f32.mrb[0].mxu0
      %2206 = vmatprep.mubr.bf16.mxu0 0
      %2207 = vmatmul.mubr.bf16.gmra.mrb[0].mxu0 %v2120
      %v2208 = vpop.f32.mrb[0].mxu0
      %v2209 = vadd.f32 0.0, %v2208
      %v2210 = vpop.f32.mrb[0].mxu0
      %v2211 = vpop.f32.mrb[0].mxu0
      %v2212 = vadd.f32 0.0, %v2211
      %v2213 = vpop.f32.mrb[0].mxu0
      %2214 = vmatprep.mubr.bf16.mxu0 0
      %2215 = vmatmul.mubr.bf16.gmra.mrb[0].mxu0 %v2122
      %v2216 = vpop.f32.mrb[0].mxu0
      %v2217 = vadd.f32 0.0, %v2216
      %v2218 = vpop.f32.mrb[0].mxu0
      %v2219 = vpop.f32.mrb[0].mxu0
      %v2220 = vadd.f32 0.0, %v2219
      %v2221 = vpop.f32.mrb[0].mxu0
      %2222 = vmatprep.mubr.bf16.mxu0 0
      %2223 = vmatmul.mubr.bf16.gmra.mrb[0].mxu0 %v2124
      %v2224 = vpop.f32.mrb[0].mxu0
      %v2225 = vadd.f32 0.0, %v2224
      %v2226 = vpop.f32.mrb[0].mxu0
      %v2227 = vpop.f32.mrb[0].mxu0
      %v2228 = vadd.f32 0.0, %v2227
      %v2229 = vpop.f32.mrb[0].mxu0
      %2230 = vmatprep.mubr.bf16.mxu0 0
      %2231 = vmatmul.mubr.bf16.gmra.mrb[0].mxu0 %v2126
      %v2232 = vpop.f32.mrb[0].mxu0
      %v2233 = vadd.f32 0.0, %v2232
      %v2234 = vpop.f32.mrb[0].mxu0
      %v2235 = vpop.f32.mrb[0].mxu0
      %v2236 = vadd.f32 0.0, %v2235
      %v2237 = vpop.f32.mrb[0].mxu0
      %2238 = vmatprep.mubr.bf16.mxu0 0
      %2239 = vmatmul.mubr.bf16.gmra.mrb[0].mxu0 %v2128
      %v2240 = vpop.f32.mrb[0].mxu0
      %v2241 = vadd.f32 0.0, %v2240
      %v2242 = vpop.f32.mrb[0].mxu0
      %v2243 = vpop.f32.mrb[0].mxu0
      %v2244 = vadd.f32 0.0, %v2243
      %v2245 = vpop.f32.mrb[0].mxu0
      %2246 = vmatprep.mubr.bf16.mxu0 0
      %2247 = vmatmul.mubr.bf16.gmra.mrb[0].mxu0 %v2130
      %v2248 = vpop.f32.mrb[0].mxu0
      %v2249 = vadd.f32 0.0, %v2248
      %v2250 = vpop.f32.mrb[0].mxu0
      %v2251 = vpop.f32.mrb[0].mxu0
      %v2252 = vadd.f32 0.0, %v2251
      %v2253 = vpop.f32.mrb[0].mxu0
      %2254 = vmatprep.mubr.bf16.mxu0 0
      %2255 = vmatmul.mubr.bf16.gmra.mrb[0].mxu0 %v2132
      %v2256 = vpop.f32.mrb[0].mxu0
      %v2257 = vadd.f32 0.0, %v2256
      %v2258 = vpop.f32.mrb[0].mxu0
      %v2259 = vpop.f32.mrb[0].mxu0
      %v2260 = vadd.f32 0.0, %v2259
      %v2261 = vpop.f32.mrb[0].mxu0
      %2262 = vmatprep.mubr.bf16.mxu0 0
      %2263 = vmatmul.mubr.bf16.gmra.mrb[0].mxu0 %v2134
      %v2264 = vpop.f32.mrb[0].mxu0
      %v2265 = vadd.f32 0.0, %v2264
      %v2266 = vpop.f32.mrb[0].mxu0
      %v2267 = vpop.f32.mrb[0].mxu0
      %v2268 = vadd.f32 0.0, %v2267
      %v2269 = vpop.f32.mrb[0].mxu0
      %2270 = vmatprep.mubr.bf16.mxu0 0
      %2271 = vmatmul.mubr.bf16.gmra.mrb[0].mxu0 %v2136
      %v2272 = vpop.f32.mrb[0].mxu0
      %v2273 = vadd.f32 0.0, %v2272
      %v2274 = vpop.f32.mrb[0].mxu0
      %v2275 = vpop.f32.mrb[0].mxu0
      %v2276 = vadd.f32 0.0, %v2275
      %v2277 = vpop.f32.mrb[0].mxu0
      %2278 = vmatprep.mubr.bf16.mxu0 0
      %2279 = vmatmul.mubr.bf16.gmra.mrb[0].mxu0 %v2138
      %v2280 = vpop.f32.mrb[0].mxu0
      %v2281 = vadd.f32 0.0, %v2280
      %v2282 = vpop.f32.mrb[0].mxu0
      %v2283 = vpop.f32.mrb[0].mxu0
      %v2284 = vadd.f32 0.0, %v2283
      %v2285 = vpop.f32.mrb[0].mxu0
      %2286 = vmatprep.mubr.bf16.mxu0 0
      %2287 = vmatmul.mubr.bf16.gmra.mrb[0].mxu0 %v2140
      %v2288 = vpop.f32.mrb[0].mxu0
      %v2289 = vadd.f32 0.0, %v2288
      %v2290 = vpop.f32.mrb[0].mxu0
      %v2291 = vpop.f32.mrb[0].mxu0
      %v2292 = vadd.f32 0.0, %v2291
      %v2293 = vpop.f32.mrb[0].mxu0
      %2294 = vmatprep.mubr.bf16.mxu0 0
      %2295 = vmatmul.mubr.bf16.gmra.mrb[0].mxu0 %v2142
      %v2296 = vpop.f32.mrb[0].mxu0
      %v2297 = vadd.f32 0.0, %v2296
      %v2298 = vpop.f32.mrb[0].mxu0
      %v2299 = vpop.f32.mrb[0].mxu0
      %v2300 = vadd.f32 0.0, %v2299
      %v2301 = vpop.f32.mrb[0].mxu0
      %2302 = vmatprep.mubr.bf16.mxu0 0
      %2303 = vmatmul.mubr.bf16.gmra.mrb[0].mxu0 %v2144
      %v2304 = vpop.f32.mrb[0].mxu0
      %v2305 = vadd.f32 0.0, %v2304
      %v2306 = vpop.f32.mrb[0].mxu0
      %v2307 = vpop.f32.mrb[0].mxu0
      %v2308 = vadd.f32 0.0, %v2307
      %v2309 = vpop.f32.mrb[0].mxu0
      %2310 = vdwg.mxu0
      %2311 = vst.msk [vmem:[#allocation3] sm:$0xff] %vm2040, %v2185
      %2312 = vst.msk [vmem:[#allocation3 + $0x8] sm:$0xff] %vm2040, %v2188
      %2313 = vst.msk [vmem:[#allocation3 + $0x10] sm:$0xff] %vm2040, %v2193
      %2314 = vst.msk [vmem:[#allocation3 + $0x18] sm:$0xff] %vm2040, %v2196
      %2315 = vst.msk [vmem:[#allocation3 + $0x20] sm:$0xff] %vm2040, %v2201
      %2316 = vst.msk [vmem:[#allocation3 + $0x28] sm:$0xff] %vm2040, %v2204
      %2317 = vst.msk [vmem:[#allocation3 + $0x30] sm:$0xff] %vm2040, %v2209
      %2318 = vst.msk [vmem:[#allocation3 + $0x38] sm:$0xff] %vm2040, %v2212
      %2319 = vst.msk [vmem:[#allocation3 + $0x40] sm:$0xff] %vm2040, %v2217
      %2320 = vst.msk [vmem:[#allocation3 + $0x48] sm:$0xff] %vm2040, %v2220
      %2321 = vst.msk [vmem:[#allocation3 + $0x50] sm:$0xff] %vm2040, %v2225
      %2322 = vst.msk [vmem:[#allocation3 + $0x58] sm:$0xff] %vm2040, %v2228
      %2323 = vst.msk [vmem:[#allocation3 + $0x60] sm:$0xff] %vm2040, %v2233
      %2324 = vst.msk [vmem:[#allocation3 + $0x68] sm:$0xff] %vm2040, %v2236
      %2325 = vst.msk [vmem:[#allocation3 + $0x70] sm:$0xff] %vm2040, %v2241
      %2326 = vst.msk [vmem:[#allocation3 + $0x78] sm:$0xff] %vm2040, %v2244
      %2327 = vst.msk [vmem:[#allocation3 + $0x80] sm:$0xff] %vm2040, %v2249
      %2328 = vst.msk [vmem:[#allocation3 + $0x88] sm:$0xff] %vm2040, %v2252
      %2329 = vst.msk [vmem:[#allocation3 + $0x90] sm:$0xff] %vm2040, %v2257
      %2330 = vst.msk [vmem:[#allocation3 + $0x98] sm:$0xff] %vm2040, %v2260
      %2331 = vst.msk [vmem:[#allocation3 + $0xa0] sm:$0xff] %vm2040, %v2265
      %2332 = vst.msk [vmem:[#allocation3 + $0xa8] sm:$0xff] %vm2040, %v2268
      %2333 = vst.msk [vmem:[#allocation3 + $0xb0] sm:$0xff] %vm2040, %v2273
      %2334 = vst.msk [vmem:[#allocation3 + $0xb8] sm:$0xff] %vm2040, %v2276
      %2335 = vst.msk [vmem:[#allocation3 + $0xc0] sm:$0xff] %vm2040, %v2281
      %2336 = vst.msk [vmem:[#allocation3 + $0xc8] sm:$0xff] %vm2040, %v2284
      %2337 = vst.msk [vmem:[#allocation3 + $0xd0] sm:$0xff] %vm2040, %v2289
      %2338 = vst.msk [vmem:[#allocation3 + $0xd8] sm:$0xff] %vm2040, %v2292
      %2339 = vst.msk [vmem:[#allocation3 + $0xe0] sm:$0xff] %vm2040, %v2297
      %2340 = vst.msk [vmem:[#allocation3 + $0xe8] sm:$0xff] %vm2040, %v2300
      %2341 = vst.msk [vmem:[#allocation3 + $0xf0] sm:$0xff] %vm2040, %v2305
      %2342 = vst.msk [vmem:[#allocation3 + $0xf8] sm:$0xff] %vm2040, %v2308
      %v2343 = vld [vmem:[%s1379] sm:$0xf]
      %v2344 = vld [vmem:[%s1379 + $0x4] sm:$0xf]
      %v2345 = vld [vmem:[%s1379 + $0xc] sm:$0xf]
      %v2346 = vld [vmem:[%s1379 + $0x10] sm:$0xf]
      %v2347 = vld [vmem:[%s1379 + $0x18] sm:$0xf]
      %v2348 = vld [vmem:[%s1379 + $0x1c] sm:$0xf]
      %v2349 = vld [vmem:[%s1379 + $0x24] sm:$0xf]
      %v2350 = vld [vmem:[%s1379 + $0x28] sm:$0xf]
      %v2351 = vld [vmem:[%s1379 + $0x30] sm:$0xf]
      %v2352 = vld [vmem:[%s1379 + $0x34] sm:$0xf]
      %v2353 = vld [vmem:[%s1379 + $0x3c] sm:$0xf]
      %v2354 = vld [vmem:[%s1379 + $0x40] sm:$0xf]
      %v2355 = vld [vmem:[%s1379 + $0x48] sm:$0xf]
      %v2356 = vld [vmem:[%s1379 + $0x4c] sm:$0xf]
      %v2357 = vld [vmem:[%s1379 + $0x54] sm:$0xf]
      %v2358 = vld [vmem:[%s1379 + $0x58] sm:$0xf]
      %v2359 = vld [vmem:[%s1379 + $0x60] sm:$0xf]
      %v2360 = vld [vmem:[%s1379 + $0x64] sm:$0xf]
      %v2361 = vld [vmem:[%s1379 + $0x6c] sm:$0xf]
      %v2362 = vld [vmem:[%s1379 + $0x70] sm:$0xf]
      %v2363 = vld [vmem:[%s1379 + $0x78] sm:$0xf]
      %v2364 = vld [vmem:[%s1379 + $0x7c] sm:$0xf]
      %v2365 = vld [vmem:[%s1379 + $0x84] sm:$0xf]
      %v2366 = vld [vmem:[%s1379 + $0x88] sm:$0xf]
      %v2367 = vld [vmem:[%s1379 + $0x90] sm:$0xf]
      %v2368 = vld [vmem:[%s1379 + $0x94] sm:$0xf]
      %v2369 = vld [vmem:[%s1379 + $0x9c] sm:$0xf]
      %v2370 = vld [vmem:[%s1379 + $0xa0] sm:$0xf]
      %v2371 = vld [vmem:[%s1379 + $0xa8] sm:$0xf]
      %v2372 = vld [vmem:[%s1379 + $0xac] sm:$0xf]
      %v2373 = vld [vmem:[%s1379 + $0xb4] sm:$0xf]
      %v2374 = vld [vmem:[%s1379 + $0xb8] sm:$0xf]
      %v2375 = vld [vmem:[%s1379 + $0x8] sm:$0x1]
      %v2376 = vld [vmem:[%s1379 + $0x14] sm:$0x1]
      %v2377 = vld [vmem:[%s1379 + $0x20] sm:$0x1]
      %v2378 = vld [vmem:[%s1379 + $0x2c] sm:$0x1]
      %v2379 = vld [vmem:[%s1379 + $0x38] sm:$0x1]
      %v2380 = vld [vmem:[%s1379 + $0x44] sm:$0x1]
      %v2381 = vld [vmem:[%s1379 + $0x50] sm:$0x1]
      %v2382 = vld [vmem:[%s1379 + $0x5c] sm:$0x1]
      %v2383 = vld [vmem:[%s1379 + $0x68] sm:$0x1]
      %v2384 = vld [vmem:[%s1379 + $0x74] sm:$0x1]
      %v2385 = vld [vmem:[%s1379 + $0x80] sm:$0x1]
      %v2386 = vld [vmem:[%s1379 + $0x8c] sm:$0x1]
      %v2387 = vld [vmem:[%s1379 + $0x98] sm:$0x1]
      %v2388 = vld [vmem:[%s1379 + $0xa4] sm:$0x1]
      %v2389 = vld [vmem:[%s1379 + $0xb0] sm:$0x1]
      %v2390 = vld [vmem:[%s1379 + $0xbc] sm:$0x1]
      %v2391 = vld [vmem:[%s1379] sm:$0xe]
      %v2392 = vld [vmem:[%s1379 + $0xc] sm:$0xe]
      %v2393 = vld [vmem:[%s1379 + $0x18] sm:$0xe]
      %v2394 = vld [vmem:[%s1379 + $0x24] sm:$0xe]
      %v2395 = vld [vmem:[%s1379 + $0x30] sm:$0xe]
      %v2396 = vld [vmem:[%s1379 + $0x3c] sm:$0xe]
      %v2397 = vld [vmem:[%s1379 + $0x48] sm:$0xe]
      %v2398 = vld [vmem:[%s1379 + $0x54] sm:$0xe]
      %v2399 = vld [vmem:[%s1379 + $0x60] sm:$0xe]
      %v2400 = vld [vmem:[%s1379 + $0x6c] sm:$0xe]
      %v2401 = vld [vmem:[%s1379 + $0x78] sm:$0xe]
      %v2402 = vld [vmem:[%s1379 + $0x84] sm:$0xe]
      %v2403 = vld [vmem:[%s1379 + $0x90] sm:$0xe]
      %v2404 = vld [vmem:[%s1379 + $0x9c] sm:$0xe]
      %v2405 = vld [vmem:[%s1379 + $0xa8] sm:$0xe]
      %v2406 = vld [vmem:[%s1379 + $0xb4] sm:$0xe]
      %v2439 = vunpack.c.l.b16 %v2343
      %v2440 = vunpack.c.l.b16 %v2344
      %v2441 = vunpack.c.l.b16 %v2345
      %v2442 = vunpack.c.l.b16 %v2346
      %v2443 = vunpack.c.l.b16 %v2347
      %v2444 = vunpack.c.l.b16 %v2348
      %v2445 = vunpack.c.l.b16 %v2349
      %v2446 = vunpack.c.l.b16 %v2350
      %v2447 = vunpack.c.l.b16 %v2351
      %v2448 = vunpack.c.l.b16 %v2352
      %v2449 = vunpack.c.l.b16 %v2353
      %v2450 = vunpack.c.l.b16 %v2354
      %v2451 = vunpack.c.l.b16 %v2355
      %v2452 = vunpack.c.l.b16 %v2356
      %v2453 = vunpack.c.l.b16 %v2357
      %v2454 = vunpack.c.l.b16 %v2358
      %v2455 = vunpack.c.l.b16 %v2359
      %v2456 = vunpack.c.l.b16 %v2360
      %v2457 = vunpack.c.l.b16 %v2361
      %v2458 = vunpack.c.l.b16 %v2362
      %v2459 = vunpack.c.l.b16 %v2363
      %v2460 = vunpack.c.l.b16 %v2364
      %v2461 = vunpack.c.l.b16 %v2365
      %v2462 = vunpack.c.l.b16 %v2366
      %v2463 = vunpack.c.l.b16 %v2367
      %v2464 = vunpack.c.l.b16 %v2368
      %v2465 = vunpack.c.l.b16 %v2369
      %v2466 = vunpack.c.l.b16 %v2370
      %v2467 = vunpack.c.l.b16 %v2371
      %v2468 = vunpack.c.l.b16 %v2372
      %v2469 = vunpack.c.l.b16 %v2373
      %v2470 = vunpack.c.l.b16 %v2374
      %v2471 = vpack.c.b16 %v2440, %v2439
      %v2472 = vpack.c.b16 %v2442, %v2441
      %v2473 = vpack.c.b16 %v2444, %v2443
      %v2474 = vpack.c.b16 %v2446, %v2445
      %v2475 = vpack.c.b16 %v2448, %v2447
      %v2476 = vpack.c.b16 %v2450, %v2449
      %v2477 = vpack.c.b16 %v2452, %v2451
      %v2478 = vpack.c.b16 %v2454, %v2453
      %v2479 = vpack.c.b16 %v2456, %v2455
      %v2480 = vpack.c.b16 %v2458, %v2457
      %v2481 = vpack.c.b16 %v2460, %v2459
      %v2482 = vpack.c.b16 %v2462, %v2461
      %v2483 = vpack.c.b16 %v2464, %v2463
      %v2484 = vpack.c.b16 %v2466, %v2465
      %v2485 = vpack.c.b16 %v2468, %v2467
      %v2486 = vpack.c.b16 %v2470, %v2469
      %v2503 = vunpack.c.l.b16 %v2375
      %v2504 = vunpack.c.l.b16 %v2376
      %v2505 = vunpack.c.l.b16 %v2377
      %v2506 = vunpack.c.l.b16 %v2378
      %v2507 = vunpack.c.l.b16 %v2379
      %v2508 = vunpack.c.l.b16 %v2380
      %v2509 = vunpack.c.l.b16 %v2381
      %v2510 = vunpack.c.l.b16 %v2382
      %v2511 = vunpack.c.l.b16 %v2383
      %v2512 = vunpack.c.l.b16 %v2384
      %v2513 = vunpack.c.l.b16 %v2385
      %v2514 = vunpack.c.l.b16 %v2386
      %v2515 = vunpack.c.l.b16 %v2387
      %v2516 = vunpack.c.l.b16 %v2388
      %v2517 = vunpack.c.l.b16 %v2389
      %v2518 = vunpack.c.l.b16 %v2390
      %v2519 = vpack.c.b16 %v2503, %v2503
      %v2520 = vpack.c.b16 %v2504, %v2504
      %v2521 = vpack.c.b16 %v2505, %v2505
      %v2522 = vpack.c.b16 %v2506, %v2506
      %v2523 = vpack.c.b16 %v2507, %v2507
      %v2524 = vpack.c.b16 %v2508, %v2508
      %v2525 = vpack.c.b16 %v2509, %v2509
      %v2526 = vpack.c.b16 %v2510, %v2510
      %v2527 = vpack.c.b16 %v2511, %v2511
      %v2528 = vpack.c.b16 %v2512, %v2512
      %v2529 = vpack.c.b16 %v2513, %v2513
      %v2530 = vpack.c.b16 %v2514, %v2514
      %v2531 = vpack.c.b16 %v2515, %v2515
      %v2532 = vpack.c.b16 %v2516, %v2516
      %v2533 = vpack.c.b16 %v2517, %v2517
      %v2534 = vpack.c.b16 %v2518, %v2518
      %v2536 = vshrl.u32 %v2471, 16
      %v2538 = vshll.u32 %v2471, 16
      %v2540 = vrot.slane %v2538, 1
      %v2541 = vor.u32 %v2536, %v2540
      %v2543 = vshll.u32 %v2519, 16
      %v2545 = vrot.slane %v2543, 1
      %v2546 = vsel %vm1686, %v2541, %v2545
      %v2548 = vshrl.u32 %v2472, 16
      %v2550 = vshll.u32 %v2472, 16
      %v2552 = vrot.slane %v2550, 1
      %v2553 = vor.u32 %v2548, %v2552
      %v2555 = vshll.u32 %v2520, 16
      %v2557 = vrot.slane %v2555, 1
      %v2558 = vsel %vm1686, %v2553, %v2557
      %v2560 = vshrl.u32 %v2473, 16
      %v2562 = vshll.u32 %v2473, 16
      %v2564 = vrot.slane %v2562, 1
      %v2565 = vor.u32 %v2560, %v2564
      %v2567 = vshll.u32 %v2521, 16
      %v2569 = vrot.slane %v2567, 1
      %v2570 = vsel %vm1686, %v2565, %v2569
      %v2572 = vshrl.u32 %v2474, 16
      %v2574 = vshll.u32 %v2474, 16
      %v2576 = vrot.slane %v2574, 1
      %v2577 = vor.u32 %v2572, %v2576
      %v2579 = vshll.u32 %v2522, 16
      %v2581 = vrot.slane %v2579, 1
      %v2582 = vsel %vm1686, %v2577, %v2581
      %v2584 = vshrl.u32 %v2475, 16
      %v2586 = vshll.u32 %v2475, 16
      %v2588 = vrot.slane %v2586, 1
      %v2589 = vor.u32 %v2584, %v2588
      %v2591 = vshll.u32 %v2523, 16
      %v2593 = vrot.slane %v2591, 1
      %v2594 = vsel %vm1686, %v2589, %v2593
      %v2596 = vshrl.u32 %v2476, 16
      %v2598 = vshll.u32 %v2476, 16
      %v2600 = vrot.slane %v2598, 1
      %v2601 = vor.u32 %v2596, %v2600
      %v2603 = vshll.u32 %v2524, 16
      %v2605 = vrot.slane %v2603, 1
      %v2606 = vsel %vm1686, %v2601, %v2605
      %v2608 = vshrl.u32 %v2477, 16
      %v2610 = vshll.u32 %v2477, 16
      %v2612 = vrot.slane %v2610, 1
      %v2613 = vor.u32 %v2608, %v2612
      %v2615 = vshll.u32 %v2525, 16
      %v2617 = vrot.slane %v2615, 1
      %v2618 = vsel %vm1686, %v2613, %v2617
      %v2620 = vshrl.u32 %v2478, 16
      %v2622 = vshll.u32 %v2478, 16
      %v2624 = vrot.slane %v2622, 1
      %v2625 = vor.u32 %v2620, %v2624
      %v2627 = vshll.u32 %v2526, 16
      %v2629 = vrot.slane %v2627, 1
      %v2630 = vsel %vm1686, %v2625, %v2629
      %v2632 = vshrl.u32 %v2479, 16
      %v2634 = vshll.u32 %v2479, 16
      %v2636 = vrot.slane %v2634, 1
      %v2637 = vor.u32 %v2632, %v2636
      %v2639 = vshll.u32 %v2527, 16
      %v2641 = vrot.slane %v2639, 1
      %v2642 = vsel %vm1686, %v2637, %v2641
      %v2644 = vshrl.u32 %v2480, 16
      %v2646 = vshll.u32 %v2480, 16
      %v2648 = vrot.slane %v2646, 1
      %v2649 = vor.u32 %v2644, %v2648
      %v2651 = vshll.u32 %v2528, 16
      %v2653 = vrot.slane %v2651, 1
      %v2654 = vsel %vm1686, %v2649, %v2653
      %v2656 = vshrl.u32 %v2481, 16
      %v2658 = vshll.u32 %v2481, 16
      %v2660 = vrot.slane %v2658, 1
      %v2661 = vor.u32 %v2656, %v2660
      %v2663 = vshll.u32 %v2529, 16
      %v2665 = vrot.slane %v2663, 1
      %v2666 = vsel %vm1686, %v2661, %v2665
      %v2668 = vshrl.u32 %v2482, 16
      %v2670 = vshll.u32 %v2482, 16
      %v2672 = vrot.slane %v2670, 1
      %v2673 = vor.u32 %v2668, %v2672
      %v2675 = vshll.u32 %v2530, 16
      %v2677 = vrot.slane %v2675, 1
      %v2678 = vsel %vm1686, %v2673, %v2677
      %v2680 = vshrl.u32 %v2483, 16
      %v2682 = vshll.u32 %v2483, 16
      %v2684 = vrot.slane %v2682, 1
      %v2685 = vor.u32 %v2680, %v2684
      %v2687 = vshll.u32 %v2531, 16
      %v2689 = vrot.slane %v2687, 1
      %v2690 = vsel %vm1686, %v2685, %v2689
      %v2692 = vshrl.u32 %v2484, 16
      %v2694 = vshll.u32 %v2484, 16
      %v2696 = vrot.slane %v2694, 1
      %v2697 = vor.u32 %v2692, %v2696
      %v2699 = vshll.u32 %v2532, 16
      %v2701 = vrot.slane %v2699, 1
      %v2702 = vsel %vm1686, %v2697, %v2701
      %v2704 = vshrl.u32 %v2485, 16
      %v2706 = vshll.u32 %v2485, 16
      %v2708 = vrot.slane %v2706, 1
      %v2709 = vor.u32 %v2704, %v2708
      %v2711 = vshll.u32 %v2533, 16
      %v2713 = vrot.slane %v2711, 1
      %v2714 = vsel %vm1686, %v2709, %v2713
      %v2716 = vshrl.u32 %v2486, 16
      %v2718 = vshll.u32 %v2486, 16
      %v2720 = vrot.slane %v2718, 1
      %v2721 = vor.u32 %v2716, %v2720
      %v2723 = vshll.u32 %v2534, 16
      %v2725 = vrot.slane %v2723, 1
      %v2726 = vsel %vm1686, %v2721, %v2725
      %2727 = vrot.lane.b32.xlu0 %v2546, 4
      %v2728 = vpop.permute.xlu0 %2727
      %2729 = vrot.lane.b32.xlu0 %v2558, 4
      %v2730 = vpop.permute.xlu0 %2729
      %2731 = vrot.lane.b32.xlu0 %v2570, 4
      %v2732 = vpop.permute.xlu0 %2731
      %2733 = vrot.lane.b32.xlu0 %v2582, 4
      %v2734 = vpop.permute.xlu0 %2733
      %2735 = vrot.lane.b32.xlu0 %v2594, 4
      %v2736 = vpop.permute.xlu0 %2735
      %2737 = vrot.lane.b32.xlu0 %v2606, 4
      %v2738 = vpop.permute.xlu0 %2737
      %2739 = vrot.lane.b32.xlu0 %v2618, 4
      %v2740 = vpop.permute.xlu0 %2739
      %2741 = vrot.lane.b32.xlu0 %v2630, 4
      %v2742 = vpop.permute.xlu0 %2741
      %2743 = vrot.lane.b32.xlu0 %v2642, 4
      %v2744 = vpop.permute.xlu0 %2743
      %2745 = vrot.lane.b32.xlu0 %v2654, 4
      %v2746 = vpop.permute.xlu0 %2745
      %2747 = vrot.lane.b32.xlu0 %v2666, 4
      %v2748 = vpop.permute.xlu0 %2747
      %2749 = vrot.lane.b32.xlu0 %v2678, 4
      %v2750 = vpop.permute.xlu0 %2749
      %2751 = vrot.lane.b32.xlu0 %v2690, 4
      %v2752 = vpop.permute.xlu0 %2751
      %2753 = vrot.lane.b32.xlu0 %v2702, 4
      %v2754 = vpop.permute.xlu0 %2753
      %2755 = vrot.lane.b32.xlu0 %v2714, 4
      %v2756 = vpop.permute.xlu0 %2755
      %2757 = vrot.lane.b32.xlu0 %v2726, 4
      %v2758 = vpop.permute.xlu0 %2757
      %v2775 = vunpack.c.l.b16 %v2391
      %v2776 = vunpack.c.l.b16 %v2392
      %v2777 = vunpack.c.l.b16 %v2393
      %v2778 = vunpack.c.l.b16 %v2394
      %v2779 = vunpack.c.l.b16 %v2395
      %v2780 = vunpack.c.l.b16 %v2396
      %v2781 = vunpack.c.l.b16 %v2397
      %v2782 = vunpack.c.l.b16 %v2398
      %v2783 = vunpack.c.l.b16 %v2399
      %v2784 = vunpack.c.l.b16 %v2400
      %v2785 = vunpack.c.l.b16 %v2401
      %v2786 = vunpack.c.l.b16 %v2402
      %v2787 = vunpack.c.l.b16 %v2403
      %v2788 = vunpack.c.l.b16 %v2404
      %v2789 = vunpack.c.l.b16 %v2405
      %v2790 = vunpack.c.l.b16 %v2406
      %v2791 = vpack.c.b16 %v2440, %v2775
      %v2792 = vpack.c.b16 %v2442, %v2776
      %v2793 = vpack.c.b16 %v2444, %v2777
      %v2794 = vpack.c.b16 %v2446, %v2778
      %v2795 = vpack.c.b16 %v2448, %v2779
      %v2796 = vpack.c.b16 %v2450, %v2780
      %v2797 = vpack.c.b16 %v2452, %v2781
      %v2798 = vpack.c.b16 %v2454, %v2782
      %v2799 = vpack.c.b16 %v2456, %v2783
      %v2800 = vpack.c.b16 %v2458, %v2784
      %v2801 = vpack.c.b16 %v2460, %v2785
      %v2802 = vpack.c.b16 %v2462, %v2786
      %v2803 = vpack.c.b16 %v2464, %v2787
      %v2804 = vpack.c.b16 %v2466, %v2788
      %v2805 = vpack.c.b16 %v2468, %v2789
      %v2806 = vpack.c.b16 %v2470, %v2790
      %v2807 = vrot.slane %v2791, 1
      %v2808 = vrot.slane %v2519, 1
      %v2809 = vsel %vm1959, %v2807, %v2808
      %v2810 = vrot.slane %v2792, 1
      %v2811 = vrot.slane %v2520, 1
      %v2812 = vsel %vm1959, %v2810, %v2811
      %v2813 = vrot.slane %v2793, 1
      %v2814 = vrot.slane %v2521, 1
      %v2815 = vsel %vm1959, %v2813, %v2814
      %v2816 = vrot.slane %v2794, 1
      %v2817 = vrot.slane %v2522, 1
      %v2818 = vsel %vm1959, %v2816, %v2817
      %v2819 = vrot.slane %v2795, 1
      %v2820 = vrot.slane %v2523, 1
      %v2821 = vsel %vm1959, %v2819, %v2820
      %v2822 = vrot.slane %v2796, 1
      %v2823 = vrot.slane %v2524, 1
      %v2824 = vsel %vm1959, %v2822, %v2823
      %v2825 = vrot.slane %v2797, 1
      %v2826 = vrot.slane %v2525, 1
      %v2827 = vsel %vm1959, %v2825, %v2826
      %v2828 = vrot.slane %v2798, 1
      %v2829 = vrot.slane %v2526, 1
      %v2830 = vsel %vm1959, %v2828, %v2829
      %v2831 = vrot.slane %v2799, 1
      %v2832 = vrot.slane %v2527, 1
      %v2833 = vsel %vm1959, %v2831, %v2832
      %v2834 = vrot.slane %v2800, 1
      %v2835 = vrot.slane %v2528, 1
      %v2836 = vsel %vm1959, %v2834, %v2835
      %v2837 = vrot.slane %v2801, 1
      %v2838 = vrot.slane %v2529, 1
      %v2839 = vsel %vm1959, %v2837, %v2838
      %v2840 = vrot.slane %v2802, 1
      %v2841 = vrot.slane %v2530, 1
      %v2842 = vsel %vm1959, %v2840, %v2841
      %v2843 = vrot.slane %v2803, 1
      %v2844 = vrot.slane %v2531, 1
      %v2845 = vsel %vm1959, %v2843, %v2844
      %v2846 = vrot.slane %v2804, 1
      %v2847 = vrot.slane %v2532, 1
      %v2848 = vsel %vm1959, %v2846, %v2847
      %v2849 = vrot.slane %v2805, 1
      %v2850 = vrot.slane %v2533, 1
      %v2851 = vsel %vm1959, %v2849, %v2850
      %v2852 = vrot.slane %v2806, 1
      %v2853 = vrot.slane %v2534, 1
      %v2854 = vsel %vm1959, %v2852, %v2853
      %2855 = vrot.lane.b32.xlu0 %v2809, 8
      %v2856 = vpop.permute.xlu0 %2855
      %2857 = vrot.lane.b32.xlu0 %v2812, 8
      %v2858 = vpop.permute.xlu0 %2857
      %2859 = vrot.lane.b32.xlu0 %v2815, 8
      %v2860 = vpop.permute.xlu0 %2859
      %2861 = vrot.lane.b32.xlu0 %v2818, 8
      %v2862 = vpop.permute.xlu0 %2861
      %2863 = vrot.lane.b32.xlu0 %v2821, 8
      %v2864 = vpop.permute.xlu0 %2863
      %2865 = vrot.lane.b32.xlu0 %v2824, 8
      %v2866 = vpop.permute.xlu0 %2865
      %2867 = vrot.lane.b32.xlu0 %v2827, 8
      %v2868 = vpop.permute.xlu0 %2867
      %2869 = vrot.lane.b32.xlu0 %v2830, 8
      %v2870 = vpop.permute.xlu0 %2869
      %2871 = vrot.lane.b32.xlu0 %v2833, 8
      %v2872 = vpop.permute.xlu0 %2871
      %2873 = vrot.lane.b32.xlu0 %v2836, 8
      %v2874 = vpop.permute.xlu0 %2873
      %2875 = vrot.lane.b32.xlu0 %v2839, 8
      %v2876 = vpop.permute.xlu0 %2875
      %2877 = vrot.lane.b32.xlu0 %v2842, 8
      %v2878 = vpop.permute.xlu0 %2877
      %2879 = vrot.lane.b32.xlu0 %v2845, 8
      %v2880 = vpop.permute.xlu0 %2879
      %2881 = vrot.lane.b32.xlu0 %v2848, 8
      %v2882 = vpop.permute.xlu0 %2881
      %2883 = vrot.lane.b32.xlu0 %v2851, 8
      %v2884 = vpop.permute.xlu0 %2883
      %2885 = vrot.lane.b32.xlu0 %v2854, 8
      %v2886 = vpop.permute.xlu0 %2885
      %v2888 = vsel %vm2040, %v2471, %v2728
      %v2890 = vsel %vm2040, %v2472, %v2730
      %v2892 = vsel %vm2040, %v2473, %v2732
      %v2894 = vsel %vm2040, %v2474, %v2734
      %v2896 = vsel %vm2040, %v2475, %v2736
      %v2898 = vsel %vm2040, %v2476, %v2738
      %v2900 = vsel %vm2040, %v2477, %v2740
      %v2902 = vsel %vm2040, %v2478, %v2742
      %v2904 = vsel %vm2040, %v2479, %v2744
      %v2906 = vsel %vm2040, %v2480, %v2746
      %v2908 = vsel %vm2040, %v2481, %v2748
      %v2910 = vsel %vm2040, %v2482, %v2750
      %v2912 = vsel %vm2040, %v2483, %v2752
      %v2914 = vsel %vm2040, %v2484, %v2754
      %v2916 = vsel %vm2040, %v2485, %v2756
      %v2918 = vsel %vm2040, %v2486, %v2758
      %v2920 = vsel %vm2073, %v2888, %v2856
      %v2922 = vsel %vm2073, %v2890, %v2858
      %v2924 = vsel %vm2073, %v2892, %v2860
      %v2926 = vsel %vm2073, %v2894, %v2862
      %v2928 = vsel %vm2073, %v2896, %v2864
      %v2930 = vsel %vm2073, %v2898, %v2866
      %v2932 = vsel %vm2073, %v2900, %v2868
      %v2934 = vsel %vm2073, %v2902, %v2870
      %v2936 = vsel %vm2073, %v2904, %v2872
      %v2938 = vsel %vm2073, %v2906, %v2874
      %v2940 = vsel %vm2073, %v2908, %v2876
      %v2942 = vsel %vm2073, %v2910, %v2878
      %v2944 = vsel %vm2073, %v2912, %v2880
      %v2946 = vsel %vm2073, %v2914, %v2882
      %v2948 = vsel %vm2073, %v2916, %v2884
      %v2950 = vsel %vm2073, %v2918, %v2886
      %s2951 = scalar_lea.vmem %s4, 8
      %v2952 = vld [vmem:[%s2951] sm:$0xf]
      %v2953 = vld [vmem:[%s2951 + $0x4] sm:$0x3]
      %v2956 = vunpack.c.l.b16 %v2952
      %v2957 = vunpack.c.l.b16 %v2953
      %v2958 = vpack.c.b16 %v2957, %v2956
      %v2959 = vsel %vm2113, %v2920, 0
      %v2961 = vsel %vm2113, %v2922, 0
      %v2963 = vsel %vm2113, %v2924, 0
      %v2965 = vsel %vm2113, %v2926, 0
      %v2967 = vsel %vm2113, %v2928, 0
      %v2969 = vsel %vm2113, %v2930, 0
      %v2971 = vsel %vm2113, %v2932, 0
      %v2973 = vsel %vm2113, %v2934, 0
      %v2975 = vsel %vm2113, %v2936, 0
      %v2977 = vsel %vm2113, %v2938, 0
      %v2979 = vsel %vm2113, %v2940, 0
      %v2981 = vsel %vm2113, %v2942, 0
      %v2983 = vsel %vm2113, %v2944, 0
      %v2985 = vsel %vm2113, %v2946, 0
      %v2987 = vsel %vm2113, %v2948, 0
      %v2989 = vsel %vm2113, %v2950, 0
      %v2992 = vsel %vm2146, %v2958, 0
      %2994 = vmatprep.subr.bf16.mxu0 0
      %2995 = vmatpush1.bf16.msra.mxu0 %v2992
      %2996 = vmatprep.subr.bf16.mxu0 0
      %2997 = vmatpush1.bf16.msra.mxu0 0
      %2998 = vmatprep.subr.bf16.mxu0 0
      %2999 = vmatpush1.bf16.msra.mxu0 0
      %3000 = vmatprep.subr.bf16.mxu0 0
      %3001 = vmatpush1.bf16.msra.mxu0 0
      %3002 = vmatprep.subr.bf16.mxu0 0
      %3003 = vmatpush1.bf16.msra.mxu0 0
      %3004 = vmatprep.subr.bf16.mxu0 0
      %3005 = vmatpush1.bf16.msra.mxu0 0
      %3006 = vmatprep.subr.bf16.mxu0 0
      %3007 = vmatpush1.bf16.msra.mxu0 0
      %3008 = vmatprep.subr.bf16.mxu0 0
      %3009 = vmatpush1.bf16.msra.mxu0 0
      %3010 = vmatprep.subr.bf16.mxu0 0
      %3011 = vmatpush1.bf16.msra.mxu0 0
      %3012 = vmatprep.subr.bf16.mxu0 0
      %3013 = vmatpush1.bf16.msra.mxu0 0
      %3014 = vmatprep.subr.bf16.mxu0 0
      %3015 = vmatpush1.bf16.msra.mxu0 0
      %3016 = vmatprep.subr.bf16.mxu0 0
      %3017 = vmatpush1.bf16.msra.mxu0 0
      %3018 = vmatprep.subr.bf16.mxu0 0
      %3019 = vmatpush1.bf16.msra.mxu0 0
      %3020 = vmatprep.subr.bf16.mxu0 0
      %3021 = vmatpush1.bf16.msra.mxu0 0
      %3022 = vmatprep.subr.bf16.mxu0 0
      %3023 = vmatpush1.bf16.msra.mxu0 0
      %3024 = vmatprep.subr.bf16.mxu0 0
      %3025 = vmatpush1.bf16.msra.mxu0 0
      %3026 = vmatprep.mubr.bf16.mxu0 0
      %3027 = vmatmul.mubr.bf16.gmra.mrb[0].mxu0 %v2959
      %v3028 = vpop.f32.mrb[0].mxu0
      %v3029 = vadd.f32 0.0, %v3028
      %v3030 = vpop.f32.mrb[0].mxu0
      %v3031 = vpop.f32.mrb[0].mxu0
      %v3032 = vadd.f32 0.0, %v3031
      %v3033 = vpop.f32.mrb[0].mxu0
      %3034 = vmatprep.mubr.bf16.mxu0 0
      %3035 = vmatmul.mubr.bf16.gmra.mrb[0].mxu0 %v2961
      %v3036 = vpop.f32.mrb[0].mxu0
      %v3037 = vadd.f32 0.0, %v3036
      %v3038 = vpop.f32.mrb[0].mxu0
      %v3039 = vpop.f32.mrb[0].mxu0
      %v3040 = vadd.f32 0.0, %v3039
      %v3041 = vpop.f32.mrb[0].mxu0
      %3042 = vmatprep.mubr.bf16.mxu0 0
      %3043 = vmatmul.mubr.bf16.gmra.mrb[0].mxu0 %v2963
      %v3044 = vpop.f32.mrb[0].mxu0
      %v3045 = vadd.f32 0.0, %v3044
      %v3046 = vpop.f32.mrb[0].mxu0
      %v3047 = vpop.f32.mrb[0].mxu0
      %v3048 = vadd.f32 0.0, %v3047
      %v3049 = vpop.f32.mrb[0].mxu0
      %3050 = vmatprep.mubr.bf16.mxu0 0
      %3051 = vmatmul.mubr.bf16.gmra.mrb[0].mxu0 %v2965
      %v3052 = vpop.f32.mrb[0].mxu0
      %v3053 = vadd.f32 0.0, %v3052
      %v3054 = vpop.f32.mrb[0].mxu0
      %v3055 = vpop.f32.mrb[0].mxu0
      %v3056 = vadd.f32 0.0, %v3055
      %v3057 = vpop.f32.mrb[0].mxu0
      %3058 = vmatprep.mubr.bf16.mxu0 0
      %3059 = vmatmul.mubr.bf16.gmra.mrb[0].mxu0 %v2967
      %v3060 = vpop.f32.mrb[0].mxu0
      %v3061 = vadd.f32 0.0, %v3060
      %v3062 = vpop.f32.mrb[0].mxu0
      %v3063 = vpop.f32.mrb[0].mxu0
      %v3064 = vadd.f32 0.0, %v3063
      %v3065 = vpop.f32.mrb[0].mxu0
      %3066 = vmatprep.mubr.bf16.mxu0 0
      %3067 = vmatmul.mubr.bf16.gmra.mrb[0].mxu0 %v2969
      %v3068 = vpop.f32.mrb[0].mxu0
      %v3069 = vadd.f32 0.0, %v3068
      %v3070 = vpop.f32.mrb[0].mxu0
      %v3071 = vpop.f32.mrb[0].mxu0
      %v3072 = vadd.f32 0.0, %v3071
      %v3073 = vpop.f32.mrb[0].mxu0
      %3074 = vmatprep.mubr.bf16.mxu0 0
      %3075 = vmatmul.mubr.bf16.gmra.mrb[0].mxu0 %v2971
      %v3076 = vpop.f32.mrb[0].mxu0
      %v3077 = vadd.f32 0.0, %v3076
      %v3078 = vpop.f32.mrb[0].mxu0
      %v3079 = vpop.f32.mrb[0].mxu0
      %v3080 = vadd.f32 0.0, %v3079
      %v3081 = vpop.f32.mrb[0].mxu0
      %3082 = vmatprep.mubr.bf16.mxu0 0
      %3083 = vmatmul.mubr.bf16.gmra.mrb[0].mxu0 %v2973
      %v3084 = vpop.f32.mrb[0].mxu0
      %v3085 = vadd.f32 0.0, %v3084
      %v3086 = vpop.f32.mrb[0].mxu0
      %v3087 = vpop.f32.mrb[0].mxu0
      %v3088 = vadd.f32 0.0, %v3087
      %v3089 = vpop.f32.mrb[0].mxu0
      %3090 = vmatprep.mubr.bf16.mxu0 0
      %3091 = vmatmul.mubr.bf16.gmra.mrb[0].mxu0 %v2975
      %v3092 = vpop.f32.mrb[0].mxu0
      %v3093 = vadd.f32 0.0, %v3092
      %v3094 = vpop.f32.mrb[0].mxu0
      %v3095 = vpop.f32.mrb[0].mxu0
      %v3096 = vadd.f32 0.0, %v3095
      %v3097 = vpop.f32.mrb[0].mxu0
      %3098 = vmatprep.mubr.bf16.mxu0 0
      %3099 = vmatmul.mubr.bf16.gmra.mrb[0].mxu0 %v2977
      %v3100 = vpop.f32.mrb[0].mxu0
      %v3101 = vadd.f32 0.0, %v3100
      %v3102 = vpop.f32.mrb[0].mxu0
      %v3103 = vpop.f32.mrb[0].mxu0
      %v3104 = vadd.f32 0.0, %v3103
      %v3105 = vpop.f32.mrb[0].mxu0
      %3106 = vmatprep.mubr.bf16.mxu0 0
      %3107 = vmatmul.mubr.bf16.gmra.mrb[0].mxu0 %v2979
      %v3108 = vpop.f32.mrb[0].mxu0
      %v3109 = vadd.f32 0.0, %v3108
      %v3110 = vpop.f32.mrb[0].mxu0
      %v3111 = vpop.f32.mrb[0].mxu0
      %v3112 = vadd.f32 0.0, %v3111
      %v3113 = vpop.f32.mrb[0].mxu0
      %3114 = vmatprep.mubr.bf16.mxu0 0
      %3115 = vmatmul.mubr.bf16.gmra.mrb[0].mxu0 %v2981
      %v3116 = vpop.f32.mrb[0].mxu0
      %v3117 = vadd.f32 0.0, %v3116
      %v3118 = vpop.f32.mrb[0].mxu0
      %v3119 = vpop.f32.mrb[0].mxu0
      %v3120 = vadd.f32 0.0, %v3119
      %v3121 = vpop.f32.mrb[0].mxu0
      %3122 = vmatprep.mubr.bf16.mxu0 0
      %3123 = vmatmul.mubr.bf16.gmra.mrb[0].mxu0 %v2983
      %v3124 = vpop.f32.mrb[0].mxu0
      %v3125 = vadd.f32 0.0, %v3124
      %v3126 = vpop.f32.mrb[0].mxu0
      %v3127 = vpop.f32.mrb[0].mxu0
      %v3128 = vadd.f32 0.0, %v3127
      %v3129 = vpop.f32.mrb[0].mxu0
      %3130 = vmatprep.mubr.bf16.mxu0 0
      %3131 = vmatmul.mubr.bf16.gmra.mrb[0].mxu0 %v2985
      %v3132 = vpop.f32.mrb[0].mxu0
      %v3133 = vadd.f32 0.0, %v3132
      %v3134 = vpop.f32.mrb[0].mxu0
      %v3135 = vpop.f32.mrb[0].mxu0
      %v3136 = vadd.f32 0.0, %v3135
      %v3137 = vpop.f32.mrb[0].mxu0
      %3138 = vmatprep.mubr.bf16.mxu0 0
      %3139 = vmatmul.mubr.bf16.gmra.mrb[0].mxu0 %v2987
      %v3140 = vpop.f32.mrb[0].mxu0
      %v3141 = vadd.f32 0.0, %v3140
      %v3142 = vpop.f32.mrb[0].mxu0
      %v3143 = vpop.f32.mrb[0].mxu0
      %v3144 = vadd.f32 0.0, %v3143
      %v3145 = vpop.f32.mrb[0].mxu0
      %3146 = vmatprep.mubr.bf16.mxu0 0
      %3147 = vmatmul.mubr.bf16.gmra.mrb[0].mxu0 %v2989
      %v3148 = vpop.f32.mrb[0].mxu0
      %v3149 = vadd.f32 0.0, %v3148
      %v3150 = vpop.f32.mrb[0].mxu0
      %v3151 = vpop.f32.mrb[0].mxu0
      %v3152 = vadd.f32 0.0, %v3151
      %v3153 = vpop.f32.mrb[0].mxu0
      %3154 = vdwg.mxu0
      %v3155 = vld [vmem:[#allocation3] sm:$0xff]
      %v3156 = vld [vmem:[#allocation3 + $0x8] sm:$0xff]
      %v3157 = vld [vmem:[#allocation3 + $0x10] sm:$0xff]
      %v3158 = vld [vmem:[#allocation3 + $0x18] sm:$0xff]
      %v3159 = vld [vmem:[#allocation3 + $0x20] sm:$0xff]
      %v3160 = vld [vmem:[#allocation3 + $0x28] sm:$0xff]
      %v3161 = vld [vmem:[#allocation3 + $0x30] sm:$0xff]
      %v3162 = vld [vmem:[#allocation3 + $0x38] sm:$0xff]
      %v3163 = vld [vmem:[#allocation3 + $0x40] sm:$0xff]
      %v3164 = vld [vmem:[#allocation3 + $0x48] sm:$0xff]
      %v3165 = vld [vmem:[#allocation3 + $0x50] sm:$0xff]
      %v3166 = vld [vmem:[#allocation3 + $0x58] sm:$0xff]
      %v3167 = vld [vmem:[#allocation3 + $0x60] sm:$0xff]
      %v3168 = vld [vmem:[#allocation3 + $0x68] sm:$0xff]
      %v3169 = vld [vmem:[#allocation3 + $0x70] sm:$0xff]
      %v3170 = vld [vmem:[#allocation3 + $0x78] sm:$0xff]
      %v3171 = vld [vmem:[#allocation3 + $0x80] sm:$0xff]
      %v3172 = vld [vmem:[#allocation3 + $0x88] sm:$0xff]
      %v3173 = vld [vmem:[#allocation3 + $0x90] sm:$0xff]
      %v3174 = vld [vmem:[#allocation3 + $0x98] sm:$0xff]
      %v3175 = vld [vmem:[#allocation3 + $0xa0] sm:$0xff]
      %v3176 = vld [vmem:[#allocation3 + $0xa8] sm:$0xff]
      %v3177 = vld [vmem:[#allocation3 + $0xb0] sm:$0xff]
      %v3178 = vld [vmem:[#allocation3 + $0xb8] sm:$0xff]
      %v3179 = vld [vmem:[#allocation3 + $0xc0] sm:$0xff]
      %v3180 = vld [vmem:[#allocation3 + $0xc8] sm:$0xff]
      %v3181 = vld [vmem:[#allocation3 + $0xd0] sm:$0xff]
      %v3182 = vld [vmem:[#allocation3 + $0xd8] sm:$0xff]
      %v3183 = vld [vmem:[#allocation3 + $0xe0] sm:$0xff]
      %v3184 = vld [vmem:[#allocation3 + $0xe8] sm:$0xff]
      %v3185 = vld [vmem:[#allocation3 + $0xf0] sm:$0xff]
      %v3186 = vld [vmem:[#allocation3 + $0xf8] sm:$0xff]
      %v3187 = vadd.f32 %v3155, %v3029
      %v3188 = vadd.f32 %v3156, %v3032
      %v3189 = vadd.f32 %v3157, %v3037
      %v3190 = vadd.f32 %v3158, %v3040
      %v3191 = vadd.f32 %v3159, %v3045
      %v3192 = vadd.f32 %v3160, %v3048
      %v3193 = vadd.f32 %v3161, %v3053
      %v3194 = vadd.f32 %v3162, %v3056
      %v3195 = vadd.f32 %v3163, %v3061
      %v3196 = vadd.f32 %v3164, %v3064
      %v3197 = vadd.f32 %v3165, %v3069
      %v3198 = vadd.f32 %v3166, %v3072
      %v3199 = vadd.f32 %v3167, %v3077
      %v3200 = vadd.f32 %v3168, %v3080
      %v3201 = vadd.f32 %v3169, %v3085
      %v3202 = vadd.f32 %v3170, %v3088
      %v3203 = vadd.f32 %v3171, %v3093
      %v3204 = vadd.f32 %v3172, %v3096
      %v3205 = vadd.f32 %v3173, %v3101
      %v3206 = vadd.f32 %v3174, %v3104
      %v3207 = vadd.f32 %v3175, %v3109
      %v3208 = vadd.f32 %v3176, %v3112
      %v3209 = vadd.f32 %v3177, %v3117
      %v3210 = vadd.f32 %v3178, %v3120
      %v3211 = vadd.f32 %v3179, %v3125
      %v3212 = vadd.f32 %v3180, %v3128
      %v3213 = vadd.f32 %v3181, %v3133
      %v3214 = vadd.f32 %v3182, %v3136
      %v3215 = vadd.f32 %v3183, %v3141
      %v3216 = vadd.f32 %v3184, %v3144
      %v3217 = vadd.f32 %v3185, %v3149
      %v3218 = vadd.f32 %v3186, %v3152
      %3219 = vst.msk [vmem:[#allocation3] sm:$0xff] %vm2040, %v3187
      %3220 = vst.msk [vmem:[#allocation3 + $0x8] sm:$0xff] %vm2040, %v3188
      %3221 = vst.msk [vmem:[#allocation3 + $0x10] sm:$0xff] %vm2040, %v3189
      %3222 = vst.msk [vmem:[#allocation3 + $0x18] sm:$0xff] %vm2040, %v3190
      %3223 = vst.msk [vmem:[#allocation3 + $0x20] sm:$0xff] %vm2040, %v3191
      %3224 = vst.msk [vmem:[#allocation3 + $0x28] sm:$0xff] %vm2040, %v3192
      %3225 = vst.msk [vmem:[#allocation3 + $0x30] sm:$0xff] %vm2040, %v3193
      %3226 = vst.msk [vmem:[#allocation3 + $0x38] sm:$0xff] %vm2040, %v3194
      %3227 = vst.msk [vmem:[#allocation3 + $0x40] sm:$0xff] %vm2040, %v3195
      %3228 = vst.msk [vmem:[#allocation3 + $0x48] sm:$0xff] %vm2040, %v3196
      %3229 = vst.msk [vmem:[#allocation3 + $0x50] sm:$0xff] %vm2040, %v3197
      %3230 = vst.msk [vmem:[#allocation3 + $0x58] sm:$0xff] %vm2040, %v3198
      %3231 = vst.msk [vmem:[#allocation3 + $0x60] sm:$0xff] %vm2040, %v3199
      %3232 = vst.msk [vmem:[#allocation3 + $0x68] sm:$0xff] %vm2040, %v3200
      %3233 = vst.msk [vmem:[#allocation3 + $0x70] sm:$0xff] %vm2040, %v3201
      %3234 = vst.msk [vmem:[#allocation3 + $0x78] sm:$0xff] %vm2040, %v3202
      %3235 = vst.msk [vmem:[#allocation3 + $0x80] sm:$0xff] %vm2040, %v3203
      %3236 = vst.msk [vmem:[#allocation3 + $0x88] sm:$0xff] %vm2040, %v3204
      %3237 = vst.msk [vmem:[#allocation3 + $0x90] sm:$0xff] %vm2040, %v3205
      %3238 = vst.msk [vmem:[#allocation3 + $0x98] sm:$0xff] %vm2040, %v3206
      %3239 = vst.msk [vmem:[#allocation3 + $0xa0] sm:$0xff] %vm2040, %v3207
      %3240 = vst.msk [vmem:[#allocation3 + $0xa8] sm:$0xff] %vm2040, %v3208
      %3241 = vst.msk [vmem:[#allocation3 + $0xb0] sm:$0xff] %vm2040, %v3209
      %3242 = vst.msk [vmem:[#allocation3 + $0xb8] sm:$0xff] %vm2040, %v3210
      %3243 = vst.msk [vmem:[#allocation3 + $0xc0] sm:$0xff] %vm2040, %v3211
      %3244 = vst.msk [vmem:[#allocation3 + $0xc8] sm:$0xff] %vm2040, %v3212
      %3245 = vst.msk [vmem:[#allocation3 + $0xd0] sm:$0xff] %vm2040, %v3213
      %3246 = vst.msk [vmem:[#allocation3 + $0xd8] sm:$0xff] %vm2040, %v3214
      %3247 = vst.msk [vmem:[#allocation3 + $0xe0] sm:$0xff] %vm2040, %v3215
      %3248 = vst.msk [vmem:[#allocation3 + $0xe8] sm:$0xff] %vm2040, %v3216
      %3249 = vst.msk [vmem:[#allocation3 + $0xf0] sm:$0xff] %vm2040, %v3217
      %3250 = vst.msk [vmem:[#allocation3 + $0xf8] sm:$0xff] %vm2040, %v3218
      %s3251 = scalar_lea.vmem [#allocation2], 24
      %v3252 = vld [vmem:[%s3251] sm:$0xf]
      %v3253 = vld [vmem:[%s3251 + $0x4] sm:$0xf]
      %v3254 = vld [vmem:[%s3251 + $0xc] sm:$0xf]
      %v3255 = vld [vmem:[%s3251 + $0x10] sm:$0xf]
      %v3256 = vld [vmem:[%s3251 + $0x18] sm:$0xf]
      %v3257 = vld [vmem:[%s3251 + $0x1c] sm:$0xf]
      %v3258 = vld [vmem:[%s3251 + $0x24] sm:$0xf]
      %v3259 = vld [vmem:[%s3251 + $0x28] sm:$0xf]
      %v3260 = vld [vmem:[%s3251 + $0x30] sm:$0xf]
      %v3261 = vld [vmem:[%s3251 + $0x34] sm:$0xf]
      %v3262 = vld [vmem:[%s3251 + $0x3c] sm:$0xf]
      %v3263 = vld [vmem:[%s3251 + $0x40] sm:$0xf]
      %v3264 = vld [vmem:[%s3251 + $0x48] sm:$0xf]
      %v3265 = vld [vmem:[%s3251 + $0x4c] sm:$0xf]
      %v3266 = vld [vmem:[%s3251 + $0x54] sm:$0xf]
      %v3267 = vld [vmem:[%s3251 + $0x58] sm:$0xf]
      %v3268 = vld [vmem:[%s3251 + $0x60] sm:$0xf]
      %v3269 = vld [vmem:[%s3251 + $0x64] sm:$0xf]
      %v3270 = vld [vmem:[%s3251 + $0x6c] sm:$0xf]
      %v3271 = vld [vmem:[%s3251 + $0x70] sm:$0xf]
      %v3272 = vld [vmem:[%s3251 + $0x78] sm:$0xf]
      %v3273 = vld [vmem:[%s3251 + $0x7c] sm:$0xf]
      %v3274 = vld [vmem:[%s3251 + $0x84] sm:$0xf]
      %v3275 = vld [vmem:[%s3251 + $0x88] sm:$0xf]
      %v3276 = vld [vmem:[%s3251 + $0x90] sm:$0xf]
      %v3277 = vld [vmem:[%s3251 + $0x94] sm:$0xf]
      %v3278 = vld [vmem:[%s3251 + $0x9c] sm:$0xf]
      %v3279 = vld [vmem:[%s3251 + $0xa0] sm:$0xf]
      %v3280 = vld [vmem:[%s3251 + $0xa8] sm:$0xf]
      %v3281 = vld [vmem:[%s3251 + $0xac] sm:$0xf]
      %v3282 = vld [vmem:[%s3251 + $0xb4] sm:$0xf]
      %v3283 = vld [vmem:[%s3251 + $0xb8] sm:$0xf]
      %v3284 = vld [vmem:[%s3251 + $0x8] sm:$0x1]
      %v3285 = vld [vmem:[%s3251 + $0x14] sm:$0x1]
      %v3286 = vld [vmem:[%s3251 + $0x20] sm:$0x1]
      %v3287 = vld [vmem:[%s3251 + $0x2c] sm:$0x1]
      %v3288 = vld [vmem:[%s3251 + $0x38] sm:$0x1]
      %v3289 = vld [vmem:[%s3251 + $0x44] sm:$0x1]
      %v3290 = vld [vmem:[%s3251 + $0x50] sm:$0x1]
      %v3291 = vld [vmem:[%s3251 + $0x5c] sm:$0x1]
      %v3292 = vld [vmem:[%s3251 + $0x68] sm:$0x1]
      %v3293 = vld [vmem:[%s3251 + $0x74] sm:$0x1]
      %v3294 = vld [vmem:[%s3251 + $0x80] sm:$0x1]
      %v3295 = vld [vmem:[%s3251 + $0x8c] sm:$0x1]
      %v3296 = vld [vmem:[%s3251 + $0x98] sm:$0x1]
      %v3297 = vld [vmem:[%s3251 + $0xa4] sm:$0x1]
      %v3298 = vld [vmem:[%s3251 + $0xb0] sm:$0x1]
      %v3299 = vld [vmem:[%s3251 + $0xbc] sm:$0x1]
      %v3300 = vld [vmem:[%s3251] sm:$0xe]
      %v3301 = vld [vmem:[%s3251 + $0xc] sm:$0xe]
      %v3302 = vld [vmem:[%s3251 + $0x18] sm:$0xe]
      %v3303 = vld [vmem:[%s3251 + $0x24] sm:$0xe]
      %v3304 = vld [vmem:[%s3251 + $0x30] sm:$0xe]
      %v3305 = vld [vmem:[%s3251 + $0x3c] sm:$0xe]
      %v3306 = vld [vmem:[%s3251 + $0x48] sm:$0xe]
      %v3307 = vld [vmem:[%s3251 + $0x54] sm:$0xe]
      %v3308 = vld [vmem:[%s3251 + $0x60] sm:$0xe]
      %v3309 = vld [vmem:[%s3251 + $0x6c] sm:$0xe]
      %v3310 = vld [vmem:[%s3251 + $0x78] sm:$0xe]
      %v3311 = vld [vmem:[%s3251 + $0x84] sm:$0xe]
      %v3312 = vld [vmem:[%s3251 + $0x90] sm:$0xe]
      %v3313 = vld [vmem:[%s3251 + $0x9c] sm:$0xe]
      %v3314 = vld [vmem:[%s3251 + $0xa8] sm:$0xe]
      %v3315 = vld [vmem:[%s3251 + $0xb4] sm:$0xe]
      %v3348 = vunpack.c.l.b16 %v3252
      %v3349 = vunpack.c.l.b16 %v3253
      %v3350 = vunpack.c.l.b16 %v3254
      %v3351 = vunpack.c.l.b16 %v3255
      %v3352 = vunpack.c.l.b16 %v3256
      %v3353 = vunpack.c.l.b16 %v3257
      %v3354 = vunpack.c.l.b16 %v3258
      %v3355 = vunpack.c.l.b16 %v3259
      %v3356 = vunpack.c.l.b16 %v3260
      %v3357 = vunpack.c.l.b16 %v3261
      %v3358 = vunpack.c.l.b16 %v3262
      %v3359 = vunpack.c.l.b16 %v3263
      %v3360 = vunpack.c.l.b16 %v3264
      %v3361 = vunpack.c.l.b16 %v3265
      %v3362 = vunpack.c.l.b16 %v3266
      %v3363 = vunpack.c.l.b16 %v3267
      %v3364 = vunpack.c.l.b16 %v3268
      %v3365 = vunpack.c.l.b16 %v3269
      %v3366 = vunpack.c.l.b16 %v3270
      %v3367 = vunpack.c.l.b16 %v3271
      %v3368 = vunpack.c.l.b16 %v3272
      %v3369 = vunpack.c.l.b16 %v3273
      %v3370 = vunpack.c.l.b16 %v3274
      %v3371 = vunpack.c.l.b16 %v3275
      %v3372 = vunpack.c.l.b16 %v3276
      %v3373 = vunpack.c.l.b16 %v3277
      %v3374 = vunpack.c.l.b16 %v3278
      %v3375 = vunpack.c.l.b16 %v3279
      %v3376 = vunpack.c.l.b16 %v3280
      %v3377 = vunpack.c.l.b16 %v3281
      %v3378 = vunpack.c.l.b16 %v3282
      %v3379 = vunpack.c.l.b16 %v3283
      %v3380 = vpack.c.b16 %v3349, %v3348
      %v3381 = vpack.c.b16 %v3351, %v3350
      %v3382 = vpack.c.b16 %v3353, %v3352
      %v3383 = vpack.c.b16 %v3355, %v3354
      %v3384 = vpack.c.b16 %v3357, %v3356
      %v3385 = vpack.c.b16 %v3359, %v3358
      %v3386 = vpack.c.b16 %v3361, %v3360
      %v3387 = vpack.c.b16 %v3363, %v3362
      %v3388 = vpack.c.b16 %v3365, %v3364
      %v3389 = vpack.c.b16 %v3367, %v3366
      %v3390 = vpack.c.b16 %v3369, %v3368
      %v3391 = vpack.c.b16 %v3371, %v3370
      %v3392 = vpack.c.b16 %v3373, %v3372
      %v3393 = vpack.c.b16 %v3375, %v3374
      %v3394 = vpack.c.b16 %v3377, %v3376
      %v3395 = vpack.c.b16 %v3379, %v3378
      %v3412 = vunpack.c.l.b16 %v3284
      %v3413 = vunpack.c.l.b16 %v3285
      %v3414 = vunpack.c.l.b16 %v3286
      %v3415 = vunpack.c.l.b16 %v3287
      %v3416 = vunpack.c.l.b16 %v3288
      %v3417 = vunpack.c.l.b16 %v3289
      %v3418 = vunpack.c.l.b16 %v3290
      %v3419 = vunpack.c.l.b16 %v3291
      %v3420 = vunpack.c.l.b16 %v3292
      %v3421 = vunpack.c.l.b16 %v3293
      %v3422 = vunpack.c.l.b16 %v3294
      %v3423 = vunpack.c.l.b16 %v3295
      %v3424 = vunpack.c.l.b16 %v3296
      %v3425 = vunpack.c.l.b16 %v3297
      %v3426 = vunpack.c.l.b16 %v3298
      %v3427 = vunpack.c.l.b16 %v3299
      %v3428 = vpack.c.b16 %v3412, %v3412
      %v3429 = vpack.c.b16 %v3413, %v3413
      %v3430 = vpack.c.b16 %v3414, %v3414
      %v3431 = vpack.c.b16 %v3415, %v3415
      %v3432 = vpack.c.b16 %v3416, %v3416
      %v3433 = vpack.c.b16 %v3417, %v3417
      %v3434 = vpack.c.b16 %v3418, %v3418
      %v3435 = vpack.c.b16 %v3419, %v3419
      %v3436 = vpack.c.b16 %v3420, %v3420
      %v3437 = vpack.c.b16 %v3421, %v3421
      %v3438 = vpack.c.b16 %v3422, %v3422
      %v3439 = vpack.c.b16 %v3423, %v3423
      %v3440 = vpack.c.b16 %v3424, %v3424
      %v3441 = vpack.c.b16 %v3425, %v3425
      %v3442 = vpack.c.b16 %v3426, %v3426
      %v3443 = vpack.c.b16 %v3427, %v3427
      %v3445 = vshrl.u32 %v3380, 16
      %v3447 = vshll.u32 %v3380, 16
      %v3449 = vrot.slane %v3447, 1
      %v3450 = vor.u32 %v3445, %v3449
      %v3452 = vshll.u32 %v3428, 16
      %v3454 = vrot.slane %v3452, 1
      %v3455 = vsel %vm1686, %v3450, %v3454
      %v3457 = vshrl.u32 %v3381, 16
      %v3459 = vshll.u32 %v3381, 16
      %v3461 = vrot.slane %v3459, 1
      %v3462 = vor.u32 %v3457, %v3461
      %v3464 = vshll.u32 %v3429, 16
      %v3466 = vrot.slane %v3464, 1
      %v3467 = vsel %vm1686, %v3462, %v3466
      %v3469 = vshrl.u32 %v3382, 16
      %v3471 = vshll.u32 %v3382, 16
      %v3473 = vrot.slane %v3471, 1
      %v3474 = vor.u32 %v3469, %v3473
      %v3476 = vshll.u32 %v3430, 16
      %v3478 = vrot.slane %v3476, 1
      %v3479 = vsel %vm1686, %v3474, %v3478
      %v3481 = vshrl.u32 %v3383, 16
      %v3483 = vshll.u32 %v3383, 16
      %v3485 = vrot.slane %v3483, 1
      %v3486 = vor.u32 %v3481, %v3485
      %v3488 = vshll.u32 %v3431, 16
      %v3490 = vrot.slane %v3488, 1
      %v3491 = vsel %vm1686, %v3486, %v3490
      %v3493 = vshrl.u32 %v3384, 16
      %v3495 = vshll.u32 %v3384, 16
      %v3497 = vrot.slane %v3495, 1
      %v3498 = vor.u32 %v3493, %v3497
      %v3500 = vshll.u32 %v3432, 16
      %v3502 = vrot.slane %v3500, 1
      %v3503 = vsel %vm1686, %v3498, %v3502
      %v3505 = vshrl.u32 %v3385, 16
      %v3507 = vshll.u32 %v3385, 16
      %v3509 = vrot.slane %v3507, 1
      %v3510 = vor.u32 %v3505, %v3509
      %v3512 = vshll.u32 %v3433, 16
      %v3514 = vrot.slane %v3512, 1
      %v3515 = vsel %vm1686, %v3510, %v3514
      %v3517 = vshrl.u32 %v3386, 16
      %v3519 = vshll.u32 %v3386, 16
      %v3521 = vrot.slane %v3519, 1
      %v3522 = vor.u32 %v3517, %v3521
      %v3524 = vshll.u32 %v3434, 16
      %v3526 = vrot.slane %v3524, 1
      %v3527 = vsel %vm1686, %v3522, %v3526
      %v3529 = vshrl.u32 %v3387, 16
      %v3531 = vshll.u32 %v3387, 16
      %v3533 = vrot.slane %v3531, 1
      %v3534 = vor.u32 %v3529, %v3533
      %v3536 = vshll.u32 %v3435, 16
      %v3538 = vrot.slane %v3536, 1
      %v3539 = vsel %vm1686, %v3534, %v3538
      %v3541 = vshrl.u32 %v3388, 16
      %v3543 = vshll.u32 %v3388, 16
      %v3545 = vrot.slane %v3543, 1
      %v3546 = vor.u32 %v3541, %v3545
      %v3548 = vshll.u32 %v3436, 16
      %v3550 = vrot.slane %v3548, 1
      %v3551 = vsel %vm1686, %v3546, %v3550
      %v3553 = vshrl.u32 %v3389, 16
      %v3555 = vshll.u32 %v3389, 16
      %v3557 = vrot.slane %v3555, 1
      %v3558 = vor.u32 %v3553, %v3557
      %v3560 = vshll.u32 %v3437, 16
      %v3562 = vrot.slane %v3560, 1
      %v3563 = vsel %vm1686, %v3558, %v3562
      %v3565 = vshrl.u32 %v3390, 16
      %v3567 = vshll.u32 %v3390, 16
      %v3569 = vrot.slane %v3567, 1
      %v3570 = vor.u32 %v3565, %v3569
      %v3572 = vshll.u32 %v3438, 16
      %v3574 = vrot.slane %v3572, 1
      %v3575 = vsel %vm1686, %v3570, %v3574
      %v3577 = vshrl.u32 %v3391, 16
      %v3579 = vshll.u32 %v3391, 16
      %v3581 = vrot.slane %v3579, 1
      %v3582 = vor.u32 %v3577, %v3581
      %v3584 = vshll.u32 %v3439, 16
      %v3586 = vrot.slane %v3584, 1
      %v3587 = vsel %vm1686, %v3582, %v3586
      %v3589 = vshrl.u32 %v3392, 16
      %v3591 = vshll.u32 %v3392, 16
      %v3593 = vrot.slane %v3591, 1
      %v3594 = vor.u32 %v3589, %v3593
      %v3596 = vshll.u32 %v3440, 16
      %v3598 = vrot.slane %v3596, 1
      %v3599 = vsel %vm1686, %v3594, %v3598
      %v3601 = vshrl.u32 %v3393, 16
      %v3603 = vshll.u32 %v3393, 16
      %v3605 = vrot.slane %v3603, 1
      %v3606 = vor.u32 %v3601, %v3605
      %v3608 = vshll.u32 %v3441, 16
      %v3610 = vrot.slane %v3608, 1
      %v3611 = vsel %vm1686, %v3606, %v3610
      %v3613 = vshrl.u32 %v3394, 16
      %v3615 = vshll.u32 %v3394, 16
      %v3617 = vrot.slane %v3615, 1
      %v3618 = vor.u32 %v3613, %v3617
      %v3620 = vshll.u32 %v3442, 16
      %v3622 = vrot.slane %v3620, 1
      %v3623 = vsel %vm1686, %v3618, %v3622
      %v3625 = vshrl.u32 %v3395, 16
      %v3627 = vshll.u32 %v3395, 16
      %v3629 = vrot.slane %v3627, 1
      %v3630 = vor.u32 %v3625, %v3629
      %v3632 = vshll.u32 %v3443, 16
      %v3634 = vrot.slane %v3632, 1
      %v3635 = vsel %vm1686, %v3630, %v3634
      %3636 = vrot.lane.b32.xlu0 %v3455, 4
      %v3637 = vpop.permute.xlu0 %3636
      %3638 = vrot.lane.b32.xlu0 %v3467, 4
      %v3639 = vpop.permute.xlu0 %3638
      %3640 = vrot.lane.b32.xlu0 %v3479, 4
      %v3641 = vpop.permute.xlu0 %3640
      %3642 = vrot.lane.b32.xlu0 %v3491, 4
      %v3643 = vpop.permute.xlu0 %3642
      %3644 = vrot.lane.b32.xlu0 %v3503, 4
      %v3645 = vpop.permute.xlu0 %3644
      %3646 = vrot.lane.b32.xlu0 %v3515, 4
      %v3647 = vpop.permute.xlu0 %3646
      %3648 = vrot.lane.b32.xlu0 %v3527, 4
      %v3649 = vpop.permute.xlu0 %3648
      %3650 = vrot.lane.b32.xlu0 %v3539, 4
      %v3651 = vpop.permute.xlu0 %3650
      %3652 = vrot.lane.b32.xlu0 %v3551, 4
      %v3653 = vpop.permute.xlu0 %3652
      %3654 = vrot.lane.b32.xlu0 %v3563, 4
      %v3655 = vpop.permute.xlu0 %3654
      %3656 = vrot.lane.b32.xlu0 %v3575, 4
      %v3657 = vpop.permute.xlu0 %3656
      %3658 = vrot.lane.b32.xlu0 %v3587, 4
      %v3659 = vpop.permute.xlu0 %3658
      %3660 = vrot.lane.b32.xlu0 %v3599, 4
      %v3661 = vpop.permute.xlu0 %3660
      %3662 = vrot.lane.b32.xlu0 %v3611, 4
      %v3663 = vpop.permute.xlu0 %3662
      %3664 = vrot.lane.b32.xlu0 %v3623, 4
      %v3665 = vpop.permute.xlu0 %3664
      %3666 = vrot.lane.b32.xlu0 %v3635, 4
      %v3667 = vpop.permute.xlu0 %3666
      %v3684 = vunpack.c.l.b16 %v3300
      %v3685 = vunpack.c.l.b16 %v3301
      %v3686 = vunpack.c.l.b16 %v3302
      %v3687 = vunpack.c.l.b16 %v3303
      %v3688 = vunpack.c.l.b16 %v3304
      %v3689 = vunpack.c.l.b16 %v3305
      %v3690 = vunpack.c.l.b16 %v3306
      %v3691 = vunpack.c.l.b16 %v3307
      %v3692 = vunpack.c.l.b16 %v3308
      %v3693 = vunpack.c.l.b16 %v3309
      %v3694 = vunpack.c.l.b16 %v3310
      %v3695 = vunpack.c.l.b16 %v3311
      %v3696 = vunpack.c.l.b16 %v3312
      %v3697 = vunpack.c.l.b16 %v3313
      %v3698 = vunpack.c.l.b16 %v3314
      %v3699 = vunpack.c.l.b16 %v3315
      %v3700 = vpack.c.b16 %v3349, %v3684
      %v3701 = vpack.c.b16 %v3351, %v3685
      %v3702 = vpack.c.b16 %v3353, %v3686
      %v3703 = vpack.c.b16 %v3355, %v3687
      %v3704 = vpack.c.b16 %v3357, %v3688
      %v3705 = vpack.c.b16 %v3359, %v3689
      %v3706 = vpack.c.b16 %v3361, %v3690
      %v3707 = vpack.c.b16 %v3363, %v3691
      %v3708 = vpack.c.b16 %v3365, %v3692
      %v3709 = vpack.c.b16 %v3367, %v3693
      %v3710 = vpack.c.b16 %v3369, %v3694
      %v3711 = vpack.c.b16 %v3371, %v3695
      %v3712 = vpack.c.b16 %v3373, %v3696
      %v3713 = vpack.c.b16 %v3375, %v3697
      %v3714 = vpack.c.b16 %v3377, %v3698
      %v3715 = vpack.c.b16 %v3379, %v3699
      %v3716 = vrot.slane %v3700, 1
      %v3717 = vrot.slane %v3428, 1
      %v3718 = vsel %vm1959, %v3716, %v3717
      %v3719 = vrot.slane %v3701, 1
      %v3720 = vrot.slane %v3429, 1
      %v3721 = vsel %vm1959, %v3719, %v3720
      %v3722 = vrot.slane %v3702, 1
      %v3723 = vrot.slane %v3430, 1
      %v3724 = vsel %vm1959, %v3722, %v3723
      %v3725 = vrot.slane %v3703, 1
      %v3726 = vrot.slane %v3431, 1
      %v3727 = vsel %vm1959, %v3725, %v3726
      %v3728 = vrot.slane %v3704, 1
      %v3729 = vrot.slane %v3432, 1
      %v3730 = vsel %vm1959, %v3728, %v3729
      %v3731 = vrot.slane %v3705, 1
      %v3732 = vrot.slane %v3433, 1
      %v3733 = vsel %vm1959, %v3731, %v3732
      %v3734 = vrot.slane %v3706, 1
      %v3735 = vrot.slane %v3434, 1
      %v3736 = vsel %vm1959, %v3734, %v3735
      %v3737 = vrot.slane %v3707, 1
      %v3738 = vrot.slane %v3435, 1
      %v3739 = vsel %vm1959, %v3737, %v3738
      %v3740 = vrot.slane %v3708, 1
      %v3741 = vrot.slane %v3436, 1
      %v3742 = vsel %vm1959, %v3740, %v3741
      %v3743 = vrot.slane %v3709, 1
      %v3744 = vrot.slane %v3437, 1
      %v3745 = vsel %vm1959, %v3743, %v3744
      %v3746 = vrot.slane %v3710, 1
      %v3747 = vrot.slane %v3438, 1
      %v3748 = vsel %vm1959, %v3746, %v3747
      %v3749 = vrot.slane %v3711, 1
      %v3750 = vrot.slane %v3439, 1
      %v3751 = vsel %vm1959, %v3749, %v3750
      %v3752 = vrot.slane %v3712, 1
      %v3753 = vrot.slane %v3440, 1
      %v3754 = vsel %vm1959, %v3752, %v3753
      %v3755 = vrot.slane %v3713, 1
      %v3756 = vrot.slane %v3441, 1
      %v3757 = vsel %vm1959, %v3755, %v3756
      %v3758 = vrot.slane %v3714, 1
      %v3759 = vrot.slane %v3442, 1
      %v3760 = vsel %vm1959, %v3758, %v3759
      %v3761 = vrot.slane %v3715, 1
      %v3762 = vrot.slane %v3443, 1
      %v3763 = vsel %vm1959, %v3761, %v3762
      %3764 = vrot.lane.b32.xlu0 %v3718, 8
      %v3765 = vpop.permute.xlu0 %3764
      %3766 = vrot.lane.b32.xlu0 %v3721, 8
      %v3767 = vpop.permute.xlu0 %3766
      %3768 = vrot.lane.b32.xlu0 %v3724, 8
      %v3769 = vpop.permute.xlu0 %3768
      %3770 = vrot.lane.b32.xlu0 %v3727, 8
      %v3771 = vpop.permute.xlu0 %3770
      %3772 = vrot.lane.b32.xlu0 %v3730, 8
      %v3773 = vpop.permute.xlu0 %3772
      %3774 = vrot.lane.b32.xlu0 %v3733, 8
      %v3775 = vpop.permute.xlu0 %3774
      %3776 = vrot.lane.b32.xlu0 %v3736, 8
      %v3777 = vpop.permute.xlu0 %3776
      %3778 = vrot.lane.b32.xlu0 %v3739, 8
      %v3779 = vpop.permute.xlu0 %3778
      %3780 = vrot.lane.b32.xlu0 %v3742, 8
      %v3781 = vpop.permute.xlu0 %3780
      %3782 = vrot.lane.b32.xlu0 %v3745, 8
      %v3783 = vpop.permute.xlu0 %3782
      %3784 = vrot.lane.b32.xlu0 %v3748, 8
      %v3785 = vpop.permute.xlu0 %3784
      %3786 = vrot.lane.b32.xlu0 %v3751, 8
      %v3787 = vpop.permute.xlu0 %3786
      %3788 = vrot.lane.b32.xlu0 %v3754, 8
      %v3789 = vpop.permute.xlu0 %3788
      %3790 = vrot.lane.b32.xlu0 %v3757, 8
      %v3791 = vpop.permute.xlu0 %3790
      %3792 = vrot.lane.b32.xlu0 %v3760, 8
      %v3793 = vpop.permute.xlu0 %3792
      %3794 = vrot.lane.b32.xlu0 %v3763, 8
      %v3795 = vpop.permute.xlu0 %3794
      %v3797 = vsel %vm2040, %v3380, %v3637
      %v3799 = vsel %vm2040, %v3381, %v3639
      %v3801 = vsel %vm2040, %v3382, %v3641
      %v3803 = vsel %vm2040, %v3383, %v3643
      %v3805 = vsel %vm2040, %v3384, %v3645
      %v3807 = vsel %vm2040, %v3385, %v3647
      %v3809 = vsel %vm2040, %v3386, %v3649
      %v3811 = vsel %vm2040, %v3387, %v3651
      %v3813 = vsel %vm2040, %v3388, %v3653
      %v3815 = vsel %vm2040, %v3389, %v3655
      %v3817 = vsel %vm2040, %v3390, %v3657
      %v3819 = vsel %vm2040, %v3391, %v3659
      %v3821 = vsel %vm2040, %v3392, %v3661
      %v3823 = vsel %vm2040, %v3393, %v3663
      %v3825 = vsel %vm2040, %v3394, %v3665
      %v3827 = vsel %vm2040, %v3395, %v3667
      %v3829 = vsel %vm2073, %v3797, %v3765
      %v3831 = vsel %vm2073, %v3799, %v3767
      %v3833 = vsel %vm2073, %v3801, %v3769
      %v3835 = vsel %vm2073, %v3803, %v3771
      %v3837 = vsel %vm2073, %v3805, %v3773
      %v3839 = vsel %vm2073, %v3807, %v3775
      %v3841 = vsel %vm2073, %v3809, %v3777
      %v3843 = vsel %vm2073, %v3811, %v3779
      %v3845 = vsel %vm2073, %v3813, %v3781
      %v3847 = vsel %vm2073, %v3815, %v3783
      %v3849 = vsel %vm2073, %v3817, %v3785
      %v3851 = vsel %vm2073, %v3819, %v3787
      %v3853 = vsel %vm2073, %v3821, %v3789
      %v3855 = vsel %vm2073, %v3823, %v3791
      %v3857 = vsel %vm2073, %v3825, %v3793
      %v3859 = vsel %vm2073, %v3827, %v3795
      %s3860 = scalar_lea.vmem %s4, 16
      %v3861 = vld [vmem:[%s3860] sm:$0xf]
      %v3862 = vld [vmem:[%s3860 + $0x4] sm:$0x3]
      %v3865 = vunpack.c.l.b16 %v3861
      %v3866 = vunpack.c.l.b16 %v3862
      %v3867 = vpack.c.b16 %v3866, %v3865
      %v3868 = vsel %vm2113, %v3829, 0
      %v3870 = vsel %vm2113, %v3831, 0
      %v3872 = vsel %vm2113, %v3833, 0
      %v3874 = vsel %vm2113, %v3835, 0
      %v3876 = vsel %vm2113, %v3837, 0
      %v3878 = vsel %vm2113, %v3839, 0
      %v3880 = vsel %vm2113, %v3841, 0
      %v3882 = vsel %vm2113, %v3843, 0
      %v3884 = vsel %vm2113, %v3845, 0
      %v3886 = vsel %vm2113, %v3847, 0
      %v3888 = vsel %vm2113, %v3849, 0
      %v3890 = vsel %vm2113, %v3851, 0
      %v3892 = vsel %vm2113, %v3853, 0
      %v3894 = vsel %vm2113, %v3855, 0
      %v3896 = vsel %vm2113, %v3857, 0
      %v3898 = vsel %vm2113, %v3859, 0
      %v3901 = vsel %vm2146, %v3867, 0
      %3903 = vmatprep.subr.bf16.mxu0 0
      %3904 = vmatpush1.bf16.msra.mxu0 %v3901
      %3905 = vmatprep.subr.bf16.mxu0 0
      %3906 = vmatpush1.bf16.msra.mxu0 0
      %3907 = vmatprep.subr.bf16.mxu0 0
      %3908 = vmatpush1.bf16.msra.mxu0 0
      %3909 = vmatprep.subr.bf16.mxu0 0
      %3910 = vmatpush1.bf16.msra.mxu0 0
      %3911 = vmatprep.subr.bf16.mxu0 0
      %3912 = vmatpush1.bf16.msra.mxu0 0
      %3913 = vmatprep.subr.bf16.mxu0 0
      %3914 = vmatpush1.bf16.msra.mxu0 0
      %3915 = vmatprep.subr.bf16.mxu0 0
      %3916 = vmatpush1.bf16.msra.mxu0 0
      %3917 = vmatprep.subr.bf16.mxu0 0
      %3918 = vmatpush1.bf16.msra.mxu0 0
      %3919 = vmatprep.subr.bf16.mxu0 0
      %3920 = vmatpush1.bf16.msra.mxu0 0
      %3921 = vmatprep.subr.bf16.mxu0 0
      %3922 = vmatpush1.bf16.msra.mxu0 0
      %3923 = vmatprep.subr.bf16.mxu0 0
      %3924 = vmatpush1.bf16.msra.mxu0 0
      %3925 = vmatprep.subr.bf16.mxu0 0
      %3926 = vmatpush1.bf16.msra.mxu0 0
      %3927 = vmatprep.subr.bf16.mxu0 0
      %3928 = vmatpush1.bf16.msra.mxu0 0
      %3929 = vmatprep.subr.bf16.mxu0 0
      %3930 = vmatpush1.bf16.msra.mxu0 0
      %3931 = vmatprep.subr.bf16.mxu0 0
      %3932 = vmatpush1.bf16.msra.mxu0 0
      %3933 = vmatprep.subr.bf16.mxu0 0
      %3934 = vmatpush1.bf16.msra.mxu0 0
      %3935 = vmatprep.mubr.bf16.mxu0 0
      %3936 = vmatmul.mubr.bf16.gmra.mrb[0].mxu0 %v3868
      %v3937 = vpop.f32.mrb[0].mxu0
      %v3938 = vadd.f32 0.0, %v3937
      %v3939 = vpop.f32.mrb[0].mxu0
      %v3940 = vpop.f32.mrb[0].mxu0
      %v3941 = vadd.f32 0.0, %v3940
      %v3942 = vpop.f32.mrb[0].mxu0
      %3943 = vmatprep.mubr.bf16.mxu0 0
      %3944 = vmatmul.mubr.bf16.gmra.mrb[0].mxu0 %v3870
      %v3945 = vpop.f32.mrb[0].mxu0
      %v3946 = vadd.f32 0.0, %v3945
      %v3947 = vpop.f32.mrb[0].mxu0
      %v3948 = vpop.f32.mrb[0].mxu0
      %v3949 = vadd.f32 0.0, %v3948
      %v3950 = vpop.f32.mrb[0].mxu0
      %3951 = vmatprep.mubr.bf16.mxu0 0
      %3952 = vmatmul.mubr.bf16.gmra.mrb[0].mxu0 %v3872
      %v3953 = vpop.f32.mrb[0].mxu0
      %v3954 = vadd.f32 0.0, %v3953
      %v3955 = vpop.f32.mrb[0].mxu0
      %v3956 = vpop.f32.mrb[0].mxu0
      %v3957 = vadd.f32 0.0, %v3956
      %v3958 = vpop.f32.mrb[0].mxu0
      %3959 = vmatprep.mubr.bf16.mxu0 0
      %3960 = vmatmul.mubr.bf16.gmra.mrb[0].mxu0 %v3874
      %v3961 = vpop.f32.mrb[0].mxu0
      %v3962 = vadd.f32 0.0, %v3961
      %v3963 = vpop.f32.mrb[0].mxu0
      %v3964 = vpop.f32.mrb[0].mxu0
      %v3965 = vadd.f32 0.0, %v3964
      %v3966 = vpop.f32.mrb[0].mxu0
      %3967 = vmatprep.mubr.bf16.mxu0 0
      %3968 = vmatmul.mubr.bf16.gmra.mrb[0].mxu0 %v3876
      %v3969 = vpop.f32.mrb[0].mxu0
      %v3970 = vadd.f32 0.0, %v3969
      %v3971 = vpop.f32.mrb[0].mxu0
      %v3972 = vpop.f32.mrb[0].mxu0
      %v3973 = vadd.f32 0.0, %v3972
      %v3974 = vpop.f32.mrb[0].mxu0
      %3975 = vmatprep.mubr.bf16.mxu0 0
      %3976 = vmatmul.mubr.bf16.gmra.mrb[0].mxu0 %v3878
      %v3977 = vpop.f32.mrb[0].mxu0
      %v3978 = vadd.f32 0.0, %v3977
      %v3979 = vpop.f32.mrb[0].mxu0
      %v3980 = vpop.f32.mrb[0].mxu0
      %v3981 = vadd.f32 0.0, %v3980
      %v3982 = vpop.f32.mrb[0].mxu0
      %3983 = vmatprep.mubr.bf16.mxu0 0
      %3984 = vmatmul.mubr.bf16.gmra.mrb[0].mxu0 %v3880
      %v3985 = vpop.f32.mrb[0].mxu0
      %v3986 = vadd.f32 0.0, %v3985
      %v3987 = vpop.f32.mrb[0].mxu0
      %v3988 = vpop.f32.mrb[0].mxu0
      %v3989 = vadd.f32 0.0, %v3988
      %v3990 = vpop.f32.mrb[0].mxu0
      %3991 = vmatprep.mubr.bf16.mxu0 0
      %3992 = vmatmul.mubr.bf16.gmra.mrb[0].mxu0 %v3882
      %v3993 = vpop.f32.mrb[0].mxu0
      %v3994 = vadd.f32 0.0, %v3993
      %v3995 = vpop.f32.mrb[0].mxu0
      %v3996 = vpop.f32.mrb[0].mxu0
      %v3997 = vadd.f32 0.0, %v3996
      %v3998 = vpop.f32.mrb[0].mxu0
      %3999 = vmatprep.mubr.bf16.mxu0 0
      %4000 = vmatmul.mubr.bf16.gmra.mrb[0].mxu0 %v3884
      %v4001 = vpop.f32.mrb[0].mxu0
      %v4002 = vadd.f32 0.0, %v4001
      %v4003 = vpop.f32.mrb[0].mxu0
      %v4004 = vpop.f32.mrb[0].mxu0
      %v4005 = vadd.f32 0.0, %v4004
      %v4006 = vpop.f32.mrb[0].mxu0
      %4007 = vmatprep.mubr.bf16.mxu0 0
      %4008 = vmatmul.mubr.bf16.gmra.mrb[0].mxu0 %v3886
      %v4009 = vpop.f32.mrb[0].mxu0
      %v4010 = vadd.f32 0.0, %v4009
      %v4011 = vpop.f32.mrb[0].mxu0
      %v4012 = vpop.f32.mrb[0].mxu0
      %v4013 = vadd.f32 0.0, %v4012
      %v4014 = vpop.f32.mrb[0].mxu0
      %4015 = vmatprep.mubr.bf16.mxu0 0
      %4016 = vmatmul.mubr.bf16.gmra.mrb[0].mxu0 %v3888
      %v4017 = vpop.f32.mrb[0].mxu0
      %v4018 = vadd.f32 0.0, %v4017
      %v4019 = vpop.f32.mrb[0].mxu0
      %v4020 = vpop.f32.mrb[0].mxu0
      %v4021 = vadd.f32 0.0, %v4020
      %v4022 = vpop.f32.mrb[0].mxu0
      %4023 = vmatprep.mubr.bf16.mxu0 0
      %4024 = vmatmul.mubr.bf16.gmra.mrb[0].mxu0 %v3890
      %v4025 = vpop.f32.mrb[0].mxu0
      %v4026 = vadd.f32 0.0, %v4025
      %v4027 = vpop.f32.mrb[0].mxu0
      %v4028 = vpop.f32.mrb[0].mxu0
      %v4029 = vadd.f32 0.0, %v4028
      %v4030 = vpop.f32.mrb[0].mxu0
      %4031 = vmatprep.mubr.bf16.mxu0 0
      %4032 = vmatmul.mubr.bf16.gmra.mrb[0].mxu0 %v3892
      %v4033 = vpop.f32.mrb[0].mxu0
      %v4034 = vadd.f32 0.0, %v4033
      %v4035 = vpop.f32.mrb[0].mxu0
      %v4036 = vpop.f32.mrb[0].mxu0
      %v4037 = vadd.f32 0.0, %v4036
      %v4038 = vpop.f32.mrb[0].mxu0
      %4039 = vmatprep.mubr.bf16.mxu0 0
      %4040 = vmatmul.mubr.bf16.gmra.mrb[0].mxu0 %v3894
      %v4041 = vpop.f32.mrb[0].mxu0
      %v4042 = vadd.f32 0.0, %v4041
      %v4043 = vpop.f32.mrb[0].mxu0
      %v4044 = vpop.f32.mrb[0].mxu0
      %v4045 = vadd.f32 0.0, %v4044
      %v4046 = vpop.f32.mrb[0].mxu0
      %4047 = vmatprep.mubr.bf16.mxu0 0
      %4048 = vmatmul.mubr.bf16.gmra.mrb[0].mxu0 %v3896
      %v4049 = vpop.f32.mrb[0].mxu0
      %v4050 = vadd.f32 0.0, %v4049
      %v4051 = vpop.f32.mrb[0].mxu0
      %v4052 = vpop.f32.mrb[0].mxu0
      %v4053 = vadd.f32 0.0, %v4052
      %v4054 = vpop.f32.mrb[0].mxu0
      %4055 = vmatprep.mubr.bf16.mxu0 0
      %4056 = vmatmul.mubr.bf16.gmra.mrb[0].mxu0 %v3898
      %v4057 = vpop.f32.mrb[0].mxu0
      %v4058 = vadd.f32 0.0, %v4057
      %v4059 = vpop.f32.mrb[0].mxu0
      %v4060 = vpop.f32.mrb[0].mxu0
      %v4061 = vadd.f32 0.0, %v4060
      %v4062 = vpop.f32.mrb[0].mxu0
      %4063 = vdwg.mxu0
      %v4064 = vld [vmem:[#allocation3] sm:$0xff]
      %v4065 = vld [vmem:[#allocation3 + $0x8] sm:$0xff]
      %v4066 = vld [vmem:[#allocation3 + $0x10] sm:$0xff]
      %v4067 = vld [vmem:[#allocation3 + $0x18] sm:$0xff]
      %v4068 = vld [vmem:[#allocation3 + $0x20] sm:$0xff]
      %v4069 = vld [vmem:[#allocation3 + $0x28] sm:$0xff]
      %v4070 = vld [vmem:[#allocation3 + $0x30] sm:$0xff]
      %v4071 = vld [vmem:[#allocation3 + $0x38] sm:$0xff]
      %v4072 = vld [vmem:[#allocation3 + $0x40] sm:$0xff]
      %v4073 = vld [vmem:[#allocation3 + $0x48] sm:$0xff]
      %v4074 = vld [vmem:[#allocation3 + $0x50] sm:$0xff]
      %v4075 = vld [vmem:[#allocation3 + $0x58] sm:$0xff]
      %v4076 = vld [vmem:[#allocation3 + $0x60] sm:$0xff]
      %v4077 = vld [vmem:[#allocation3 + $0x68] sm:$0xff]
      %v4078 = vld [vmem:[#allocation3 + $0x70] sm:$0xff]
      %v4079 = vld [vmem:[#allocation3 + $0x78] sm:$0xff]
      %v4080 = vld [vmem:[#allocation3 + $0x80] sm:$0xff]
      %v4081 = vld [vmem:[#allocation3 + $0x88] sm:$0xff]
      %v4082 = vld [vmem:[#allocation3 + $0x90] sm:$0xff]
      %v4083 = vld [vmem:[#allocation3 + $0x98] sm:$0xff]
      %v4084 = vld [vmem:[#allocation3 + $0xa0] sm:$0xff]
      %v4085 = vld [vmem:[#allocation3 + $0xa8] sm:$0xff]
      %v4086 = vld [vmem:[#allocation3 + $0xb0] sm:$0xff]
      %v4087 = vld [vmem:[#allocation3 + $0xb8] sm:$0xff]
      %v4088 = vld [vmem:[#allocation3 + $0xc0] sm:$0xff]
      %v4089 = vld [vmem:[#allocation3 + $0xc8] sm:$0xff]
      %v4090 = vld [vmem:[#allocation3 + $0xd0] sm:$0xff]
      %v4091 = vld [vmem:[#allocation3 + $0xd8] sm:$0xff]
      %v4092 = vld [vmem:[#allocation3 + $0xe0] sm:$0xff]
      %v4093 = vld [vmem:[#allocation3 + $0xe8] sm:$0xff]
      %v4094 = vld [vmem:[#allocation3 + $0xf0] sm:$0xff]
      %v4095 = vld [vmem:[#allocation3 + $0xf8] sm:$0xff]
      %v4096 = vadd.f32 %v4064, %v3938
      %v4097 = vadd.f32 %v4065, %v3941
      %v4098 = vadd.f32 %v4066, %v3946
      %v4099 = vadd.f32 %v4067, %v3949
      %v4100 = vadd.f32 %v4068, %v3954
      %v4101 = vadd.f32 %v4069, %v3957
      %v4102 = vadd.f32 %v4070, %v3962
      %v4103 = vadd.f32 %v4071, %v3965
      %v4104 = vadd.f32 %v4072, %v3970
      %v4105 = vadd.f32 %v4073, %v3973
      %v4106 = vadd.f32 %v4074, %v3978
      %v4107 = vadd.f32 %v4075, %v3981
      %v4108 = vadd.f32 %v4076, %v3986
      %v4109 = vadd.f32 %v4077, %v3989
      %v4110 = vadd.f32 %v4078, %v3994
      %v4111 = vadd.f32 %v4079, %v3997
      %v4112 = vadd.f32 %v4080, %v4002
      %v4113 = vadd.f32 %v4081, %v4005
      %v4114 = vadd.f32 %v4082, %v4010
      %v4115 = vadd.f32 %v4083, %v4013
      %v4116 = vadd.f32 %v4084, %v4018
      %v4117 = vadd.f32 %v4085, %v4021
      %v4118 = vadd.f32 %v4086, %v4026
      %v4119 = vadd.f32 %v4087, %v4029
      %v4120 = vadd.f32 %v4088, %v4034
      %v4121 = vadd.f32 %v4089, %v4037
      %v4122 = vadd.f32 %v4090, %v4042
      %v4123 = vadd.f32 %v4091, %v4045
      %v4124 = vadd.f32 %v4092, %v4050
      %v4125 = vadd.f32 %v4093, %v4053
      %v4126 = vadd.f32 %v4094, %v4058
      %v4127 = vadd.f32 %v4095, %v4061
      %4128 = vst.msk [vmem:[#allocation3] sm:$0xff] %vm2040, %v4096
      %4129 = vst.msk [vmem:[#allocation3 + $0x8] sm:$0xff] %vm2040, %v4097
      %4130 = vst.msk [vmem:[#allocation3 + $0x10] sm:$0xff] %vm2040, %v4098
      %4131 = vst.msk [vmem:[#allocation3 + $0x18] sm:$0xff] %vm2040, %v4099
      %4132 = vst.msk [vmem:[#allocation3 + $0x20] sm:$0xff] %vm2040, %v4100
      %4133 = vst.msk [vmem:[#allocation3 + $0x28] sm:$0xff] %vm2040, %v4101
      %4134 = vst.msk [vmem:[#allocation3 + $0x30] sm:$0xff] %vm2040, %v4102
      %4135 = vst.msk [vmem:[#allocation3 + $0x38] sm:$0xff] %vm2040, %v4103
      %4136 = vst.msk [vmem:[#allocation3 + $0x40] sm:$0xff] %vm2040, %v4104
      %4137 = vst.msk [vmem:[#allocation3 + $0x48] sm:$0xff] %vm2040, %v4105
      %4138 = vst.msk [vmem:[#allocation3 + $0x50] sm:$0xff] %vm2040, %v4106
      %4139 = vst.msk [vmem:[#allocation3 + $0x58] sm:$0xff] %vm2040, %v4107
      %4140 = vst.msk [vmem:[#allocation3 + $0x60] sm:$0xff] %vm2040, %v4108
      %4141 = vst.msk [vmem:[#allocation3 + $0x68] sm:$0xff] %vm2040, %v4109
      %4142 = vst.msk [vmem:[#allocation3 + $0x70] sm:$0xff] %vm2040, %v4110
      %4143 = vst.msk [vmem:[#allocation3 + $0x78] sm:$0xff] %vm2040, %v4111
      %4144 = vst.msk [vmem:[#allocation3 + $0x80] sm:$0xff] %vm2040, %v4112
      %4145 = vst.msk [vmem:[#allocation3 + $0x88] sm:$0xff] %vm2040, %v4113
      %4146 = vst.msk [vmem:[#allocation3 + $0x90] sm:$0xff] %vm2040, %v4114
      %4147 = vst.msk [vmem:[#allocation3 + $0x98] sm:$0xff] %vm2040, %v4115
      %4148 = vst.msk [vmem:[#allocation3 + $0xa0] sm:$0xff] %vm2040, %v4116
      %4149 = vst.msk [vmem:[#allocation3 + $0xa8] sm:$0xff] %vm2040, %v4117
      %4150 = vst.msk [vmem:[#allocation3 + $0xb0] sm:$0xff] %vm2040, %v4118
      %4151 = vst.msk [vmem:[#allocation3 + $0xb8] sm:$0xff] %vm2040, %v4119
      %4152 = vst.msk [vmem:[#allocation3 + $0xc0] sm:$0xff] %vm2040, %v4120
      %4153 = vst.msk [vmem:[#allocation3 + $0xc8] sm:$0xff] %vm2040, %v4121
      %4154 = vst.msk [vmem:[#allocation3 + $0xd0] sm:$0xff] %vm2040, %v4122
      %4155 = vst.msk [vmem:[#allocation3 + $0xd8] sm:$0xff] %vm2040, %v4123
      %4156 = vst.msk [vmem:[#allocation3 + $0xe0] sm:$0xff] %vm2040, %v4124
      %4157 = vst.msk [vmem:[#allocation3 + $0xe8] sm:$0xff] %vm2040, %v4125
      %4158 = vst.msk [vmem:[#allocation3 + $0xf0] sm:$0xff] %vm2040, %v4126
      %4159 = vst.msk [vmem:[#allocation3 + $0xf8] sm:$0xff] %vm2040, %v4127
      %v4160 = vld [vmem:[#allocation3] sm:$0xff]
      %v4161 = vld [vmem:[#allocation3 + $0x8] sm:$0xff]
      %v4162 = vld [vmem:[#allocation3 + $0x10] sm:$0xff]
      %v4163 = vld [vmem:[#allocation3 + $0x18] sm:$0xff]
      %v4164 = vld [vmem:[#allocation3 + $0x20] sm:$0xff]
      %v4165 = vld [vmem:[#allocation3 + $0x28] sm:$0xff]
      %v4166 = vld [vmem:[#allocation3 + $0x30] sm:$0xff]
      %v4167 = vld [vmem:[#allocation3 + $0x38] sm:$0xff]
      %v4168 = vld [vmem:[#allocation3 + $0x40] sm:$0xff]
      %v4169 = vld [vmem:[#allocation3 + $0x48] sm:$0xff]
      %v4170 = vld [vmem:[#allocation3 + $0x50] sm:$0xff]
      %v4171 = vld [vmem:[#allocation3 + $0x58] sm:$0xff]
      %v4172 = vld [vmem:[#allocation3 + $0x60] sm:$0xff]
      %v4173 = vld [vmem:[#allocation3 + $0x68] sm:$0xff]
      %v4174 = vld [vmem:[#allocation3 + $0x70] sm:$0xff]
      %v4175 = vld [vmem:[#allocation3 + $0x78] sm:$0xff]
      %v4176 = vld [vmem:[#allocation3 + $0x80] sm:$0xff]
      %v4177 = vld [vmem:[#allocation3 + $0x88] sm:$0xff]
      %v4178 = vld [vmem:[#allocation3 + $0x90] sm:$0xff]
      %v4179 = vld [vmem:[#allocation3 + $0x98] sm:$0xff]
      %v4180 = vld [vmem:[#allocation3 + $0xa0] sm:$0xff]
      %v4181 = vld [vmem:[#allocation3 + $0xa8] sm:$0xff]
      %v4182 = vld [vmem:[#allocation3 + $0xb0] sm:$0xff]
      %v4183 = vld [vmem:[#allocation3 + $0xb8] sm:$0xff]
      %v4184 = vld [vmem:[#allocation3 + $0xc0] sm:$0xff]
      %v4185 = vld [vmem:[#allocation3 + $0xc8] sm:$0xff]
      %v4186 = vld [vmem:[#allocation3 + $0xd0] sm:$0xff]
      %v4187 = vld [vmem:[#allocation3 + $0xd8] sm:$0xff]
      %v4188 = vld [vmem:[#allocation3 + $0xe0] sm:$0xff]
      %v4189 = vld [vmem:[#allocation3 + $0xe8] sm:$0xff]
      %v4190 = vld [vmem:[#allocation3 + $0xf0] sm:$0xff]
      %v4191 = vld [vmem:[#allocation3 + $0xf8] sm:$0xff]
      %v4192 = vld [vmem:[%s5] sm:$0x1]
      %v4194 = vlaneseq
      %v4195 = vshrl.u32 %v4194, 7
      %v4196 = vsub.s32 0, %v4195
      %v4197 = vrot.slane %v4192, %v4196
      %v4199 = vmul.f32 %v4160, %v4197
      %v4200 = vmul.f32 %v4161, %v4197
      %v4201 = vmul.f32 %v4162, %v4197
      %v4202 = vmul.f32 %v4163, %v4197
      %v4203 = vmul.f32 %v4164, %v4197
      %v4204 = vmul.f32 %v4165, %v4197
      %v4205 = vmul.f32 %v4166, %v4197
      %v4206 = vmul.f32 %v4167, %v4197
      %v4207 = vmul.f32 %v4168, %v4197
      %v4208 = vmul.f32 %v4169, %v4197
      %v4209 = vmul.f32 %v4170, %v4197
      %v4210 = vmul.f32 %v4171, %v4197
      %v4211 = vmul.f32 %v4172, %v4197
      %v4212 = vmul.f32 %v4173, %v4197
      %v4213 = vmul.f32 %v4174, %v4197
      %v4214 = vmul.f32 %v4175, %v4197
      %v4215 = vmul.f32 %v4176, %v4197
      %v4216 = vmul.f32 %v4177, %v4197
      %v4217 = vmul.f32 %v4178, %v4197
      %v4218 = vmul.f32 %v4179, %v4197
      %v4219 = vmul.f32 %v4180, %v4197
      %v4220 = vmul.f32 %v4181, %v4197
      %v4221 = vmul.f32 %v4182, %v4197
      %v4222 = vmul.f32 %v4183, %v4197
      %v4223 = vmul.f32 %v4184, %v4197
      %v4224 = vmul.f32 %v4185, %v4197
      %v4225 = vmul.f32 %v4186, %v4197
      %v4226 = vmul.f32 %v4187, %v4197
      %v4227 = vmul.f32 %v4188, %v4197
      %v4228 = vmul.f32 %v4189, %v4197
      %v4229 = vmul.f32 %v4190, %v4197
      %v4230 = vmul.f32 %v4191, %v4197
      %v4231 = vld [vmem:[%s6] sm:$0x1]
      %v4233 = vlaneseq
      %v4234 = vshrl.u32 %v4233, 7
      %v4235 = vsub.s32 0, %v4234
      %v4236 = vrot.slane %v4231, %v4235
      %v4238 = vadd.f32 %v4199, %v4236
      %v4239 = vadd.f32 %v4200, %v4236
      %v4240 = vadd.f32 %v4201, %v4236
      %v4241 = vadd.f32 %v4202, %v4236
      %v4242 = vadd.f32 %v4203, %v4236
      %v4243 = vadd.f32 %v4204, %v4236
      %v4244 = vadd.f32 %v4205, %v4236
      %v4245 = vadd.f32 %v4206, %v4236
      %v4246 = vadd.f32 %v4207, %v4236
      %v4247 = vadd.f32 %v4208, %v4236
      %v4248 = vadd.f32 %v4209, %v4236
      %v4249 = vadd.f32 %v4210, %v4236
      %v4250 = vadd.f32 %v4211, %v4236
      %v4251 = vadd.f32 %v4212, %v4236
      %v4252 = vadd.f32 %v4213, %v4236
      %v4253 = vadd.f32 %v4214, %v4236
      %v4254 = vadd.f32 %v4215, %v4236
      %v4255 = vadd.f32 %v4216, %v4236
      %v4256 = vadd.f32 %v4217, %v4236
      %v4257 = vadd.f32 %v4218, %v4236
      %v4258 = vadd.f32 %v4219, %v4236
      %v4259 = vadd.f32 %v4220, %v4236
      %v4260 = vadd.f32 %v4221, %v4236
      %v4261 = vadd.f32 %v4222, %v4236
      %v4262 = vadd.f32 %v4223, %v4236
      %v4263 = vadd.f32 %v4224, %v4236
      %v4264 = vadd.f32 %v4225, %v4236
      %v4265 = vadd.f32 %v4226, %v4236
      %v4266 = vadd.f32 %v4227, %v4236
      %v4267 = vadd.f32 %v4228, %v4236
      %v4268 = vadd.f32 %v4229, %v4236
      %v4269 = vadd.f32 %v4230, %v4236
      %v4270 = vmax.f32 %v4238, 0.0
      %v4271 = vmax.f32 %v4239, 0.0
      %v4272 = vmax.f32 %v4240, 0.0
      %v4273 = vmax.f32 %v4241, 0.0
      %v4274 = vmax.f32 %v4242, 0.0
      %v4275 = vmax.f32 %v4243, 0.0
      %v4276 = vmax.f32 %v4244, 0.0
      %v4277 = vmax.f32 %v4245, 0.0
      %v4278 = vmax.f32 %v4246, 0.0
      %v4279 = vmax.f32 %v4247, 0.0
      %v4280 = vmax.f32 %v4248, 0.0
      %v4281 = vmax.f32 %v4249, 0.0
      %v4282 = vmax.f32 %v4250, 0.0
      %v4283 = vmax.f32 %v4251, 0.0
      %v4284 = vmax.f32 %v4252, 0.0
      %v4285 = vmax.f32 %v4253, 0.0
      %v4286 = vmax.f32 %v4254, 0.0
      %v4287 = vmax.f32 %v4255, 0.0
      %v4288 = vmax.f32 %v4256, 0.0
      %v4289 = vmax.f32 %v4257, 0.0
      %v4290 = vmax.f32 %v4258, 0.0
      %v4291 = vmax.f32 %v4259, 0.0
      %v4292 = vmax.f32 %v4260, 0.0
      %v4293 = vmax.f32 %v4261, 0.0
      %v4294 = vmax.f32 %v4262, 0.0
      %v4295 = vmax.f32 %v4263, 0.0
      %v4296 = vmax.f32 %v4264, 0.0
      %v4297 = vmax.f32 %v4265, 0.0
      %v4298 = vmax.f32 %v4266, 0.0
      %v4299 = vmax.f32 %v4267, 0.0
      %v4300 = vmax.f32 %v4268, 0.0
      %v4301 = vmax.f32 %v4269, 0.0
      %v4302 = vpack.c.bf16 %v4271, %v4270
      %v4303 = vpack.c.bf16 %v4273, %v4272
      %v4304 = vpack.c.bf16 %v4275, %v4274
      %v4305 = vpack.c.bf16 %v4277, %v4276
      %v4306 = vpack.c.bf16 %v4279, %v4278
      %v4307 = vpack.c.bf16 %v4281, %v4280
      %v4308 = vpack.c.bf16 %v4283, %v4282
      %v4309 = vpack.c.bf16 %v4285, %v4284
      %v4310 = vpack.c.bf16 %v4287, %v4286
      %v4311 = vpack.c.bf16 %v4289, %v4288
      %v4312 = vpack.c.bf16 %v4291, %v4290
      %v4313 = vpack.c.bf16 %v4293, %v4292
      %v4314 = vpack.c.bf16 %v4295, %v4294
      %v4315 = vpack.c.bf16 %v4297, %v4296
      %v4316 = vpack.c.bf16 %v4299, %v4298
      %v4317 = vpack.c.bf16 %v4301, %v4300
      %v4318 = vld [vmem:[%s7] sm:$0x3]
      %v4320 = vsel %vm2040, %v4302, 0
      %v4323 = vsel %vm2040, %v4303, 0
      %v4326 = vsel %vm2040, %v4304, 0
      %v4329 = vsel %vm2040, %v4305, 0
      %v4332 = vsel %vm2040, %v4306, 0
      %v4335 = vsel %vm2040, %v4307, 0
      %v4338 = vsel %vm2040, %v4308, 0
      %v4341 = vsel %vm2040, %v4309, 0
      %v4344 = vsel %vm2040, %v4310, 0
      %v4347 = vsel %vm2040, %v4311, 0
      %v4350 = vsel %vm2040, %v4312, 0
      %v4353 = vsel %vm2040, %v4313, 0
      %v4356 = vsel %vm2040, %v4314, 0
      %v4359 = vsel %vm2040, %v4315, 0
      %v4362 = vsel %vm2040, %v4316, 0
      %v4365 = vsel %vm2040, %v4317, 0
      %vm4367 = vcmask 1041408
      %v4369 = vsel %vm4367, %v4318, 0
      %4371 = vmatprep.subr.bf16.mxu0 0
      %4372 = vmatpush1.bf16.msra.mxu0 %v4369
      %4373 = vmatprep.subr.bf16.mxu0 0
      %4374 = vmatpush1.bf16.msra.mxu0 0
      %4375 = vmatprep.subr.bf16.mxu0 0
      %4376 = vmatpush1.bf16.msra.mxu0 0
      %4377 = vmatprep.subr.bf16.mxu0 0
      %4378 = vmatpush1.bf16.msra.mxu0 0
      %4379 = vmatprep.subr.bf16.mxu0 0
      %4380 = vmatpush1.bf16.msra.mxu0 0
      %4381 = vmatprep.subr.bf16.mxu0 0
      %4382 = vmatpush1.bf16.msra.mxu0 0
      %4383 = vmatprep.subr.bf16.mxu0 0
      %4384 = vmatpush1.bf16.msra.mxu0 0
      %4385 = vmatprep.subr.bf16.mxu0 0
      %4386 = vmatpush1.bf16.msra.mxu0 0
      %4387 = vmatprep.subr.bf16.mxu0 0
      %4388 = vmatpush1.bf16.msra.mxu0 0
      %4389 = vmatprep.subr.bf16.mxu0 0
      %4390 = vmatpush1.bf16.msra.mxu0 0
      %4391 = vmatprep.subr.bf16.mxu0 0
      %4392 = vmatpush1.bf16.msra.mxu0 0
      %4393 = vmatprep.subr.bf16.mxu0 0
      %4394 = vmatpush1.bf16.msra.mxu0 0
      %4395 = vmatprep.subr.bf16.mxu0 0
      %4396 = vmatpush1.bf16.msra.mxu0 0
      %4397 = vmatprep.subr.bf16.mxu0 0
      %4398 = vmatpush1.bf16.msra.mxu0 0
      %4399 = vmatprep.subr.bf16.mxu0 0
      %4400 = vmatpush1.bf16.msra.mxu0 0
      %4401 = vmatprep.subr.bf16.mxu0 0
      %4402 = vmatpush1.bf16.msra.mxu0 0
      %4403 = vmatprep.mubr.bf16.mxu0 0
      %4404 = vmatmul.mubr.bf16.gmra.mrb[0].mxu0 %v4320
      %v4405 = vpop.f32.mrb[0].mxu0
      %v4406 = vadd.f32 0.0, %v4405
      %v4407 = vpop.f32.mrb[0].mxu0
      %v4408 = vpop.f32.mrb[0].mxu0
      %v4409 = vadd.f32 0.0, %v4408
      %v4410 = vpop.f32.mrb[0].mxu0
      %4411 = vmatprep.mubr.bf16.mxu0 0
      %4412 = vmatmul.mubr.bf16.gmra.mrb[0].mxu0 %v4323
      %v4413 = vpop.f32.mrb[0].mxu0
      %v4414 = vadd.f32 0.0, %v4413
      %v4415 = vpop.f32.mrb[0].mxu0
      %v4416 = vpop.f32.mrb[0].mxu0
      %v4417 = vadd.f32 0.0, %v4416
      %v4418 = vpop.f32.mrb[0].mxu0
      %4419 = vmatprep.mubr.bf16.mxu0 0
      %4420 = vmatmul.mubr.bf16.gmra.mrb[0].mxu0 %v4326
      %v4421 = vpop.f32.mrb[0].mxu0
      %v4422 = vadd.f32 0.0, %v4421
      %v4423 = vpop.f32.mrb[0].mxu0
      %v4424 = vpop.f32.mrb[0].mxu0
      %v4425 = vadd.f32 0.0, %v4424
      %v4426 = vpop.f32.mrb[0].mxu0
      %4427 = vmatprep.mubr.bf16.mxu0 0
      %4428 = vmatmul.mubr.bf16.gmra.mrb[0].mxu0 %v4329
      %v4429 = vpop.f32.mrb[0].mxu0
      %v4430 = vadd.f32 0.0, %v4429
      %v4431 = vpop.f32.mrb[0].mxu0
      %v4432 = vpop.f32.mrb[0].mxu0
      %v4433 = vadd.f32 0.0, %v4432
      %v4434 = vpop.f32.mrb[0].mxu0
      %4435 = vmatprep.mubr.bf16.mxu0 0
      %4436 = vmatmul.mubr.bf16.gmra.mrb[0].mxu0 %v4332
      %v4437 = vpop.f32.mrb[0].mxu0
      %v4438 = vadd.f32 0.0, %v4437
      %v4439 = vpop.f32.mrb[0].mxu0
      %v4440 = vpop.f32.mrb[0].mxu0
      %v4441 = vadd.f32 0.0, %v4440
      %v4442 = vpop.f32.mrb[0].mxu0
      %4443 = vmatprep.mubr.bf16.mxu0 0
      %4444 = vmatmul.mubr.bf16.gmra.mrb[0].mxu0 %v4335
      %v4445 = vpop.f32.mrb[0].mxu0
      %v4446 = vadd.f32 0.0, %v4445
      %v4447 = vpop.f32.mrb[0].mxu0
      %v4448 = vpop.f32.mrb[0].mxu0
      %v4449 = vadd.f32 0.0, %v4448
      %v4450 = vpop.f32.mrb[0].mxu0
      %4451 = vmatprep.mubr.bf16.mxu0 0
      %4452 = vmatmul.mubr.bf16.gmra.mrb[0].mxu0 %v4338
      %v4453 = vpop.f32.mrb[0].mxu0
      %v4454 = vadd.f32 0.0, %v4453
      %v4455 = vpop.f32.mrb[0].mxu0
      %v4456 = vpop.f32.mrb[0].mxu0
      %v4457 = vadd.f32 0.0, %v4456
      %v4458 = vpop.f32.mrb[0].mxu0
      %4459 = vmatprep.mubr.bf16.mxu0 0
      %4460 = vmatmul.mubr.bf16.gmra.mrb[0].mxu0 %v4341
      %v4461 = vpop.f32.mrb[0].mxu0
      %v4462 = vadd.f32 0.0, %v4461
      %v4463 = vpop.f32.mrb[0].mxu0
      %v4464 = vpop.f32.mrb[0].mxu0
      %v4465 = vadd.f32 0.0, %v4464
      %v4466 = vpop.f32.mrb[0].mxu0
      %4467 = vmatprep.mubr.bf16.mxu0 0
      %4468 = vmatmul.mubr.bf16.gmra.mrb[0].mxu0 %v4344
      %v4469 = vpop.f32.mrb[0].mxu0
      %v4470 = vadd.f32 0.0, %v4469
      %v4471 = vpop.f32.mrb[0].mxu0
      %v4472 = vpop.f32.mrb[0].mxu0
      %v4473 = vadd.f32 0.0, %v4472
      %v4474 = vpop.f32.mrb[0].mxu0
      %4475 = vmatprep.mubr.bf16.mxu0 0
      %4476 = vmatmul.mubr.bf16.gmra.mrb[0].mxu0 %v4347
      %v4477 = vpop.f32.mrb[0].mxu0
      %v4478 = vadd.f32 0.0, %v4477
      %v4479 = vpop.f32.mrb[0].mxu0
      %v4480 = vpop.f32.mrb[0].mxu0
      %v4481 = vadd.f32 0.0, %v4480
      %v4482 = vpop.f32.mrb[0].mxu0
      %4483 = vmatprep.mubr.bf16.mxu0 0
      %4484 = vmatmul.mubr.bf16.gmra.mrb[0].mxu0 %v4350
      %v4485 = vpop.f32.mrb[0].mxu0
      %v4486 = vadd.f32 0.0, %v4485
      %v4487 = vpop.f32.mrb[0].mxu0
      %v4488 = vpop.f32.mrb[0].mxu0
      %v4489 = vadd.f32 0.0, %v4488
      %v4490 = vpop.f32.mrb[0].mxu0
      %4491 = vmatprep.mubr.bf16.mxu0 0
      %4492 = vmatmul.mubr.bf16.gmra.mrb[0].mxu0 %v4353
      %v4493 = vpop.f32.mrb[0].mxu0
      %v4494 = vadd.f32 0.0, %v4493
      %v4495 = vpop.f32.mrb[0].mxu0
      %v4496 = vpop.f32.mrb[0].mxu0
      %v4497 = vadd.f32 0.0, %v4496
      %v4498 = vpop.f32.mrb[0].mxu0
      %4499 = vmatprep.mubr.bf16.mxu0 0
      %4500 = vmatmul.mubr.bf16.gmra.mrb[0].mxu0 %v4356
      %v4501 = vpop.f32.mrb[0].mxu0
      %v4502 = vadd.f32 0.0, %v4501
      %v4503 = vpop.f32.mrb[0].mxu0
      %v4504 = vpop.f32.mrb[0].mxu0
      %v4505 = vadd.f32 0.0, %v4504
      %v4506 = vpop.f32.mrb[0].mxu0
      %4507 = vmatprep.mubr.bf16.mxu0 0
      %4508 = vmatmul.mubr.bf16.gmra.mrb[0].mxu0 %v4359
      %v4509 = vpop.f32.mrb[0].mxu0
      %v4510 = vadd.f32 0.0, %v4509
      %v4511 = vpop.f32.mrb[0].mxu0
      %v4512 = vpop.f32.mrb[0].mxu0
      %v4513 = vadd.f32 0.0, %v4512
      %v4514 = vpop.f32.mrb[0].mxu0
      %4515 = vmatprep.mubr.bf16.mxu0 0
      %4516 = vmatmul.mubr.bf16.gmra.mrb[0].mxu0 %v4362
      %v4517 = vpop.f32.mrb[0].mxu0
      %v4518 = vadd.f32 0.0, %v4517
      %v4519 = vpop.f32.mrb[0].mxu0
      %v4520 = vpop.f32.mrb[0].mxu0
      %v4521 = vadd.f32 0.0, %v4520
      %v4522 = vpop.f32.mrb[0].mxu0
      %4523 = vmatprep.mubr.bf16.mxu0 0
      %4524 = vmatmul.mubr.bf16.gmra.mrb[0].mxu0 %v4365
      %v4525 = vpop.f32.mrb[0].mxu0
      %v4526 = vadd.f32 0.0, %v4525
      %v4527 = vpop.f32.mrb[0].mxu0
      %v4528 = vpop.f32.mrb[0].mxu0
      %v4529 = vadd.f32 0.0, %v4528
      %v4530 = vpop.f32.mrb[0].mxu0
      %4531 = vdwg.mxu0
      %v4532 = vld [vmem:[%s8] sm:$0x1]
      %v4534 = vlaneseq
      %v4535 = vshrl.u32 %v4534, 7
      %v4536 = vsub.s32 0, %v4535
      %v4537 = vrot.slane %v4532, %v4536
      %v4539 = vmul.f32 %v4406, %v4537
      %v4540 = vmul.f32 %v4409, %v4537
      %v4541 = vmul.f32 %v4414, %v4537
      %v4542 = vmul.f32 %v4417, %v4537
      %v4543 = vmul.f32 %v4422, %v4537
      %v4544 = vmul.f32 %v4425, %v4537
      %v4545 = vmul.f32 %v4430, %v4537
      %v4546 = vmul.f32 %v4433, %v4537
      %v4547 = vmul.f32 %v4438, %v4537
      %v4548 = vmul.f32 %v4441, %v4537
      %v4549 = vmul.f32 %v4446, %v4537
      %v4550 = vmul.f32 %v4449, %v4537
      %v4551 = vmul.f32 %v4454, %v4537
      %v4552 = vmul.f32 %v4457, %v4537
      %v4553 = vmul.f32 %v4462, %v4537
      %v4554 = vmul.f32 %v4465, %v4537
      %v4555 = vmul.f32 %v4470, %v4537
      %v4556 = vmul.f32 %v4473, %v4537
      %v4557 = vmul.f32 %v4478, %v4537
      %v4558 = vmul.f32 %v4481, %v4537
      %v4559 = vmul.f32 %v4486, %v4537
      %v4560 = vmul.f32 %v4489, %v4537
      %v4561 = vmul.f32 %v4494, %v4537
      %v4562 = vmul.f32 %v4497, %v4537
      %v4563 = vmul.f32 %v4502, %v4537
      %v4564 = vmul.f32 %v4505, %v4537
      %v4565 = vmul.f32 %v4510, %v4537
      %v4566 = vmul.f32 %v4513, %v4537
      %v4567 = vmul.f32 %v4518, %v4537
      %v4568 = vmul.f32 %v4521, %v4537
      %v4569 = vmul.f32 %v4526, %v4537
      %v4570 = vmul.f32 %v4529, %v4537
      %v4571 = vld [vmem:[%s9] sm:$0x1]
      %v4573 = vlaneseq
      %v4574 = vshrl.u32 %v4573, 7
      %v4575 = vsub.s32 0, %v4574
      %v4576 = vrot.slane %v4571, %v4575
      %v4578 = vadd.f32 %v4539, %v4576
      %v4579 = vadd.f32 %v4540, %v4576
      %v4580 = vadd.f32 %v4541, %v4576
      %v4581 = vadd.f32 %v4542, %v4576
      %v4582 = vadd.f32 %v4543, %v4576
      %v4583 = vadd.f32 %v4544, %v4576
      %v4584 = vadd.f32 %v4545, %v4576
      %v4585 = vadd.f32 %v4546, %v4576
      %v4586 = vadd.f32 %v4547, %v4576
      %v4587 = vadd.f32 %v4548, %v4576
      %v4588 = vadd.f32 %v4549, %v4576
      %v4589 = vadd.f32 %v4550, %v4576
      %v4590 = vadd.f32 %v4551, %v4576
      %v4591 = vadd.f32 %v4552, %v4576
      %v4592 = vadd.f32 %v4553, %v4576
      %v4593 = vadd.f32 %v4554, %v4576
      %v4594 = vadd.f32 %v4555, %v4576
      %v4595 = vadd.f32 %v4556, %v4576
      %v4596 = vadd.f32 %v4557, %v4576
      %v4597 = vadd.f32 %v4558, %v4576
      %v4598 = vadd.f32 %v4559, %v4576
      %v4599 = vadd.f32 %v4560, %v4576
      %v4600 = vadd.f32 %v4561, %v4576
      %v4601 = vadd.f32 %v4562, %v4576
      %v4602 = vadd.f32 %v4563, %v4576
      %v4603 = vadd.f32 %v4564, %v4576
      %v4604 = vadd.f32 %v4565, %v4576
      %v4605 = vadd.f32 %v4566, %v4576
      %v4606 = vadd.f32 %v4567, %v4576
      %v4607 = vadd.f32 %v4568, %v4576
      %v4608 = vadd.f32 %v4569, %v4576
      %v4609 = vadd.f32 %v4570, %v4576
      %v4610 = vpack.c.bf16 %v4579, %v4578
      %v4611 = vpack.c.bf16 %v4581, %v4580
      %v4612 = vpack.c.bf16 %v4583, %v4582
      %v4613 = vpack.c.bf16 %v4585, %v4584
      %v4614 = vpack.c.bf16 %v4587, %v4586
      %v4615 = vpack.c.bf16 %v4589, %v4588
      %v4616 = vpack.c.bf16 %v4591, %v4590
      %v4617 = vpack.c.bf16 %v4593, %v4592
      %v4618 = vpack.c.bf16 %v4595, %v4594
      %v4619 = vpack.c.bf16 %v4597, %v4596
      %v4620 = vpack.c.bf16 %v4599, %v4598
      %v4621 = vpack.c.bf16 %v4601, %v4600
      %v4622 = vpack.c.bf16 %v4603, %v4602
      %v4623 = vpack.c.bf16 %v4605, %v4604
      %v4624 = vpack.c.bf16 %v4607, %v4606
      %v4625 = vpack.c.bf16 %v4609, %v4608
      %v4642 = vunpack.c.l.b16 %v4610
      %v4643 = vunpack.c.h.b16 %v4610
      %v4644 = vunpack.c.l.b16 %v4611
      %v4645 = vunpack.c.h.b16 %v4611
      %v4646 = vunpack.c.l.b16 %v4612
      %v4647 = vunpack.c.h.b16 %v4612
      %v4648 = vunpack.c.l.b16 %v4613
      %v4649 = vunpack.c.h.b16 %v4613
      %v4650 = vunpack.c.l.b16 %v4614
      %v4651 = vunpack.c.h.b16 %v4614
      %v4652 = vunpack.c.l.b16 %v4615
      %v4653 = vunpack.c.h.b16 %v4615
      %v4654 = vunpack.c.l.b16 %v4616
      %v4655 = vunpack.c.h.b16 %v4616
      %v4656 = vunpack.c.l.b16 %v4617
      %v4657 = vunpack.c.h.b16 %v4617
      %v4658 = vunpack.c.l.b16 %v4618
      %v4659 = vunpack.c.h.b16 %v4618
      %v4660 = vunpack.c.l.b16 %v4619
      %v4661 = vunpack.c.h.b16 %v4619
      %v4662 = vunpack.c.l.b16 %v4620
      %v4663 = vunpack.c.h.b16 %v4620
      %v4664 = vunpack.c.l.b16 %v4621
      %v4665 = vunpack.c.h.b16 %v4621
      %v4666 = vunpack.c.l.b16 %v4622
      %v4667 = vunpack.c.h.b16 %v4622
      %v4668 = vunpack.c.l.b16 %v4623
      %v4669 = vunpack.c.h.b16 %v4623
      %v4670 = vunpack.c.l.b16 %v4624
      %v4671 = vunpack.c.h.b16 %v4624
      %v4672 = vunpack.c.l.b16 %v4625
      %v4673 = vunpack.c.h.b16 %v4625
      %v4674 = vpack.c.b16 %v4642, %v4642
      %v4675 = vpack.c.b16 %v4643, %v4643
      %v4676 = vpack.c.b16 %v4644, %v4644
      %v4677 = vpack.c.b16 %v4645, %v4645
      %v4678 = vpack.c.b16 %v4646, %v4646
      %v4679 = vpack.c.b16 %v4647, %v4647
      %v4680 = vpack.c.b16 %v4648, %v4648
      %v4681 = vpack.c.b16 %v4649, %v4649
      %v4682 = vpack.c.b16 %v4650, %v4650
      %v4683 = vpack.c.b16 %v4651, %v4651
      %v4684 = vpack.c.b16 %v4652, %v4652
      %v4685 = vpack.c.b16 %v4653, %v4653
      %v4686 = vpack.c.b16 %v4654, %v4654
      %v4687 = vpack.c.b16 %v4655, %v4655
      %v4688 = vpack.c.b16 %v4656, %v4656
      %v4689 = vpack.c.b16 %v4657, %v4657
      %v4690 = vpack.c.b16 %v4658, %v4658
      %v4691 = vpack.c.b16 %v4659, %v4659
      %v4692 = vpack.c.b16 %v4660, %v4660
      %v4693 = vpack.c.b16 %v4661, %v4661
      %v4694 = vpack.c.b16 %v4662, %v4662
      %v4695 = vpack.c.b16 %v4663, %v4663
      %v4696 = vpack.c.b16 %v4664, %v4664
      %v4697 = vpack.c.b16 %v4665, %v4665
      %v4698 = vpack.c.b16 %v4666, %v4666
      %v4699 = vpack.c.b16 %v4667, %v4667
      %v4700 = vpack.c.b16 %v4668, %v4668
      %v4701 = vpack.c.b16 %v4669, %v4669
      %v4702 = vpack.c.b16 %v4670, %v4670
      %v4703 = vpack.c.b16 %v4671, %v4671
      %v4704 = vpack.c.b16 %v4672, %v4672
      %v4705 = vpack.c.b16 %v4673, %v4673
      %vm4738 = vcmask 125952
      %4739 = vst.msk [vmem:[%s393] sm:$0xf] %vm4738, %v4674
      %4740 = vst.msk [vmem:[%s393 + $0x4] sm:$0xf] %vm4738, %v4675
      %4741 = vst.msk [vmem:[%s393 + $0x8] sm:$0xf] %vm4738, %v4676
      %4742 = vst.msk [vmem:[%s393 + $0xc] sm:$0xf] %vm4738, %v4677
      %4743 = vst.msk [vmem:[%s393 + $0x10] sm:$0xf] %vm4738, %v4678
      %4744 = vst.msk [vmem:[%s393 + $0x14] sm:$0xf] %vm4738, %v4679
      %4745 = vst.msk [vmem:[%s393 + $0x18] sm:$0xf] %vm4738, %v4680
      %4746 = vst.msk [vmem:[%s393 + $0x1c] sm:$0xf] %vm4738, %v4681
      %4747 = vst.msk [vmem:[%s393 + $0x20] sm:$0xf] %vm4738, %v4682
      %4748 = vst.msk [vmem:[%s393 + $0x24] sm:$0xf] %vm4738, %v4683
      %4749 = vst.msk [vmem:[%s393 + $0x28] sm:$0xf] %vm4738, %v4684
      %4750 = vst.msk [vmem:[%s393 + $0x2c] sm:$0xf] %vm4738, %v4685
      %4751 = vst.msk [vmem:[%s393 + $0x30] sm:$0xf] %vm4738, %v4686
      %4752 = vst.msk [vmem:[%s393 + $0x34] sm:$0xf] %vm4738, %v4687
      %4753 = vst.msk [vmem:[%s393 + $0x38] sm:$0xf] %vm4738, %v4688
      %4754 = vst.msk [vmem:[%s393 + $0x3c] sm:$0xf] %vm4738, %v4689
      %4755 = vst.msk [vmem:[%s393 + $0x40] sm:$0xf] %vm4738, %v4690
      %4756 = vst.msk [vmem:[%s393 + $0x44] sm:$0xf] %vm4738, %v4691
      %4757 = vst.msk [vmem:[%s393 + $0x48] sm:$0xf] %vm4738, %v4692
      %4758 = vst.msk [vmem:[%s393 + $0x4c] sm:$0xf] %vm4738, %v4693
      %4759 = vst.msk [vmem:[%s393 + $0x50] sm:$0xf] %vm4738, %v4694
      %4760 = vst.msk [vmem:[%s393 + $0x54] sm:$0xf] %vm4738, %v4695
      %4761 = vst.msk [vmem:[%s393 + $0x58] sm:$0xf] %vm4738, %v4696
      %4762 = vst.msk [vmem:[%s393 + $0x5c] sm:$0xf] %vm4738, %v4697
      %4763 = vst.msk [vmem:[%s393 + $0x60] sm:$0xf] %vm4738, %v4698
      %4764 = vst.msk [vmem:[%s393 + $0x64] sm:$0xf] %vm4738, %v4699
      %4765 = vst.msk [vmem:[%s393 + $0x68] sm:$0xf] %vm4738, %v4700
      %4766 = vst.msk [vmem:[%s393 + $0x6c] sm:$0xf] %vm4738, %v4701
      %4767 = vst.msk [vmem:[%s393 + $0x70] sm:$0xf] %vm4738, %v4702
      %4768 = vst.msk [vmem:[%s393 + $0x74] sm:$0xf] %vm4738, %v4703
      %4769 = vst.msk [vmem:[%s393 + $0x78] sm:$0xf] %vm4738, %v4704
      %4770 = vst.msk [vmem:[%s393 + $0x7c] sm:$0xf] %vm4738, %v4705
      %v4771 = vsel %vm519, %v4578, 0.0
      %v4772 = vsel %vm519, %v4579, 0.0
      %v4773 = vadd.f32 %v4771, %v4772
      %v4774 = vsel %vm519, %v4580, 0.0
      %v4775 = vadd.f32 %v4773, %v4774
      %v4776 = vsel %vm519, %v4581, 0.0
      %v4777 = vadd.f32 %v4775, %v4776
      %v4778 = vsel %vm519, %v4582, 0.0
      %v4779 = vadd.f32 %v4777, %v4778
      %v4780 = vsel %vm519, %v4583, 0.0
      %v4781 = vadd.f32 %v4779, %v4780
      %v4782 = vsel %vm519, %v4584, 0.0
      %v4783 = vadd.f32 %v4781, %v4782
      %v4784 = vsel %vm519, %v4585, 0.0
      %v4785 = vadd.f32 %v4783, %v4784
      %v4786 = vsel %vm519, %v4586, 0.0
      %v4787 = vadd.f32 %v4785, %v4786
      %v4788 = vsel %vm519, %v4587, 0.0
      %v4789 = vadd.f32 %v4787, %v4788
      %v4790 = vsel %vm519, %v4588, 0.0
      %v4791 = vadd.f32 %v4789, %v4790
      %v4792 = vsel %vm519, %v4589, 0.0
      %v4793 = vadd.f32 %v4791, %v4792
      %v4794 = vsel %vm519, %v4590, 0.0
      %v4795 = vadd.f32 %v4793, %v4794
      %v4796 = vsel %vm519, %v4591, 0.0
      %v4797 = vadd.f32 %v4795, %v4796
      %v4798 = vsel %vm519, %v4592, 0.0
      %v4799 = vadd.f32 %v4797, %v4798
      %v4800 = vsel %vm519, %v4593, 0.0
      %v4801 = vadd.f32 %v4799, %v4800
      %v4802 = vsel %vm519, %v4594, 0.0
      %v4803 = vadd.f32 %v4801, %v4802
      %v4804 = vsel %vm519, %v4595, 0.0
      %v4805 = vadd.f32 %v4803, %v4804
      %v4806 = vsel %vm519, %v4596, 0.0
      %v4807 = vadd.f32 %v4805, %v4806
      %v4808 = vsel %vm519, %v4597, 0.0
      %v4809 = vadd.f32 %v4807, %v4808
      %v4810 = vsel %vm519, %v4598, 0.0
      %v4811 = vadd.f32 %v4809, %v4810
      %v4812 = vsel %vm519, %v4599, 0.0
      %v4813 = vadd.f32 %v4811, %v4812
      %v4814 = vsel %vm519, %v4600, 0.0
      %v4815 = vadd.f32 %v4813, %v4814
      %v4816 = vsel %vm519, %v4601, 0.0
      %v4817 = vadd.f32 %v4815, %v4816
      %v4818 = vsel %vm519, %v4602, 0.0
      %v4819 = vadd.f32 %v4817, %v4818
      %v4820 = vsel %vm519, %v4603, 0.0
      %v4821 = vadd.f32 %v4819, %v4820
      %v4822 = vsel %vm519, %v4604, 0.0
      %v4823 = vadd.f32 %v4821, %v4822
      %v4824 = vsel %vm519, %v4605, 0.0
      %v4825 = vadd.f32 %v4823, %v4824
      %v4826 = vsel %vm519, %v4606, 0.0
      %v4827 = vadd.f32 %v4825, %v4826
      %v4828 = vsel %vm519, %v4607, 0.0
      %v4829 = vadd.f32 %v4827, %v4828
      %v4830 = vsel %vm519, %v4608, 0.0
      %v4831 = vadd.f32 %v4829, %v4830
      %v4832 = vsel %vm519, %v4609, 0.0
      %v4833 = vadd.f32 %v4831, %v4832
      %v4834 = vrot.slane %v4833, 4
      %v4835 = vadd.f32 %v4833, %v4834
      %v4836 = vrot.slane %v4835, 2
      %v4837 = vadd.f32 %v4835, %v4836
      %v4838 = vrot.slane %v4837, 1
      %v4839 = vadd.f32 %v4837, %v4838
      %v4840 = vrcp.pop 256.0
      %v4841 = vmul.f32 %v4839, %v4840
      %v4842 = vsel %vm519, %v4578, -inf
      %v4843 = vsel %vm519, %v4579, -inf
      %v4844 = vsel %vm519, %v4580, -inf
      %v4845 = vsel %vm519, %v4581, -inf
      %v4846 = vsel %vm519, %v4582, -inf
      %v4847 = vmax.f32 %v4842, %v4846
      %v4848 = vsel %vm519, %v4583, -inf
      %v4849 = vmax.f32 %v4843, %v4848
      %v4850 = vsel %vm519, %v4584, -inf
      %v4851 = vmax.f32 %v4844, %v4850
      %v4852 = vsel %vm519, %v4585, -inf
      %v4853 = vmax.f32 %v4845, %v4852
      %v4854 = vsel %vm519, %v4586, -inf
      %v4855 = vmax.f32 %v4847, %v4854
      %v4856 = vsel %vm519, %v4587, -inf
      %v4857 = vmax.f32 %v4849, %v4856
      %v4858 = vsel %vm519, %v4588, -inf
      %v4859 = vmax.f32 %v4851, %v4858
      %v4860 = vsel %vm519, %v4589, -inf
      %v4861 = vmax.f32 %v4853, %v4860
      %v4862 = vsel %vm519, %v4590, -inf
      %v4863 = vmax.f32 %v4855, %v4862
      %v4864 = vsel %vm519, %v4591, -inf
      %v4865 = vmax.f32 %v4857, %v4864
      %v4866 = vsel %vm519, %v4592, -inf
      %v4867 = vmax.f32 %v4859, %v4866
      %v4868 = vsel %vm519, %v4593, -inf
      %v4869 = vmax.f32 %v4861, %v4868
      %v4870 = vsel %vm519, %v4594, -inf
      %v4871 = vmax.f32 %v4863, %v4870
      %v4872 = vsel %vm519, %v4595, -inf
      %v4873 = vmax.f32 %v4865, %v4872
      %v4874 = vsel %vm519, %v4596, -inf
      %v4875 = vmax.f32 %v4867, %v4874
      %v4876 = vsel %vm519, %v4597, -inf
      %v4877 = vmax.f32 %v4869, %v4876
      %v4878 = vsel %vm519, %v4598, -inf
      %v4879 = vmax.f32 %v4871, %v4878
      %v4880 = vsel %vm519, %v4599, -inf
      %v4881 = vmax.f32 %v4873, %v4880
      %v4882 = vsel %vm519, %v4600, -inf
      %v4883 = vmax.f32 %v4875, %v4882
      %v4884 = vsel %vm519, %v4601, -inf
      %v4885 = vmax.f32 %v4877, %v4884
      %v4886 = vsel %vm519, %v4602, -inf
      %v4887 = vmax.f32 %v4879, %v4886
      %v4888 = vsel %vm519, %v4603, -inf
      %v4889 = vmax.f32 %v4881, %v4888
      %v4890 = vsel %vm519, %v4604, -inf
      %v4891 = vmax.f32 %v4883, %v4890
      %v4892 = vsel %vm519, %v4605, -inf
      %v4893 = vmax.f32 %v4885, %v4892
      %v4894 = vsel %vm519, %v4606, -inf
      %v4895 = vmax.f32 %v4887, %v4894
      %v4896 = vsel %vm519, %v4607, -inf
      %v4897 = vmax.f32 %v4889, %v4896
      %v4898 = vsel %vm519, %v4608, -inf
      %v4899 = vmax.f32 %v4891, %v4898
      %v4900 = vsel %vm519, %v4609, -inf
      %v4901 = vmax.f32 %v4893, %v4900
      %v4902 = vmax.f32 %v4895, %v4897
      %v4903 = vmax.f32 %v4899, %v4901
      %v4904 = vmax.f32 %v4902, %v4903
      %v4905 = vrot.slane %v4904, 4
      %v4906 = vmax.f32 %v4904, %v4905
      %v4907 = vrot.slane %v4906, 2
      %v4908 = vmax.f32 %v4906, %v4907
      %v4909 = vrot.slane %v4908, 1
      %v4910 = vmax.f32 %v4908, %v4909
      %vm4911 = vcmask 1040384
      %v4912 = vsel %vm4911, %v4841, %v4910
      %vm4913 = vcmask 123904
      %4914 = vst.msk [vmem:[%s397] sm:$0x3] %vm4913, %v4912
      %p4915 = scmp.lt.s32.totalorder %s23, 1
      %s4916 = scalar_select %p4915, %s23, 1
      %s4917 = smul.addr %s4916, 32
      %s4918 = smul.addr %s4917, 4
      %s4919 = scalar_lea.vmem %s10, %s4918
      %p4920 = scmp.lt.s32.totalorder %s23, 1
      %s4921 = scalar_select %p4920, %s23, 1
      %s4922 = smul.addr %s4921, 2
      %s4923 = scalar_lea.vmem %s11, %s4922
      // Predicated region
      $region61: #{bottleneck_forward.2} parent=59 // pred_check
        %p4924 = pneg %p256
      $region62: #{bottleneck_forward.2} parent=59 // pred_check_branch
        %4926 = sbr.rel (%p4924) target = $region64
      $region63: #{bottleneck_forward.2} parent=59 // pred_region
        _
      $region64: #{bottleneck_forward.2} parent=59 // pred_fallthru
        _
      // Predicated region
      $region65: #{bottleneck_forward.2} parent=59 // pred_check
        %p4927 = pneg %p282
      $region66: #{bottleneck_forward.2} parent=59 // pred_check_branch
        %4929 = sbr.rel (%p4927) target = $region68
      $region67: #{bottleneck_forward.2} parent=59 // pred_region
        _
      $region68: #{bottleneck_forward.2} parent=59 // pred_fallthru
        _
    $region60: #{bottleneck_forward.2} parent=5 // pred_fallthru
      _
    %p4930 = scmp.le.s32.totalorder 2, %s18
    // Predicated region
    $region69: #{bottleneck_forward.2} parent=5 // pred_check
      %p4931 = pneg %p4930
    $region70: #{bottleneck_forward.2} parent=5 // pred_check_branch
      %4933 = sbr.rel (%p4931) target = $region72
    $region71: #{bottleneck_forward.2} parent=5 // pred_region
      %s4934 = ssub.s32 %s18, 2
      // Predicated region
      $region73: #{bottleneck_forward.2} parent=71 // pred_check
        %p4935 = pneg %p262
      $region74: #{bottleneck_forward.2} parent=71 // pred_check_branch
        %4937 = sbr.rel (%p4935) target = $region76
      $region75: #{bottleneck_forward.2} parent=71 // pred_region
        %p4938 = scmp.lt.s32.totalorder %s24, 1
        %s4939 = scalar_select %p4938, %s24, 1
        %s4940 = smul.addr %s4939, 32
        %s4941 = smul.addr %s4940, 4
        %s4942 = scalar_lea.vmem %s10, %s4941
      $region76: #{bottleneck_forward.2} parent=71 // pred_fallthru
        _
      // Predicated region
      $region77: #{bottleneck_forward.2} parent=71 // pred_check
        %p4943 = pneg %p288
      $region78: #{bottleneck_forward.2} parent=71 // pred_check_branch
        %4945 = sbr.rel (%p4943) target = $region80
      $region79: #{bottleneck_forward.2} parent=71 // pred_region
        %p4946 = scmp.lt.s32.totalorder %s24, 1
        %s4947 = scalar_select %p4946, %s24, 1
        %s4948 = smul.addr %s4947, 2
        %s4949 = scalar_lea.vmem %s11, %s4948
      $region80: #{bottleneck_forward.2} parent=71 // pred_fallthru
        _
    $region72: #{bottleneck_forward.2} parent=5 // pred_fallthru
      _
  $region6: #{bottleneck_forward.2} parent=0 // loop_footer
    %s22 = sadd.s32 1, %s18
  $region7: #{bottleneck_forward.2} parent=0 // loop_footer_branch
    %17 = sbr.rel target = $region3
  $region8: #{bottleneck_forward.2} parent=0 // loop_exit
    _

</llo_original>
